<compile_context>
chip_gen: v7x
topology: tpu7x:2x2x1
jax: 0.10.0
libtpu: 0.0.40
codegen_flags: <defaults>
</compile_context>

<pallas_src>
import numpy as np
import jax
import jax.numpy as jnp
from jax.experimental import pallas as pl
from jax.experimental.pallas import tpu as pltpu


NEG_SLOPE = 0.01     # PyTorch LeakyReLU default

# Combined-branch (pred | targ) channel sizes and spatial widths.
C1 = 64              # conv1 out channels: 32 + 32
C2 = 128             # conv2 out channels: 64 + 64
C3 = 128             # conv3 out channels: 64 + 64
F1 = 384             # fc1 out: 192 + 192
F2 = 128             # fc2 out: 64 + 64
K1 = 27              # conv1 patch size (3*3*3)
OW1 = 7              # conv1 output width (21 / stride 3)
IW2, OW2 = 7, 5      # conv2 in/out width
IW3, OW3 = 5, 3      # conv3 in/out width


def _round_up(x, m):
    return ((x + m - 1) // m) * m


def _pick_b_tile(n):
    # Biggest tile that still gives >= 2 grid steps (v7x has 2 TensorCores) and
    # does not pad tiny batches excessively.
    for b in (32, 16, 8):
        if n >= 2 * b:
            return b
    return 8


# ----------------------------------------------------------------------------
# Fused kernel: per grid step, B_TILE images through the whole network
# (both branches).  Only 2-D matmuls, elementwise math and row-offset reads.
# ----------------------------------------------------------------------------
def _rnd_fused_kernel(x_ref, w1_ref, b1_ref, w2_ref, b2_ref, w3_ref, b3_ref,
                      wf1_ref, bf1_ref, wf2_ref, bf2_ref, sel_ref, o_ref,
                      a1_ref, a2_ref):
    f32, bf16 = jnp.float32, jnp.bfloat16
    r1 = a1_ref.shape[0]          # 7*b
    r2 = a2_ref.shape[0]          # 7*b - 2
    r3 = r2 - 2                   # 7*b - 4

    def leaky(v):
        return jnp.where(v > 0, v, NEG_SLOPE * v)

    # conv1 (3x3, stride 3): patches laid out outside (pure relayout); weight
    # is block-diagonal over the 7 horizontal positions -> lanes = (x, ch).
    a1_ref[...] = leaky(
        jnp.dot(x_ref[...], w1_ref[...], preferred_element_type=f32)
        + b1_ref[...]).astype(bf16)                              # (7b, 7*64)

    # conv2 (3x3, stride 1): vertical taps = VMEM reads at row offsets 0/1/2;
    # horizontal taps folded into the block-Toeplitz weights w2[i] (448 x 640).
    acc = jnp.dot(a1_ref[pl.ds(0, r2), :], w2_ref[0], preferred_element_type=f32)
    acc += jnp.dot(a1_ref[pl.ds(1, r2), :], w2_ref[1], preferred_element_type=f32)
    acc += jnp.dot(a1_ref[pl.ds(2, r2), :], w2_ref[2], preferred_element_type=f32)
    a2_ref[...] = leaky(acc + b2_ref[...]).astype(bf16)          # (7b-2, 5*128)

    # conv3 (3x3, stride 1), same structure (640 x 384 weights).
    acc = jnp.dot(a2_ref[pl.ds(0, r3), :], w3_ref[0], preferred_element_type=f32)
    acc += jnp.dot(a2_ref[pl.ds(1, r3), :], w3_ref[1], preferred_element_type=f32)
    acc += jnp.dot(a2_ref[pl.ds(2, r3), :], w3_ref[2], preferred_element_type=f32)
    a3 = leaky(acc + b3_ref[...]).astype(bf16)                   # (7b-4, 3*128)

    # Flatten + fc1: a tiny (b, 7b-4) one-hot pick of the valid row per image
    # for each of the 3 valid y's, accumulated through the permuted fc1 weight
    # (PyTorch's channel-major flatten order is absorbed into wf1's rows).
    h = jnp.dot(jnp.dot(sel_ref[0], a3, preferred_element_type=f32).astype(bf16),
                wf1_ref[0], preferred_element_type=f32)
    h += jnp.dot(jnp.dot(sel_ref[1], a3, preferred_element_type=f32).astype(bf16),
                 wf1_ref[1], preferred_element_type=f32)
    h += jnp.dot(jnp.dot(sel_ref[2], a3, preferred_element_type=f32).astype(bf16),
                 wf1_ref[2], preferred_element_type=f32)
    h = jnp.tanh(h + bf1_ref[...]).astype(bf16)                  # (b, 384)

    # fc2 (block-diagonal over branches): lanes 0:64 predictor, 64:128 target.
    o_ref[...] = (jnp.dot(h, wf2_ref[...], preferred_element_type=f32)
                  + bf2_ref[...])                                # (b, 128) f32


# ----------------------------------------------------------------------------
# One-time parameter preparation (branch fusion + block-Toeplitz layout).
# All prepared weights are batch-tile independent.
# ----------------------------------------------------------------------------
def _conv1_weight(pred_w, targ_w):
    # (32,3,3,3) OIHW each -> block-diagonal (7*27, 7*64):
    # rows (x1, i, j, c), cols (x1, o_comb).
    wp = np.transpose(np.asarray(pred_w, np.float32), (2, 3, 1, 0)).reshape(K1, 32)
    wt = np.transpose(np.asarray(targ_w, np.float32), (2, 3, 1, 0)).reshape(K1, 32)
    blk = np.concatenate([wp, wt], axis=1)                       # (27, 64)
    out = np.zeros((OW1 * K1, OW1 * C1), np.float32)
    for x in range(OW1):
        out[x * K1:(x + 1) * K1, x * C1:(x + 1) * C1] = blk
    return out


def _conv_toeplitz_weight(pred_w, targ_w, iw, ow):
    # (Cout,Cin,3,3) OIHW each -> (3, iw*2Cin, ow*2Cout):
    # W[i][(x_in, c_comb), (x_out, o_comb)] = w[o, c, i, x_in - x_out]
    # (branch block-diagonal, zero outside the 3-tap band).
    co, ci = pred_w.shape[0], pred_w.shape[1]
    blk = np.zeros((3, 3, 2 * ci, 2 * co), np.float32)           # (i, j, c, o)
    blk[:, :, :ci, :co] = np.transpose(np.asarray(pred_w, np.float32), (2, 3, 1, 0))
    blk[:, :, ci:, co:] = np.transpose(np.asarray(targ_w, np.float32), (2, 3, 1, 0))
    out = np.zeros((3, iw * 2 * ci, ow * 2 * co), np.float32)
    for xo in range(ow):
        for j in range(3):
            xi = xo + j
            out[:, xi * 2 * ci:(xi + 1) * 2 * ci,
                xo * 2 * co:(xo + 1) * 2 * co] = blk[:, j]
    return out


def _fc1_weight(pred_w, targ_w):
    # (192,576) each, PyTorch flatten index = c*9 + y*3 + x  ->
    # (3, 3*128, 384): wf1[y][(x, c_comb), u_comb].
    def rearr(w):
        return np.transpose(np.asarray(w, np.float32).reshape(192, 64, 3, 3),
                            (2, 3, 1, 0))                        # (y, x, c, u)
    rp, rt = rearr(pred_w), rearr(targ_w)
    out = np.zeros((3, 3, C3, F1), np.float32)
    out[:, :, :64, :192] = rp
    out[:, :, 64:, 192:] = rt
    return out.reshape(3, 3 * C3, F1)


def _fc2_weight(pred_w, targ_w):
    out = np.zeros((F1, F2), np.float32)
    out[:192, :64] = np.asarray(pred_w, np.float32).T
    out[192:, 64:] = np.asarray(targ_w, np.float32).T
    return out


def _bias_row(pred_b, targ_b, reps):
    b = np.concatenate([np.asarray(pred_b, np.float32),
                        np.asarray(targ_b, np.float32)])
    return np.tile(b, reps).reshape(1, -1)


def prepare_rnd_params(pred, targ):
    bf16 = jnp.bfloat16
    return {
        "w1": jnp.asarray(_conv1_weight(pred["conv1_w"], targ["conv1_w"]), bf16),
        "b1": jnp.asarray(_bias_row(pred["conv1_b"], targ["conv1_b"], OW1)),
        "w2": jnp.asarray(_conv_toeplitz_weight(pred["conv2_w"], targ["conv2_w"],
                                                IW2, OW2), bf16),
        "b2": jnp.asarray(_bias_row(pred["conv2_b"], targ["conv2_b"], OW2)),
        "w3": jnp.asarray(_conv_toeplitz_weight(pred["conv3_w"], targ["conv3_w"],
                                                IW3, OW3), bf16),
        "b3": jnp.asarray(_bias_row(pred["conv3_b"], targ["conv3_b"], OW3)),
        "wf1": jnp.asarray(_fc1_weight(pred["fc1_w"], targ["fc1_w"]), bf16),
        "bf1": jnp.asarray(_bias_row(pred["fc1_b"], targ["fc1_b"], 1)),
        "wf2": jnp.asarray(_fc2_weight(pred["fc2_w"], targ["fc2_w"]), bf16),
        "bf2": jnp.asarray(_bias_row(pred["fc2_b"], targ["fc2_b"], 1)),
    }


def _flatten_sel(b):
    # sel[y] @ a3 picks, for every image bb, conv3-output row y  ->  (b, 384).
    rows = 7 * b - 4
    sel = np.zeros((3, b, rows), np.float32)
    for y in range(3):
        for bb in range(b):
            sel[y, bb, bb * 7 + y] = 1.0
    return sel


# ----------------------------------------------------------------------------
# Forward: per-forward XLA glue is only the conv1 im2col (pure relayout since
# stride == kernel) plus batch padding; everything else is one pallas_call.
# ----------------------------------------------------------------------------
def rnd_forward(next_obs, prep):
    """Matches RND.forward: returns (predict_feature, target_feature)."""
    n = next_obs.shape[0]
    b = _pick_b_tile(n)
    n_pad = _round_up(max(n, b), b)
    n_steps = n_pad // b

    # conv1 im2col: rows (image, y1), lanes (x1, i, j, c).
    x = next_obs.astype(jnp.float32)
    if n_pad != n:
        x = jnp.pad(x, ((0, n_pad - n), (0, 0), (0, 0), (0, 0)))
    x = jnp.transpose(x, (0, 2, 3, 1))                           # NHWC (Np,21,21,3)
    x = x.reshape(n_pad, 7, 3, 7, 3, 3).transpose(0, 1, 3, 2, 4, 5)
    x = x.reshape(n_pad * 7, OW1 * K1).astype(jnp.bfloat16)      # (7*Np, 189)

    sel = jnp.asarray(_flatten_sel(b), jnp.bfloat16)

    names = ("w1", "b1", "w2", "b2", "w3", "b3", "wf1", "bf1", "wf2", "bf2")
    weight_args = [prep[k] for k in names] + [sel]

    def full_spec(arr):
        nd = arr.ndim
        return pl.BlockSpec(tuple(arr.shape), lambda t, _nd=nd: (0,) * _nd)

    in_specs = [pl.BlockSpec((7 * b, OW1 * K1), lambda t: (t, 0))]
    in_specs += [full_spec(a) for a in weight_args]

    flops_step = 2 * ((7 * b) * (OW1 * K1) * (OW1 * C1)
                      + 3 * (7 * b - 2) * (IW2 * C1) * (OW2 * C2)
                      + 3 * (7 * b - 4) * (IW3 * C2) * (OW3 * C3)
                      + 3 * b * (7 * b - 4) * (OW3 * C3)
                      + 3 * b * (OW3 * C3) * F1
                      + b * F1 * F2)
    bytes_accessed = (x.size * 2
                      + sum(int(a.size) * a.dtype.itemsize for a in weight_args)
                      + n_pad * F2 * 4)

    out = pl.pallas_call(
        _rnd_fused_kernel,
        out_shape=jax.ShapeDtypeStruct((n_pad, F2), jnp.float32),
        grid=(n_steps,),
        in_specs=in_specs,
        out_specs=pl.BlockSpec((b, F2), lambda t: (t, 0)),
        scratch_shapes=[
            pltpu.VMEM((7 * b, IW2 * C1), jnp.bfloat16),       # a1
            pltpu.VMEM((7 * b - 2, IW3 * C2), jnp.bfloat16),   # a2
        ],
        compiler_params=pltpu.CompilerParams(
            dimension_semantics=("parallel",)),
        cost_estimate=pl.CostEstimate(
            flops=int(flops_step) * n_steps,
            transcendentals=b * F1 * n_steps,
            bytes_accessed=int(bytes_accessed)),
    )(x, *weight_args)

    predict_feature = out[:n, :64]
    target_feature = out[:n, 64:]
    return predict_feature, target_feature


# ----------------------------------------------------------------------------
# Deterministic parameter init (orthogonal gain sqrt(2), zero bias), mirroring
# RND.__init__ in PyTorch layouts.
# ----------------------------------------------------------------------------
def _init_branch_params(key):
    orth = jax.nn.initializers.orthogonal(scale=float(np.sqrt(2)))
    ks = jax.random.split(key, 5)
    p = {}
    p["conv1_w"] = orth(ks[0], (32, 27), jnp.float32).reshape(32, 3, 3, 3)
    p["conv1_b"] = jnp.zeros((32,), jnp.float32)
    p["conv2_w"] = orth(ks[1], (64, 32 * 9), jnp.float32).reshape(64, 32, 3, 3)
    p["conv2_b"] = jnp.zeros((64,), jnp.float32)
    p["conv3_w"] = orth(ks[2], (64, 64 * 9), jnp.float32).reshape(64, 64, 3, 3)
    p["conv3_b"] = jnp.zeros((64,), jnp.float32)
    p["fc1_w"] = orth(ks[3], (192, 576), jnp.float32)
    p["fc1_b"] = jnp.zeros((192,), jnp.float32)
    p["fc2_w"] = orth(ks[4], (64, 192), jnp.float32)
    p["fc2_b"] = jnp.zeros((64,), jnp.float32)
    return p


# ----------------------------------------------------------------------------
# Pure-JAX reference (lax conv, f32) for the correctness check.
# ----------------------------------------------------------------------------
def _ref_branch(x_nchw, p):
    def conv(x, w, b, stride):
        y = jax.lax.conv_general_dilated(
            x, w, (stride, stride), "VALID",
            dimension_numbers=("NCHW", "OIHW", "NCHW"))
        return y + b[None, :, None, None]

    y = jax.nn.leaky_relu(conv(x_nchw, p["conv1_w"], p["conv1_b"], 3), NEG_SLOPE)
    y = jax.nn.leaky_relu(conv(y, p["conv2_w"], p["conv2_b"], 1), NEG_SLOPE)
    y = jax.nn.leaky_relu(conv(y, p["conv3_w"], p["conv3_b"], 1), NEG_SLOPE)
    f = y.reshape(y.shape[0], -1)
    h = jnp.tanh(f @ p["fc1_w"].T + p["fc1_b"])
    return h @ p["fc2_w"].T + p["fc2_b"]


if __name__ == "__main__":
    key = jax.random.PRNGKey(0)
    k_x, k_x2, k_pred, k_targ = jax.random.split(key, 4)

    # Input implied by the module: Linear(576,.) <= 64*3*3 <= convs <= 21x21.
    predictor_params = _init_branch_params(k_pred)
    target_params = _init_branch_params(k_targ)
    prep = prepare_rnd_params(predictor_params, target_params)

    fwd = jax.jit(rnd_forward)

    # Small-batch check (single grid step, B_TILE=8).
    batch = 2
    next_obs = jax.random.normal(k_x, (batch, 3, 21, 21), dtype=jnp.float32)
    predict_feature, target_feature = fwd(next_obs, prep)
    predict_feature = jax.block_until_ready(predict_feature)
    target_feature = jax.block_until_ready(target_feature)
    assert predict_feature.shape == (batch, 64)
    assert target_feature.shape == (batch, 64)
    np.testing.assert_allclose(np.asarray(predict_feature),
                               np.asarray(_ref_branch(next_obs, predictor_params)),
                               rtol=5e-2, atol=5e-2)
    np.testing.assert_allclose(np.asarray(target_feature),
                               np.asarray(_ref_branch(next_obs, target_params)),
                               rtol=5e-2, atol=5e-2)

    # Larger batch: exercises multi-step grid (megacore path) + ragged tail.
    batch2 = 40
    next_obs2 = jax.random.normal(k_x2, (batch2, 3, 21, 21), dtype=jnp.float32)
    pf2, tf2 = fwd(next_obs2, prep)
    pf2 = jax.block_until_ready(pf2)
    tf2 = jax.block_until_ready(tf2)
    assert pf2.shape == (batch2, 64) and tf2.shape == (batch2, 64)
    np.testing.assert_allclose(np.asarray(pf2),
                               np.asarray(_ref_branch(next_obs2, predictor_params)),
                               rtol=5e-2, atol=5e-2)
    np.testing.assert_allclose(np.asarray(tf2),
                               np.asarray(_ref_branch(next_obs2, target_params)),
                               rtol=5e-2, atol=5e-2)

    print("KERNEL_OK")
</pallas_src>

<mosaic_0001>
module attributes {stable_mosaic.version = 11 : i64} {
  func.func @_rnd_fused_kernel(%arg0: i32, %arg1: memref<56x189xbf16, #tpu.memory_space<vmem>>, %arg2: memref<189x448xbf16, #tpu.memory_space<vmem>>, %arg3: memref<1x448xf32, #tpu.memory_space<vmem>>, %arg4: memref<3x448x640xbf16, #tpu.memory_space<vmem>>, %arg5: memref<1x640xf32, #tpu.memory_space<vmem>>, %arg6: memref<3x640x384xbf16, #tpu.memory_space<vmem>>, %arg7: memref<1x384xf32, #tpu.memory_space<vmem>>, %arg8: memref<3x384x384xbf16, #tpu.memory_space<vmem>>, %arg9: memref<1x384xf32, #tpu.memory_space<vmem>>, %arg10: memref<384x128xbf16, #tpu.memory_space<vmem>>, %arg11: memref<1x128xf32, #tpu.memory_space<vmem>>, %arg12: memref<3x8x52xbf16, #tpu.memory_space<vmem>>, %arg13: memref<8x128xf32, #tpu.memory_space<vmem>>, %arg14: memref<56x448xbf16, #tpu.memory_space<vmem>>, %arg15: memref<54x640xbf16, #tpu.memory_space<vmem>>) attributes {dimension_semantics = [#tpu.dimension_semantics<parallel>], iteration_bounds = array<i64: 1>, scalar_prefetch = 0 : i64, scratch_operands = 2 : i64, tpu.core_type = #tpu.core_type<tc>, window_params = [{transform_indices = @transform_0, window_bounds = array<i64: 56, 189>}, {pipeline_mode = #tpu.pipeline_mode<synchronous>, transform_indices = @transform_1, window_bounds = array<i64: 189, 448>}, {pipeline_mode = #tpu.pipeline_mode<synchronous>, transform_indices = @transform_2, window_bounds = array<i64: 1, 448>}, {pipeline_mode = #tpu.pipeline_mode<synchronous>, transform_indices = @transform_3, window_bounds = array<i64: 3, 448, 640>}, {pipeline_mode = #tpu.pipeline_mode<synchronous>, transform_indices = @transform_4, window_bounds = array<i64: 1, 640>}, {pipeline_mode = #tpu.pipeline_mode<synchronous>, transform_indices = @transform_5, window_bounds = array<i64: 3, 640, 384>}, {pipeline_mode = #tpu.pipeline_mode<synchronous>, transform_indices = @transform_6, window_bounds = array<i64: 1, 384>}, {pipeline_mode = #tpu.pipeline_mode<synchronous>, transform_indices = @transform_7, window_bounds = array<i64: 3, 384, 384>}, {pipeline_mode = #tpu.pipeline_mode<synchronous>, transform_indices = @transform_8, window_bounds = array<i64: 1, 384>}, {pipeline_mode = #tpu.pipeline_mode<synchronous>, transform_indices = @transform_9, window_bounds = array<i64: 384, 128>}, {pipeline_mode = #tpu.pipeline_mode<synchronous>, transform_indices = @transform_10, window_bounds = array<i64: 1, 128>}, {pipeline_mode = #tpu.pipeline_mode<synchronous>, transform_indices = @transform_11, window_bounds = array<i64: 3, 8, 52>}, {transform_indices = @transform_12, window_bounds = array<i64: 8, 128>}]} {
    %c0 = arith.constant 0 : index
    %c0_0 = arith.constant 0 : index
    %0 = vector.load %arg1[%c0, %c0_0] : memref<56x189xbf16, #tpu.memory_space<vmem>>, vector<56x189xbf16>
    %c0_1 = arith.constant 0 : index
    %c0_2 = arith.constant 0 : index
    %1 = vector.load %arg2[%c0_1, %c0_2] : memref<189x448xbf16, #tpu.memory_space<vmem>>, vector<189x448xbf16>
    %cst = arith.constant dense<0.000000e+00> : vector<56x448xf32>
    %2 = tpu.matmul %0, %1, %cst {dimension_numbers = #tpu.dot_dimension_numbers<[1], [0], [0], [1], [0, 0, 1, 1], [], []>} : vector<56x189xbf16>, vector<189x448xbf16>, vector<56x448xf32> -> vector<56x448xf32>
    %c0_3 = arith.constant 0 : index
    %c0_4 = arith.constant 0 : index
    %3 = vector.load %arg3[%c0_3, %c0_4] : memref<1x448xf32, #tpu.memory_space<vmem>>, vector<1x448xf32>
    %4 = vector.broadcast %3 : vector<1x448xf32> to vector<56x448xf32>
    %5 = arith.addf %2, %4 : vector<56x448xf32>
    %cst_5 = arith.constant 0.000000e+00 : f32
    %6 = vector.broadcast %cst_5 : f32 to vector<56x448xf32>
    %7 = arith.cmpf ogt, %5, %6 : vector<56x448xf32>
    %cst_6 = arith.constant 0.00999999977 : f32
    %8 = vector.broadcast %cst_6 : f32 to vector<56x448xf32>
    %9 = arith.mulf %8, %5 : vector<56x448xf32>
    %10 = arith.select %7, %5, %9 : vector<56x448xi1>, vector<56x448xf32>
    %11 = arith.truncf %10 : vector<56x448xf32> to vector<56x448xbf16>
    %c0_7 = arith.constant 0 : index
    %c0_8 = arith.constant 0 : index
    %12 = vector.load %arg14[%c0_7, %c0_8] : memref<56x448xbf16, #tpu.memory_space<vmem>>, vector<56x448xbf16>
    tpu.vector_store %arg14[%c0_7, %c0_8], %11 {strides = array<i32>} : memref<56x448xbf16, #tpu.memory_space<vmem>>, vector<56x448xbf16>,
    %c0_9 = arith.constant 0 : index
    %c0_10 = arith.constant 0 : index
    %13 = vector.load %arg14[%c0_9, %c0_10] : memref<56x448xbf16, #tpu.memory_space<vmem>>, vector<54x448xbf16>
    %c0_11 = arith.constant 0 : index
    %c0_12 = arith.constant 0 : index
    %c0_13 = arith.constant 0 : index
    %14 = vector.load %arg4[%c0_11, %c0_12, %c0_13] : memref<3x448x640xbf16, #tpu.memory_space<vmem>>, vector<1x448x640xbf16>
    %15 = vector.shape_cast %14 : vector<1x448x640xbf16> to vector<448x640xbf16>
    %cst_14 = arith.constant dense<0.000000e+00> : vector<54x640xf32>
    %16 = tpu.matmul %13, %15, %cst_14 {dimension_numbers = #tpu.dot_dimension_numbers<[1], [0], [0], [1], [0, 0, 1, 1], [], []>} : vector<54x448xbf16>, vector<448x640xbf16>, vector<54x640xf32> -> vector<54x640xf32>
    %c1 = arith.constant 1 : index
    %c0_15 = arith.constant 0 : index
    %17 = vector.load %arg14[%c1, %c0_15] : memref<56x448xbf16, #tpu.memory_space<vmem>>, vector<54x448xbf16>
    %c1_16 = arith.constant 1 : index
    %c0_17 = arith.constant 0 : index
    %c0_18 = arith.constant 0 : index
    %18 = vector.load %arg4[%c1_16, %c0_17, %c0_18] : memref<3x448x640xbf16, #tpu.memory_space<vmem>>, vector<1x448x640xbf16>
    %19 = vector.shape_cast %18 : vector<1x448x640xbf16> to vector<448x640xbf16>
    %cst_19 = arith.constant dense<0.000000e+00> : vector<54x640xf32>
    %20 = tpu.matmul %17, %19, %cst_19 {dimension_numbers = #tpu.dot_dimension_numbers<[1], [0], [0], [1], [0, 0, 1, 1], [], []>} : vector<54x448xbf16>, vector<448x640xbf16>, vector<54x640xf32> -> vector<54x640xf32>
    %21 = arith.addf %16, %20 : vector<54x640xf32>
    %c2 = arith.constant 2 : index
    %c0_20 = arith.constant 0 : index
    %22 = vector.load %arg14[%c2, %c0_20] : memref<56x448xbf16, #tpu.memory_space<vmem>>, vector<54x448xbf16>
    %c2_21 = arith.constant 2 : index
    %c0_22 = arith.constant 0 : index
    %c0_23 = arith.constant 0 : index
    %23 = vector.load %arg4[%c2_21, %c0_22, %c0_23] : memref<3x448x640xbf16, #tpu.memory_space<vmem>>, vector<1x448x640xbf16>
    %24 = vector.shape_cast %23 : vector<1x448x640xbf16> to vector<448x640xbf16>
    %cst_24 = arith.constant dense<0.000000e+00> : vector<54x640xf32>
    %25 = tpu.matmul %22, %24, %cst_24 {dimension_numbers = #tpu.dot_dimension_numbers<[1], [0], [0], [1], [0, 0, 1, 1], [], []>} : vector<54x448xbf16>, vector<448x640xbf16>, vector<54x640xf32> -> vector<54x640xf32>
    %26 = arith.addf %21, %25 : vector<54x640xf32>
    %c0_25 = arith.constant 0 : index
    %c0_26 = arith.constant 0 : index
    %27 = vector.load %arg5[%c0_25, %c0_26] : memref<1x640xf32, #tpu.memory_space<vmem>>, vector<1x640xf32>
    %28 = vector.broadcast %27 : vector<1x640xf32> to vector<54x640xf32>
    %29 = arith.addf %26, %28 : vector<54x640xf32>
    %cst_27 = arith.constant 0.000000e+00 : f32
    %30 = vector.broadcast %cst_27 : f32 to vector<54x640xf32>
    %31 = arith.cmpf ogt, %29, %30 : vector<54x640xf32>
    %cst_28 = arith.constant 0.00999999977 : f32
    %32 = vector.broadcast %cst_28 : f32 to vector<54x640xf32>
    %33 = arith.mulf %32, %29 : vector<54x640xf32>
    %34 = arith.select %31, %29, %33 : vector<54x640xi1>, vector<54x640xf32>
    %35 = arith.truncf %34 : vector<54x640xf32> to vector<54x640xbf16>
    %c0_29 = arith.constant 0 : index
    %c0_30 = arith.constant 0 : index
    %36 = vector.load %arg15[%c0_29, %c0_30] : memref<54x640xbf16, #tpu.memory_space<vmem>>, vector<54x640xbf16>
    tpu.vector_store %arg15[%c0_29, %c0_30], %35 {strides = array<i32>} : memref<54x640xbf16, #tpu.memory_space<vmem>>, vector<54x640xbf16>,
    %c0_31 = arith.constant 0 : index
    %c0_32 = arith.constant 0 : index
    %37 = vector.load %arg15[%c0_31, %c0_32] : memref<54x640xbf16, #tpu.memory_space<vmem>>, vector<52x640xbf16>
    %c0_33 = arith.constant 0 : index
    %c0_34 = arith.constant 0 : index
    %c0_35 = arith.constant 0 : index
    %38 = vector.load %arg6[%c0_33, %c0_34, %c0_35] : memref<3x640x384xbf16, #tpu.memory_space<vmem>>, vector<1x640x384xbf16>
    %39 = vector.shape_cast %38 : vector<1x640x384xbf16> to vector<640x384xbf16>
    %cst_36 = arith.constant dense<0.000000e+00> : vector<52x384xf32>
    %40 = tpu.matmul %37, %39, %cst_36 {dimension_numbers = #tpu.dot_dimension_numbers<[1], [0], [0], [1], [0, 0, 1, 1], [], []>} : vector<52x640xbf16>, vector<640x384xbf16>, vector<52x384xf32> -> vector<52x384xf32>
    %c1_37 = arith.constant 1 : index
    %c0_38 = arith.constant 0 : index
    %41 = vector.load %arg15[%c1_37, %c0_38] : memref<54x640xbf16, #tpu.memory_space<vmem>>, vector<52x640xbf16>
    %c1_39 = arith.constant 1 : index
    %c0_40 = arith.constant 0 : index
    %c0_41 = arith.constant 0 : index
    %42 = vector.load %arg6[%c1_39, %c0_40, %c0_41] : memref<3x640x384xbf16, #tpu.memory_space<vmem>>, vector<1x640x384xbf16>
    %43 = vector.shape_cast %42 : vector<1x640x384xbf16> to vector<640x384xbf16>
    %cst_42 = arith.constant dense<0.000000e+00> : vector<52x384xf32>
    %44 = tpu.matmul %41, %43, %cst_42 {dimension_numbers = #tpu.dot_dimension_numbers<[1], [0], [0], [1], [0, 0, 1, 1], [], []>} : vector<52x640xbf16>, vector<640x384xbf16>, vector<52x384xf32> -> vector<52x384xf32>
    %45 = arith.addf %40, %44 : vector<52x384xf32>
    %c2_43 = arith.constant 2 : index
    %c0_44 = arith.constant 0 : index
    %46 = vector.load %arg15[%c2_43, %c0_44] : memref<54x640xbf16, #tpu.memory_space<vmem>>, vector<52x640xbf16>
    %c2_45 = arith.constant 2 : index
    %c0_46 = arith.constant 0 : index
    %c0_47 = arith.constant 0 : index
    %47 = vector.load %arg6[%c2_45, %c0_46, %c0_47] : memref<3x640x384xbf16, #tpu.memory_space<vmem>>, vector<1x640x384xbf16>
    %48 = vector.shape_cast %47 : vector<1x640x384xbf16> to vector<640x384xbf16>
    %cst_48 = arith.constant dense<0.000000e+00> : vector<52x384xf32>
    %49 = tpu.matmul %46, %48, %cst_48 {dimension_numbers = #tpu.dot_dimension_numbers<[1], [0], [0], [1], [0, 0, 1, 1], [], []>} : vector<52x640xbf16>, vector<640x384xbf16>, vector<52x384xf32> -> vector<52x384xf32>
    %50 = arith.addf %45, %49 : vector<52x384xf32>
    %c0_49 = arith.constant 0 : index
    %c0_50 = arith.constant 0 : index
    %51 = vector.load %arg7[%c0_49, %c0_50] : memref<1x384xf32, #tpu.memory_space<vmem>>, vector<1x384xf32>
    %52 = vector.broadcast %51 : vector<1x384xf32> to vector<52x384xf32>
    %53 = arith.addf %50, %52 : vector<52x384xf32>
    %cst_51 = arith.constant 0.000000e+00 : f32
    %54 = vector.broadcast %cst_51 : f32 to vector<52x384xf32>
    %55 = arith.cmpf ogt, %53, %54 : vector<52x384xf32>
    %cst_52 = arith.constant 0.00999999977 : f32
    %56 = vector.broadcast %cst_52 : f32 to vector<52x384xf32>
    %57 = arith.mulf %56, %53 : vector<52x384xf32>
    %58 = arith.select %55, %53, %57 : vector<52x384xi1>, vector<52x384xf32>
    %59 = arith.truncf %58 : vector<52x384xf32> to vector<52x384xbf16>
    %c0_53 = arith.constant 0 : index
    %c0_54 = arith.constant 0 : index
    %c0_55 = arith.constant 0 : index
    %60 = vector.load %arg12[%c0_53, %c0_54, %c0_55] : memref<3x8x52xbf16, #tpu.memory_space<vmem>>, vector<1x8x52xbf16>
    %61 = vector.shape_cast %60 : vector<1x8x52xbf16> to vector<8x52xbf16>
    %cst_56 = arith.constant dense<0.000000e+00> : vector<8x384xf32>
    %62 = tpu.matmul %61, %59, %cst_56 {dimension_numbers = #tpu.dot_dimension_numbers<[1], [0], [0], [1], [0, 0, 1, 1], [], []>} : vector<8x52xbf16>, vector<52x384xbf16>, vector<8x384xf32> -> vector<8x384xf32>
    %63 = arith.truncf %62 : vector<8x384xf32> to vector<8x384xbf16>
    %c0_57 = arith.constant 0 : index
    %c0_58 = arith.constant 0 : index
    %c0_59 = arith.constant 0 : index
    %64 = vector.load %arg8[%c0_57, %c0_58, %c0_59] : memref<3x384x384xbf16, #tpu.memory_space<vmem>>, vector<1x384x384xbf16>
    %65 = vector.shape_cast %64 : vector<1x384x384xbf16> to vector<384x384xbf16>
    %cst_60 = arith.constant dense<0.000000e+00> : vector<8x384xf32>
    %66 = tpu.matmul %63, %65, %cst_60 {dimension_numbers = #tpu.dot_dimension_numbers<[1], [0], [0], [1], [0, 0, 1, 1], [], []>} : vector<8x384xbf16>, vector<384x384xbf16>, vector<8x384xf32> -> vector<8x384xf32>
    %c1_61 = arith.constant 1 : index
    %c0_62 = arith.constant 0 : index
    %c0_63 = arith.constant 0 : index
    %67 = vector.load %arg12[%c1_61, %c0_62, %c0_63] : memref<3x8x52xbf16, #tpu.memory_space<vmem>>, vector<1x8x52xbf16>
    %68 = vector.shape_cast %67 : vector<1x8x52xbf16> to vector<8x52xbf16>
    %cst_64 = arith.constant dense<0.000000e+00> : vector<8x384xf32>
    %69 = tpu.matmul %68, %59, %cst_64 {dimension_numbers = #tpu.dot_dimension_numbers<[1], [0], [0], [1], [0, 0, 1, 1], [], []>} : vector<8x52xbf16>, vector<52x384xbf16>, vector<8x384xf32> -> vector<8x384xf32>
    %70 = arith.truncf %69 : vector<8x384xf32> to vector<8x384xbf16>
    %c1_65 = arith.constant 1 : index
    %c0_66 = arith.constant 0 : index
    %c0_67 = arith.constant 0 : index
    %71 = vector.load %arg8[%c1_65, %c0_66, %c0_67] : memref<3x384x384xbf16, #tpu.memory_space<vmem>>, vector<1x384x384xbf16>
    %72 = vector.shape_cast %71 : vector<1x384x384xbf16> to vector<384x384xbf16>
    %cst_68 = arith.constant dense<0.000000e+00> : vector<8x384xf32>
    %73 = tpu.matmul %70, %72, %cst_68 {dimension_numbers = #tpu.dot_dimension_numbers<[1], [0], [0], [1], [0, 0, 1, 1], [], []>} : vector<8x384xbf16>, vector<384x384xbf16>, vector<8x384xf32> -> vector<8x384xf32>
    %74 = arith.addf %66, %73 : vector<8x384xf32>
    %c2_69 = arith.constant 2 : index
    %c0_70 = arith.constant 0 : index
    %c0_71 = arith.constant 0 : index
    %75 = vector.load %arg12[%c2_69, %c0_70, %c0_71] : memref<3x8x52xbf16, #tpu.memory_space<vmem>>, vector<1x8x52xbf16>
    %76 = vector.shape_cast %75 : vector<1x8x52xbf16> to vector<8x52xbf16>
    %cst_72 = arith.constant dense<0.000000e+00> : vector<8x384xf32>
    %77 = tpu.matmul %76, %59, %cst_72 {dimension_numbers = #tpu.dot_dimension_numbers<[1], [0], [0], [1], [0, 0, 1, 1], [], []>} : vector<8x52xbf16>, vector<52x384xbf16>, vector<8x384xf32> -> vector<8x384xf32>
    %78 = arith.truncf %77 : vector<8x384xf32> to vector<8x384xbf16>
    %c2_73 = arith.constant 2 : index
    %c0_74 = arith.constant 0 : index
    %c0_75 = arith.constant 0 : index
    %79 = vector.load %arg8[%c2_73, %c0_74, %c0_75] : memref<3x384x384xbf16, #tpu.memory_space<vmem>>, vector<1x384x384xbf16>
    %80 = vector.shape_cast %79 : vector<1x384x384xbf16> to vector<384x384xbf16>
    %cst_76 = arith.constant dense<0.000000e+00> : vector<8x384xf32>
    %81 = tpu.matmul %78, %80, %cst_76 {dimension_numbers = #tpu.dot_dimension_numbers<[1], [0], [0], [1], [0, 0, 1, 1], [], []>} : vector<8x384xbf16>, vector<384x384xbf16>, vector<8x384xf32> -> vector<8x384xf32>
    %82 = arith.addf %74, %81 : vector<8x384xf32>
    %c0_77 = arith.constant 0 : index
    %c0_78 = arith.constant 0 : index
    %83 = vector.load %arg9[%c0_77, %c0_78] : memref<1x384xf32, #tpu.memory_space<vmem>>, vector<1x384xf32>
    %84 = vector.broadcast %83 : vector<1x384xf32> to vector<8x384xf32>
    %85 = arith.addf %82, %84 : vector<8x384xf32>
    %86 = math.tanh %85 : vector<8x384xf32>
    %87 = arith.truncf %86 : vector<8x384xf32> to vector<8x384xbf16>
    %c0_79 = arith.constant 0 : index
    %c0_80 = arith.constant 0 : index
    %88 = vector.load %arg10[%c0_79, %c0_80] : memref<384x128xbf16, #tpu.memory_space<vmem>>, vector<384x128xbf16>
    %cst_81 = arith.constant dense<0.000000e+00> : vector<8x128xf32>
    %89 = tpu.matmul %87, %88, %cst_81 {dimension_numbers = #tpu.dot_dimension_numbers<[1], [0], [0], [1], [0, 0, 1, 1], [], []>} : vector<8x384xbf16>, vector<384x128xbf16>, vector<8x128xf32> -> vector<8x128xf32>
    %c0_82 = arith.constant 0 : index
    %c0_83 = arith.constant 0 : index
    %90 = vector.load %arg11[%c0_82, %c0_83] : memref<1x128xf32, #tpu.memory_space<vmem>>, vector<1x128xf32>
    %91 = vector.broadcast %90 : vector<1x128xf32> to vector<8x128xf32>
    %92 = arith.addf %89, %91 : vector<8x128xf32>
    %c0_84 = arith.constant 0 : index
    %c0_85 = arith.constant 0 : index
    %93 = vector.load %arg13[%c0_84, %c0_85] : memref<8x128xf32, #tpu.memory_space<vmem>>, vector<8x128xf32>
    tpu.vector_store %arg13[%c0_84, %c0_85], %92 {strides = array<i32>} : memref<8x128xf32, #tpu.memory_space<vmem>>, vector<8x128xf32>,
    return
  }
  func.func @transform_0(%arg0: i32) -> (i32, i32) {
    %c0_i32 = arith.constant 0 : i32
    %c0_i32_0 = arith.constant 0 : i32
    return %arg0, %c0_i32 : i32, i32
  }
  func.func @transform_1(%arg0: i32) -> (i32, i32) {
    %c0_i32 = arith.constant 0 : i32
    %c0_i32_0 = arith.constant 0 : i32
    %c0_i32_1 = arith.constant 0 : i32
    return %c0_i32, %c0_i32_0 : i32, i32
  }
  func.func @transform_2(%arg0: i32) -> (i32, i32) {
    %c0_i32 = arith.constant 0 : i32
    %c0_i32_0 = arith.constant 0 : i32
    %c0_i32_1 = arith.constant 0 : i32
    return %c0_i32, %c0_i32_0 : i32, i32
  }
  func.func @transform_3(%arg0: i32) -> (i32, i32, i32) {
    %c0_i32 = arith.constant 0 : i32
    %c0_i32_0 = arith.constant 0 : i32
    %c0_i32_1 = arith.constant 0 : i32
    %c0_i32_2 = arith.constant 0 : i32
    return %c0_i32, %c0_i32_0, %c0_i32_1 : i32, i32, i32
  }
  func.func @transform_4(%arg0: i32) -> (i32, i32) {
    %c0_i32 = arith.constant 0 : i32
    %c0_i32_0 = arith.constant 0 : i32
    %c0_i32_1 = arith.constant 0 : i32
    return %c0_i32, %c0_i32_0 : i32, i32
  }
  func.func @transform_5(%arg0: i32) -> (i32, i32, i32) {
    %c0_i32 = arith.constant 0 : i32
    %c0_i32_0 = arith.constant 0 : i32
    %c0_i32_1 = arith.constant 0 : i32
    %c0_i32_2 = arith.constant 0 : i32
    return %c0_i32, %c0_i32_0, %c0_i32_1 : i32, i32, i32
  }
  func.func @transform_6(%arg0: i32) -> (i32, i32) {
    %c0_i32 = arith.constant 0 : i32
    %c0_i32_0 = arith.constant 0 : i32
    %c0_i32_1 = arith.constant 0 : i32
    return %c0_i32, %c0_i32_0 : i32, i32
  }
  func.func @transform_7(%arg0: i32) -> (i32, i32, i32) {
    %c0_i32 = arith.constant 0 : i32
    %c0_i32_0 = arith.constant 0 : i32
    %c0_i32_1 = arith.constant 0 : i32
    %c0_i32_2 = arith.constant 0 : i32
    return %c0_i32, %c0_i32_0, %c0_i32_1 : i32, i32, i32
  }
  func.func @transform_8(%arg0: i32) -> (i32, i32) {
    %c0_i32 = arith.constant 0 : i32
    %c0_i32_0 = arith.constant 0 : i32
    %c0_i32_1 = arith.constant 0 : i32
    return %c0_i32, %c0_i32_0 : i32, i32
  }
  func.func @transform_9(%arg0: i32) -> (i32, i32) {
    %c0_i32 = arith.constant 0 : i32
    %c0_i32_0 = arith.constant 0 : i32
    %c0_i32_1 = arith.constant 0 : i32
    return %c0_i32, %c0_i32_0 : i32, i32
  }
  func.func @transform_10(%arg0: i32) -> (i32, i32) {
    %c0_i32 = arith.constant 0 : i32
    %c0_i32_0 = arith.constant 0 : i32
    %c0_i32_1 = arith.constant 0 : i32
    return %c0_i32, %c0_i32_0 : i32, i32
  }
  func.func @transform_11(%arg0: i32) -> (i32, i32, i32) {
    %c0_i32 = arith.constant 0 : i32
    %c0_i32_0 = arith.constant 0 : i32
    %c0_i32_1 = arith.constant 0 : i32
    %c0_i32_2 = arith.constant 0 : i32
    return %c0_i32, %c0_i32_0, %c0_i32_1 : i32, i32, i32
  }
  func.func @transform_12(%arg0: i32) -> (i32, i32) {
    %c0_i32 = arith.constant 0 : i32
    %c0_i32_0 = arith.constant 0 : i32
    return %arg0, %c0_i32 : i32, i32
  }
}

</mosaic_0001>

<llo_original>
// kernel: rnd_forward.1
$region0: #{rnd_forward.1}
  #allocation0 [shape = 'u32[]', space=smem, size = 0x4, offset = 0x4, fixed_abs, tag = 'smem constant byte address 0x4 - core index']
  #allocation1 [shape = 'u32[144,128]{1,0:T(1,128)}', space=vmem, size = 0x12000, scoped, tag = 'internal scratch']
  #allocation2 [shape = 'bf16[56,448]{1,0:T(8,128)(2,1)}', space=vmem, size = 0xe000, scoped, tag = 'scratch operand']
  #allocation3 [shape = 'bf16[54,640]{1,0:T(8,128)(2,1)}', space=vmem, size = 0x11800, scoped, tag = 'scratch operand']
  %s0 = inlined_call_operand.vmem [shape: bf16[56,189], index: 0, kind: input, shape index: {}]
  %s1 = inlined_call_operand.vmem [shape: bf16[189,448], index: 1, kind: input, shape index: {}]
  %s2 = inlined_call_operand.vmem [shape: f32[1,448], index: 2, kind: input, shape index: {}]
  %s3 = inlined_call_operand.vmem [shape: bf16[3,448,640], index: 3, kind: input, shape index: {}]
  %s4 = inlined_call_operand.vmem [shape: f32[1,640], index: 4, kind: input, shape index: {}]
  %s5 = inlined_call_operand.hbm [shape: bf16[3,640,384], index: 5, kind: input, shape index: {}]
  %s6 = inlined_call_operand.vmem [shape: f32[1,384], index: 6, kind: input, shape index: {}]
  %s7 = inlined_call_operand.vmem [shape: bf16[3,384,384], index: 7, kind: input, shape index: {}]
  %s8 = inlined_call_operand.vmem [shape: f32[1,384], index: 8, kind: input, shape index: {}]
  %s9 = inlined_call_operand.vmem [shape: bf16[384,128], index: 9, kind: input, shape index: {}]
  %s10 = inlined_call_operand.vmem [shape: f32[1,128], index: 10, kind: input, shape index: {}]
  %s11 = inlined_call_operand.vmem [shape: bf16[3,8,52], index: 11, kind: input, shape index: {}]
  %s12 = inlined_call_operand.vmem [shape: f32[8,128], index: 12, kind: output, shape index: {}]
  %s13 = sld [smem:[#allocation0]]
  $region62: #{rnd_forward.1} parent=0
    _
  %s15 = ssub.s32 1, %s13
  %s16 = scalar_select 0, %s15, %s13
  $region1: #{rnd_forward.1} parent=0
    #allocation4 [shape = 'u8[1474560]{0}', space=vmem, size = 0x168000, scoped, tag = 'input window, operand 5, single buffered']
    #allocation5 [shape = 's32[1]{0}', space=sflag, size = 0x4, scoped, tag = 'scoped memory for rnd_forward.1']
    %17 = vsyncpa [#allocation5], 0
    // Predicated region
    $region2: #{rnd_forward.1} parent=1 // pred_check
      _
    $region3: #{rnd_forward.1} parent=1 // pred_check_branch
      %19 = sbr.rel (0) target = $region5
    $region4: #{rnd_forward.1} parent=1 // pred_region
      _
    $region5: #{rnd_forward.1} parent=1 // pred_fallthru
      _
    // Predicated region
    $region6: #{rnd_forward.1} parent=1 // pred_check
      _
    $region7: #{rnd_forward.1} parent=1 // pred_check_branch
      %21 = sbr.rel (0) target = $region9
    $region8: #{rnd_forward.1} parent=1 // pred_region
      _
    $region9: #{rnd_forward.1} parent=1 // pred_fallthru
      _
    // Predicated region
    $region10: #{rnd_forward.1} parent=1 // pred_check
      _
    $region11: #{rnd_forward.1} parent=1 // pred_check_branch
      %23 = sbr.rel (0) target = $region13
    $region12: #{rnd_forward.1} parent=1 // pred_region
      _
    $region13: #{rnd_forward.1} parent=1 // pred_fallthru
      _
    // Predicated region
    $region14: #{rnd_forward.1} parent=1 // pred_check
      _
    $region15: #{rnd_forward.1} parent=1 // pred_check_branch
      %25 = sbr.rel (0) target = $region17
    $region16: #{rnd_forward.1} parent=1 // pred_region
      _
    $region17: #{rnd_forward.1} parent=1 // pred_fallthru
      _
    // Predicated region
    $region18: #{rnd_forward.1} parent=1 // pred_check
      _
    $region19: #{rnd_forward.1} parent=1 // pred_check_branch
      %27 = sbr.rel (0) target = $region21
    $region20: #{rnd_forward.1} parent=1 // pred_region
      _
    $region21: #{rnd_forward.1} parent=1 // pred_fallthru
      _
    // Predicated region
    $region22: #{rnd_forward.1} parent=1 // pred_check
      _
    $region23: #{rnd_forward.1} parent=1 // pred_check_branch
      %29 = sbr.rel (0) target = $region25
    $region24: #{rnd_forward.1} parent=1 // pred_region
      %s31 = ssub.s32 46080, 46080
      %32 = vsyncadd [#allocation5], %s31
      %s33 = sshll.u32 [#allocation4], 4
      %s34 = int_to_ptr.vmem [resolvable:$true] %s33
      %39 = dma.hbm_to_vmem [thread:$0]  %s5, 46080, %s34, [#allocation5], 192, 192, 12
    $region25: #{rnd_forward.1} parent=1 // pred_fallthru
      _
    // Predicated region
    $region26: #{rnd_forward.1} parent=1 // pred_check
      _
    $region27: #{rnd_forward.1} parent=1 // pred_check_branch
      %41 = sbr.rel (0) target = $region29
    $region28: #{rnd_forward.1} parent=1 // pred_region
      _
    $region29: #{rnd_forward.1} parent=1 // pred_fallthru
      _
    // Predicated region
    $region30: #{rnd_forward.1} parent=1 // pred_check
      _
    $region31: #{rnd_forward.1} parent=1 // pred_check_branch
      %43 = sbr.rel (0) target = $region33
    $region32: #{rnd_forward.1} parent=1 // pred_region
      _
    $region33: #{rnd_forward.1} parent=1 // pred_fallthru
      _
    // Predicated region
    $region34: #{rnd_forward.1} parent=1 // pred_check
      _
    $region35: #{rnd_forward.1} parent=1 // pred_check_branch
      %45 = sbr.rel (0) target = $region37
    $region36: #{rnd_forward.1} parent=1 // pred_region
      _
    $region37: #{rnd_forward.1} parent=1 // pred_fallthru
      _
    // Predicated region
    $region38: #{rnd_forward.1} parent=1 // pred_check
      _
    $region39: #{rnd_forward.1} parent=1 // pred_check_branch
      %47 = sbr.rel (0) target = $region41
    $region40: #{rnd_forward.1} parent=1 // pred_region
      _
    $region41: #{rnd_forward.1} parent=1 // pred_fallthru
      _
    // Predicated region
    $region42: #{rnd_forward.1} parent=1 // pred_check
      _
    $region43: #{rnd_forward.1} parent=1 // pred_check_branch
      %49 = sbr.rel (0) target = $region45
    $region44: #{rnd_forward.1} parent=1 // pred_region
      _
    $region45: #{rnd_forward.1} parent=1 // pred_fallthru
      _
    // Predicated region
    $region46: #{rnd_forward.1} parent=1 // pred_check
      _
    $region47: #{rnd_forward.1} parent=1 // pred_check_branch
      %51 = sbr.rel (0) target = $region49
    $region48: #{rnd_forward.1} parent=1 // pred_region
      _
    $region49: #{rnd_forward.1} parent=1 // pred_fallthru
      _
    // Predicated region
    $region50: #{rnd_forward.1} parent=1 // pred_check
      _
    $region51: #{rnd_forward.1} parent=1 // pred_check_branch
      %53 = sbr.rel (0) target = $region53
    $region52: #{rnd_forward.1} parent=1 // pred_region
      %54 = dma.done [#allocation5], 46080
    $region53: #{rnd_forward.1} parent=1 // pred_fallthru
      _
    %v56 = vld [vmem:[%s0] sm:$0xff]
    %v57 = vld [vmem:[%s0 + $0x8] sm:$0xff]
    %v58 = vld [vmem:[%s0 + $0x10] sm:$0xff]
    %v59 = vld [vmem:[%s0 + $0x18] sm:$0xff]
    %v60 = vld [vmem:[%s0 + $0x20] sm:$0xff]
    %v61 = vld [vmem:[%s0 + $0x28] sm:$0xff]
    %v62 = vld [vmem:[%s0 + $0x30] sm:$0xff]
    %v63 = vld [vmem:[%s1] sm:$0xff]
    %v64 = vld [vmem:[%s1 + $0x8] sm:$0xff]
    %v65 = vld [vmem:[%s1 + $0x10] sm:$0xff]
    %v66 = vld [vmem:[%s1 + $0x18] sm:$0xff]
    %v67 = vld [vmem:[%s1 + $0x20] sm:$0xff]
    %v68 = vld [vmem:[%s1 + $0x28] sm:$0xff]
    %v69 = vld [vmem:[%s1 + $0x30] sm:$0xff]
    %v70 = vld [vmem:[%s1 + $0x38] sm:$0xff]
    %v71 = vld [vmem:[%s1 + $0x40] sm:$0xff]
    %v72 = vld [vmem:[%s1 + $0x48] sm:$0xff]
    %v73 = vld [vmem:[%s1 + $0x50] sm:$0xff]
    %v74 = vld [vmem:[%s1 + $0x58] sm:$0xff]
    %v75 = vld [vmem:[%s1 + $0x60] sm:$0xff]
    %v76 = vld [vmem:[%s1 + $0x68] sm:$0xff]
    %v77 = vld [vmem:[%s1 + $0x70] sm:$0xff]
    %v78 = vld [vmem:[%s1 + $0x78] sm:$0xff]
    %v79 = vld [vmem:[%s1 + $0x80] sm:$0xff]
    %v80 = vld [vmem:[%s1 + $0x88] sm:$0xff]
    %v81 = vld [vmem:[%s1 + $0x90] sm:$0xff]
    %v82 = vld [vmem:[%s1 + $0x98] sm:$0xff]
    %v83 = vld [vmem:[%s1 + $0xa0] sm:$0xff]
    %v84 = vld [vmem:[%s1 + $0xa8] sm:$0xff]
    %v85 = vld [vmem:[%s1 + $0xb0] sm:$0xff]
    %v86 = vld [vmem:[%s1 + $0xb8] sm:$0xff]
    %v87 = vld [vmem:[%s1 + $0xc0] sm:$0xff]
    %v88 = vld [vmem:[%s1 + $0xc8] sm:$0xff]
    %v89 = vld [vmem:[%s1 + $0xd0] sm:$0xff]
    %v90 = vld [vmem:[%s1 + $0xd8] sm:$0xff]
    %v91 = vld [vmem:[%s1 + $0xe0] sm:$0xff]
    %v92 = vld [vmem:[%s1 + $0xe8] sm:$0xff]
    %v93 = vld [vmem:[%s1 + $0xf0] sm:$0xff]
    %v94 = vld [vmem:[%s1 + $0xf8] sm:$0xff]
    %v95 = vld [vmem:[%s1 + $0x100] sm:$0xff]
    %v96 = vld [vmem:[%s1 + $0x108] sm:$0xff]
    %v97 = vld [vmem:[%s1 + $0x110] sm:$0xff]
    %v98 = vld [vmem:[%s1 + $0x118] sm:$0xff]
    %v99 = vld [vmem:[%s1 + $0x120] sm:$0xff]
    %v100 = vld [vmem:[%s1 + $0x128] sm:$0xff]
    %v101 = vld [vmem:[%s1 + $0x130] sm:$0xff]
    %v102 = vld [vmem:[%s1 + $0x138] sm:$0xff]
    %v103 = vld [vmem:[%s1 + $0x140] sm:$0xff]
    %v104 = vld [vmem:[%s1 + $0x148] sm:$0xff]
    %v105 = vld [vmem:[%s1 + $0x150] sm:$0xff]
    %v106 = vld [vmem:[%s1 + $0x158] sm:$0xff]
    %v107 = vld [vmem:[%s1 + $0x160] sm:$0xff]
    %v108 = vld [vmem:[%s1 + $0x168] sm:$0xff]
    %v109 = vld [vmem:[%s1 + $0x170] sm:$0x77]
    %v110 = vld [vmem:[%s1 + $0x178] sm:$0x77]
    %v111 = vld [vmem:[%s2] sm:$0xf]
    %v113 = vlaneseq
    %v114 = vshrl.u32 %v113, 7
    %v115 = vsub.s32 0, %v114
    %v116 = vrot.slane %v111, %v115
    %v117 = vlaneseq
    %v118 = vshrl.u32 %v117, 7
    %v119 = vsub.s32 1, %v118
    %v120 = vrot.slane %v111, %v119
    %v121 = vlaneseq
    %v122 = vshrl.u32 %v121, 7
    %v123 = vsub.s32 2, %v122
    %v124 = vrot.slane %v111, %v123
    %v125 = vlaneseq
    %v126 = vshrl.u32 %v125, 7
    %v127 = vsub.s32 3, %v126
    %v128 = vrot.slane %v111, %v127
    %v140 = vunpack.c.l.b16 %v56
    %v141 = vunpack.c.h.b16 %v56
    %v142 = vunpack.c.l.b16 %v57
    %v143 = vunpack.c.h.b16 %v57
    %v144 = vunpack.c.l.b16 %v58
    %v145 = vunpack.c.h.b16 %v58
    %v146 = vunpack.c.l.b16 %v59
    %v147 = vunpack.c.h.b16 %v59
    %v148 = vunpack.c.l.b16 %v60
    %v149 = vunpack.c.h.b16 %v60
    %v150 = vunpack.c.l.b16 %v61
    %v151 = vunpack.c.h.b16 %v61
    %v152 = vunpack.c.l.b16 %v62
    %v153 = vunpack.c.h.b16 %v62
    %v154 = vpack.c.b16 %v142, %v140
    %v155 = vpack.c.b16 %v143, %v141
    %v156 = vpack.c.b16 %v146, %v144
    %v157 = vpack.c.b16 %v147, %v145
    %v158 = vpack.c.b16 %v150, %v148
    %v159 = vpack.c.b16 %v151, %v149
    %v160 = vpack.c.b16 %v152, %v152
    %v161 = vpack.c.b16 %v153, %v153
    %v214 = vunpack.c.l.b16 %v63
    %v215 = vunpack.c.h.b16 %v63
    %v216 = vunpack.c.l.b16 %v64
    %v217 = vunpack.c.h.b16 %v64
    %v218 = vunpack.c.l.b16 %v65
    %v219 = vunpack.c.h.b16 %v65
    %v220 = vunpack.c.l.b16 %v66
    %v221 = vunpack.c.h.b16 %v66
    %v222 = vunpack.c.l.b16 %v67
    %v223 = vunpack.c.h.b16 %v67
    %v224 = vunpack.c.l.b16 %v68
    %v225 = vunpack.c.h.b16 %v68
    %v226 = vunpack.c.l.b16 %v69
    %v227 = vunpack.c.h.b16 %v69
    %v228 = vunpack.c.l.b16 %v70
    %v229 = vunpack.c.h.b16 %v70
    %v230 = vunpack.c.l.b16 %v71
    %v231 = vunpack.c.h.b16 %v71
    %v232 = vunpack.c.l.b16 %v72
    %v233 = vunpack.c.h.b16 %v72
    %v234 = vunpack.c.l.b16 %v73
    %v235 = vunpack.c.h.b16 %v73
    %v236 = vunpack.c.l.b16 %v74
    %v237 = vunpack.c.h.b16 %v74
    %v238 = vunpack.c.l.b16 %v75
    %v239 = vunpack.c.h.b16 %v75
    %v240 = vunpack.c.l.b16 %v76
    %v241 = vunpack.c.h.b16 %v76
    %v242 = vunpack.c.l.b16 %v77
    %v243 = vunpack.c.h.b16 %v77
    %v244 = vunpack.c.l.b16 %v78
    %v245 = vunpack.c.h.b16 %v78
    %v246 = vunpack.c.l.b16 %v79
    %v247 = vunpack.c.h.b16 %v79
    %v248 = vunpack.c.l.b16 %v80
    %v249 = vunpack.c.h.b16 %v80
    %v250 = vunpack.c.l.b16 %v81
    %v251 = vunpack.c.h.b16 %v81
    %v252 = vunpack.c.l.b16 %v82
    %v253 = vunpack.c.h.b16 %v82
    %v254 = vunpack.c.l.b16 %v83
    %v255 = vunpack.c.h.b16 %v83
    %v256 = vunpack.c.l.b16 %v84
    %v257 = vunpack.c.h.b16 %v84
    %v258 = vunpack.c.l.b16 %v85
    %v259 = vunpack.c.h.b16 %v85
    %v260 = vunpack.c.l.b16 %v86
    %v261 = vunpack.c.h.b16 %v86
    %v262 = vunpack.c.l.b16 %v87
    %v263 = vunpack.c.h.b16 %v87
    %v264 = vunpack.c.l.b16 %v88
    %v265 = vunpack.c.h.b16 %v88
    %v266 = vunpack.c.l.b16 %v89
    %v267 = vunpack.c.h.b16 %v89
    %v268 = vunpack.c.l.b16 %v90
    %v269 = vunpack.c.h.b16 %v90
    %v270 = vunpack.c.l.b16 %v91
    %v271 = vunpack.c.h.b16 %v91
    %v272 = vunpack.c.l.b16 %v92
    %v273 = vunpack.c.h.b16 %v92
    %v274 = vunpack.c.l.b16 %v93
    %v275 = vunpack.c.h.b16 %v93
    %v276 = vunpack.c.l.b16 %v94
    %v277 = vunpack.c.h.b16 %v94
    %v278 = vunpack.c.l.b16 %v95
    %v279 = vunpack.c.h.b16 %v95
    %v280 = vunpack.c.l.b16 %v96
    %v281 = vunpack.c.h.b16 %v96
    %v282 = vunpack.c.l.b16 %v97
    %v283 = vunpack.c.h.b16 %v97
    %v284 = vunpack.c.l.b16 %v98
    %v285 = vunpack.c.h.b16 %v98
    %v286 = vunpack.c.l.b16 %v99
    %v287 = vunpack.c.h.b16 %v99
    %v288 = vunpack.c.l.b16 %v100
    %v289 = vunpack.c.h.b16 %v100
    %v290 = vunpack.c.l.b16 %v101
    %v291 = vunpack.c.h.b16 %v101
    %v292 = vunpack.c.l.b16 %v102
    %v293 = vunpack.c.h.b16 %v102
    %v294 = vunpack.c.l.b16 %v103
    %v295 = vunpack.c.h.b16 %v103
    %v296 = vunpack.c.l.b16 %v104
    %v297 = vunpack.c.h.b16 %v104
    %v298 = vunpack.c.l.b16 %v105
    %v299 = vunpack.c.h.b16 %v105
    %v300 = vunpack.c.l.b16 %v106
    %v301 = vunpack.c.h.b16 %v106
    %v302 = vunpack.c.l.b16 %v107
    %v303 = vunpack.c.h.b16 %v107
    %v304 = vunpack.c.l.b16 %v108
    %v305 = vunpack.c.h.b16 %v108
    %v306 = vunpack.c.l.b16 %v109
    %v307 = vunpack.c.h.b16 %v109
    %v308 = vunpack.c.l.b16 %v110
    %v309 = vunpack.c.h.b16 %v110
    %v310 = vpack.c.b16 %v218, %v214
    %v311 = vpack.c.b16 %v219, %v215
    %v312 = vpack.c.b16 %v220, %v216
    %v313 = vpack.c.b16 %v221, %v217
    %v314 = vpack.c.b16 %v226, %v222
    %v315 = vpack.c.b16 %v227, %v223
    %v316 = vpack.c.b16 %v228, %v224
    %v317 = vpack.c.b16 %v229, %v225
    %v318 = vpack.c.b16 %v234, %v230
    %v319 = vpack.c.b16 %v235, %v231
    %v320 = vpack.c.b16 %v236, %v232
    %v321 = vpack.c.b16 %v237, %v233
    %v322 = vpack.c.b16 %v242, %v238
    %v323 = vpack.c.b16 %v243, %v239
    %v324 = vpack.c.b16 %v244, %v240
    %v325 = vpack.c.b16 %v245, %v241
    %v326 = vpack.c.b16 %v250, %v246
    %v327 = vpack.c.b16 %v251, %v247
    %v328 = vpack.c.b16 %v252, %v248
    %v329 = vpack.c.b16 %v253, %v249
    %v330 = vpack.c.b16 %v258, %v254
    %v331 = vpack.c.b16 %v259, %v255
    %v332 = vpack.c.b16 %v260, %v256
    %v333 = vpack.c.b16 %v261, %v257
    %v334 = vpack.c.b16 %v266, %v262
    %v335 = vpack.c.b16 %v267, %v263
    %v336 = vpack.c.b16 %v268, %v264
    %v337 = vpack.c.b16 %v269, %v265
    %v338 = vpack.c.b16 %v274, %v270
    %v339 = vpack.c.b16 %v275, %v271
    %v340 = vpack.c.b16 %v276, %v272
    %v341 = vpack.c.b16 %v277, %v273
    %v342 = vpack.c.b16 %v282, %v278
    %v343 = vpack.c.b16 %v283, %v279
    %v344 = vpack.c.b16 %v284, %v280
    %v345 = vpack.c.b16 %v285, %v281
    %v346 = vpack.c.b16 %v290, %v286
    %v347 = vpack.c.b16 %v291, %v287
    %v348 = vpack.c.b16 %v292, %v288
    %v349 = vpack.c.b16 %v293, %v289
    %v350 = vpack.c.b16 %v298, %v294
    %v351 = vpack.c.b16 %v299, %v295
    %v352 = vpack.c.b16 %v300, %v296
    %v353 = vpack.c.b16 %v301, %v297
    %v354 = vpack.c.b16 %v306, %v302
    %v355 = vpack.c.b16 %v307, %v303
    %v356 = vpack.c.b16 %v308, %v304
    %v357 = vpack.c.b16 %v309, %v305
    %vm402 = vcmask 498688
    %v404 = vsel %vm402, %v155, 0
    %v407 = vsel %vm402, %v157, 0
    %v410 = vsel %vm402, %v159, 0
    %v413 = vsel %vm402, %v161, 0
    %vm415 = vcmask 1045504
    %vm416 = vcmask 1046528
    %v417 = vsel %vm415, 4294967295, 65535
    %v418 = vsel %vm416, %v417, 0
    %v420 = vand.u32 %v354, %v418
    %v423 = vand.u32 %v355, %v418
    %v426 = vand.u32 %v356, %v418
    %v429 = vand.u32 %v357, %v418
    %431 = vmatprep.subr.bf16.mxu0 %v311
    %432 = vmatpush1.bf16.msra.mxu0 %v310
    %433 = vmatprep.subr.bf16.mxu0 %v315
    %434 = vmatpush1.bf16.msra.mxu0 %v314
    %435 = vmatprep.subr.bf16.mxu0 %v319
    %436 = vmatpush1.bf16.msra.mxu0 %v318
    %437 = vmatprep.subr.bf16.mxu0 %v323
    %438 = vmatpush1.bf16.msra.mxu0 %v322
    %439 = vmatprep.subr.bf16.mxu0 %v327
    %440 = vmatpush1.bf16.msra.mxu0 %v326
    %441 = vmatprep.subr.bf16.mxu0 %v331
    %442 = vmatpush1.bf16.msra.mxu0 %v330
    %443 = vmatprep.subr.bf16.mxu0 %v335
    %444 = vmatpush1.bf16.msra.mxu0 %v334
    %445 = vmatprep.subr.bf16.mxu0 %v339
    %446 = vmatpush1.bf16.msra.mxu0 %v338
    %447 = vmatprep.subr.bf16.mxu0 %v343
    %448 = vmatpush1.bf16.msra.mxu0 %v342
    %449 = vmatprep.subr.bf16.mxu0 %v347
    %450 = vmatpush1.bf16.msra.mxu0 %v346
    %451 = vmatprep.subr.bf16.mxu0 %v351
    %452 = vmatpush1.bf16.msra.mxu0 %v350
    %453 = vmatprep.subr.bf16.mxu0 %v423
    %454 = vmatpush1.bf16.msra.mxu0 %v420
    %455 = vmatprep.subr.bf16.mxu0 0
    %456 = vmatpush1.bf16.msra.mxu0 0
    %457 = vmatprep.subr.bf16.mxu0 0
    %458 = vmatpush1.bf16.msra.mxu0 0
    %459 = vmatprep.subr.bf16.mxu0 0
    %460 = vmatpush1.bf16.msra.mxu0 0
    %461 = vmatprep.subr.bf16.mxu0 0
    %462 = vmatpush1.bf16.msra.mxu0 0
    %463 = vmatprep.mubr.bf16.mxu0 %v404
    %464 = vmatmul.mubr.bf16.gmra.mrb[0].mxu0 %v154
    %v465 = vpop.f32.mrb[0].mxu0
    %v466 = vadd.f32 %v116, %v465
    %v467 = vpop.f32.mrb[0].mxu0
    %v468 = vadd.f32 %v120, %v467
    %v469 = vpop.f32.mrb[0].mxu0
    %v470 = vadd.f32 %v116, %v469
    %v471 = vpop.f32.mrb[0].mxu0
    %v472 = vadd.f32 %v120, %v471
    %473 = vmatprep.mubr.bf16.mxu0 %v407
    %474 = vmatmul.mubr.bf16.gmra.mrb[0].mxu0 %v156
    %v475 = vpop.f32.mrb[0].mxu0
    %v476 = vadd.f32 %v116, %v475
    %v477 = vpop.f32.mrb[0].mxu0
    %v478 = vadd.f32 %v120, %v477
    %v479 = vpop.f32.mrb[0].mxu0
    %v480 = vadd.f32 %v116, %v479
    %v481 = vpop.f32.mrb[0].mxu0
    %v482 = vadd.f32 %v120, %v481
    %483 = vmatprep.mubr.bf16.mxu0 %v410
    %484 = vmatmul.mubr.bf16.gmra.mrb[0].mxu0 %v158
    %v485 = vpop.f32.mrb[0].mxu0
    %v486 = vadd.f32 %v116, %v485
    %v487 = vpop.f32.mrb[0].mxu0
    %v488 = vadd.f32 %v120, %v487
    %v489 = vpop.f32.mrb[0].mxu0
    %v490 = vadd.f32 %v116, %v489
    %v491 = vpop.f32.mrb[0].mxu0
    %v492 = vadd.f32 %v120, %v491
    %493 = vmatprep.mubr.bf16.mxu0 %v413
    %494 = vmatmul.mubr.bf16.gmra.mrb[0].mxu0 %v160
    %v495 = vpop.f32.mrb[0].mxu0
    %v496 = vadd.f32 %v116, %v495
    %v497 = vpop.f32.mrb[0].mxu0
    %v498 = vadd.f32 %v120, %v497
    %v499 = vpop.f32.mrb[0].mxu0
    %v500 = vpop.f32.mrb[0].mxu0
    %501 = vdwg.mxu0
    %502 = vmatprep.subr.bf16.mxu0 %v313
    %503 = vmatpush1.bf16.msra.mxu0 %v312
    %504 = vmatprep.subr.bf16.mxu0 %v317
    %505 = vmatpush1.bf16.msra.mxu0 %v316
    %506 = vmatprep.subr.bf16.mxu0 %v321
    %507 = vmatpush1.bf16.msra.mxu0 %v320
    %508 = vmatprep.subr.bf16.mxu0 %v325
    %509 = vmatpush1.bf16.msra.mxu0 %v324
    %510 = vmatprep.subr.bf16.mxu0 %v329
    %511 = vmatpush1.bf16.msra.mxu0 %v328
    %512 = vmatprep.subr.bf16.mxu0 %v333
    %513 = vmatpush1.bf16.msra.mxu0 %v332
    %514 = vmatprep.subr.bf16.mxu0 %v337
    %515 = vmatpush1.bf16.msra.mxu0 %v336
    %516 = vmatprep.subr.bf16.mxu0 %v341
    %517 = vmatpush1.bf16.msra.mxu0 %v340
    %518 = vmatprep.subr.bf16.mxu0 %v345
    %519 = vmatpush1.bf16.msra.mxu0 %v344
    %520 = vmatprep.subr.bf16.mxu0 %v349
    %521 = vmatpush1.bf16.msra.mxu0 %v348
    %522 = vmatprep.subr.bf16.mxu0 %v353
    %523 = vmatpush1.bf16.msra.mxu0 %v352
    %524 = vmatprep.subr.bf16.mxu0 %v429
    %525 = vmatpush1.bf16.msra.mxu0 %v426
    %526 = vmatprep.subr.bf16.mxu0 0
    %527 = vmatpush1.bf16.msra.mxu0 0
    %528 = vmatprep.subr.bf16.mxu0 0
    %529 = vmatpush1.bf16.msra.mxu0 0
    %530 = vmatprep.subr.bf16.mxu0 0
    %531 = vmatpush1.bf16.msra.mxu0 0
    %532 = vmatprep.subr.bf16.mxu0 0
    %533 = vmatpush1.bf16.msra.mxu0 0
    %534 = vmatprep.mubr.bf16.mxu0 %v404
    %535 = vmatmul.mubr.bf16.gmra.mrb[0].mxu0 %v154
    %v536 = vpop.f32.mrb[0].mxu0
    %v537 = vadd.f32 %v124, %v536
    %v538 = vpop.f32.mrb[0].mxu0
    %v539 = vadd.f32 %v128, %v538
    %v540 = vpop.f32.mrb[0].mxu0
    %v541 = vadd.f32 %v124, %v540
    %v542 = vpop.f32.mrb[0].mxu0
    %v543 = vadd.f32 %v128, %v542
    %544 = vmatprep.mubr.bf16.mxu0 %v407
    %545 = vmatmul.mubr.bf16.gmra.mrb[0].mxu0 %v156
    %v546 = vpop.f32.mrb[0].mxu0
    %v547 = vadd.f32 %v124, %v546
    %v548 = vpop.f32.mrb[0].mxu0
    %v549 = vadd.f32 %v128, %v548
    %v550 = vpop.f32.mrb[0].mxu0
    %v551 = vadd.f32 %v124, %v550
    %v552 = vpop.f32.mrb[0].mxu0
    %v553 = vadd.f32 %v128, %v552
    %554 = vmatprep.mubr.bf16.mxu0 %v410
    %555 = vmatmul.mubr.bf16.gmra.mrb[0].mxu0 %v158
    %v556 = vpop.f32.mrb[0].mxu0
    %v557 = vadd.f32 %v124, %v556
    %v558 = vpop.f32.mrb[0].mxu0
    %v559 = vadd.f32 %v128, %v558
    %v560 = vpop.f32.mrb[0].mxu0
    %v561 = vadd.f32 %v124, %v560
    %v562 = vpop.f32.mrb[0].mxu0
    %v563 = vadd.f32 %v128, %v562
    %564 = vmatprep.mubr.bf16.mxu0 %v413
    %565 = vmatmul.mubr.bf16.gmra.mrb[0].mxu0 %v160
    %v566 = vpop.f32.mrb[0].mxu0
    %v567 = vadd.f32 %v124, %v566
    %v568 = vpop.f32.mrb[0].mxu0
    %v569 = vadd.f32 %v128, %v568
    %v570 = vpop.f32.mrb[0].mxu0
    %v571 = vpop.f32.mrb[0].mxu0
    %572 = vdwg.mxu0
    %vm573 = vcmp.gt.f32.partialorder %v466, 0.0
    %vm574 = vcmp.gt.f32.partialorder %v468, 0.0
    %vm575 = vcmp.gt.f32.partialorder %v537, 0.0
    %vm576 = vcmp.gt.f32.partialorder %v539, 0.0
    %vm577 = vcmp.gt.f32.partialorder %v470, 0.0
    %vm578 = vcmp.gt.f32.partialorder %v472, 0.0
    %vm579 = vcmp.gt.f32.partialorder %v541, 0.0
    %vm580 = vcmp.gt.f32.partialorder %v543, 0.0
    %vm581 = vcmp.gt.f32.partialorder %v476, 0.0
    %vm582 = vcmp.gt.f32.partialorder %v478, 0.0
    %vm583 = vcmp.gt.f32.partialorder %v547, 0.0
    %vm584 = vcmp.gt.f32.partialorder %v549, 0.0
    %vm585 = vcmp.gt.f32.partialorder %v480, 0.0
    %vm586 = vcmp.gt.f32.partialorder %v482, 0.0
    %vm587 = vcmp.gt.f32.partialorder %v551, 0.0
    %vm588 = vcmp.gt.f32.partialorder %v553, 0.0
    %vm589 = vcmp.gt.f32.partialorder %v486, 0.0
    %vm590 = vcmp.gt.f32.partialorder %v488, 0.0
    %vm591 = vcmp.gt.f32.partialorder %v557, 0.0
    %vm592 = vcmp.gt.f32.partialorder %v559, 0.0
    %vm593 = vcmp.gt.f32.partialorder %v490, 0.0
    %vm594 = vcmp.gt.f32.partialorder %v492, 0.0
    %vm595 = vcmp.gt.f32.partialorder %v561, 0.0
    %vm596 = vcmp.gt.f32.partialorder %v563, 0.0
    %vm597 = vcmp.gt.f32.partialorder %v496, 0.0
    %vm598 = vcmp.gt.f32.partialorder %v498, 0.0
    %vm599 = vcmp.gt.f32.partialorder %v567, 0.0
    %vm600 = vcmp.gt.f32.partialorder %v569, 0.0
    %v601 = vmul.f32 %v466, 0.01
    %v602 = vmul.f32 %v468, 0.01
    %v603 = vmul.f32 %v537, 0.01
    %v604 = vmul.f32 %v539, 0.01
    %v605 = vmul.f32 %v470, 0.01
    %v606 = vmul.f32 %v472, 0.01
    %v607 = vmul.f32 %v541, 0.01
    %v608 = vmul.f32 %v543, 0.01
    %v609 = vmul.f32 %v476, 0.01
    %v610 = vmul.f32 %v478, 0.01
    %v611 = vmul.f32 %v547, 0.01
    %v612 = vmul.f32 %v549, 0.01
    %v613 = vmul.f32 %v480, 0.01
    %v614 = vmul.f32 %v482, 0.01
    %v615 = vmul.f32 %v551, 0.01
    %v616 = vmul.f32 %v553, 0.01
    %v617 = vmul.f32 %v486, 0.01
    %v618 = vmul.f32 %v488, 0.01
    %v619 = vmul.f32 %v557, 0.01
    %v620 = vmul.f32 %v559, 0.01
    %v621 = vmul.f32 %v490, 0.01
    %v622 = vmul.f32 %v492, 0.01
    %v623 = vmul.f32 %v561, 0.01
    %v624 = vmul.f32 %v563, 0.01
    %v625 = vmul.f32 %v496, 0.01
    %v626 = vmul.f32 %v498, 0.01
    %v627 = vmul.f32 %v567, 0.01
    %v628 = vmul.f32 %v569, 0.01
    %v629 = vsel %vm573, %v466, %v601
    %v630 = vsel %vm574, %v468, %v602
    %v631 = vsel %vm575, %v537, %v603
    %v632 = vsel %vm576, %v539, %v604
    %v633 = vsel %vm577, %v470, %v605
    %v634 = vsel %vm578, %v472, %v606
    %v635 = vsel %vm579, %v541, %v607
    %v636 = vsel %vm580, %v543, %v608
    %v637 = vsel %vm581, %v476, %v609
    %v638 = vsel %vm582, %v478, %v610
    %v639 = vsel %vm583, %v547, %v611
    %v640 = vsel %vm584, %v549, %v612
    %v641 = vsel %vm585, %v480, %v613
    %v642 = vsel %vm586, %v482, %v614
    %v643 = vsel %vm587, %v551, %v615
    %v644 = vsel %vm588, %v553, %v616
    %v645 = vsel %vm589, %v486, %v617
    %v646 = vsel %vm590, %v488, %v618
    %v647 = vsel %vm591, %v557, %v619
    %v648 = vsel %vm592, %v559, %v620
    %v649 = vsel %vm593, %v490, %v621
    %v650 = vsel %vm594, %v492, %v622
    %v651 = vsel %vm595, %v561, %v623
    %v652 = vsel %vm596, %v563, %v624
    %v653 = vsel %vm597, %v496, %v625
    %v654 = vsel %vm598, %v498, %v626
    %v655 = vsel %vm599, %v567, %v627
    %v656 = vsel %vm600, %v569, %v628
    %v657 = vpack.c.bf16 %v633, %v629
    %v658 = vpack.c.bf16 %v634, %v630
    %v659 = vpack.c.bf16 %v635, %v631
    %v660 = vpack.c.bf16 %v636, %v632
    %v661 = vpack.c.bf16 %v641, %v637
    %v662 = vpack.c.bf16 %v642, %v638
    %v663 = vpack.c.bf16 %v643, %v639
    %v664 = vpack.c.bf16 %v644, %v640
    %v665 = vpack.c.bf16 %v649, %v645
    %v666 = vpack.c.bf16 %v650, %v646
    %v667 = vpack.c.bf16 %v651, %v647
    %v668 = vpack.c.bf16 %v652, %v648
    %v669 = vpack.c.bf16 %v653, %v653
    %v670 = vpack.c.bf16 %v654, %v654
    %v671 = vpack.c.bf16 %v655, %v655
    %v672 = vpack.c.bf16 %v656, %v656
    %v689 = vunpack.c.l.b16 %v657
    %v690 = vunpack.c.l.b16 %v658
    %v691 = vunpack.c.l.b16 %v659
    %v692 = vunpack.c.l.b16 %v660
    %v693 = vunpack.c.h.b16 %v657
    %v694 = vunpack.c.h.b16 %v658
    %v695 = vunpack.c.h.b16 %v659
    %v696 = vunpack.c.h.b16 %v660
    %v697 = vunpack.c.l.b16 %v661
    %v698 = vunpack.c.l.b16 %v662
    %v699 = vunpack.c.l.b16 %v663
    %v700 = vunpack.c.l.b16 %v664
    %v701 = vunpack.c.h.b16 %v661
    %v702 = vunpack.c.h.b16 %v662
    %v703 = vunpack.c.h.b16 %v663
    %v704 = vunpack.c.h.b16 %v664
    %v705 = vunpack.c.l.b16 %v665
    %v706 = vunpack.c.l.b16 %v666
    %v707 = vunpack.c.l.b16 %v667
    %v708 = vunpack.c.l.b16 %v668
    %v709 = vunpack.c.h.b16 %v665
    %v710 = vunpack.c.h.b16 %v666
    %v711 = vunpack.c.h.b16 %v667
    %v712 = vunpack.c.h.b16 %v668
    %v713 = vunpack.c.l.b16 %v669
    %v714 = vunpack.c.l.b16 %v670
    %v715 = vunpack.c.l.b16 %v671
    %v716 = vunpack.c.l.b16 %v672
    %v717 = vpack.c.b16 %v690, %v689
    %v718 = vpack.c.b16 %v692, %v691
    %v719 = vpack.c.b16 %v694, %v693
    %v720 = vpack.c.b16 %v696, %v695
    %v721 = vpack.c.b16 %v698, %v697
    %v722 = vpack.c.b16 %v700, %v699
    %v723 = vpack.c.b16 %v702, %v701
    %v724 = vpack.c.b16 %v704, %v703
    %v725 = vpack.c.b16 %v706, %v705
    %v726 = vpack.c.b16 %v708, %v707
    %v727 = vpack.c.b16 %v710, %v709
    %v728 = vpack.c.b16 %v712, %v711
    %v729 = vpack.c.b16 %v714, %v713
    %v730 = vpack.c.b16 %v716, %v715
    %745 = vst [vmem:[#allocation2] sm:$0xff] %v717
    %vm746 = vcmask 1043456
    %vm747 = vcmask 523268
    %vm748 = vmor %vm747, %vm746
    %749 = vst.msk [vmem:[#allocation2 + $0x8] sm:$0xff] %vm748, %v718
    %750 = vst [vmem:[#allocation2 + $0x10] sm:$0xff] %v719
    %751 = vst.msk [vmem:[#allocation2 + $0x18] sm:$0xff] %vm748, %v720
    %752 = vst [vmem:[#allocation2 + $0x20] sm:$0xff] %v721
    %753 = vst.msk [vmem:[#allocation2 + $0x28] sm:$0xff] %vm748, %v722
    %754 = vst [vmem:[#allocation2 + $0x30] sm:$0xff] %v723
    %755 = vst.msk [vmem:[#allocation2 + $0x38] sm:$0xff] %vm748, %v724
    %756 = vst [vmem:[#allocation2 + $0x40] sm:$0xff] %v725
    %757 = vst.msk [vmem:[#allocation2 + $0x48] sm:$0xff] %vm748, %v726
    %758 = vst [vmem:[#allocation2 + $0x50] sm:$0xff] %v727
    %759 = vst.msk [vmem:[#allocation2 + $0x58] sm:$0xff] %vm748, %v728
    %760 = vst [vmem:[#allocation2 + $0x60] sm:$0xff] %v729
    %761 = vst.msk [vmem:[#allocation2 + $0x68] sm:$0xff] %vm748, %v730
    %v762 = vld [vmem:[#allocation2] sm:$0xff]
    %v763 = vld [vmem:[#allocation2 + $0x8] sm:$0xff]
    %v764 = vld [vmem:[#allocation2 + $0x10] sm:$0xff]
    %v765 = vld [vmem:[#allocation2 + $0x18] sm:$0xff]
    %v766 = vld [vmem:[#allocation2 + $0x20] sm:$0xff]
    %v767 = vld [vmem:[#allocation2 + $0x28] sm:$0xff]
    %v768 = vld [vmem:[#allocation2 + $0x30] sm:$0xff]
    %v769 = vld [vmem:[#allocation2 + $0x38] sm:$0xff]
    %v770 = vld [vmem:[#allocation2 + $0x40] sm:$0xff]
    %v771 = vld [vmem:[#allocation2 + $0x48] sm:$0xff]
    %v772 = vld [vmem:[#allocation2 + $0x50] sm:$0xff]
    %v773 = vld [vmem:[#allocation2 + $0x58] sm:$0xff]
    %v774 = vld [vmem:[#allocation2 + $0x60] sm:$0x77]
    %v775 = vld [vmem:[#allocation2 + $0x68] sm:$0x77]
    %v776 = vld [vmem:[%s3] sm:$0xff]
    %v777 = vld [vmem:[%s3 + $0x8] sm:$0xff]
    %v778 = vld [vmem:[%s3 + $0x10] sm:$0xf]
    %v779 = vld [vmem:[%s3 + $0x14] sm:$0xff]
    %v780 = vld [vmem:[%s3 + $0x1c] sm:$0xff]
    %v781 = vld [vmem:[%s3 + $0x24] sm:$0xf]
    %v782 = vld [vmem:[%s3 + $0x28] sm:$0xff]
    %v783 = vld [vmem:[%s3 + $0x30] sm:$0xff]
    %v784 = vld [vmem:[%s3 + $0x38] sm:$0xf]
    %v785 = vld [vmem:[%s3 + $0x3c] sm:$0xff]
    %v786 = vld [vmem:[%s3 + $0x44] sm:$0xff]
    %v787 = vld [vmem:[%s3 + $0x4c] sm:$0xf]
    %v788 = vld [vmem:[%s3 + $0x50] sm:$0xff]
    %v789 = vld [vmem:[%s3 + $0x58] sm:$0xff]
    %v790 = vld [vmem:[%s3 + $0x60] sm:$0xf]
    %v791 = vld [vmem:[%s3 + $0x64] sm:$0xff]
    %v792 = vld [vmem:[%s3 + $0x6c] sm:$0xff]
    %v793 = vld [vmem:[%s3 + $0x74] sm:$0xf]
    %v794 = vld [vmem:[%s3 + $0x78] sm:$0xff]
    %v795 = vld [vmem:[%s3 + $0x80] sm:$0xff]
    %v796 = vld [vmem:[%s3 + $0x88] sm:$0xf]
    %v797 = vld [vmem:[%s3 + $0x8c] sm:$0xff]
    %v798 = vld [vmem:[%s3 + $0x94] sm:$0xff]
    %v799 = vld [vmem:[%s3 + $0x9c] sm:$0xf]
    %v800 = vld [vmem:[%s3 + $0xa0] sm:$0xff]
    %v801 = vld [vmem:[%s3 + $0xa8] sm:$0xff]
    %v802 = vld [vmem:[%s3 + $0xb0] sm:$0xf]
    %v803 = vld [vmem:[%s3 + $0xb4] sm:$0xff]
    %v804 = vld [vmem:[%s3 + $0xbc] sm:$0xff]
    %v805 = vld [vmem:[%s3 + $0xc4] sm:$0xf]
    %v806 = vld [vmem:[%s3 + $0xc8] sm:$0xff]
    %v807 = vld [vmem:[%s3 + $0xd0] sm:$0xff]
    %v808 = vld [vmem:[%s3 + $0xd8] sm:$0xf]
    %v809 = vld [vmem:[%s3 + $0xdc] sm:$0xff]
    %v810 = vld [vmem:[%s3 + $0xe4] sm:$0xff]
    %v811 = vld [vmem:[%s3 + $0xec] sm:$0xf]
    %v812 = vld [vmem:[%s3 + $0xf0] sm:$0xff]
    %v813 = vld [vmem:[%s3 + $0xf8] sm:$0xff]
    %v814 = vld [vmem:[%s3 + $0x100] sm:$0xf]
    %v815 = vld [vmem:[%s3 + $0x104] sm:$0xff]
    %v816 = vld [vmem:[%s3 + $0x10c] sm:$0xff]
    %v817 = vld [vmem:[%s3 + $0x114] sm:$0xf]
    %v818 = vld [vmem:[%s3 + $0x118] sm:$0xff]
    %v819 = vld [vmem:[%s3 + $0x120] sm:$0xff]
    %v820 = vld [vmem:[%s3 + $0x128] sm:$0xf]
    %v821 = vld [vmem:[%s3 + $0x12c] sm:$0xff]
    %v822 = vld [vmem:[%s3 + $0x134] sm:$0xff]
    %v823 = vld [vmem:[%s3 + $0x13c] sm:$0xf]
    %v824 = vld [vmem:[%s3 + $0x140] sm:$0xff]
    %v825 = vld [vmem:[%s3 + $0x148] sm:$0xff]
    %v826 = vld [vmem:[%s3 + $0x150] sm:$0xf]
    %v827 = vld [vmem:[%s3 + $0x154] sm:$0xff]
    %v828 = vld [vmem:[%s3 + $0x15c] sm:$0xff]
    %v829 = vld [vmem:[%s3 + $0x164] sm:$0xf]
    %v830 = vld [vmem:[%s3 + $0x168] sm:$0xff]
    %v831 = vld [vmem:[%s3 + $0x170] sm:$0xff]
    %v832 = vld [vmem:[%s3 + $0x178] sm:$0xf]
    %v833 = vld [vmem:[%s3 + $0x17c] sm:$0xff]
    %v834 = vld [vmem:[%s3 + $0x184] sm:$0xff]
    %v835 = vld [vmem:[%s3 + $0x18c] sm:$0xf]
    %v836 = vld [vmem:[%s3 + $0x190] sm:$0xff]
    %v837 = vld [vmem:[%s3 + $0x198] sm:$0xff]
    %v838 = vld [vmem:[%s3 + $0x1a0] sm:$0xf]
    %v839 = vld [vmem:[%s3 + $0x1a4] sm:$0xff]
    %v840 = vld [vmem:[%s3 + $0x1ac] sm:$0xff]
    %v841 = vld [vmem:[%s3 + $0x1b4] sm:$0xf]
    %v842 = vld [vmem:[%s3 + $0x1b8] sm:$0xff]
    %v843 = vld [vmem:[%s3 + $0x1c0] sm:$0xff]
    %v844 = vld [vmem:[%s3 + $0x1c8] sm:$0xf]
    %v845 = vld [vmem:[%s3 + $0x1cc] sm:$0xff]
    %v846 = vld [vmem:[%s3 + $0x1d4] sm:$0xff]
    %v847 = vld [vmem:[%s3 + $0x1dc] sm:$0xf]
    %v848 = vld [vmem:[%s3 + $0x1e0] sm:$0xff]
    %v849 = vld [vmem:[%s3 + $0x1e8] sm:$0xff]
    %v850 = vld [vmem:[%s3 + $0x1f0] sm:$0xf]
    %v851 = vld [vmem:[%s3 + $0x1f4] sm:$0xff]
    %v852 = vld [vmem:[%s3 + $0x1fc] sm:$0xff]
    %v853 = vld [vmem:[%s3 + $0x204] sm:$0xf]
    %v854 = vld [vmem:[%s3 + $0x208] sm:$0xff]
    %v855 = vld [vmem:[%s3 + $0x210] sm:$0xff]
    %v856 = vld [vmem:[%s3 + $0x218] sm:$0xf]
    %v857 = vld [vmem:[%s3 + $0x21c] sm:$0xff]
    %v858 = vld [vmem:[%s3 + $0x224] sm:$0xff]
    %v859 = vld [vmem:[%s3 + $0x22c] sm:$0xf]
    %v860 = vld [vmem:[%s3 + $0x230] sm:$0xff]
    %v861 = vld [vmem:[%s3 + $0x238] sm:$0xff]
    %v862 = vld [vmem:[%s3 + $0x240] sm:$0xf]
    %v863 = vld [vmem:[%s3 + $0x244] sm:$0xff]
    %v864 = vld [vmem:[%s3 + $0x24c] sm:$0xff]
    %v865 = vld [vmem:[%s3 + $0x254] sm:$0xf]
    %v866 = vld [vmem:[%s3 + $0x258] sm:$0xff]
    %v867 = vld [vmem:[%s3 + $0x260] sm:$0xff]
    %v868 = vld [vmem:[%s3 + $0x268] sm:$0xf]
    %v869 = vld [vmem:[%s3 + $0x26c] sm:$0xff]
    %v870 = vld [vmem:[%s3 + $0x274] sm:$0xff]
    %v871 = vld [vmem:[%s3 + $0x27c] sm:$0xf]
    %v872 = vld [vmem:[%s3 + $0x280] sm:$0xff]
    %v873 = vld [vmem:[%s3 + $0x288] sm:$0xff]
    %v874 = vld [vmem:[%s3 + $0x290] sm:$0xf]
    %v875 = vld [vmem:[%s3 + $0x294] sm:$0xff]
    %v876 = vld [vmem:[%s3 + $0x29c] sm:$0xff]
    %v877 = vld [vmem:[%s3 + $0x2a4] sm:$0xf]
    %v878 = vld [vmem:[%s3 + $0x2a8] sm:$0xff]
    %v879 = vld [vmem:[%s3 + $0x2b0] sm:$0xff]
    %v880 = vld [vmem:[%s3 + $0x2b8] sm:$0xf]
    %v881 = vld [vmem:[%s3 + $0x2bc] sm:$0xff]
    %v882 = vld [vmem:[%s3 + $0x2c4] sm:$0xff]
    %v883 = vld [vmem:[%s3 + $0x2cc] sm:$0xf]
    %v884 = vld [vmem:[%s3 + $0x2d0] sm:$0xff]
    %v885 = vld [vmem:[%s3 + $0x2d8] sm:$0xff]
    %v886 = vld [vmem:[%s3 + $0x2e0] sm:$0xf]
    %v887 = vld [vmem:[%s3 + $0x2e4] sm:$0xff]
    %v888 = vld [vmem:[%s3 + $0x2ec] sm:$0xff]
    %v889 = vld [vmem:[%s3 + $0x2f4] sm:$0xf]
    %v890 = vld [vmem:[%s3 + $0x2f8] sm:$0xff]
    %v891 = vld [vmem:[%s3 + $0x300] sm:$0xff]
    %v892 = vld [vmem:[%s3 + $0x308] sm:$0xf]
    %v893 = vld [vmem:[%s3 + $0x30c] sm:$0xff]
    %v894 = vld [vmem:[%s3 + $0x314] sm:$0xff]
    %v895 = vld [vmem:[%s3 + $0x31c] sm:$0xf]
    %v896 = vld [vmem:[%s3 + $0x320] sm:$0xff]
    %v897 = vld [vmem:[%s3 + $0x328] sm:$0xff]
    %v898 = vld [vmem:[%s3 + $0x330] sm:$0xf]
    %v899 = vld [vmem:[%s3 + $0x334] sm:$0xff]
    %v900 = vld [vmem:[%s3 + $0x33c] sm:$0xff]
    %v901 = vld [vmem:[%s3 + $0x344] sm:$0xf]
    %v902 = vld [vmem:[%s3 + $0x348] sm:$0xff]
    %v903 = vld [vmem:[%s3 + $0x350] sm:$0xff]
    %v904 = vld [vmem:[%s3 + $0x358] sm:$0xf]
    %v905 = vld [vmem:[%s3 + $0x35c] sm:$0xff]
    %v906 = vld [vmem:[%s3 + $0x364] sm:$0xff]
    %v907 = vld [vmem:[%s3 + $0x36c] sm:$0xf]
    %v908 = vld [vmem:[%s3 + $0x370] sm:$0xff]
    %v909 = vld [vmem:[%s3 + $0x378] sm:$0xff]
    %v910 = vld [vmem:[%s3 + $0x380] sm:$0xf]
    %v911 = vld [vmem:[%s3 + $0x384] sm:$0xff]
    %v912 = vld [vmem:[%s3 + $0x38c] sm:$0xff]
    %v913 = vld [vmem:[%s3 + $0x394] sm:$0xf]
    %v914 = vld [vmem:[%s3 + $0x398] sm:$0xff]
    %v915 = vld [vmem:[%s3 + $0x3a0] sm:$0xff]
    %v916 = vld [vmem:[%s3 + $0x3a8] sm:$0xf]
    %v917 = vld [vmem:[%s3 + $0x3ac] sm:$0xff]
    %v918 = vld [vmem:[%s3 + $0x3b4] sm:$0xff]
    %v919 = vld [vmem:[%s3 + $0x3bc] sm:$0xf]
    %v920 = vld [vmem:[%s3 + $0x3c0] sm:$0xff]
    %v921 = vld [vmem:[%s3 + $0x3c8] sm:$0xff]
    %v922 = vld [vmem:[%s3 + $0x3d0] sm:$0xf]
    %v923 = vld [vmem:[%s3 + $0x3d4] sm:$0xff]
    %v924 = vld [vmem:[%s3 + $0x3dc] sm:$0xff]
    %v925 = vld [vmem:[%s3 + $0x3e4] sm:$0xf]
    %v926 = vld [vmem:[%s3 + $0x3e8] sm:$0xff]
    %v927 = vld [vmem:[%s3 + $0x3f0] sm:$0xff]
    %v928 = vld [vmem:[%s3 + $0x3f8] sm:$0xf]
    %v929 = vld [vmem:[%s3 + $0x3fc] sm:$0xff]
    %v930 = vld [vmem:[%s3 + $0x404] sm:$0xff]
    %v931 = vld [vmem:[%s3 + $0x40c] sm:$0xf]
    %v932 = vld [vmem:[%s3 + $0x410] sm:$0xff]
    %v933 = vld [vmem:[%s3 + $0x418] sm:$0xff]
    %v934 = vld [vmem:[%s3 + $0x420] sm:$0xf]
    %v935 = vld [vmem:[%s3 + $0x424] sm:$0xff]
    %v936 = vld [vmem:[%s3 + $0x42c] sm:$0xff]
    %v937 = vld [vmem:[%s3 + $0x434] sm:$0xf]
    %v938 = vld [vmem:[%s3 + $0x438] sm:$0xff]
    %v939 = vld [vmem:[%s3 + $0x440] sm:$0xff]
    %v940 = vld [vmem:[%s3 + $0x448] sm:$0xf]
    %v941 = vld [vmem:[%s3 + $0x44c] sm:$0xff]
    %v942 = vld [vmem:[%s3 + $0x454] sm:$0xff]
    %v943 = vld [vmem:[%s3 + $0x45c] sm:$0xf]
    %v944 = vld [vmem:[#allocation2 + $0x60] sm:$0xff]
    %v945 = vld [vmem:[#allocation2 + $0x68] sm:$0xff]
    %s946 = scalar_lea.vmem %s3, 1120
    %v947 = vld [vmem:[%s946] sm:$0xff]
    %v948 = vld [vmem:[%s946 + $0x8] sm:$0xff]
    %v949 = vld [vmem:[%s946 + $0x10] sm:$0xf]
    %v950 = vld [vmem:[%s946 + $0x14] sm:$0xff]
    %v951 = vld [vmem:[%s946 + $0x1c] sm:$0xff]
    %v952 = vld [vmem:[%s946 + $0x24] sm:$0xf]
    %v953 = vld [vmem:[%s946 + $0x28] sm:$0xff]
    %v954 = vld [vmem:[%s946 + $0x30] sm:$0xff]
    %v955 = vld [vmem:[%s946 + $0x38] sm:$0xf]
    %v956 = vld [vmem:[%s946 + $0x3c] sm:$0xff]
    %v957 = vld [vmem:[%s946 + $0x44] sm:$0xff]
    %v958 = vld [vmem:[%s946 + $0x4c] sm:$0xf]
    %v959 = vld [vmem:[%s946 + $0x50] sm:$0xff]
    %v960 = vld [vmem:[%s946 + $0x58] sm:$0xff]
    %v961 = vld [vmem:[%s946 + $0x60] sm:$0xf]
    %v962 = vld [vmem:[%s946 + $0x64] sm:$0xff]
    %v963 = vld [vmem:[%s946 + $0x6c] sm:$0xff]
    %v964 = vld [vmem:[%s946 + $0x74] sm:$0xf]
    %v965 = vld [vmem:[%s946 + $0x78] sm:$0xff]
    %v966 = vld [vmem:[%s946 + $0x80] sm:$0xff]
    %v967 = vld [vmem:[%s946 + $0x88] sm:$0xf]
    %v968 = vld [vmem:[%s946 + $0x8c] sm:$0xff]
    %v969 = vld [vmem:[%s946 + $0x94] sm:$0xff]
    %v970 = vld [vmem:[%s946 + $0x9c] sm:$0xf]
    %v971 = vld [vmem:[%s946 + $0xa0] sm:$0xff]
    %v972 = vld [vmem:[%s946 + $0xa8] sm:$0xff]
    %v973 = vld [vmem:[%s946 + $0xb0] sm:$0xf]
    %v974 = vld [vmem:[%s946 + $0xb4] sm:$0xff]
    %v975 = vld [vmem:[%s946 + $0xbc] sm:$0xff]
    %v976 = vld [vmem:[%s946 + $0xc4] sm:$0xf]
    %v977 = vld [vmem:[%s946 + $0xc8] sm:$0xff]
    %v978 = vld [vmem:[%s946 + $0xd0] sm:$0xff]
    %v979 = vld [vmem:[%s946 + $0xd8] sm:$0xf]
    %v980 = vld [vmem:[%s946 + $0xdc] sm:$0xff]
    %v981 = vld [vmem:[%s946 + $0xe4] sm:$0xff]
    %v982 = vld [vmem:[%s946 + $0xec] sm:$0xf]
    %v983 = vld [vmem:[%s946 + $0xf0] sm:$0xff]
    %v984 = vld [vmem:[%s946 + $0xf8] sm:$0xff]
    %v985 = vld [vmem:[%s946 + $0x100] sm:$0xf]
    %v986 = vld [vmem:[%s946 + $0x104] sm:$0xff]
    %v987 = vld [vmem:[%s946 + $0x10c] sm:$0xff]
    %v988 = vld [vmem:[%s946 + $0x114] sm:$0xf]
    %v989 = vld [vmem:[%s946 + $0x118] sm:$0xff]
    %v990 = vld [vmem:[%s946 + $0x120] sm:$0xff]
    %v991 = vld [vmem:[%s946 + $0x128] sm:$0xf]
    %v992 = vld [vmem:[%s946 + $0x12c] sm:$0xff]
    %v993 = vld [vmem:[%s946 + $0x134] sm:$0xff]
    %v994 = vld [vmem:[%s946 + $0x13c] sm:$0xf]
    %v995 = vld [vmem:[%s946 + $0x140] sm:$0xff]
    %v996 = vld [vmem:[%s946 + $0x148] sm:$0xff]
    %v997 = vld [vmem:[%s946 + $0x150] sm:$0xf]
    %v998 = vld [vmem:[%s946 + $0x154] sm:$0xff]
    %v999 = vld [vmem:[%s946 + $0x15c] sm:$0xff]
    %v1000 = vld [vmem:[%s946 + $0x164] sm:$0xf]
    %v1001 = vld [vmem:[%s946 + $0x168] sm:$0xff]
    %v1002 = vld [vmem:[%s946 + $0x170] sm:$0xff]
    %v1003 = vld [vmem:[%s946 + $0x178] sm:$0xf]
    %v1004 = vld [vmem:[%s946 + $0x17c] sm:$0xff]
    %v1005 = vld [vmem:[%s946 + $0x184] sm:$0xff]
    %v1006 = vld [vmem:[%s946 + $0x18c] sm:$0xf]
    %v1007 = vld [vmem:[%s946 + $0x190] sm:$0xff]
    %v1008 = vld [vmem:[%s946 + $0x198] sm:$0xff]
    %v1009 = vld [vmem:[%s946 + $0x1a0] sm:$0xf]
    %v1010 = vld [vmem:[%s946 + $0x1a4] sm:$0xff]
    %v1011 = vld [vmem:[%s946 + $0x1ac] sm:$0xff]
    %v1012 = vld [vmem:[%s946 + $0x1b4] sm:$0xf]
    %v1013 = vld [vmem:[%s946 + $0x1b8] sm:$0xff]
    %v1014 = vld [vmem:[%s946 + $0x1c0] sm:$0xff]
    %v1015 = vld [vmem:[%s946 + $0x1c8] sm:$0xf]
    %v1016 = vld [vmem:[%s946 + $0x1cc] sm:$0xff]
    %v1017 = vld [vmem:[%s946 + $0x1d4] sm:$0xff]
    %v1018 = vld [vmem:[%s946 + $0x1dc] sm:$0xf]
    %v1019 = vld [vmem:[%s946 + $0x1e0] sm:$0xff]
    %v1020 = vld [vmem:[%s946 + $0x1e8] sm:$0xff]
    %v1021 = vld [vmem:[%s946 + $0x1f0] sm:$0xf]
    %v1022 = vld [vmem:[%s946 + $0x1f4] sm:$0xff]
    %v1023 = vld [vmem:[%s946 + $0x1fc] sm:$0xff]
    %v1024 = vld [vmem:[%s946 + $0x204] sm:$0xf]
    %v1025 = vld [vmem:[%s946 + $0x208] sm:$0xff]
    %v1026 = vld [vmem:[%s946 + $0x210] sm:$0xff]
    %v1027 = vld [vmem:[%s946 + $0x218] sm:$0xf]
    %v1028 = vld [vmem:[%s946 + $0x21c] sm:$0xff]
    %v1029 = vld [vmem:[%s946 + $0x224] sm:$0xff]
    %v1030 = vld [vmem:[%s946 + $0x22c] sm:$0xf]
    %v1031 = vld [vmem:[%s946 + $0x230] sm:$0xff]
    %v1032 = vld [vmem:[%s946 + $0x238] sm:$0xff]
    %v1033 = vld [vmem:[%s946 + $0x240] sm:$0xf]
    %v1034 = vld [vmem:[%s946 + $0x244] sm:$0xff]
    %v1035 = vld [vmem:[%s946 + $0x24c] sm:$0xff]
    %v1036 = vld [vmem:[%s946 + $0x254] sm:$0xf]
    %v1037 = vld [vmem:[%s946 + $0x258] sm:$0xff]
    %v1038 = vld [vmem:[%s946 + $0x260] sm:$0xff]
    %v1039 = vld [vmem:[%s946 + $0x268] sm:$0xf]
    %v1040 = vld [vmem:[%s946 + $0x26c] sm:$0xff]
    %v1041 = vld [vmem:[%s946 + $0x274] sm:$0xff]
    %v1042 = vld [vmem:[%s946 + $0x27c] sm:$0xf]
    %v1043 = vld [vmem:[%s946 + $0x280] sm:$0xff]
    %v1044 = vld [vmem:[%s946 + $0x288] sm:$0xff]
    %v1045 = vld [vmem:[%s946 + $0x290] sm:$0xf]
    %v1046 = vld [vmem:[%s946 + $0x294] sm:$0xff]
    %v1047 = vld [vmem:[%s946 + $0x29c] sm:$0xff]
    %v1048 = vld [vmem:[%s946 + $0x2a4] sm:$0xf]
    %v1049 = vld [vmem:[%s946 + $0x2a8] sm:$0xff]
    %v1050 = vld [vmem:[%s946 + $0x2b0] sm:$0xff]
    %v1051 = vld [vmem:[%s946 + $0x2b8] sm:$0xf]
    %v1052 = vld [vmem:[%s946 + $0x2bc] sm:$0xff]
    %v1053 = vld [vmem:[%s946 + $0x2c4] sm:$0xff]
    %v1054 = vld [vmem:[%s946 + $0x2cc] sm:$0xf]
    %v1055 = vld [vmem:[%s946 + $0x2d0] sm:$0xff]
    %v1056 = vld [vmem:[%s946 + $0x2d8] sm:$0xff]
    %v1057 = vld [vmem:[%s946 + $0x2e0] sm:$0xf]
    %v1058 = vld [vmem:[%s946 + $0x2e4] sm:$0xff]
    %v1059 = vld [vmem:[%s946 + $0x2ec] sm:$0xff]
    %v1060 = vld [vmem:[%s946 + $0x2f4] sm:$0xf]
    %v1061 = vld [vmem:[%s946 + $0x2f8] sm:$0xff]
    %v1062 = vld [vmem:[%s946 + $0x300] sm:$0xff]
    %v1063 = vld [vmem:[%s946 + $0x308] sm:$0xf]
    %v1064 = vld [vmem:[%s946 + $0x30c] sm:$0xff]
    %v1065 = vld [vmem:[%s946 + $0x314] sm:$0xff]
    %v1066 = vld [vmem:[%s946 + $0x31c] sm:$0xf]
    %v1067 = vld [vmem:[%s946 + $0x320] sm:$0xff]
    %v1068 = vld [vmem:[%s946 + $0x328] sm:$0xff]
    %v1069 = vld [vmem:[%s946 + $0x330] sm:$0xf]
    %v1070 = vld [vmem:[%s946 + $0x334] sm:$0xff]
    %v1071 = vld [vmem:[%s946 + $0x33c] sm:$0xff]
    %v1072 = vld [vmem:[%s946 + $0x344] sm:$0xf]
    %v1073 = vld [vmem:[%s946 + $0x348] sm:$0xff]
    %v1074 = vld [vmem:[%s946 + $0x350] sm:$0xff]
    %v1075 = vld [vmem:[%s946 + $0x358] sm:$0xf]
    %v1076 = vld [vmem:[%s946 + $0x35c] sm:$0xff]
    %v1077 = vld [vmem:[%s946 + $0x364] sm:$0xff]
    %v1078 = vld [vmem:[%s946 + $0x36c] sm:$0xf]
    %v1079 = vld [vmem:[%s946 + $0x370] sm:$0xff]
    %v1080 = vld [vmem:[%s946 + $0x378] sm:$0xff]
    %v1081 = vld [vmem:[%s946 + $0x380] sm:$0xf]
    %v1082 = vld [vmem:[%s946 + $0x384] sm:$0xff]
    %v1083 = vld [vmem:[%s946 + $0x38c] sm:$0xff]
    %v1084 = vld [vmem:[%s946 + $0x394] sm:$0xf]
    %v1085 = vld [vmem:[%s946 + $0x398] sm:$0xff]
    %v1086 = vld [vmem:[%s946 + $0x3a0] sm:$0xff]
    %v1087 = vld [vmem:[%s946 + $0x3a8] sm:$0xf]
    %v1088 = vld [vmem:[%s946 + $0x3ac] sm:$0xff]
    %v1089 = vld [vmem:[%s946 + $0x3b4] sm:$0xff]
    %v1090 = vld [vmem:[%s946 + $0x3bc] sm:$0xf]
    %v1091 = vld [vmem:[%s946 + $0x3c0] sm:$0xff]
    %v1092 = vld [vmem:[%s946 + $0x3c8] sm:$0xff]
    %v1093 = vld [vmem:[%s946 + $0x3d0] sm:$0xf]
    %v1094 = vld [vmem:[%s946 + $0x3d4] sm:$0xff]
    %v1095 = vld [vmem:[%s946 + $0x3dc] sm:$0xff]
    %v1096 = vld [vmem:[%s946 + $0x3e4] sm:$0xf]
    %v1097 = vld [vmem:[%s946 + $0x3e8] sm:$0xff]
    %v1098 = vld [vmem:[%s946 + $0x3f0] sm:$0xff]
    %v1099 = vld [vmem:[%s946 + $0x3f8] sm:$0xf]
    %v1100 = vld [vmem:[%s946 + $0x3fc] sm:$0xff]
    %v1101 = vld [vmem:[%s946 + $0x404] sm:$0xff]
    %v1102 = vld [vmem:[%s946 + $0x40c] sm:$0xf]
    %v1103 = vld [vmem:[%s946 + $0x410] sm:$0xff]
    %v1104 = vld [vmem:[%s946 + $0x418] sm:$0xff]
    %v1105 = vld [vmem:[%s946 + $0x420] sm:$0xf]
    %v1106 = vld [vmem:[%s946 + $0x424] sm:$0xff]
    %v1107 = vld [vmem:[%s946 + $0x42c] sm:$0xff]
    %v1108 = vld [vmem:[%s946 + $0x434] sm:$0xf]
    %v1109 = vld [vmem:[%s946 + $0x438] sm:$0xff]
    %v1110 = vld [vmem:[%s946 + $0x440] sm:$0xff]
    %v1111 = vld [vmem:[%s946 + $0x448] sm:$0xf]
    %v1112 = vld [vmem:[%s946 + $0x44c] sm:$0xff]
    %v1113 = vld [vmem:[%s946 + $0x454] sm:$0xff]
    %v1114 = vld [vmem:[%s946 + $0x45c] sm:$0xf]
    %v1129 = vunpack.c.l.b16 %v762
    %v1130 = vunpack.c.h.b16 %v762
    %v1131 = vunpack.c.l.b16 %v763
    %v1132 = vunpack.c.h.b16 %v763
    %v1133 = vunpack.c.l.b16 %v764
    %v1134 = vunpack.c.h.b16 %v764
    %v1135 = vunpack.c.l.b16 %v765
    %v1136 = vunpack.c.h.b16 %v765
    %v1137 = vunpack.c.l.b16 %v766
    %v1138 = vunpack.c.h.b16 %v766
    %v1139 = vunpack.c.l.b16 %v767
    %v1140 = vunpack.c.h.b16 %v767
    %v1141 = vunpack.c.l.b16 %v768
    %v1142 = vunpack.c.h.b16 %v768
    %v1143 = vunpack.c.l.b16 %v769
    %v1144 = vunpack.c.h.b16 %v769
    %v1145 = vunpack.c.l.b16 %v770
    %v1146 = vunpack.c.h.b16 %v770
    %v1147 = vunpack.c.l.b16 %v771
    %v1148 = vunpack.c.h.b16 %v771
    %v1149 = vunpack.c.l.b16 %v772
    %v1150 = vunpack.c.h.b16 %v772
    %v1151 = vunpack.c.l.b16 %v773
    %v1152 = vunpack.c.h.b16 %v773
    %v1153 = vunpack.c.l.b16 %v944
    %v1154 = vunpack.c.h.b16 %v944
    %v1155 = vunpack.c.l.b16 %v945
    %v1156 = vunpack.c.h.b16 %v945
    %v1157 = vpack.c.b16 %v1133, %v1129
    %v1158 = vpack.c.b16 %v1134, %v1130
    %v1159 = vpack.c.b16 %v1135, %v1131
    %v1160 = vpack.c.b16 %v1136, %v1132
    %v1161 = vpack.c.b16 %v1141, %v1137
    %v1162 = vpack.c.b16 %v1142, %v1138
    %v1163 = vpack.c.b16 %v1143, %v1139
    %v1164 = vpack.c.b16 %v1144, %v1140
    %v1165 = vpack.c.b16 %v1149, %v1145
    %v1166 = vpack.c.b16 %v1150, %v1146
    %v1167 = vpack.c.b16 %v1151, %v1147
    %v1168 = vpack.c.b16 %v1152, %v1148
    %v1169 = vpack.c.b16 %v1153, %v1153
    %v1170 = vpack.c.b16 %v1154, %v1154
    %v1171 = vpack.c.b16 %v1155, %v1155
    %v1172 = vpack.c.b16 %v1156, %v1156
    %vm1173 = vsmask.f32 7424
    %v1175 = vshrl.u32 %v1157, 16
    %v1177 = vshll.u32 %v1157, 16
    %v1179 = vrot.slane %v1177, 1
    %v1180 = vor.u32 %v1175, %v1179
    %v1182 = vshll.u32 %v1161, 16
    %v1184 = vrot.slane %v1182, 1
    %v1185 = vsel %vm1173, %v1180, %v1184
    %v1187 = vshrl.u32 %v1158, 16
    %v1189 = vshll.u32 %v1158, 16
    %v1191 = vrot.slane %v1189, 1
    %v1192 = vor.u32 %v1187, %v1191
    %v1194 = vshll.u32 %v1162, 16
    %v1196 = vrot.slane %v1194, 1
    %v1197 = vsel %vm1173, %v1192, %v1196
    %v1199 = vshrl.u32 %v1159, 16
    %v1201 = vshll.u32 %v1159, 16
    %v1203 = vrot.slane %v1201, 1
    %v1204 = vor.u32 %v1199, %v1203
    %v1206 = vshll.u32 %v1163, 16
    %v1208 = vrot.slane %v1206, 1
    %v1209 = vsel %vm1173, %v1204, %v1208
    %v1211 = vshrl.u32 %v1160, 16
    %v1213 = vshll.u32 %v1160, 16
    %v1215 = vrot.slane %v1213, 1
    %v1216 = vor.u32 %v1211, %v1215
    %v1218 = vshll.u32 %v1164, 16
    %v1220 = vrot.slane %v1218, 1
    %v1221 = vsel %vm1173, %v1216, %v1220
    %v1222 = vshrl.u32 %v1161, 16
    %v1224 = vor.u32 %v1222, %v1184
    %v1226 = vshll.u32 %v1165, 16
    %v1228 = vrot.slane %v1226, 1
    %v1229 = vsel %vm1173, %v1224, %v1228
    %v1230 = vshrl.u32 %v1162, 16
    %v1232 = vor.u32 %v1230, %v1196
    %v1234 = vshll.u32 %v1166, 16
    %v1236 = vrot.slane %v1234, 1
    %v1237 = vsel %vm1173, %v1232, %v1236
    %v1238 = vshrl.u32 %v1163, 16
    %v1240 = vor.u32 %v1238, %v1208
    %v1242 = vshll.u32 %v1167, 16
    %v1244 = vrot.slane %v1242, 1
    %v1245 = vsel %vm1173, %v1240, %v1244
    %v1246 = vshrl.u32 %v1164, 16
    %v1248 = vor.u32 %v1246, %v1220
    %v1250 = vshll.u32 %v1168, 16
    %v1252 = vrot.slane %v1250, 1
    %v1253 = vsel %vm1173, %v1248, %v1252
    %v1254 = vshrl.u32 %v1165, 16
    %v1256 = vor.u32 %v1254, %v1228
    %v1258 = vshll.u32 %v1169, 16
    %v1260 = vrot.slane %v1258, 1
    %v1261 = vsel %vm1173, %v1256, %v1260
    %v1262 = vshrl.u32 %v1166, 16
    %v1264 = vor.u32 %v1262, %v1236
    %v1266 = vshll.u32 %v1170, 16
    %v1268 = vrot.slane %v1266, 1
    %v1269 = vsel %vm1173, %v1264, %v1268
    %v1270 = vshrl.u32 %v1167, 16
    %v1272 = vor.u32 %v1270, %v1244
    %v1274 = vshll.u32 %v1171, 16
    %v1276 = vrot.slane %v1274, 1
    %v1277 = vsel %vm1173, %v1272, %v1276
    %v1278 = vshrl.u32 %v1168, 16
    %v1280 = vor.u32 %v1278, %v1252
    %v1282 = vshll.u32 %v1172, 16
    %v1284 = vrot.slane %v1282, 1
    %v1285 = vsel %vm1173, %v1280, %v1284
    %v1286 = vshrl.u32 %v1169, 16
    %v1288 = vor.u32 %v1286, %v1260
    %v1289 = vshrl.u32 %v1170, 16
    %v1291 = vor.u32 %v1289, %v1268
    %v1292 = vshrl.u32 %v1171, 16
    %v1294 = vor.u32 %v1292, %v1276
    %v1295 = vshrl.u32 %v1172, 16
    %v1297 = vor.u32 %v1295, %v1284
    %v1478 = vunpack.c.l.b16 %v947
    %v1479 = vunpack.c.h.b16 %v947
    %v1480 = vunpack.c.l.b16 %v948
    %v1481 = vunpack.c.h.b16 %v948
    %v1482 = vunpack.c.l.b16 %v949
    %v1483 = vunpack.c.l.b16 %v950
    %v1484 = vunpack.c.h.b16 %v950
    %v1485 = vunpack.c.l.b16 %v951
    %v1486 = vunpack.c.h.b16 %v951
    %v1487 = vunpack.c.l.b16 %v952
    %v1488 = vunpack.c.l.b16 %v953
    %v1489 = vunpack.c.h.b16 %v953
    %v1490 = vunpack.c.l.b16 %v954
    %v1491 = vunpack.c.h.b16 %v954
    %v1492 = vunpack.c.l.b16 %v955
    %v1493 = vunpack.c.l.b16 %v956
    %v1494 = vunpack.c.h.b16 %v956
    %v1495 = vunpack.c.l.b16 %v957
    %v1496 = vunpack.c.h.b16 %v957
    %v1497 = vunpack.c.l.b16 %v958
    %v1498 = vunpack.c.l.b16 %v959
    %v1499 = vunpack.c.h.b16 %v959
    %v1500 = vunpack.c.l.b16 %v960
    %v1501 = vunpack.c.h.b16 %v960
    %v1502 = vunpack.c.l.b16 %v961
    %v1503 = vunpack.c.l.b16 %v962
    %v1504 = vunpack.c.h.b16 %v962
    %v1505 = vunpack.c.l.b16 %v963
    %v1506 = vunpack.c.h.b16 %v963
    %v1507 = vunpack.c.l.b16 %v964
    %v1508 = vunpack.c.l.b16 %v965
    %v1509 = vunpack.c.h.b16 %v965
    %v1510 = vunpack.c.l.b16 %v966
    %v1511 = vunpack.c.h.b16 %v966
    %v1512 = vunpack.c.l.b16 %v967
    %v1513 = vunpack.c.l.b16 %v968
    %v1514 = vunpack.c.h.b16 %v968
    %v1515 = vunpack.c.l.b16 %v969
    %v1516 = vunpack.c.h.b16 %v969
    %v1517 = vunpack.c.l.b16 %v970
    %v1518 = vunpack.c.l.b16 %v971
    %v1519 = vunpack.c.h.b16 %v971
    %v1520 = vunpack.c.l.b16 %v972
    %v1521 = vunpack.c.h.b16 %v972
    %v1522 = vunpack.c.l.b16 %v973
    %v1523 = vunpack.c.l.b16 %v974
    %v1524 = vunpack.c.h.b16 %v974
    %v1525 = vunpack.c.l.b16 %v975
    %v1526 = vunpack.c.h.b16 %v975
    %v1527 = vunpack.c.l.b16 %v976
    %v1528 = vunpack.c.l.b16 %v977
    %v1529 = vunpack.c.h.b16 %v977
    %v1530 = vunpack.c.l.b16 %v978
    %v1531 = vunpack.c.h.b16 %v978
    %v1532 = vunpack.c.l.b16 %v979
    %v1533 = vunpack.c.l.b16 %v980
    %v1534 = vunpack.c.h.b16 %v980
    %v1535 = vunpack.c.l.b16 %v981
    %v1536 = vunpack.c.h.b16 %v981
    %v1537 = vunpack.c.l.b16 %v982
    %v1538 = vunpack.c.l.b16 %v983
    %v1539 = vunpack.c.h.b16 %v983
    %v1540 = vunpack.c.l.b16 %v984
    %v1541 = vunpack.c.h.b16 %v984
    %v1542 = vunpack.c.l.b16 %v985
    %v1543 = vunpack.c.l.b16 %v986
    %v1544 = vunpack.c.h.b16 %v986
    %v1545 = vunpack.c.l.b16 %v987
    %v1546 = vunpack.c.h.b16 %v987
    %v1547 = vunpack.c.l.b16 %v988
    %v1548 = vunpack.c.l.b16 %v989
    %v1549 = vunpack.c.h.b16 %v989
    %v1550 = vunpack.c.l.b16 %v990
    %v1551 = vunpack.c.h.b16 %v990
    %v1552 = vunpack.c.l.b16 %v991
    %v1553 = vunpack.c.l.b16 %v992
    %v1554 = vunpack.c.h.b16 %v992
    %v1555 = vunpack.c.l.b16 %v993
    %v1556 = vunpack.c.h.b16 %v993
    %v1557 = vunpack.c.l.b16 %v994
    %v1558 = vunpack.c.l.b16 %v995
    %v1559 = vunpack.c.h.b16 %v995
    %v1560 = vunpack.c.l.b16 %v996
    %v1561 = vunpack.c.h.b16 %v996
    %v1562 = vunpack.c.l.b16 %v997
    %v1563 = vunpack.c.l.b16 %v998
    %v1564 = vunpack.c.h.b16 %v998
    %v1565 = vunpack.c.l.b16 %v999
    %v1566 = vunpack.c.h.b16 %v999
    %v1567 = vunpack.c.l.b16 %v1000
    %v1568 = vunpack.c.l.b16 %v1001
    %v1569 = vunpack.c.h.b16 %v1001
    %v1570 = vunpack.c.l.b16 %v1002
    %v1571 = vunpack.c.h.b16 %v1002
    %v1572 = vunpack.c.l.b16 %v1003
    %v1573 = vunpack.c.l.b16 %v1004
    %v1574 = vunpack.c.h.b16 %v1004
    %v1575 = vunpack.c.l.b16 %v1005
    %v1576 = vunpack.c.h.b16 %v1005
    %v1577 = vunpack.c.l.b16 %v1006
    %v1578 = vunpack.c.l.b16 %v1007
    %v1579 = vunpack.c.h.b16 %v1007
    %v1580 = vunpack.c.l.b16 %v1008
    %v1581 = vunpack.c.h.b16 %v1008
    %v1582 = vunpack.c.l.b16 %v1009
    %v1583 = vunpack.c.l.b16 %v1010
    %v1584 = vunpack.c.h.b16 %v1010
    %v1585 = vunpack.c.l.b16 %v1011
    %v1586 = vunpack.c.h.b16 %v1011
    %v1587 = vunpack.c.l.b16 %v1012
    %v1588 = vunpack.c.l.b16 %v1013
    %v1589 = vunpack.c.h.b16 %v1013
    %v1590 = vunpack.c.l.b16 %v1014
    %v1591 = vunpack.c.h.b16 %v1014
    %v1592 = vunpack.c.l.b16 %v1015
    %v1593 = vunpack.c.l.b16 %v1016
    %v1594 = vunpack.c.h.b16 %v1016
    %v1595 = vunpack.c.l.b16 %v1017
    %v1596 = vunpack.c.h.b16 %v1017
    %v1597 = vunpack.c.l.b16 %v1018
    %v1598 = vunpack.c.l.b16 %v1019
    %v1599 = vunpack.c.h.b16 %v1019
    %v1600 = vunpack.c.l.b16 %v1020
    %v1601 = vunpack.c.h.b16 %v1020
    %v1602 = vunpack.c.l.b16 %v1021
    %v1603 = vunpack.c.l.b16 %v1022
    %v1604 = vunpack.c.h.b16 %v1022
    %v1605 = vunpack.c.l.b16 %v1023
    %v1606 = vunpack.c.h.b16 %v1023
    %v1607 = vunpack.c.l.b16 %v1024
    %v1608 = vunpack.c.l.b16 %v1025
    %v1609 = vunpack.c.h.b16 %v1025
    %v1610 = vunpack.c.l.b16 %v1026
    %v1611 = vunpack.c.h.b16 %v1026
    %v1612 = vunpack.c.l.b16 %v1027
    %v1613 = vunpack.c.l.b16 %v1028
    %v1614 = vunpack.c.h.b16 %v1028
    %v1615 = vunpack.c.l.b16 %v1029
    %v1616 = vunpack.c.h.b16 %v1029
    %v1617 = vunpack.c.l.b16 %v1030
    %v1618 = vunpack.c.l.b16 %v1031
    %v1619 = vunpack.c.h.b16 %v1031
    %v1620 = vunpack.c.l.b16 %v1032
    %v1621 = vunpack.c.h.b16 %v1032
    %v1622 = vunpack.c.l.b16 %v1033
    %v1623 = vunpack.c.l.b16 %v1034
    %v1624 = vunpack.c.h.b16 %v1034
    %v1625 = vunpack.c.l.b16 %v1035
    %v1626 = vunpack.c.h.b16 %v1035
    %v1627 = vunpack.c.l.b16 %v1036
    %v1628 = vunpack.c.l.b16 %v1037
    %v1629 = vunpack.c.h.b16 %v1037
    %v1630 = vunpack.c.l.b16 %v1038
    %v1631 = vunpack.c.h.b16 %v1038
    %v1632 = vunpack.c.l.b16 %v1039
    %v1633 = vunpack.c.l.b16 %v1040
    %v1634 = vunpack.c.h.b16 %v1040
    %v1635 = vunpack.c.l.b16 %v1041
    %v1636 = vunpack.c.h.b16 %v1041
    %v1637 = vunpack.c.l.b16 %v1042
    %v1638 = vunpack.c.l.b16 %v1043
    %v1639 = vunpack.c.h.b16 %v1043
    %v1640 = vunpack.c.l.b16 %v1044
    %v1641 = vunpack.c.h.b16 %v1044
    %v1642 = vunpack.c.l.b16 %v1045
    %v1643 = vunpack.c.l.b16 %v1046
    %v1644 = vunpack.c.h.b16 %v1046
    %v1645 = vunpack.c.l.b16 %v1047
    %v1646 = vunpack.c.h.b16 %v1047
    %v1647 = vunpack.c.l.b16 %v1048
    %v1648 = vunpack.c.l.b16 %v1049
    %v1649 = vunpack.c.h.b16 %v1049
    %v1650 = vunpack.c.l.b16 %v1050
    %v1651 = vunpack.c.h.b16 %v1050
    %v1652 = vunpack.c.l.b16 %v1051
    %v1653 = vunpack.c.l.b16 %v1052
    %v1654 = vunpack.c.h.b16 %v1052
    %v1655 = vunpack.c.l.b16 %v1053
    %v1656 = vunpack.c.h.b16 %v1053
    %v1657 = vunpack.c.l.b16 %v1054
    %v1658 = vunpack.c.l.b16 %v1055
    %v1659 = vunpack.c.h.b16 %v1055
    %v1660 = vunpack.c.l.b16 %v1056
    %v1661 = vunpack.c.h.b16 %v1056
    %v1662 = vunpack.c.l.b16 %v1057
    %v1663 = vunpack.c.l.b16 %v1058
    %v1664 = vunpack.c.h.b16 %v1058
    %v1665 = vunpack.c.l.b16 %v1059
    %v1666 = vunpack.c.h.b16 %v1059
    %v1667 = vunpack.c.l.b16 %v1060
    %v1668 = vunpack.c.l.b16 %v1061
    %v1669 = vunpack.c.h.b16 %v1061
    %v1670 = vunpack.c.l.b16 %v1062
    %v1671 = vunpack.c.h.b16 %v1062
    %v1672 = vunpack.c.l.b16 %v1063
    %v1673 = vunpack.c.l.b16 %v1064
    %v1674 = vunpack.c.h.b16 %v1064
    %v1675 = vunpack.c.l.b16 %v1065
    %v1676 = vunpack.c.h.b16 %v1065
    %v1677 = vunpack.c.l.b16 %v1066
    %v1678 = vunpack.c.l.b16 %v1067
    %v1679 = vunpack.c.h.b16 %v1067
    %v1680 = vunpack.c.l.b16 %v1068
    %v1681 = vunpack.c.h.b16 %v1068
    %v1682 = vunpack.c.l.b16 %v1069
    %v1683 = vunpack.c.l.b16 %v1070
    %v1684 = vunpack.c.h.b16 %v1070
    %v1685 = vunpack.c.l.b16 %v1071
    %v1686 = vunpack.c.h.b16 %v1071
    %v1687 = vunpack.c.l.b16 %v1072
    %v1688 = vunpack.c.l.b16 %v1073
    %v1689 = vunpack.c.h.b16 %v1073
    %v1690 = vunpack.c.l.b16 %v1074
    %v1691 = vunpack.c.h.b16 %v1074
    %v1692 = vunpack.c.l.b16 %v1075
    %v1693 = vunpack.c.l.b16 %v1076
    %v1694 = vunpack.c.h.b16 %v1076
    %v1695 = vunpack.c.l.b16 %v1077
    %v1696 = vunpack.c.h.b16 %v1077
    %v1697 = vunpack.c.l.b16 %v1078
    %v1698 = vunpack.c.l.b16 %v1079
    %v1699 = vunpack.c.h.b16 %v1079
    %v1700 = vunpack.c.l.b16 %v1080
    %v1701 = vunpack.c.h.b16 %v1080
    %v1702 = vunpack.c.l.b16 %v1081
    %v1703 = vunpack.c.l.b16 %v1082
    %v1704 = vunpack.c.h.b16 %v1082
    %v1705 = vunpack.c.l.b16 %v1083
    %v1706 = vunpack.c.h.b16 %v1083
    %v1707 = vunpack.c.l.b16 %v1084
    %v1708 = vunpack.c.l.b16 %v1085
    %v1709 = vunpack.c.h.b16 %v1085
    %v1710 = vunpack.c.l.b16 %v1086
    %v1711 = vunpack.c.h.b16 %v1086
    %v1712 = vunpack.c.l.b16 %v1087
    %v1713 = vunpack.c.l.b16 %v1088
    %v1714 = vunpack.c.h.b16 %v1088
    %v1715 = vunpack.c.l.b16 %v1089
    %v1716 = vunpack.c.h.b16 %v1089
    %v1717 = vunpack.c.l.b16 %v1090
    %v1718 = vunpack.c.l.b16 %v1091
    %v1719 = vunpack.c.h.b16 %v1091
    %v1720 = vunpack.c.l.b16 %v1092
    %v1721 = vunpack.c.h.b16 %v1092
    %v1722 = vunpack.c.l.b16 %v1093
    %v1723 = vunpack.c.l.b16 %v1094
    %v1724 = vunpack.c.h.b16 %v1094
    %v1725 = vunpack.c.l.b16 %v1095
    %v1726 = vunpack.c.h.b16 %v1095
    %v1727 = vunpack.c.l.b16 %v1096
    %v1728 = vunpack.c.l.b16 %v1097
    %v1729 = vunpack.c.h.b16 %v1097
    %v1730 = vunpack.c.l.b16 %v1098
    %v1731 = vunpack.c.h.b16 %v1098
    %v1732 = vunpack.c.l.b16 %v1099
    %v1733 = vunpack.c.l.b16 %v1100
    %v1734 = vunpack.c.h.b16 %v1100
    %v1735 = vunpack.c.l.b16 %v1101
    %v1736 = vunpack.c.h.b16 %v1101
    %v1737 = vunpack.c.l.b16 %v1102
    %v1738 = vunpack.c.l.b16 %v1103
    %v1739 = vunpack.c.h.b16 %v1103
    %v1740 = vunpack.c.l.b16 %v1104
    %v1741 = vunpack.c.h.b16 %v1104
    %v1742 = vunpack.c.l.b16 %v1105
    %v1743 = vunpack.c.l.b16 %v1106
    %v1744 = vunpack.c.h.b16 %v1106
    %v1745 = vunpack.c.l.b16 %v1107
    %v1746 = vunpack.c.h.b16 %v1107
    %v1747 = vunpack.c.l.b16 %v1108
    %v1748 = vunpack.c.l.b16 %v1109
    %v1749 = vunpack.c.h.b16 %v1109
    %v1750 = vunpack.c.l.b16 %v1110
    %v1751 = vunpack.c.h.b16 %v1110
    %v1752 = vunpack.c.l.b16 %v1111
    %v1753 = vunpack.c.l.b16 %v1112
    %v1754 = vunpack.c.h.b16 %v1112
    %v1755 = vunpack.c.l.b16 %v1113
    %v1756 = vunpack.c.h.b16 %v1113
    %v1757 = vunpack.c.l.b16 %v1114
    %v1758 = vpack.c.b16 %v1483, %v1478
    %v1759 = vpack.c.b16 %v1484, %v1479
    %v1760 = vpack.c.b16 %v1485, %v1480
    %v1761 = vpack.c.b16 %v1486, %v1481
    %v1762 = vpack.c.b16 %v1487, %v1482
    %v1763 = vpack.c.b16 %v1493, %v1488
    %v1764 = vpack.c.b16 %v1494, %v1489
    %v1765 = vpack.c.b16 %v1495, %v1490
    %v1766 = vpack.c.b16 %v1496, %v1491
    %v1767 = vpack.c.b16 %v1497, %v1492
    %v1768 = vpack.c.b16 %v1503, %v1498
    %v1769 = vpack.c.b16 %v1504, %v1499
    %v1770 = vpack.c.b16 %v1505, %v1500
    %v1771 = vpack.c.b16 %v1506, %v1501
    %v1772 = vpack.c.b16 %v1507, %v1502
    %v1773 = vpack.c.b16 %v1513, %v1508
    %v1774 = vpack.c.b16 %v1514, %v1509
    %v1775 = vpack.c.b16 %v1515, %v1510
    %v1776 = vpack.c.b16 %v1516, %v1511
    %v1777 = vpack.c.b16 %v1517, %v1512
    %v1778 = vpack.c.b16 %v1523, %v1518
    %v1779 = vpack.c.b16 %v1524, %v1519
    %v1780 = vpack.c.b16 %v1525, %v1520
    %v1781 = vpack.c.b16 %v1526, %v1521
    %v1782 = vpack.c.b16 %v1527, %v1522
    %v1783 = vpack.c.b16 %v1533, %v1528
    %v1784 = vpack.c.b16 %v1534, %v1529
    %v1785 = vpack.c.b16 %v1535, %v1530
    %v1786 = vpack.c.b16 %v1536, %v1531
    %v1787 = vpack.c.b16 %v1537, %v1532
    %v1788 = vpack.c.b16 %v1543, %v1538
    %v1789 = vpack.c.b16 %v1544, %v1539
    %v1790 = vpack.c.b16 %v1545, %v1540
    %v1791 = vpack.c.b16 %v1546, %v1541
    %v1792 = vpack.c.b16 %v1547, %v1542
    %v1793 = vpack.c.b16 %v1553, %v1548
    %v1794 = vpack.c.b16 %v1554, %v1549
    %v1795 = vpack.c.b16 %v1555, %v1550
    %v1796 = vpack.c.b16 %v1556, %v1551
    %v1797 = vpack.c.b16 %v1557, %v1552
    %v1798 = vpack.c.b16 %v1563, %v1558
    %v1799 = vpack.c.b16 %v1564, %v1559
    %v1800 = vpack.c.b16 %v1565, %v1560
    %v1801 = vpack.c.b16 %v1566, %v1561
    %v1802 = vpack.c.b16 %v1567, %v1562
    %v1803 = vpack.c.b16 %v1573, %v1568
    %v1804 = vpack.c.b16 %v1574, %v1569
    %v1805 = vpack.c.b16 %v1575, %v1570
    %v1806 = vpack.c.b16 %v1576, %v1571
    %v1807 = vpack.c.b16 %v1577, %v1572
    %v1808 = vpack.c.b16 %v1583, %v1578
    %v1809 = vpack.c.b16 %v1584, %v1579
    %v1810 = vpack.c.b16 %v1585, %v1580
    %v1811 = vpack.c.b16 %v1586, %v1581
    %v1812 = vpack.c.b16 %v1587, %v1582
    %v1813 = vpack.c.b16 %v1593, %v1588
    %v1814 = vpack.c.b16 %v1594, %v1589
    %v1815 = vpack.c.b16 %v1595, %v1590
    %v1816 = vpack.c.b16 %v1596, %v1591
    %v1817 = vpack.c.b16 %v1597, %v1592
    %v1818 = vpack.c.b16 %v1603, %v1598
    %v1819 = vpack.c.b16 %v1604, %v1599
    %v1820 = vpack.c.b16 %v1605, %v1600
    %v1821 = vpack.c.b16 %v1606, %v1601
    %v1822 = vpack.c.b16 %v1607, %v1602
    %v1823 = vpack.c.b16 %v1613, %v1608
    %v1824 = vpack.c.b16 %v1614, %v1609
    %v1825 = vpack.c.b16 %v1615, %v1610
    %v1826 = vpack.c.b16 %v1616, %v1611
    %v1827 = vpack.c.b16 %v1617, %v1612
    %v1828 = vpack.c.b16 %v1623, %v1618
    %v1829 = vpack.c.b16 %v1624, %v1619
    %v1830 = vpack.c.b16 %v1625, %v1620
    %v1831 = vpack.c.b16 %v1626, %v1621
    %v1832 = vpack.c.b16 %v1627, %v1622
    %v1833 = vpack.c.b16 %v1633, %v1628
    %v1834 = vpack.c.b16 %v1634, %v1629
    %v1835 = vpack.c.b16 %v1635, %v1630
    %v1836 = vpack.c.b16 %v1636, %v1631
    %v1837 = vpack.c.b16 %v1637, %v1632
    %v1838 = vpack.c.b16 %v1643, %v1638
    %v1839 = vpack.c.b16 %v1644, %v1639
    %v1840 = vpack.c.b16 %v1645, %v1640
    %v1841 = vpack.c.b16 %v1646, %v1641
    %v1842 = vpack.c.b16 %v1647, %v1642
    %v1843 = vpack.c.b16 %v1653, %v1648
    %v1844 = vpack.c.b16 %v1654, %v1649
    %v1845 = vpack.c.b16 %v1655, %v1650
    %v1846 = vpack.c.b16 %v1656, %v1651
    %v1847 = vpack.c.b16 %v1657, %v1652
    %v1848 = vpack.c.b16 %v1663, %v1658
    %v1849 = vpack.c.b16 %v1664, %v1659
    %v1850 = vpack.c.b16 %v1665, %v1660
    %v1851 = vpack.c.b16 %v1666, %v1661
    %v1852 = vpack.c.b16 %v1667, %v1662
    %v1853 = vpack.c.b16 %v1673, %v1668
    %v1854 = vpack.c.b16 %v1674, %v1669
    %v1855 = vpack.c.b16 %v1675, %v1670
    %v1856 = vpack.c.b16 %v1676, %v1671
    %v1857 = vpack.c.b16 %v1677, %v1672
    %v1858 = vpack.c.b16 %v1683, %v1678
    %v1859 = vpack.c.b16 %v1684, %v1679
    %v1860 = vpack.c.b16 %v1685, %v1680
    %v1861 = vpack.c.b16 %v1686, %v1681
    %v1862 = vpack.c.b16 %v1687, %v1682
    %v1863 = vpack.c.b16 %v1693, %v1688
    %v1864 = vpack.c.b16 %v1694, %v1689
    %v1865 = vpack.c.b16 %v1695, %v1690
    %v1866 = vpack.c.b16 %v1696, %v1691
    %v1867 = vpack.c.b16 %v1697, %v1692
    %v1868 = vpack.c.b16 %v1703, %v1698
    %v1869 = vpack.c.b16 %v1704, %v1699
    %v1870 = vpack.c.b16 %v1705, %v1700
    %v1871 = vpack.c.b16 %v1706, %v1701
    %v1872 = vpack.c.b16 %v1707, %v1702
    %v1873 = vpack.c.b16 %v1713, %v1708
    %v1874 = vpack.c.b16 %v1714, %v1709
    %v1875 = vpack.c.b16 %v1715, %v1710
    %v1876 = vpack.c.b16 %v1716, %v1711
    %v1877 = vpack.c.b16 %v1717, %v1712
    %v1878 = vpack.c.b16 %v1723, %v1718
    %v1879 = vpack.c.b16 %v1724, %v1719
    %v1880 = vpack.c.b16 %v1725, %v1720
    %v1881 = vpack.c.b16 %v1726, %v1721
    %v1882 = vpack.c.b16 %v1727, %v1722
    %v1883 = vpack.c.b16 %v1733, %v1728
    %v1884 = vpack.c.b16 %v1734, %v1729
    %v1885 = vpack.c.b16 %v1735, %v1730
    %v1886 = vpack.c.b16 %v1736, %v1731
    %v1887 = vpack.c.b16 %v1737, %v1732
    %v1888 = vpack.c.b16 %v1743, %v1738
    %v1889 = vpack.c.b16 %v1744, %v1739
    %v1890 = vpack.c.b16 %v1745, %v1740
    %v1891 = vpack.c.b16 %v1746, %v1741
    %v1892 = vpack.c.b16 %v1747, %v1742
    %v1893 = vpack.c.b16 %v1753, %v1748
    %v1894 = vpack.c.b16 %v1754, %v1749
    %v1895 = vpack.c.b16 %v1755, %v1750
    %v1896 = vpack.c.b16 %v1756, %v1751
    %v1897 = vpack.c.b16 %v1757, %v1752
    %vm2038 = vcmask 523264
    %v2040 = vsel %vm2038, %v1221, 0
    %v2043 = vsel %vm2038, %v1253, 0
    %v2046 = vsel %vm2038, %v1285, 0
    %v2049 = vsel %vm2038, %v1297, 0
    %2051 = vmatprep.subr.bf16.mxu0 %v1759
    %2052 = vmatpush1.bf16.msra.mxu0 %v1758
    %2053 = vmatprep.subr.bf16.mxu0 %v1764
    %2054 = vmatpush1.bf16.msra.mxu0 %v1763
    %2055 = vmatprep.subr.bf16.mxu0 %v1769
    %2056 = vmatpush1.bf16.msra.mxu0 %v1768
    %2057 = vmatprep.subr.bf16.mxu0 %v1774
    %2058 = vmatpush1.bf16.msra.mxu0 %v1773
    %2059 = vmatprep.subr.bf16.mxu0 %v1779
    %2060 = vmatpush1.bf16.msra.mxu0 %v1778
    %2061 = vmatprep.subr.bf16.mxu0 %v1784
    %2062 = vmatpush1.bf16.msra.mxu0 %v1783
    %2063 = vmatprep.subr.bf16.mxu0 %v1789
    %2064 = vmatpush1.bf16.msra.mxu0 %v1788
    %2065 = vmatprep.subr.bf16.mxu0 %v1794
    %2066 = vmatpush1.bf16.msra.mxu0 %v1793
    %2067 = vmatprep.subr.bf16.mxu0 %v1799
    %2068 = vmatpush1.bf16.msra.mxu0 %v1798
    %2069 = vmatprep.subr.bf16.mxu0 %v1804
    %2070 = vmatpush1.bf16.msra.mxu0 %v1803
    %2071 = vmatprep.subr.bf16.mxu0 %v1809
    %2072 = vmatpush1.bf16.msra.mxu0 %v1808
    %2073 = vmatprep.subr.bf16.mxu0 %v1814
    %2074 = vmatpush1.bf16.msra.mxu0 %v1813
    %2075 = vmatprep.subr.bf16.mxu0 %v1819
    %2076 = vmatpush1.bf16.msra.mxu0 %v1818
    %2077 = vmatprep.subr.bf16.mxu0 %v1824
    %2078 = vmatpush1.bf16.msra.mxu0 %v1823
    %2079 = vmatprep.subr.bf16.mxu0 %v1829
    %2080 = vmatpush1.bf16.msra.mxu0 %v1828
    %2081 = vmatprep.subr.bf16.mxu0 %v1834
    %2082 = vmatpush1.bf16.msra.mxu0 %v1833
    %2083 = vmatprep.mubr.bf16.mxu0 %v1197
    %2084 = vmatmul.mubr.bf16.gmra.mrb[0].mxu0 %v1185
    %v2085 = vpop.f32.mrb[0].mxu0
    %v2086 = vadd.f32 0.0, %v2085
    %v2087 = vpop.f32.mrb[0].mxu0
    %v2088 = vadd.f32 0.0, %v2087
    %v2089 = vpop.f32.mrb[0].mxu0
    %v2090 = vadd.f32 0.0, %v2089
    %v2091 = vpop.f32.mrb[0].mxu0
    %v2092 = vadd.f32 0.0, %v2091
    %2093 = vmatprep.mubr.bf16.mxu0 %v1237
    %2094 = vmatmul.mubr.bf16.gmra.mrb[0].mxu0 %v1229
    %v2095 = vpop.f32.mrb[0].mxu0
    %v2096 = vadd.f32 0.0, %v2095
    %v2097 = vpop.f32.mrb[0].mxu0
    %v2098 = vadd.f32 0.0, %v2097
    %v2099 = vpop.f32.mrb[0].mxu0
    %v2100 = vadd.f32 0.0, %v2099
    %v2101 = vpop.f32.mrb[0].mxu0
    %v2102 = vadd.f32 0.0, %v2101
    %2103 = vmatprep.mubr.bf16.mxu0 %v1269
    %2104 = vmatmul.mubr.bf16.gmra.mrb[0].mxu0 %v1261
    %v2105 = vpop.f32.mrb[0].mxu0
    %v2106 = vadd.f32 0.0, %v2105
    %v2107 = vpop.f32.mrb[0].mxu0
    %v2108 = vadd.f32 0.0, %v2107
    %v2109 = vpop.f32.mrb[0].mxu0
    %v2110 = vadd.f32 0.0, %v2109
    %v2111 = vpop.f32.mrb[0].mxu0
    %v2112 = vadd.f32 0.0, %v2111
    %2113 = vmatprep.mubr.bf16.mxu0 %v1291
    %2114 = vmatmul.mubr.bf16.gmra.mrb[0].mxu0 %v1288
    %v2115 = vpop.f32.mrb[0].mxu0
    %v2116 = vadd.f32 0.0, %v2115
    %v2117 = vpop.f32.mrb[0].mxu0
    %v2118 = vadd.f32 0.0, %v2117
    %v2119 = vpop.f32.mrb[0].mxu0
    %v2120 = vpop.f32.mrb[0].mxu0
    %2121 = vdwg.mxu0
    %2122 = vmatprep.subr.bf16.mxu0 %v1839
    %2123 = vmatpush1.bf16.msra.mxu0 %v1838
    %2124 = vmatprep.subr.bf16.mxu0 %v1844
    %2125 = vmatpush1.bf16.msra.mxu0 %v1843
    %2126 = vmatprep.subr.bf16.mxu0 %v1849
    %2127 = vmatpush1.bf16.msra.mxu0 %v1848
    %2128 = vmatprep.subr.bf16.mxu0 %v1854
    %2129 = vmatpush1.bf16.msra.mxu0 %v1853
    %2130 = vmatprep.subr.bf16.mxu0 %v1859
    %2131 = vmatpush1.bf16.msra.mxu0 %v1858
    %2132 = vmatprep.subr.bf16.mxu0 %v1864
    %2133 = vmatpush1.bf16.msra.mxu0 %v1863
    %2134 = vmatprep.subr.bf16.mxu0 %v1869
    %2135 = vmatpush1.bf16.msra.mxu0 %v1868
    %2136 = vmatprep.subr.bf16.mxu0 %v1874
    %2137 = vmatpush1.bf16.msra.mxu0 %v1873
    %2138 = vmatprep.subr.bf16.mxu0 %v1879
    %2139 = vmatpush1.bf16.msra.mxu0 %v1878
    %2140 = vmatprep.subr.bf16.mxu0 %v1884
    %2141 = vmatpush1.bf16.msra.mxu0 %v1883
    %2142 = vmatprep.subr.bf16.mxu0 %v1889
    %2143 = vmatpush1.bf16.msra.mxu0 %v1888
    %2144 = vmatprep.subr.bf16.mxu0 %v1894
    %2145 = vmatpush1.bf16.msra.mxu0 %v1893
    %2146 = vmatprep.subr.bf16.mxu0 0
    %2147 = vmatpush1.bf16.msra.mxu0 0
    %2148 = vmatprep.subr.bf16.mxu0 0
    %2149 = vmatpush1.bf16.msra.mxu0 0
    %2150 = vmatprep.subr.bf16.mxu0 0
    %2151 = vmatpush1.bf16.msra.mxu0 0
    %2152 = vmatprep.subr.bf16.mxu0 0
    %2153 = vmatpush1.bf16.msra.mxu0 0
    %2154 = vmatprep.mubr.bf16.mxu0 %v2040
    %2155 = vmatmul.mubr.bf16.gmra.mrb[0].mxu0 %v1209
    %v2156 = vpop.f32.mrb[0].mxu0
    %v2157 = vadd.f32 %v2086, %v2156
    %v2158 = vpop.f32.mrb[0].mxu0
    %v2159 = vadd.f32 %v2088, %v2158
    %v2160 = vpop.f32.mrb[0].mxu0
    %v2161 = vadd.f32 %v2090, %v2160
    %v2162 = vpop.f32.mrb[0].mxu0
    %v2163 = vadd.f32 %v2092, %v2162
    %2164 = vmatprep.mubr.bf16.mxu0 %v2043
    %2165 = vmatmul.mubr.bf16.gmra.mrb[0].mxu0 %v1245
    %v2166 = vpop.f32.mrb[0].mxu0
    %v2167 = vadd.f32 %v2096, %v2166
    %v2168 = vpop.f32.mrb[0].mxu0
    %v2169 = vadd.f32 %v2098, %v2168
    %v2170 = vpop.f32.mrb[0].mxu0
    %v2171 = vadd.f32 %v2100, %v2170
    %v2172 = vpop.f32.mrb[0].mxu0
    %v2173 = vadd.f32 %v2102, %v2172
    %2174 = vmatprep.mubr.bf16.mxu0 %v2046
    %2175 = vmatmul.mubr.bf16.gmra.mrb[0].mxu0 %v1277
    %v2176 = vpop.f32.mrb[0].mxu0
    %v2177 = vadd.f32 %v2106, %v2176
    %v2178 = vpop.f32.mrb[0].mxu0
    %v2179 = vadd.f32 %v2108, %v2178
    %v2180 = vpop.f32.mrb[0].mxu0
    %v2181 = vadd.f32 %v2110, %v2180
    %v2182 = vpop.f32.mrb[0].mxu0
    %v2183 = vadd.f32 %v2112, %v2182
    %2184 = vmatprep.mubr.bf16.mxu0 %v2049
    %2185 = vmatmul.mubr.bf16.gmra.mrb[0].mxu0 %v1294
    %v2186 = vpop.f32.mrb[0].mxu0
    %v2187 = vadd.f32 %v2116, %v2186
    %v2188 = vpop.f32.mrb[0].mxu0
    %v2189 = vadd.f32 %v2118, %v2188
    %v2190 = vpop.f32.mrb[0].mxu0
    %v2191 = vpop.f32.mrb[0].mxu0
    %2192 = vdwg.mxu0
    %2193 = vmatprep.subr.bf16.mxu0 %v1761
    %2194 = vmatpush1.bf16.msra.mxu0 %v1760
    %2195 = vmatprep.subr.bf16.mxu0 %v1766
    %2196 = vmatpush1.bf16.msra.mxu0 %v1765
    %2197 = vmatprep.subr.bf16.mxu0 %v1771
    %2198 = vmatpush1.bf16.msra.mxu0 %v1770
    %2199 = vmatprep.subr.bf16.mxu0 %v1776
    %2200 = vmatpush1.bf16.msra.mxu0 %v1775
    %2201 = vmatprep.subr.bf16.mxu0 %v1781
    %2202 = vmatpush1.bf16.msra.mxu0 %v1780
    %2203 = vmatprep.subr.bf16.mxu0 %v1786
    %2204 = vmatpush1.bf16.msra.mxu0 %v1785
    %2205 = vmatprep.subr.bf16.mxu0 %v1791
    %2206 = vmatpush1.bf16.msra.mxu0 %v1790
    %2207 = vmatprep.subr.bf16.mxu0 %v1796
    %2208 = vmatpush1.bf16.msra.mxu0 %v1795
    %2209 = vmatprep.subr.bf16.mxu0 %v1801
    %2210 = vmatpush1.bf16.msra.mxu0 %v1800
    %2211 = vmatprep.subr.bf16.mxu0 %v1806
    %2212 = vmatpush1.bf16.msra.mxu0 %v1805
    %2213 = vmatprep.subr.bf16.mxu0 %v1811
    %2214 = vmatpush1.bf16.msra.mxu0 %v1810
    %2215 = vmatprep.subr.bf16.mxu0 %v1816
    %2216 = vmatpush1.bf16.msra.mxu0 %v1815
    %2217 = vmatprep.subr.bf16.mxu0 %v1821
    %2218 = vmatpush1.bf16.msra.mxu0 %v1820
    %2219 = vmatprep.subr.bf16.mxu0 %v1826
    %2220 = vmatpush1.bf16.msra.mxu0 %v1825
    %2221 = vmatprep.subr.bf16.mxu0 %v1831
    %2222 = vmatpush1.bf16.msra.mxu0 %v1830
    %2223 = vmatprep.subr.bf16.mxu0 %v1836
    %2224 = vmatpush1.bf16.msra.mxu0 %v1835
    %2225 = vmatprep.mubr.bf16.mxu0 %v1197
    %2226 = vmatmul.mubr.bf16.gmra.mrb[0].mxu0 %v1185
    %v2227 = vpop.f32.mrb[0].mxu0
    %v2228 = vadd.f32 0.0, %v2227
    %v2229 = vpop.f32.mrb[0].mxu0
    %v2230 = vadd.f32 0.0, %v2229
    %v2231 = vpop.f32.mrb[0].mxu0
    %v2232 = vadd.f32 0.0, %v2231
    %v2233 = vpop.f32.mrb[0].mxu0
    %v2234 = vadd.f32 0.0, %v2233
    %2235 = vmatprep.mubr.bf16.mxu0 %v1237
    %2236 = vmatmul.mubr.bf16.gmra.mrb[0].mxu0 %v1229
    %v2237 = vpop.f32.mrb[0].mxu0
    %v2238 = vadd.f32 0.0, %v2237
    %v2239 = vpop.f32.mrb[0].mxu0
    %v2240 = vadd.f32 0.0, %v2239
    %v2241 = vpop.f32.mrb[0].mxu0
    %v2242 = vadd.f32 0.0, %v2241
    %v2243 = vpop.f32.mrb[0].mxu0
    %v2244 = vadd.f32 0.0, %v2243
    %2245 = vmatprep.mubr.bf16.mxu0 %v1269
    %2246 = vmatmul.mubr.bf16.gmra.mrb[0].mxu0 %v1261
    %v2247 = vpop.f32.mrb[0].mxu0
    %v2248 = vadd.f32 0.0, %v2247
    %v2249 = vpop.f32.mrb[0].mxu0
    %v2250 = vadd.f32 0.0, %v2249
    %v2251 = vpop.f32.mrb[0].mxu0
    %v2252 = vadd.f32 0.0, %v2251
    %v2253 = vpop.f32.mrb[0].mxu0
    %v2254 = vadd.f32 0.0, %v2253
    %2255 = vmatprep.mubr.bf16.mxu0 %v1291
    %2256 = vmatmul.mubr.bf16.gmra.mrb[0].mxu0 %v1288
    %v2257 = vpop.f32.mrb[0].mxu0
    %v2258 = vadd.f32 0.0, %v2257
    %v2259 = vpop.f32.mrb[0].mxu0
    %v2260 = vadd.f32 0.0, %v2259
    %v2261 = vpop.f32.mrb[0].mxu0
    %v2262 = vpop.f32.mrb[0].mxu0
    %2263 = vdwg.mxu0
    %2264 = vmatprep.subr.bf16.mxu0 %v1841
    %2265 = vmatpush1.bf16.msra.mxu0 %v1840
    %2266 = vmatprep.subr.bf16.mxu0 %v1846
    %2267 = vmatpush1.bf16.msra.mxu0 %v1845
    %2268 = vmatprep.subr.bf16.mxu0 %v1851
    %2269 = vmatpush1.bf16.msra.mxu0 %v1850
    %2270 = vmatprep.subr.bf16.mxu0 %v1856
    %2271 = vmatpush1.bf16.msra.mxu0 %v1855
    %2272 = vmatprep.subr.bf16.mxu0 %v1861
    %2273 = vmatpush1.bf16.msra.mxu0 %v1860
    %2274 = vmatprep.subr.bf16.mxu0 %v1866
    %2275 = vmatpush1.bf16.msra.mxu0 %v1865
    %2276 = vmatprep.subr.bf16.mxu0 %v1871
    %2277 = vmatpush1.bf16.msra.mxu0 %v1870
    %2278 = vmatprep.subr.bf16.mxu0 %v1876
    %2279 = vmatpush1.bf16.msra.mxu0 %v1875
    %2280 = vmatprep.subr.bf16.mxu0 %v1881
    %2281 = vmatpush1.bf16.msra.mxu0 %v1880
    %2282 = vmatprep.subr.bf16.mxu0 %v1886
    %2283 = vmatpush1.bf16.msra.mxu0 %v1885
    %2284 = vmatprep.subr.bf16.mxu0 %v1891
    %2285 = vmatpush1.bf16.msra.mxu0 %v1890
    %2286 = vmatprep.subr.bf16.mxu0 %v1896
    %2287 = vmatpush1.bf16.msra.mxu0 %v1895
    %2288 = vmatprep.subr.bf16.mxu0 0
    %2289 = vmatpush1.bf16.msra.mxu0 0
    %2290 = vmatprep.subr.bf16.mxu0 0
    %2291 = vmatpush1.bf16.msra.mxu0 0
    %2292 = vmatprep.subr.bf16.mxu0 0
    %2293 = vmatpush1.bf16.msra.mxu0 0
    %2294 = vmatprep.subr.bf16.mxu0 0
    %2295 = vmatpush1.bf16.msra.mxu0 0
    %2296 = vmatprep.mubr.bf16.mxu0 %v2040
    %2297 = vmatmul.mubr.bf16.gmra.mrb[0].mxu0 %v1209
    %v2298 = vpop.f32.mrb[0].mxu0
    %v2299 = vadd.f32 %v2228, %v2298
    %v2300 = vpop.f32.mrb[0].mxu0
    %v2301 = vadd.f32 %v2230, %v2300
    %v2302 = vpop.f32.mrb[0].mxu0
    %v2303 = vadd.f32 %v2232, %v2302
    %v2304 = vpop.f32.mrb[0].mxu0
    %v2305 = vadd.f32 %v2234, %v2304
    %2306 = vmatprep.mubr.bf16.mxu0 %v2043
    %2307 = vmatmul.mubr.bf16.gmra.mrb[0].mxu0 %v1245
    %v2308 = vpop.f32.mrb[0].mxu0
    %v2309 = vadd.f32 %v2238, %v2308
    %v2310 = vpop.f32.mrb[0].mxu0
    %v2311 = vadd.f32 %v2240, %v2310
    %v2312 = vpop.f32.mrb[0].mxu0
    %v2313 = vadd.f32 %v2242, %v2312
    %v2314 = vpop.f32.mrb[0].mxu0
    %v2315 = vadd.f32 %v2244, %v2314
    %2316 = vmatprep.mubr.bf16.mxu0 %v2046
    %2317 = vmatmul.mubr.bf16.gmra.mrb[0].mxu0 %v1277
    %v2318 = vpop.f32.mrb[0].mxu0
    %v2319 = vadd.f32 %v2248, %v2318
    %v2320 = vpop.f32.mrb[0].mxu0
    %v2321 = vadd.f32 %v2250, %v2320
    %v2322 = vpop.f32.mrb[0].mxu0
    %v2323 = vadd.f32 %v2252, %v2322
    %v2324 = vpop.f32.mrb[0].mxu0
    %v2325 = vadd.f32 %v2254, %v2324
    %2326 = vmatprep.mubr.bf16.mxu0 %v2049
    %2327 = vmatmul.mubr.bf16.gmra.mrb[0].mxu0 %v1294
    %v2328 = vpop.f32.mrb[0].mxu0
    %v2329 = vadd.f32 %v2258, %v2328
    %v2330 = vpop.f32.mrb[0].mxu0
    %v2331 = vadd.f32 %v2260, %v2330
    %v2332 = vpop.f32.mrb[0].mxu0
    %v2333 = vpop.f32.mrb[0].mxu0
    %2334 = vdwg.mxu0
    %2335 = vmatprep.subr.bf16.mxu0 0
    %2336 = vmatpush1.bf16.msra.mxu0 %v1762
    %2337 = vmatprep.subr.bf16.mxu0 0
    %2338 = vmatpush1.bf16.msra.mxu0 %v1767
    %2339 = vmatprep.subr.bf16.mxu0 0
    %2340 = vmatpush1.bf16.msra.mxu0 %v1772
    %2341 = vmatprep.subr.bf16.mxu0 0
    %2342 = vmatpush1.bf16.msra.mxu0 %v1777
    %2343 = vmatprep.subr.bf16.mxu0 0
    %2344 = vmatpush1.bf16.msra.mxu0 %v1782
    %2345 = vmatprep.subr.bf16.mxu0 0
    %2346 = vmatpush1.bf16.msra.mxu0 %v1787
    %2347 = vmatprep.subr.bf16.mxu0 0
    %2348 = vmatpush1.bf16.msra.mxu0 %v1792
    %2349 = vmatprep.subr.bf16.mxu0 0
    %2350 = vmatpush1.bf16.msra.mxu0 %v1797
    %2351 = vmatprep.subr.bf16.mxu0 0
    %2352 = vmatpush1.bf16.msra.mxu0 %v1802
    %2353 = vmatprep.subr.bf16.mxu0 0
    %2354 = vmatpush1.bf16.msra.mxu0 %v1807
    %2355 = vmatprep.subr.bf16.mxu0 0
    %2356 = vmatpush1.bf16.msra.mxu0 %v1812
    %2357 = vmatprep.subr.bf16.mxu0 0
    %2358 = vmatpush1.bf16.msra.mxu0 %v1817
    %2359 = vmatprep.subr.bf16.mxu0 0
    %2360 = vmatpush1.bf16.msra.mxu0 %v1822
    %2361 = vmatprep.subr.bf16.mxu0 0
    %2362 = vmatpush1.bf16.msra.mxu0 %v1827
    %2363 = vmatprep.subr.bf16.mxu0 0
    %2364 = vmatpush1.bf16.msra.mxu0 %v1832
    %2365 = vmatprep.subr.bf16.mxu0 0
    %2366 = vmatpush1.bf16.msra.mxu0 %v1837
    %2367 = vmatprep.mubr.bf16.mxu0 %v1197
    %2368 = vmatmul.mubr.bf16.gmra.mrb[0].mxu0 %v1185
    %v2369 = vpop.f32.mrb[0].mxu0
    %v2370 = vadd.f32 0.0, %v2369
    %v2371 = vpop.f32.mrb[0].mxu0
    %v2372 = vpop.f32.mrb[0].mxu0
    %v2373 = vadd.f32 0.0, %v2372
    %v2374 = vpop.f32.mrb[0].mxu0
    %2375 = vmatprep.mubr.bf16.mxu0 %v1237
    %2376 = vmatmul.mubr.bf16.gmra.mrb[0].mxu0 %v1229
    %v2377 = vpop.f32.mrb[0].mxu0
    %v2378 = vadd.f32 0.0, %v2377
    %v2379 = vpop.f32.mrb[0].mxu0
    %v2380 = vpop.f32.mrb[0].mxu0
    %v2381 = vadd.f32 0.0, %v2380
    %v2382 = vpop.f32.mrb[0].mxu0
    %2383 = vmatprep.mubr.bf16.mxu0 %v1269
    %2384 = vmatmul.mubr.bf16.gmra.mrb[0].mxu0 %v1261
    %v2385 = vpop.f32.mrb[0].mxu0
    %v2386 = vadd.f32 0.0, %v2385
    %v2387 = vpop.f32.mrb[0].mxu0
    %v2388 = vpop.f32.mrb[0].mxu0
    %v2389 = vadd.f32 0.0, %v2388
    %v2390 = vpop.f32.mrb[0].mxu0
    %2391 = vmatprep.mubr.bf16.mxu0 %v1291
    %2392 = vmatmul.mubr.bf16.gmra.mrb[0].mxu0 %v1288
    %v2393 = vpop.f32.mrb[0].mxu0
    %v2394 = vadd.f32 0.0, %v2393
    %v2395 = vpop.f32.mrb[0].mxu0
    %v2396 = vpop.f32.mrb[0].mxu0
    %v2397 = vpop.f32.mrb[0].mxu0
    %2398 = vdwg.mxu0
    %2399 = vmatprep.subr.bf16.mxu0 0
    %2400 = vmatpush1.bf16.msra.mxu0 %v1842
    %2401 = vmatprep.subr.bf16.mxu0 0
    %2402 = vmatpush1.bf16.msra.mxu0 %v1847
    %2403 = vmatprep.subr.bf16.mxu0 0
    %2404 = vmatpush1.bf16.msra.mxu0 %v1852
    %2405 = vmatprep.subr.bf16.mxu0 0
    %2406 = vmatpush1.bf16.msra.mxu0 %v1857
    %2407 = vmatprep.subr.bf16.mxu0 0
    %2408 = vmatpush1.bf16.msra.mxu0 %v1862
    %2409 = vmatprep.subr.bf16.mxu0 0
    %2410 = vmatpush1.bf16.msra.mxu0 %v1867
    %2411 = vmatprep.subr.bf16.mxu0 0
    %2412 = vmatpush1.bf16.msra.mxu0 %v1872
    %2413 = vmatprep.subr.bf16.mxu0 0
    %2414 = vmatpush1.bf16.msra.mxu0 %v1877
    %2415 = vmatprep.subr.bf16.mxu0 0
    %2416 = vmatpush1.bf16.msra.mxu0 %v1882
    %2417 = vmatprep.subr.bf16.mxu0 0
    %2418 = vmatpush1.bf16.msra.mxu0 %v1887
    %2419 = vmatprep.subr.bf16.mxu0 0
    %2420 = vmatpush1.bf16.msra.mxu0 %v1892
    %2421 = vmatprep.subr.bf16.mxu0 0
    %2422 = vmatpush1.bf16.msra.mxu0 %v1897
    %2423 = vmatprep.subr.bf16.mxu0 0
    %2424 = vmatpush1.bf16.msra.mxu0 0
    %2425 = vmatprep.subr.bf16.mxu0 0
    %2426 = vmatpush1.bf16.msra.mxu0 0
    %2427 = vmatprep.subr.bf16.mxu0 0
    %2428 = vmatpush1.bf16.msra.mxu0 0
    %2429 = vmatprep.subr.bf16.mxu0 0
    %2430 = vmatpush1.bf16.msra.mxu0 0
    %2431 = vmatprep.mubr.bf16.mxu0 %v2040
    %2432 = vmatmul.mubr.bf16.gmra.mrb[0].mxu0 %v1209
    %v2433 = vpop.f32.mrb[0].mxu0
    %v2434 = vadd.f32 %v2370, %v2433
    %v2435 = vpop.f32.mrb[0].mxu0
    %v2436 = vpop.f32.mrb[0].mxu0
    %v2437 = vadd.f32 %v2373, %v2436
    %v2438 = vpop.f32.mrb[0].mxu0
    %2439 = vmatprep.mubr.bf16.mxu0 %v2043
    %2440 = vmatmul.mubr.bf16.gmra.mrb[0].mxu0 %v1245
    %v2441 = vpop.f32.mrb[0].mxu0
    %v2442 = vadd.f32 %v2378, %v2441
    %v2443 = vpop.f32.mrb[0].mxu0
    %v2444 = vpop.f32.mrb[0].mxu0
    %v2445 = vadd.f32 %v2381, %v2444
    %v2446 = vpop.f32.mrb[0].mxu0
    %2447 = vmatprep.mubr.bf16.mxu0 %v2046
    %2448 = vmatmul.mubr.bf16.gmra.mrb[0].mxu0 %v1277
    %v2449 = vpop.f32.mrb[0].mxu0
    %v2450 = vadd.f32 %v2386, %v2449
    %v2451 = vpop.f32.mrb[0].mxu0
    %v2452 = vpop.f32.mrb[0].mxu0
    %v2453 = vadd.f32 %v2389, %v2452
    %v2454 = vpop.f32.mrb[0].mxu0
    %2455 = vmatprep.mubr.bf16.mxu0 %v2049
    %2456 = vmatmul.mubr.bf16.gmra.mrb[0].mxu0 %v1294
    %v2457 = vpop.f32.mrb[0].mxu0
    %v2458 = vadd.f32 %v2394, %v2457
    %v2459 = vpop.f32.mrb[0].mxu0
    %v2460 = vpop.f32.mrb[0].mxu0
    %v2461 = vpop.f32.mrb[0].mxu0
    %2462 = vdwg.mxu0
    %v2465 = vunpack.c.l.b16 %v774
    %v2466 = vunpack.c.h.b16 %v774
    %v2467 = vunpack.c.l.b16 %v775
    %v2468 = vunpack.c.h.b16 %v775
    %v2469 = vpack.c.b16 %v2465, %v2465
    %v2470 = vpack.c.b16 %v2466, %v2466
    %v2471 = vpack.c.b16 %v2467, %v2467
    %v2472 = vpack.c.b16 %v2468, %v2468
    %v2653 = vunpack.c.l.b16 %v776
    %v2654 = vunpack.c.h.b16 %v776
    %v2655 = vunpack.c.l.b16 %v777
    %v2656 = vunpack.c.h.b16 %v777
    %v2657 = vunpack.c.l.b16 %v778
    %v2658 = vunpack.c.l.b16 %v779
    %v2659 = vunpack.c.h.b16 %v779
    %v2660 = vunpack.c.l.b16 %v780
    %v2661 = vunpack.c.h.b16 %v780
    %v2662 = vunpack.c.l.b16 %v781
    %v2663 = vunpack.c.l.b16 %v782
    %v2664 = vunpack.c.h.b16 %v782
    %v2665 = vunpack.c.l.b16 %v783
    %v2666 = vunpack.c.h.b16 %v783
    %v2667 = vunpack.c.l.b16 %v784
    %v2668 = vunpack.c.l.b16 %v785
    %v2669 = vunpack.c.h.b16 %v785
    %v2670 = vunpack.c.l.b16 %v786
    %v2671 = vunpack.c.h.b16 %v786
    %v2672 = vunpack.c.l.b16 %v787
    %v2673 = vunpack.c.l.b16 %v788
    %v2674 = vunpack.c.h.b16 %v788
    %v2675 = vunpack.c.l.b16 %v789
    %v2676 = vunpack.c.h.b16 %v789
    %v2677 = vunpack.c.l.b16 %v790
    %v2678 = vunpack.c.l.b16 %v791
    %v2679 = vunpack.c.h.b16 %v791
    %v2680 = vunpack.c.l.b16 %v792
    %v2681 = vunpack.c.h.b16 %v792
    %v2682 = vunpack.c.l.b16 %v793
    %v2683 = vunpack.c.l.b16 %v794
    %v2684 = vunpack.c.h.b16 %v794
    %v2685 = vunpack.c.l.b16 %v795
    %v2686 = vunpack.c.h.b16 %v795
    %v2687 = vunpack.c.l.b16 %v796
    %v2688 = vunpack.c.l.b16 %v797
    %v2689 = vunpack.c.h.b16 %v797
    %v2690 = vunpack.c.l.b16 %v798
    %v2691 = vunpack.c.h.b16 %v798
    %v2692 = vunpack.c.l.b16 %v799
    %v2693 = vunpack.c.l.b16 %v800
    %v2694 = vunpack.c.h.b16 %v800
    %v2695 = vunpack.c.l.b16 %v801
    %v2696 = vunpack.c.h.b16 %v801
    %v2697 = vunpack.c.l.b16 %v802
    %v2698 = vunpack.c.l.b16 %v803
    %v2699 = vunpack.c.h.b16 %v803
    %v2700 = vunpack.c.l.b16 %v804
    %v2701 = vunpack.c.h.b16 %v804
    %v2702 = vunpack.c.l.b16 %v805
    %v2703 = vunpack.c.l.b16 %v806
    %v2704 = vunpack.c.h.b16 %v806
    %v2705 = vunpack.c.l.b16 %v807
    %v2706 = vunpack.c.h.b16 %v807
    %v2707 = vunpack.c.l.b16 %v808
    %v2708 = vunpack.c.l.b16 %v809
    %v2709 = vunpack.c.h.b16 %v809
    %v2710 = vunpack.c.l.b16 %v810
    %v2711 = vunpack.c.h.b16 %v810
    %v2712 = vunpack.c.l.b16 %v811
    %v2713 = vunpack.c.l.b16 %v812
    %v2714 = vunpack.c.h.b16 %v812
    %v2715 = vunpack.c.l.b16 %v813
    %v2716 = vunpack.c.h.b16 %v813
    %v2717 = vunpack.c.l.b16 %v814
    %v2718 = vunpack.c.l.b16 %v815
    %v2719 = vunpack.c.h.b16 %v815
    %v2720 = vunpack.c.l.b16 %v816
    %v2721 = vunpack.c.h.b16 %v816
    %v2722 = vunpack.c.l.b16 %v817
    %v2723 = vunpack.c.l.b16 %v818
    %v2724 = vunpack.c.h.b16 %v818
    %v2725 = vunpack.c.l.b16 %v819
    %v2726 = vunpack.c.h.b16 %v819
    %v2727 = vunpack.c.l.b16 %v820
    %v2728 = vunpack.c.l.b16 %v821
    %v2729 = vunpack.c.h.b16 %v821
    %v2730 = vunpack.c.l.b16 %v822
    %v2731 = vunpack.c.h.b16 %v822
    %v2732 = vunpack.c.l.b16 %v823
    %v2733 = vunpack.c.l.b16 %v824
    %v2734 = vunpack.c.h.b16 %v824
    %v2735 = vunpack.c.l.b16 %v825
    %v2736 = vunpack.c.h.b16 %v825
    %v2737 = vunpack.c.l.b16 %v826
    %v2738 = vunpack.c.l.b16 %v827
    %v2739 = vunpack.c.h.b16 %v827
    %v2740 = vunpack.c.l.b16 %v828
    %v2741 = vunpack.c.h.b16 %v828
    %v2742 = vunpack.c.l.b16 %v829
    %v2743 = vunpack.c.l.b16 %v830
    %v2744 = vunpack.c.h.b16 %v830
    %v2745 = vunpack.c.l.b16 %v831
    %v2746 = vunpack.c.h.b16 %v831
    %v2747 = vunpack.c.l.b16 %v832
    %v2748 = vunpack.c.l.b16 %v833
    %v2749 = vunpack.c.h.b16 %v833
    %v2750 = vunpack.c.l.b16 %v834
    %v2751 = vunpack.c.h.b16 %v834
    %v2752 = vunpack.c.l.b16 %v835
    %v2753 = vunpack.c.l.b16 %v836
    %v2754 = vunpack.c.h.b16 %v836
    %v2755 = vunpack.c.l.b16 %v837
    %v2756 = vunpack.c.h.b16 %v837
    %v2757 = vunpack.c.l.b16 %v838
    %v2758 = vunpack.c.l.b16 %v839
    %v2759 = vunpack.c.h.b16 %v839
    %v2760 = vunpack.c.l.b16 %v840
    %v2761 = vunpack.c.h.b16 %v840
    %v2762 = vunpack.c.l.b16 %v841
    %v2763 = vunpack.c.l.b16 %v842
    %v2764 = vunpack.c.h.b16 %v842
    %v2765 = vunpack.c.l.b16 %v843
    %v2766 = vunpack.c.h.b16 %v843
    %v2767 = vunpack.c.l.b16 %v844
    %v2768 = vunpack.c.l.b16 %v845
    %v2769 = vunpack.c.h.b16 %v845
    %v2770 = vunpack.c.l.b16 %v846
    %v2771 = vunpack.c.h.b16 %v846
    %v2772 = vunpack.c.l.b16 %v847
    %v2773 = vunpack.c.l.b16 %v848
    %v2774 = vunpack.c.h.b16 %v848
    %v2775 = vunpack.c.l.b16 %v849
    %v2776 = vunpack.c.h.b16 %v849
    %v2777 = vunpack.c.l.b16 %v850
    %v2778 = vunpack.c.l.b16 %v851
    %v2779 = vunpack.c.h.b16 %v851
    %v2780 = vunpack.c.l.b16 %v852
    %v2781 = vunpack.c.h.b16 %v852
    %v2782 = vunpack.c.l.b16 %v853
    %v2783 = vunpack.c.l.b16 %v854
    %v2784 = vunpack.c.h.b16 %v854
    %v2785 = vunpack.c.l.b16 %v855
    %v2786 = vunpack.c.h.b16 %v855
    %v2787 = vunpack.c.l.b16 %v856
    %v2788 = vunpack.c.l.b16 %v857
    %v2789 = vunpack.c.h.b16 %v857
    %v2790 = vunpack.c.l.b16 %v858
    %v2791 = vunpack.c.h.b16 %v858
    %v2792 = vunpack.c.l.b16 %v859
    %v2793 = vunpack.c.l.b16 %v860
    %v2794 = vunpack.c.h.b16 %v860
    %v2795 = vunpack.c.l.b16 %v861
    %v2796 = vunpack.c.h.b16 %v861
    %v2797 = vunpack.c.l.b16 %v862
    %v2798 = vunpack.c.l.b16 %v863
    %v2799 = vunpack.c.h.b16 %v863
    %v2800 = vunpack.c.l.b16 %v864
    %v2801 = vunpack.c.h.b16 %v864
    %v2802 = vunpack.c.l.b16 %v865
    %v2803 = vunpack.c.l.b16 %v866
    %v2804 = vunpack.c.h.b16 %v866
    %v2805 = vunpack.c.l.b16 %v867
    %v2806 = vunpack.c.h.b16 %v867
    %v2807 = vunpack.c.l.b16 %v868
    %v2808 = vunpack.c.l.b16 %v869
    %v2809 = vunpack.c.h.b16 %v869
    %v2810 = vunpack.c.l.b16 %v870
    %v2811 = vunpack.c.h.b16 %v870
    %v2812 = vunpack.c.l.b16 %v871
    %v2813 = vunpack.c.l.b16 %v872
    %v2814 = vunpack.c.h.b16 %v872
    %v2815 = vunpack.c.l.b16 %v873
    %v2816 = vunpack.c.h.b16 %v873
    %v2817 = vunpack.c.l.b16 %v874
    %v2818 = vunpack.c.l.b16 %v875
    %v2819 = vunpack.c.h.b16 %v875
    %v2820 = vunpack.c.l.b16 %v876
    %v2821 = vunpack.c.h.b16 %v876
    %v2822 = vunpack.c.l.b16 %v877
    %v2823 = vunpack.c.l.b16 %v878
    %v2824 = vunpack.c.h.b16 %v878
    %v2825 = vunpack.c.l.b16 %v879
    %v2826 = vunpack.c.h.b16 %v879
    %v2827 = vunpack.c.l.b16 %v880
    %v2828 = vunpack.c.l.b16 %v881
    %v2829 = vunpack.c.h.b16 %v881
    %v2830 = vunpack.c.l.b16 %v882
    %v2831 = vunpack.c.h.b16 %v882
    %v2832 = vunpack.c.l.b16 %v883
    %v2833 = vunpack.c.l.b16 %v884
    %v2834 = vunpack.c.h.b16 %v884
    %v2835 = vunpack.c.l.b16 %v885
    %v2836 = vunpack.c.h.b16 %v885
    %v2837 = vunpack.c.l.b16 %v886
    %v2838 = vunpack.c.l.b16 %v887
    %v2839 = vunpack.c.h.b16 %v887
    %v2840 = vunpack.c.l.b16 %v888
    %v2841 = vunpack.c.h.b16 %v888
    %v2842 = vunpack.c.l.b16 %v889
    %v2843 = vunpack.c.l.b16 %v890
    %v2844 = vunpack.c.h.b16 %v890
    %v2845 = vunpack.c.l.b16 %v891
    %v2846 = vunpack.c.h.b16 %v891
    %v2847 = vunpack.c.l.b16 %v892
    %v2848 = vunpack.c.l.b16 %v893
    %v2849 = vunpack.c.h.b16 %v893
    %v2850 = vunpack.c.l.b16 %v894
    %v2851 = vunpack.c.h.b16 %v894
    %v2852 = vunpack.c.l.b16 %v895
    %v2853 = vunpack.c.l.b16 %v896
    %v2854 = vunpack.c.h.b16 %v896
    %v2855 = vunpack.c.l.b16 %v897
    %v2856 = vunpack.c.h.b16 %v897
    %v2857 = vunpack.c.l.b16 %v898
    %v2858 = vunpack.c.l.b16 %v899
    %v2859 = vunpack.c.h.b16 %v899
    %v2860 = vunpack.c.l.b16 %v900
    %v2861 = vunpack.c.h.b16 %v900
    %v2862 = vunpack.c.l.b16 %v901
    %v2863 = vunpack.c.l.b16 %v902
    %v2864 = vunpack.c.h.b16 %v902
    %v2865 = vunpack.c.l.b16 %v903
    %v2866 = vunpack.c.h.b16 %v903
    %v2867 = vunpack.c.l.b16 %v904
    %v2868 = vunpack.c.l.b16 %v905
    %v2869 = vunpack.c.h.b16 %v905
    %v2870 = vunpack.c.l.b16 %v906
    %v2871 = vunpack.c.h.b16 %v906
    %v2872 = vunpack.c.l.b16 %v907
    %v2873 = vunpack.c.l.b16 %v908
    %v2874 = vunpack.c.h.b16 %v908
    %v2875 = vunpack.c.l.b16 %v909
    %v2876 = vunpack.c.h.b16 %v909
    %v2877 = vunpack.c.l.b16 %v910
    %v2878 = vunpack.c.l.b16 %v911
    %v2879 = vunpack.c.h.b16 %v911
    %v2880 = vunpack.c.l.b16 %v912
    %v2881 = vunpack.c.h.b16 %v912
    %v2882 = vunpack.c.l.b16 %v913
    %v2883 = vunpack.c.l.b16 %v914
    %v2884 = vunpack.c.h.b16 %v914
    %v2885 = vunpack.c.l.b16 %v915
    %v2886 = vunpack.c.h.b16 %v915
    %v2887 = vunpack.c.l.b16 %v916
    %v2888 = vunpack.c.l.b16 %v917
    %v2889 = vunpack.c.h.b16 %v917
    %v2890 = vunpack.c.l.b16 %v918
    %v2891 = vunpack.c.h.b16 %v918
    %v2892 = vunpack.c.l.b16 %v919
    %v2893 = vunpack.c.l.b16 %v920
    %v2894 = vunpack.c.h.b16 %v920
    %v2895 = vunpack.c.l.b16 %v921
    %v2896 = vunpack.c.h.b16 %v921
    %v2897 = vunpack.c.l.b16 %v922
    %v2898 = vunpack.c.l.b16 %v923
    %v2899 = vunpack.c.h.b16 %v923
    %v2900 = vunpack.c.l.b16 %v924
    %v2901 = vunpack.c.h.b16 %v924
    %v2902 = vunpack.c.l.b16 %v925
    %v2903 = vunpack.c.l.b16 %v926
    %v2904 = vunpack.c.h.b16 %v926
    %v2905 = vunpack.c.l.b16 %v927
    %v2906 = vunpack.c.h.b16 %v927
    %v2907 = vunpack.c.l.b16 %v928
    %v2908 = vunpack.c.l.b16 %v929
    %v2909 = vunpack.c.h.b16 %v929
    %v2910 = vunpack.c.l.b16 %v930
    %v2911 = vunpack.c.h.b16 %v930
    %v2912 = vunpack.c.l.b16 %v931
    %v2913 = vunpack.c.l.b16 %v932
    %v2914 = vunpack.c.h.b16 %v932
    %v2915 = vunpack.c.l.b16 %v933
    %v2916 = vunpack.c.h.b16 %v933
    %v2917 = vunpack.c.l.b16 %v934
    %v2918 = vunpack.c.l.b16 %v935
    %v2919 = vunpack.c.h.b16 %v935
    %v2920 = vunpack.c.l.b16 %v936
    %v2921 = vunpack.c.h.b16 %v936
    %v2922 = vunpack.c.l.b16 %v937
    %v2923 = vunpack.c.l.b16 %v938
    %v2924 = vunpack.c.h.b16 %v938
    %v2925 = vunpack.c.l.b16 %v939
    %v2926 = vunpack.c.h.b16 %v939
    %v2927 = vunpack.c.l.b16 %v940
    %v2928 = vunpack.c.l.b16 %v941
    %v2929 = vunpack.c.h.b16 %v941
    %v2930 = vunpack.c.l.b16 %v942
    %v2931 = vunpack.c.h.b16 %v942
    %v2932 = vunpack.c.l.b16 %v943
    %v2933 = vpack.c.b16 %v2658, %v2653
    %v2934 = vpack.c.b16 %v2659, %v2654
    %v2935 = vpack.c.b16 %v2660, %v2655
    %v2936 = vpack.c.b16 %v2661, %v2656
    %v2937 = vpack.c.b16 %v2662, %v2657
    %v2938 = vpack.c.b16 %v2668, %v2663
    %v2939 = vpack.c.b16 %v2669, %v2664
    %v2940 = vpack.c.b16 %v2670, %v2665
    %v2941 = vpack.c.b16 %v2671, %v2666
    %v2942 = vpack.c.b16 %v2672, %v2667
    %v2943 = vpack.c.b16 %v2678, %v2673
    %v2944 = vpack.c.b16 %v2679, %v2674
    %v2945 = vpack.c.b16 %v2680, %v2675
    %v2946 = vpack.c.b16 %v2681, %v2676
    %v2947 = vpack.c.b16 %v2682, %v2677
    %v2948 = vpack.c.b16 %v2688, %v2683
    %v2949 = vpack.c.b16 %v2689, %v2684
    %v2950 = vpack.c.b16 %v2690, %v2685
    %v2951 = vpack.c.b16 %v2691, %v2686
    %v2952 = vpack.c.b16 %v2692, %v2687
    %v2953 = vpack.c.b16 %v2698, %v2693
    %v2954 = vpack.c.b16 %v2699, %v2694
    %v2955 = vpack.c.b16 %v2700, %v2695
    %v2956 = vpack.c.b16 %v2701, %v2696
    %v2957 = vpack.c.b16 %v2702, %v2697
    %v2958 = vpack.c.b16 %v2708, %v2703
    %v2959 = vpack.c.b16 %v2709, %v2704
    %v2960 = vpack.c.b16 %v2710, %v2705
    %v2961 = vpack.c.b16 %v2711, %v2706
    %v2962 = vpack.c.b16 %v2712, %v2707
    %v2963 = vpack.c.b16 %v2718, %v2713
    %v2964 = vpack.c.b16 %v2719, %v2714
    %v2965 = vpack.c.b16 %v2720, %v2715
    %v2966 = vpack.c.b16 %v2721, %v2716
    %v2967 = vpack.c.b16 %v2722, %v2717
    %v2968 = vpack.c.b16 %v2728, %v2723
    %v2969 = vpack.c.b16 %v2729, %v2724
    %v2970 = vpack.c.b16 %v2730, %v2725
    %v2971 = vpack.c.b16 %v2731, %v2726
    %v2972 = vpack.c.b16 %v2732, %v2727
    %v2973 = vpack.c.b16 %v2738, %v2733
    %v2974 = vpack.c.b16 %v2739, %v2734
    %v2975 = vpack.c.b16 %v2740, %v2735
    %v2976 = vpack.c.b16 %v2741, %v2736
    %v2977 = vpack.c.b16 %v2742, %v2737
    %v2978 = vpack.c.b16 %v2748, %v2743
    %v2979 = vpack.c.b16 %v2749, %v2744
    %v2980 = vpack.c.b16 %v2750, %v2745
    %v2981 = vpack.c.b16 %v2751, %v2746
    %v2982 = vpack.c.b16 %v2752, %v2747
    %v2983 = vpack.c.b16 %v2758, %v2753
    %v2984 = vpack.c.b16 %v2759, %v2754
    %v2985 = vpack.c.b16 %v2760, %v2755
    %v2986 = vpack.c.b16 %v2761, %v2756
    %v2987 = vpack.c.b16 %v2762, %v2757
    %v2988 = vpack.c.b16 %v2768, %v2763
    %v2989 = vpack.c.b16 %v2769, %v2764
    %v2990 = vpack.c.b16 %v2770, %v2765
    %v2991 = vpack.c.b16 %v2771, %v2766
    %v2992 = vpack.c.b16 %v2772, %v2767
    %v2993 = vpack.c.b16 %v2778, %v2773
    %v2994 = vpack.c.b16 %v2779, %v2774
    %v2995 = vpack.c.b16 %v2780, %v2775
    %v2996 = vpack.c.b16 %v2781, %v2776
    %v2997 = vpack.c.b16 %v2782, %v2777
    %v2998 = vpack.c.b16 %v2788, %v2783
    %v2999 = vpack.c.b16 %v2789, %v2784
    %v3000 = vpack.c.b16 %v2790, %v2785
    %v3001 = vpack.c.b16 %v2791, %v2786
    %v3002 = vpack.c.b16 %v2792, %v2787
    %v3003 = vpack.c.b16 %v2798, %v2793
    %v3004 = vpack.c.b16 %v2799, %v2794
    %v3005 = vpack.c.b16 %v2800, %v2795
    %v3006 = vpack.c.b16 %v2801, %v2796
    %v3007 = vpack.c.b16 %v2802, %v2797
    %v3008 = vpack.c.b16 %v2808, %v2803
    %v3009 = vpack.c.b16 %v2809, %v2804
    %v3010 = vpack.c.b16 %v2810, %v2805
    %v3011 = vpack.c.b16 %v2811, %v2806
    %v3012 = vpack.c.b16 %v2812, %v2807
    %v3013 = vpack.c.b16 %v2818, %v2813
    %v3014 = vpack.c.b16 %v2819, %v2814
    %v3015 = vpack.c.b16 %v2820, %v2815
    %v3016 = vpack.c.b16 %v2821, %v2816
    %v3017 = vpack.c.b16 %v2822, %v2817
    %v3018 = vpack.c.b16 %v2828, %v2823
    %v3019 = vpack.c.b16 %v2829, %v2824
    %v3020 = vpack.c.b16 %v2830, %v2825
    %v3021 = vpack.c.b16 %v2831, %v2826
    %v3022 = vpack.c.b16 %v2832, %v2827
    %v3023 = vpack.c.b16 %v2838, %v2833
    %v3024 = vpack.c.b16 %v2839, %v2834
    %v3025 = vpack.c.b16 %v2840, %v2835
    %v3026 = vpack.c.b16 %v2841, %v2836
    %v3027 = vpack.c.b16 %v2842, %v2837
    %v3028 = vpack.c.b16 %v2848, %v2843
    %v3029 = vpack.c.b16 %v2849, %v2844
    %v3030 = vpack.c.b16 %v2850, %v2845
    %v3031 = vpack.c.b16 %v2851, %v2846
    %v3032 = vpack.c.b16 %v2852, %v2847
    %v3033 = vpack.c.b16 %v2858, %v2853
    %v3034 = vpack.c.b16 %v2859, %v2854
    %v3035 = vpack.c.b16 %v2860, %v2855
    %v3036 = vpack.c.b16 %v2861, %v2856
    %v3037 = vpack.c.b16 %v2862, %v2857
    %v3038 = vpack.c.b16 %v2868, %v2863
    %v3039 = vpack.c.b16 %v2869, %v2864
    %v3040 = vpack.c.b16 %v2870, %v2865
    %v3041 = vpack.c.b16 %v2871, %v2866
    %v3042 = vpack.c.b16 %v2872, %v2867
    %v3043 = vpack.c.b16 %v2878, %v2873
    %v3044 = vpack.c.b16 %v2879, %v2874
    %v3045 = vpack.c.b16 %v2880, %v2875
    %v3046 = vpack.c.b16 %v2881, %v2876
    %v3047 = vpack.c.b16 %v2882, %v2877
    %v3048 = vpack.c.b16 %v2888, %v2883
    %v3049 = vpack.c.b16 %v2889, %v2884
    %v3050 = vpack.c.b16 %v2890, %v2885
    %v3051 = vpack.c.b16 %v2891, %v2886
    %v3052 = vpack.c.b16 %v2892, %v2887
    %v3053 = vpack.c.b16 %v2898, %v2893
    %v3054 = vpack.c.b16 %v2899, %v2894
    %v3055 = vpack.c.b16 %v2900, %v2895
    %v3056 = vpack.c.b16 %v2901, %v2896
    %v3057 = vpack.c.b16 %v2902, %v2897
    %v3058 = vpack.c.b16 %v2908, %v2903
    %v3059 = vpack.c.b16 %v2909, %v2904
    %v3060 = vpack.c.b16 %v2910, %v2905
    %v3061 = vpack.c.b16 %v2911, %v2906
    %v3062 = vpack.c.b16 %v2912, %v2907
    %v3063 = vpack.c.b16 %v2918, %v2913
    %v3064 = vpack.c.b16 %v2919, %v2914
    %v3065 = vpack.c.b16 %v2920, %v2915
    %v3066 = vpack.c.b16 %v2921, %v2916
    %v3067 = vpack.c.b16 %v2922, %v2917
    %v3068 = vpack.c.b16 %v2928, %v2923
    %v3069 = vpack.c.b16 %v2929, %v2924
    %v3070 = vpack.c.b16 %v2930, %v2925
    %v3071 = vpack.c.b16 %v2931, %v2926
    %v3072 = vpack.c.b16 %v2932, %v2927
    %v3213 = vsel %vm2038, %v1160, 0
    %v3215 = vsel %vm2038, %v1164, 0
    %v3217 = vsel %vm2038, %v1168, 0
    %v3220 = vsel %vm2038, %v2472, 0
    %3222 = vmatprep.subr.bf16.mxu0 %v2934
    %3223 = vmatpush1.bf16.msra.mxu0 %v2933
    %3224 = vmatprep.subr.bf16.mxu0 %v2939
    %3225 = vmatpush1.bf16.msra.mxu0 %v2938
    %3226 = vmatprep.subr.bf16.mxu0 %v2944
    %3227 = vmatpush1.bf16.msra.mxu0 %v2943
    %3228 = vmatprep.subr.bf16.mxu0 %v2949
    %3229 = vmatpush1.bf16.msra.mxu0 %v2948
    %3230 = vmatprep.subr.bf16.mxu0 %v2954
    %3231 = vmatpush1.bf16.msra.mxu0 %v2953
    %3232 = vmatprep.subr.bf16.mxu0 %v2959
    %3233 = vmatpush1.bf16.msra.mxu0 %v2958
    %3234 = vmatprep.subr.bf16.mxu0 %v2964
    %3235 = vmatpush1.bf16.msra.mxu0 %v2963
    %3236 = vmatprep.subr.bf16.mxu0 %v2969
    %3237 = vmatpush1.bf16.msra.mxu0 %v2968
    %3238 = vmatprep.subr.bf16.mxu0 %v2974
    %3239 = vmatpush1.bf16.msra.mxu0 %v2973
    %3240 = vmatprep.subr.bf16.mxu0 %v2979
    %3241 = vmatpush1.bf16.msra.mxu0 %v2978
    %3242 = vmatprep.subr.bf16.mxu0 %v2984
    %3243 = vmatpush1.bf16.msra.mxu0 %v2983
    %3244 = vmatprep.subr.bf16.mxu0 %v2989
    %3245 = vmatpush1.bf16.msra.mxu0 %v2988
    %3246 = vmatprep.subr.bf16.mxu0 %v2994
    %3247 = vmatpush1.bf16.msra.mxu0 %v2993
    %3248 = vmatprep.subr.bf16.mxu0 %v2999
    %3249 = vmatpush1.bf16.msra.mxu0 %v2998
    %3250 = vmatprep.subr.bf16.mxu0 %v3004
    %3251 = vmatpush1.bf16.msra.mxu0 %v3003
    %3252 = vmatprep.subr.bf16.mxu0 %v3009
    %3253 = vmatpush1.bf16.msra.mxu0 %v3008
    %3254 = vmatprep.mubr.bf16.mxu0 %v1158
    %3255 = vmatmul.mubr.bf16.gmra.mrb[0].mxu0 %v1157
    %v3256 = vpop.f32.mrb[0].mxu0
    %v3257 = vadd.f32 %v2157, %v3256
    %v3258 = vpop.f32.mrb[0].mxu0
    %v3259 = vadd.f32 %v2159, %v3258
    %v3260 = vpop.f32.mrb[0].mxu0
    %v3261 = vadd.f32 %v2161, %v3260
    %v3262 = vpop.f32.mrb[0].mxu0
    %v3263 = vadd.f32 %v2163, %v3262
    %3264 = vmatprep.mubr.bf16.mxu0 %v1162
    %3265 = vmatmul.mubr.bf16.gmra.mrb[0].mxu0 %v1161
    %v3266 = vpop.f32.mrb[0].mxu0
    %v3267 = vadd.f32 %v2167, %v3266
    %v3268 = vpop.f32.mrb[0].mxu0
    %v3269 = vadd.f32 %v2169, %v3268
    %v3270 = vpop.f32.mrb[0].mxu0
    %v3271 = vadd.f32 %v2171, %v3270
    %v3272 = vpop.f32.mrb[0].mxu0
    %v3273 = vadd.f32 %v2173, %v3272
    %3274 = vmatprep.mubr.bf16.mxu0 %v1166
    %3275 = vmatmul.mubr.bf16.gmra.mrb[0].mxu0 %v1165
    %v3276 = vpop.f32.mrb[0].mxu0
    %v3277 = vadd.f32 %v2177, %v3276
    %v3278 = vpop.f32.mrb[0].mxu0
    %v3279 = vadd.f32 %v2179, %v3278
    %v3280 = vpop.f32.mrb[0].mxu0
    %v3281 = vadd.f32 %v2181, %v3280
    %v3282 = vpop.f32.mrb[0].mxu0
    %v3283 = vadd.f32 %v2183, %v3282
    %3284 = vmatprep.mubr.bf16.mxu0 %v2470
    %3285 = vmatmul.mubr.bf16.gmra.mrb[0].mxu0 %v2469
    %v3286 = vpop.f32.mrb[0].mxu0
    %v3287 = vadd.f32 %v2187, %v3286
    %v3288 = vpop.f32.mrb[0].mxu0
    %v3289 = vadd.f32 %v2189, %v3288
    %v3290 = vpop.f32.mrb[0].mxu0
    %v3291 = vpop.f32.mrb[0].mxu0
    %3292 = vdwg.mxu0
    %3293 = vmatprep.subr.bf16.mxu0 %v3014
    %3294 = vmatpush1.bf16.msra.mxu0 %v3013
    %3295 = vmatprep.subr.bf16.mxu0 %v3019
    %3296 = vmatpush1.bf16.msra.mxu0 %v3018
    %3297 = vmatprep.subr.bf16.mxu0 %v3024
    %3298 = vmatpush1.bf16.msra.mxu0 %v3023
    %3299 = vmatprep.subr.bf16.mxu0 %v3029
    %3300 = vmatpush1.bf16.msra.mxu0 %v3028
    %3301 = vmatprep.subr.bf16.mxu0 %v3034
    %3302 = vmatpush1.bf16.msra.mxu0 %v3033
    %3303 = vmatprep.subr.bf16.mxu0 %v3039
    %3304 = vmatpush1.bf16.msra.mxu0 %v3038
    %3305 = vmatprep.subr.bf16.mxu0 %v3044
    %3306 = vmatpush1.bf16.msra.mxu0 %v3043
    %3307 = vmatprep.subr.bf16.mxu0 %v3049
    %3308 = vmatpush1.bf16.msra.mxu0 %v3048
    %3309 = vmatprep.subr.bf16.mxu0 %v3054
    %3310 = vmatpush1.bf16.msra.mxu0 %v3053
    %3311 = vmatprep.subr.bf16.mxu0 %v3059
    %3312 = vmatpush1.bf16.msra.mxu0 %v3058
    %3313 = vmatprep.subr.bf16.mxu0 %v3064
    %3314 = vmatpush1.bf16.msra.mxu0 %v3063
    %3315 = vmatprep.subr.bf16.mxu0 %v3069
    %3316 = vmatpush1.bf16.msra.mxu0 %v3068
    %3317 = vmatprep.subr.bf16.mxu0 0
    %3318 = vmatpush1.bf16.msra.mxu0 0
    %3319 = vmatprep.subr.bf16.mxu0 0
    %3320 = vmatpush1.bf16.msra.mxu0 0
    %3321 = vmatprep.subr.bf16.mxu0 0
    %3322 = vmatpush1.bf16.msra.mxu0 0
    %3323 = vmatprep.subr.bf16.mxu0 0
    %3324 = vmatpush1.bf16.msra.mxu0 0
    %3325 = vmatprep.mubr.bf16.mxu0 %v3213
    %3326 = vmatmul.mubr.bf16.gmra.mrb[0].mxu0 %v1159
    %v3327 = vpop.f32.mrb[0].mxu0
    %v3328 = vadd.f32 %v3257, %v3327
    %v3329 = vpop.f32.mrb[0].mxu0
    %v3330 = vadd.f32 %v3259, %v3329
    %v3331 = vpop.f32.mrb[0].mxu0
    %v3332 = vadd.f32 %v3261, %v3331
    %v3333 = vpop.f32.mrb[0].mxu0
    %v3334 = vadd.f32 %v3263, %v3333
    %3335 = vmatprep.mubr.bf16.mxu0 %v3215
    %3336 = vmatmul.mubr.bf16.gmra.mrb[0].mxu0 %v1163
    %v3337 = vpop.f32.mrb[0].mxu0
    %v3338 = vadd.f32 %v3267, %v3337
    %v3339 = vpop.f32.mrb[0].mxu0
    %v3340 = vadd.f32 %v3269, %v3339
    %v3341 = vpop.f32.mrb[0].mxu0
    %v3342 = vadd.f32 %v3271, %v3341
    %v3343 = vpop.f32.mrb[0].mxu0
    %v3344 = vadd.f32 %v3273, %v3343
    %3345 = vmatprep.mubr.bf16.mxu0 %v3217
    %3346 = vmatmul.mubr.bf16.gmra.mrb[0].mxu0 %v1167
    %v3347 = vpop.f32.mrb[0].mxu0
    %v3348 = vadd.f32 %v3277, %v3347
    %v3349 = vpop.f32.mrb[0].mxu0
    %v3350 = vadd.f32 %v3279, %v3349
    %v3351 = vpop.f32.mrb[0].mxu0
    %v3352 = vadd.f32 %v3281, %v3351
    %v3353 = vpop.f32.mrb[0].mxu0
    %v3354 = vadd.f32 %v3283, %v3353
    %3355 = vmatprep.mubr.bf16.mxu0 %v3220
    %3356 = vmatmul.mubr.bf16.gmra.mrb[0].mxu0 %v2471
    %v3357 = vpop.f32.mrb[0].mxu0
    %v3358 = vadd.f32 %v3287, %v3357
    %v3359 = vpop.f32.mrb[0].mxu0
    %v3360 = vadd.f32 %v3289, %v3359
    %v3361 = vpop.f32.mrb[0].mxu0
    %v3362 = vpop.f32.mrb[0].mxu0
    %3363 = vdwg.mxu0
    %3364 = vmatprep.subr.bf16.mxu0 %v2936
    %3365 = vmatpush1.bf16.msra.mxu0 %v2935
    %3366 = vmatprep.subr.bf16.mxu0 %v2941
    %3367 = vmatpush1.bf16.msra.mxu0 %v2940
    %3368 = vmatprep.subr.bf16.mxu0 %v2946
    %3369 = vmatpush1.bf16.msra.mxu0 %v2945
    %3370 = vmatprep.subr.bf16.mxu0 %v2951
    %3371 = vmatpush1.bf16.msra.mxu0 %v2950
    %3372 = vmatprep.subr.bf16.mxu0 %v2956
    %3373 = vmatpush1.bf16.msra.mxu0 %v2955
    %3374 = vmatprep.subr.bf16.mxu0 %v2961
    %3375 = vmatpush1.bf16.msra.mxu0 %v2960
    %3376 = vmatprep.subr.bf16.mxu0 %v2966
    %3377 = vmatpush1.bf16.msra.mxu0 %v2965
    %3378 = vmatprep.subr.bf16.mxu0 %v2971
    %3379 = vmatpush1.bf16.msra.mxu0 %v2970
    %3380 = vmatprep.subr.bf16.mxu0 %v2976
    %3381 = vmatpush1.bf16.msra.mxu0 %v2975
    %3382 = vmatprep.subr.bf16.mxu0 %v2981
    %3383 = vmatpush1.bf16.msra.mxu0 %v2980
    %3384 = vmatprep.subr.bf16.mxu0 %v2986
    %3385 = vmatpush1.bf16.msra.mxu0 %v2985
    %3386 = vmatprep.subr.bf16.mxu0 %v2991
    %3387 = vmatpush1.bf16.msra.mxu0 %v2990
    %3388 = vmatprep.subr.bf16.mxu0 %v2996
    %3389 = vmatpush1.bf16.msra.mxu0 %v2995
    %3390 = vmatprep.subr.bf16.mxu0 %v3001
    %3391 = vmatpush1.bf16.msra.mxu0 %v3000
    %3392 = vmatprep.subr.bf16.mxu0 %v3006
    %3393 = vmatpush1.bf16.msra.mxu0 %v3005
    %3394 = vmatprep.subr.bf16.mxu0 %v3011
    %3395 = vmatpush1.bf16.msra.mxu0 %v3010
    %3396 = vmatprep.mubr.bf16.mxu0 %v1158
    %3397 = vmatmul.mubr.bf16.gmra.mrb[0].mxu0 %v1157
    %v3398 = vpop.f32.mrb[0].mxu0
    %v3399 = vadd.f32 %v2299, %v3398
    %v3400 = vpop.f32.mrb[0].mxu0
    %v3401 = vadd.f32 %v2301, %v3400
    %v3402 = vpop.f32.mrb[0].mxu0
    %v3403 = vadd.f32 %v2303, %v3402
    %v3404 = vpop.f32.mrb[0].mxu0
    %v3405 = vadd.f32 %v2305, %v3404
    %3406 = vmatprep.mubr.bf16.mxu0 %v1162
    %3407 = vmatmul.mubr.bf16.gmra.mrb[0].mxu0 %v1161
    %v3408 = vpop.f32.mrb[0].mxu0
    %v3409 = vadd.f32 %v2309, %v3408
    %v3410 = vpop.f32.mrb[0].mxu0
    %v3411 = vadd.f32 %v2311, %v3410
    %v3412 = vpop.f32.mrb[0].mxu0
    %v3413 = vadd.f32 %v2313, %v3412
    %v3414 = vpop.f32.mrb[0].mxu0
    %v3415 = vadd.f32 %v2315, %v3414
    %3416 = vmatprep.mubr.bf16.mxu0 %v1166
    %3417 = vmatmul.mubr.bf16.gmra.mrb[0].mxu0 %v1165
    %v3418 = vpop.f32.mrb[0].mxu0
    %v3419 = vadd.f32 %v2319, %v3418
    %v3420 = vpop.f32.mrb[0].mxu0
    %v3421 = vadd.f32 %v2321, %v3420
    %v3422 = vpop.f32.mrb[0].mxu0
    %v3423 = vadd.f32 %v2323, %v3422
    %v3424 = vpop.f32.mrb[0].mxu0
    %v3425 = vadd.f32 %v2325, %v3424
    %3426 = vmatprep.mubr.bf16.mxu0 %v2470
    %3427 = vmatmul.mubr.bf16.gmra.mrb[0].mxu0 %v2469
    %v3428 = vpop.f32.mrb[0].mxu0
    %v3429 = vadd.f32 %v2329, %v3428
    %v3430 = vpop.f32.mrb[0].mxu0
    %v3431 = vadd.f32 %v2331, %v3430
    %v3432 = vpop.f32.mrb[0].mxu0
    %v3433 = vpop.f32.mrb[0].mxu0
    %3434 = vdwg.mxu0
    %3435 = vmatprep.subr.bf16.mxu0 %v3016
    %3436 = vmatpush1.bf16.msra.mxu0 %v3015
    %3437 = vmatprep.subr.bf16.mxu0 %v3021
    %3438 = vmatpush1.bf16.msra.mxu0 %v3020
    %3439 = vmatprep.subr.bf16.mxu0 %v3026
    %3440 = vmatpush1.bf16.msra.mxu0 %v3025
    %3441 = vmatprep.subr.bf16.mxu0 %v3031
    %3442 = vmatpush1.bf16.msra.mxu0 %v3030
    %3443 = vmatprep.subr.bf16.mxu0 %v3036
    %3444 = vmatpush1.bf16.msra.mxu0 %v3035
    %3445 = vmatprep.subr.bf16.mxu0 %v3041
    %3446 = vmatpush1.bf16.msra.mxu0 %v3040
    %3447 = vmatprep.subr.bf16.mxu0 %v3046
    %3448 = vmatpush1.bf16.msra.mxu0 %v3045
    %3449 = vmatprep.subr.bf16.mxu0 %v3051
    %3450 = vmatpush1.bf16.msra.mxu0 %v3050
    %3451 = vmatprep.subr.bf16.mxu0 %v3056
    %3452 = vmatpush1.bf16.msra.mxu0 %v3055
    %3453 = vmatprep.subr.bf16.mxu0 %v3061
    %3454 = vmatpush1.bf16.msra.mxu0 %v3060
    %3455 = vmatprep.subr.bf16.mxu0 %v3066
    %3456 = vmatpush1.bf16.msra.mxu0 %v3065
    %3457 = vmatprep.subr.bf16.mxu0 %v3071
    %3458 = vmatpush1.bf16.msra.mxu0 %v3070
    %3459 = vmatprep.subr.bf16.mxu0 0
    %3460 = vmatpush1.bf16.msra.mxu0 0
    %3461 = vmatprep.subr.bf16.mxu0 0
    %3462 = vmatpush1.bf16.msra.mxu0 0
    %3463 = vmatprep.subr.bf16.mxu0 0
    %3464 = vmatpush1.bf16.msra.mxu0 0
    %3465 = vmatprep.subr.bf16.mxu0 0
    %3466 = vmatpush1.bf16.msra.mxu0 0
    %3467 = vmatprep.mubr.bf16.mxu0 %v3213
    %3468 = vmatmul.mubr.bf16.gmra.mrb[0].mxu0 %v1159
    %v3469 = vpop.f32.mrb[0].mxu0
    %v3470 = vadd.f32 %v3399, %v3469
    %v3471 = vpop.f32.mrb[0].mxu0
    %v3472 = vadd.f32 %v3401, %v3471
    %v3473 = vpop.f32.mrb[0].mxu0
    %v3474 = vadd.f32 %v3403, %v3473
    %v3475 = vpop.f32.mrb[0].mxu0
    %v3476 = vadd.f32 %v3405, %v3475
    %3477 = vmatprep.mubr.bf16.mxu0 %v3215
    %3478 = vmatmul.mubr.bf16.gmra.mrb[0].mxu0 %v1163
    %v3479 = vpop.f32.mrb[0].mxu0
    %v3480 = vadd.f32 %v3409, %v3479
    %v3481 = vpop.f32.mrb[0].mxu0
    %v3482 = vadd.f32 %v3411, %v3481
    %v3483 = vpop.f32.mrb[0].mxu0
    %v3484 = vadd.f32 %v3413, %v3483
    %v3485 = vpop.f32.mrb[0].mxu0
    %v3486 = vadd.f32 %v3415, %v3485
    %3487 = vmatprep.mubr.bf16.mxu0 %v3217
    %3488 = vmatmul.mubr.bf16.gmra.mrb[0].mxu0 %v1167
    %v3489 = vpop.f32.mrb[0].mxu0
    %v3490 = vadd.f32 %v3419, %v3489
    %v3491 = vpop.f32.mrb[0].mxu0
    %v3492 = vadd.f32 %v3421, %v3491
    %v3493 = vpop.f32.mrb[0].mxu0
    %v3494 = vadd.f32 %v3423, %v3493
    %v3495 = vpop.f32.mrb[0].mxu0
    %v3496 = vadd.f32 %v3425, %v3495
    %3497 = vmatprep.mubr.bf16.mxu0 %v3220
    %3498 = vmatmul.mubr.bf16.gmra.mrb[0].mxu0 %v2471
    %v3499 = vpop.f32.mrb[0].mxu0
    %v3500 = vadd.f32 %v3429, %v3499
    %v3501 = vpop.f32.mrb[0].mxu0
    %v3502 = vadd.f32 %v3431, %v3501
    %v3503 = vpop.f32.mrb[0].mxu0
    %v3504 = vpop.f32.mrb[0].mxu0
    %3505 = vdwg.mxu0
    %3506 = vmatprep.subr.bf16.mxu0 0
    %3507 = vmatpush1.bf16.msra.mxu0 %v2937
    %3508 = vmatprep.subr.bf16.mxu0 0
    %3509 = vmatpush1.bf16.msra.mxu0 %v2942
    %3510 = vmatprep.subr.bf16.mxu0 0
    %3511 = vmatpush1.bf16.msra.mxu0 %v2947
    %3512 = vmatprep.subr.bf16.mxu0 0
    %3513 = vmatpush1.bf16.msra.mxu0 %v2952
    %3514 = vmatprep.subr.bf16.mxu0 0
    %3515 = vmatpush1.bf16.msra.mxu0 %v2957
    %3516 = vmatprep.subr.bf16.mxu0 0
    %3517 = vmatpush1.bf16.msra.mxu0 %v2962
    %3518 = vmatprep.subr.bf16.mxu0 0
    %3519 = vmatpush1.bf16.msra.mxu0 %v2967
    %3520 = vmatprep.subr.bf16.mxu0 0
    %3521 = vmatpush1.bf16.msra.mxu0 %v2972
    %3522 = vmatprep.subr.bf16.mxu0 0
    %3523 = vmatpush1.bf16.msra.mxu0 %v2977
    %3524 = vmatprep.subr.bf16.mxu0 0
    %3525 = vmatpush1.bf16.msra.mxu0 %v2982
    %3526 = vmatprep.subr.bf16.mxu0 0
    %3527 = vmatpush1.bf16.msra.mxu0 %v2987
    %3528 = vmatprep.subr.bf16.mxu0 0
    %3529 = vmatpush1.bf16.msra.mxu0 %v2992
    %3530 = vmatprep.subr.bf16.mxu0 0
    %3531 = vmatpush1.bf16.msra.mxu0 %v2997
    %3532 = vmatprep.subr.bf16.mxu0 0
    %3533 = vmatpush1.bf16.msra.mxu0 %v3002
    %3534 = vmatprep.subr.bf16.mxu0 0
    %3535 = vmatpush1.bf16.msra.mxu0 %v3007
    %3536 = vmatprep.subr.bf16.mxu0 0
    %3537 = vmatpush1.bf16.msra.mxu0 %v3012
    %3538 = vmatprep.mubr.bf16.mxu0 %v1158
    %3539 = vmatmul.mubr.bf16.gmra.mrb[0].mxu0 %v1157
    %v3540 = vpop.f32.mrb[0].mxu0
    %v3541 = vadd.f32 %v2434, %v3540
    %v3542 = vpop.f32.mrb[0].mxu0
    %v3543 = vpop.f32.mrb[0].mxu0
    %v3544 = vadd.f32 %v2437, %v3543
    %v3545 = vpop.f32.mrb[0].mxu0
    %3546 = vmatprep.mubr.bf16.mxu0 %v1162
    %3547 = vmatmul.mubr.bf16.gmra.mrb[0].mxu0 %v1161
    %v3548 = vpop.f32.mrb[0].mxu0
    %v3549 = vadd.f32 %v2442, %v3548
    %v3550 = vpop.f32.mrb[0].mxu0
    %v3551 = vpop.f32.mrb[0].mxu0
    %v3552 = vadd.f32 %v2445, %v3551
    %v3553 = vpop.f32.mrb[0].mxu0
    %3554 = vmatprep.mubr.bf16.mxu0 %v1166
    %3555 = vmatmul.mubr.bf16.gmra.mrb[0].mxu0 %v1165
    %v3556 = vpop.f32.mrb[0].mxu0
    %v3557 = vadd.f32 %v2450, %v3556
    %v3558 = vpop.f32.mrb[0].mxu0
    %v3559 = vpop.f32.mrb[0].mxu0
    %v3560 = vadd.f32 %v2453, %v3559
    %v3561 = vpop.f32.mrb[0].mxu0
    %3562 = vmatprep.mubr.bf16.mxu0 %v2470
    %3563 = vmatmul.mubr.bf16.gmra.mrb[0].mxu0 %v2469
    %v3564 = vpop.f32.mrb[0].mxu0
    %v3565 = vadd.f32 %v2458, %v3564
    %v3566 = vpop.f32.mrb[0].mxu0
    %v3567 = vpop.f32.mrb[0].mxu0
    %v3568 = vpop.f32.mrb[0].mxu0
    %3569 = vdwg.mxu0
    %3570 = vmatprep.subr.bf16.mxu0 0
    %3571 = vmatpush1.bf16.msra.mxu0 %v3017
    %3572 = vmatprep.subr.bf16.mxu0 0
    %3573 = vmatpush1.bf16.msra.mxu0 %v3022
    %3574 = vmatprep.subr.bf16.mxu0 0
    %3575 = vmatpush1.bf16.msra.mxu0 %v3027
    %3576 = vmatprep.subr.bf16.mxu0 0
    %3577 = vmatpush1.bf16.msra.mxu0 %v3032
    %3578 = vmatprep.subr.bf16.mxu0 0
    %3579 = vmatpush1.bf16.msra.mxu0 %v3037
    %3580 = vmatprep.subr.bf16.mxu0 0
    %3581 = vmatpush1.bf16.msra.mxu0 %v3042
    %3582 = vmatprep.subr.bf16.mxu0 0
    %3583 = vmatpush1.bf16.msra.mxu0 %v3047
    %3584 = vmatprep.subr.bf16.mxu0 0
    %3585 = vmatpush1.bf16.msra.mxu0 %v3052
    %3586 = vmatprep.subr.bf16.mxu0 0
    %3587 = vmatpush1.bf16.msra.mxu0 %v3057
    %3588 = vmatprep.subr.bf16.mxu0 0
    %3589 = vmatpush1.bf16.msra.mxu0 %v3062
    %3590 = vmatprep.subr.bf16.mxu0 0
    %3591 = vmatpush1.bf16.msra.mxu0 %v3067
    %3592 = vmatprep.subr.bf16.mxu0 0
    %3593 = vmatpush1.bf16.msra.mxu0 %v3072
    %3594 = vmatprep.subr.bf16.mxu0 0
    %3595 = vmatpush1.bf16.msra.mxu0 0
    %3596 = vmatprep.subr.bf16.mxu0 0
    %3597 = vmatpush1.bf16.msra.mxu0 0
    %3598 = vmatprep.subr.bf16.mxu0 0
    %3599 = vmatpush1.bf16.msra.mxu0 0
    %3600 = vmatprep.subr.bf16.mxu0 0
    %3601 = vmatpush1.bf16.msra.mxu0 0
    %3602 = vmatprep.mubr.bf16.mxu0 %v3213
    %3603 = vmatmul.mubr.bf16.gmra.mrb[0].mxu0 %v1159
    %v3604 = vpop.f32.mrb[0].mxu0
    %v3605 = vadd.f32 %v3541, %v3604
    %v3606 = vpop.f32.mrb[0].mxu0
    %v3607 = vpop.f32.mrb[0].mxu0
    %v3608 = vadd.f32 %v3544, %v3607
    %v3609 = vpop.f32.mrb[0].mxu0
    %3610 = vmatprep.mubr.bf16.mxu0 %v3215
    %3611 = vmatmul.mubr.bf16.gmra.mrb[0].mxu0 %v1163
    %v3612 = vpop.f32.mrb[0].mxu0
    %v3613 = vadd.f32 %v3549, %v3612
    %v3614 = vpop.f32.mrb[0].mxu0
    %v3615 = vpop.f32.mrb[0].mxu0
    %v3616 = vadd.f32 %v3552, %v3615
    %v3617 = vpop.f32.mrb[0].mxu0
    %3618 = vmatprep.mubr.bf16.mxu0 %v3217
    %3619 = vmatmul.mubr.bf16.gmra.mrb[0].mxu0 %v1167
    %v3620 = vpop.f32.mrb[0].mxu0
    %v3621 = vadd.f32 %v3557, %v3620
    %v3622 = vpop.f32.mrb[0].mxu0
    %v3623 = vpop.f32.mrb[0].mxu0
    %v3624 = vadd.f32 %v3560, %v3623
    %v3625 = vpop.f32.mrb[0].mxu0
    %3626 = vmatprep.mubr.bf16.mxu0 %v3220
    %3627 = vmatmul.mubr.bf16.gmra.mrb[0].mxu0 %v2471
    %v3628 = vpop.f32.mrb[0].mxu0
    %v3629 = vadd.f32 %v3565, %v3628
    %v3630 = vpop.f32.mrb[0].mxu0
    %v3631 = vpop.f32.mrb[0].mxu0
    %v3632 = vpop.f32.mrb[0].mxu0
    %3633 = vdwg.mxu0
    %v3634 = vld [vmem:[#allocation2] sm:$0xee]
    %v3635 = vld [vmem:[#allocation2 + $0x8] sm:$0xee]
    %s3636 = scalar_lea.vmem %s3, 2240
    %v3637 = vld [vmem:[%s3636] sm:$0xff]
    %v3638 = vld [vmem:[%s3636 + $0x8] sm:$0xff]
    %v3639 = vld [vmem:[%s3636 + $0x10] sm:$0xf]
    %v3640 = vld [vmem:[%s3636 + $0x14] sm:$0xff]
    %v3641 = vld [vmem:[%s3636 + $0x1c] sm:$0xff]
    %v3642 = vld [vmem:[%s3636 + $0x24] sm:$0xf]
    %v3643 = vld [vmem:[%s3636 + $0x28] sm:$0xff]
    %v3644 = vld [vmem:[%s3636 + $0x30] sm:$0xff]
    %v3645 = vld [vmem:[%s3636 + $0x38] sm:$0xf]
    %v3646 = vld [vmem:[%s3636 + $0x3c] sm:$0xff]
    %v3647 = vld [vmem:[%s3636 + $0x44] sm:$0xff]
    %v3648 = vld [vmem:[%s3636 + $0x4c] sm:$0xf]
    %v3649 = vld [vmem:[%s3636 + $0x50] sm:$0xff]
    %v3650 = vld [vmem:[%s3636 + $0x58] sm:$0xff]
    %v3651 = vld [vmem:[%s3636 + $0x60] sm:$0xf]
    %v3652 = vld [vmem:[%s3636 + $0x64] sm:$0xff]
    %v3653 = vld [vmem:[%s3636 + $0x6c] sm:$0xff]
    %v3654 = vld [vmem:[%s3636 + $0x74] sm:$0xf]
    %v3655 = vld [vmem:[%s3636 + $0x78] sm:$0xff]
    %v3656 = vld [vmem:[%s3636 + $0x80] sm:$0xff]
    %v3657 = vld [vmem:[%s3636 + $0x88] sm:$0xf]
    %v3658 = vld [vmem:[%s3636 + $0x8c] sm:$0xff]
    %v3659 = vld [vmem:[%s3636 + $0x94] sm:$0xff]
    %v3660 = vld [vmem:[%s3636 + $0x9c] sm:$0xf]
    %v3661 = vld [vmem:[%s3636 + $0xa0] sm:$0xff]
    %v3662 = vld [vmem:[%s3636 + $0xa8] sm:$0xff]
    %v3663 = vld [vmem:[%s3636 + $0xb0] sm:$0xf]
    %v3664 = vld [vmem:[%s3636 + $0xb4] sm:$0xff]
    %v3665 = vld [vmem:[%s3636 + $0xbc] sm:$0xff]
    %v3666 = vld [vmem:[%s3636 + $0xc4] sm:$0xf]
    %v3667 = vld [vmem:[%s3636 + $0xc8] sm:$0xff]
    %v3668 = vld [vmem:[%s3636 + $0xd0] sm:$0xff]
    %v3669 = vld [vmem:[%s3636 + $0xd8] sm:$0xf]
    %v3670 = vld [vmem:[%s3636 + $0xdc] sm:$0xff]
    %v3671 = vld [vmem:[%s3636 + $0xe4] sm:$0xff]
    %v3672 = vld [vmem:[%s3636 + $0xec] sm:$0xf]
    %v3673 = vld [vmem:[%s3636 + $0xf0] sm:$0xff]
    %v3674 = vld [vmem:[%s3636 + $0xf8] sm:$0xff]
    %v3675 = vld [vmem:[%s3636 + $0x100] sm:$0xf]
    %v3676 = vld [vmem:[%s3636 + $0x104] sm:$0xff]
    %v3677 = vld [vmem:[%s3636 + $0x10c] sm:$0xff]
    %v3678 = vld [vmem:[%s3636 + $0x114] sm:$0xf]
    %v3679 = vld [vmem:[%s3636 + $0x118] sm:$0xff]
    %v3680 = vld [vmem:[%s3636 + $0x120] sm:$0xff]
    %v3681 = vld [vmem:[%s3636 + $0x128] sm:$0xf]
    %v3682 = vld [vmem:[%s3636 + $0x12c] sm:$0xff]
    %v3683 = vld [vmem:[%s3636 + $0x134] sm:$0xff]
    %v3684 = vld [vmem:[%s3636 + $0x13c] sm:$0xf]
    %v3685 = vld [vmem:[%s3636 + $0x140] sm:$0xff]
    %v3686 = vld [vmem:[%s3636 + $0x148] sm:$0xff]
    %v3687 = vld [vmem:[%s3636 + $0x150] sm:$0xf]
    %v3688 = vld [vmem:[%s3636 + $0x154] sm:$0xff]
    %v3689 = vld [vmem:[%s3636 + $0x15c] sm:$0xff]
    %v3690 = vld [vmem:[%s3636 + $0x164] sm:$0xf]
    %v3691 = vld [vmem:[%s3636 + $0x168] sm:$0xff]
    %v3692 = vld [vmem:[%s3636 + $0x170] sm:$0xff]
    %v3693 = vld [vmem:[%s3636 + $0x178] sm:$0xf]
    %v3694 = vld [vmem:[%s3636 + $0x17c] sm:$0xff]
    %v3695 = vld [vmem:[%s3636 + $0x184] sm:$0xff]
    %v3696 = vld [vmem:[%s3636 + $0x18c] sm:$0xf]
    %v3697 = vld [vmem:[%s3636 + $0x190] sm:$0xff]
    %v3698 = vld [vmem:[%s3636 + $0x198] sm:$0xff]
    %v3699 = vld [vmem:[%s3636 + $0x1a0] sm:$0xf]
    %v3700 = vld [vmem:[%s3636 + $0x1a4] sm:$0xff]
    %v3701 = vld [vmem:[%s3636 + $0x1ac] sm:$0xff]
    %v3702 = vld [vmem:[%s3636 + $0x1b4] sm:$0xf]
    %v3703 = vld [vmem:[%s3636 + $0x1b8] sm:$0xff]
    %v3704 = vld [vmem:[%s3636 + $0x1c0] sm:$0xff]
    %v3705 = vld [vmem:[%s3636 + $0x1c8] sm:$0xf]
    %v3706 = vld [vmem:[%s3636 + $0x1cc] sm:$0xff]
    %v3707 = vld [vmem:[%s3636 + $0x1d4] sm:$0xff]
    %v3708 = vld [vmem:[%s3636 + $0x1dc] sm:$0xf]
    %v3709 = vld [vmem:[%s3636 + $0x1e0] sm:$0xff]
    %v3710 = vld [vmem:[%s3636 + $0x1e8] sm:$0xff]
    %v3711 = vld [vmem:[%s3636 + $0x1f0] sm:$0xf]
    %v3712 = vld [vmem:[%s3636 + $0x1f4] sm:$0xff]
    %v3713 = vld [vmem:[%s3636 + $0x1fc] sm:$0xff]
    %v3714 = vld [vmem:[%s3636 + $0x204] sm:$0xf]
    %v3715 = vld [vmem:[%s3636 + $0x208] sm:$0xff]
    %v3716 = vld [vmem:[%s3636 + $0x210] sm:$0xff]
    %v3717 = vld [vmem:[%s3636 + $0x218] sm:$0xf]
    %v3718 = vld [vmem:[%s3636 + $0x21c] sm:$0xff]
    %v3719 = vld [vmem:[%s3636 + $0x224] sm:$0xff]
    %v3720 = vld [vmem:[%s3636 + $0x22c] sm:$0xf]
    %v3721 = vld [vmem:[%s3636 + $0x230] sm:$0xff]
    %v3722 = vld [vmem:[%s3636 + $0x238] sm:$0xff]
    %v3723 = vld [vmem:[%s3636 + $0x240] sm:$0xf]
    %v3724 = vld [vmem:[%s3636 + $0x244] sm:$0xff]
    %v3725 = vld [vmem:[%s3636 + $0x24c] sm:$0xff]
    %v3726 = vld [vmem:[%s3636 + $0x254] sm:$0xf]
    %v3727 = vld [vmem:[%s3636 + $0x258] sm:$0xff]
    %v3728 = vld [vmem:[%s3636 + $0x260] sm:$0xff]
    %v3729 = vld [vmem:[%s3636 + $0x268] sm:$0xf]
    %v3730 = vld [vmem:[%s3636 + $0x26c] sm:$0xff]
    %v3731 = vld [vmem:[%s3636 + $0x274] sm:$0xff]
    %v3732 = vld [vmem:[%s3636 + $0x27c] sm:$0xf]
    %v3733 = vld [vmem:[%s3636 + $0x280] sm:$0xff]
    %v3734 = vld [vmem:[%s3636 + $0x288] sm:$0xff]
    %v3735 = vld [vmem:[%s3636 + $0x290] sm:$0xf]
    %v3736 = vld [vmem:[%s3636 + $0x294] sm:$0xff]
    %v3737 = vld [vmem:[%s3636 + $0x29c] sm:$0xff]
    %v3738 = vld [vmem:[%s3636 + $0x2a4] sm:$0xf]
    %v3739 = vld [vmem:[%s3636 + $0x2a8] sm:$0xff]
    %v3740 = vld [vmem:[%s3636 + $0x2b0] sm:$0xff]
    %v3741 = vld [vmem:[%s3636 + $0x2b8] sm:$0xf]
    %v3742 = vld [vmem:[%s3636 + $0x2bc] sm:$0xff]
    %v3743 = vld [vmem:[%s3636 + $0x2c4] sm:$0xff]
    %v3744 = vld [vmem:[%s3636 + $0x2cc] sm:$0xf]
    %v3745 = vld [vmem:[%s3636 + $0x2d0] sm:$0xff]
    %v3746 = vld [vmem:[%s3636 + $0x2d8] sm:$0xff]
    %v3747 = vld [vmem:[%s3636 + $0x2e0] sm:$0xf]
    %v3748 = vld [vmem:[%s3636 + $0x2e4] sm:$0xff]
    %v3749 = vld [vmem:[%s3636 + $0x2ec] sm:$0xff]
    %v3750 = vld [vmem:[%s3636 + $0x2f4] sm:$0xf]
    %v3751 = vld [vmem:[%s3636 + $0x2f8] sm:$0xff]
    %v3752 = vld [vmem:[%s3636 + $0x300] sm:$0xff]
    %v3753 = vld [vmem:[%s3636 + $0x308] sm:$0xf]
    %v3754 = vld [vmem:[%s3636 + $0x30c] sm:$0xff]
    %v3755 = vld [vmem:[%s3636 + $0x314] sm:$0xff]
    %v3756 = vld [vmem:[%s3636 + $0x31c] sm:$0xf]
    %v3757 = vld [vmem:[%s3636 + $0x320] sm:$0xff]
    %v3758 = vld [vmem:[%s3636 + $0x328] sm:$0xff]
    %v3759 = vld [vmem:[%s3636 + $0x330] sm:$0xf]
    %v3760 = vld [vmem:[%s3636 + $0x334] sm:$0xff]
    %v3761 = vld [vmem:[%s3636 + $0x33c] sm:$0xff]
    %v3762 = vld [vmem:[%s3636 + $0x344] sm:$0xf]
    %v3763 = vld [vmem:[%s3636 + $0x348] sm:$0xff]
    %v3764 = vld [vmem:[%s3636 + $0x350] sm:$0xff]
    %v3765 = vld [vmem:[%s3636 + $0x358] sm:$0xf]
    %v3766 = vld [vmem:[%s3636 + $0x35c] sm:$0xff]
    %v3767 = vld [vmem:[%s3636 + $0x364] sm:$0xff]
    %v3768 = vld [vmem:[%s3636 + $0x36c] sm:$0xf]
    %v3769 = vld [vmem:[%s3636 + $0x370] sm:$0xff]
    %v3770 = vld [vmem:[%s3636 + $0x378] sm:$0xff]
    %v3771 = vld [vmem:[%s3636 + $0x380] sm:$0xf]
    %v3772 = vld [vmem:[%s3636 + $0x384] sm:$0xff]
    %v3773 = vld [vmem:[%s3636 + $0x38c] sm:$0xff]
    %v3774 = vld [vmem:[%s3636 + $0x394] sm:$0xf]
    %v3775 = vld [vmem:[%s3636 + $0x398] sm:$0xff]
    %v3776 = vld [vmem:[%s3636 + $0x3a0] sm:$0xff]
    %v3777 = vld [vmem:[%s3636 + $0x3a8] sm:$0xf]
    %v3778 = vld [vmem:[%s3636 + $0x3ac] sm:$0xff]
    %v3779 = vld [vmem:[%s3636 + $0x3b4] sm:$0xff]
    %v3780 = vld [vmem:[%s3636 + $0x3bc] sm:$0xf]
    %v3781 = vld [vmem:[%s3636 + $0x3c0] sm:$0xff]
    %v3782 = vld [vmem:[%s3636 + $0x3c8] sm:$0xff]
    %v3783 = vld [vmem:[%s3636 + $0x3d0] sm:$0xf]
    %v3784 = vld [vmem:[%s3636 + $0x3d4] sm:$0xff]
    %v3785 = vld [vmem:[%s3636 + $0x3dc] sm:$0xff]
    %v3786 = vld [vmem:[%s3636 + $0x3e4] sm:$0xf]
    %v3787 = vld [vmem:[%s3636 + $0x3e8] sm:$0xff]
    %v3788 = vld [vmem:[%s3636 + $0x3f0] sm:$0xff]
    %v3789 = vld [vmem:[%s3636 + $0x3f8] sm:$0xf]
    %v3790 = vld [vmem:[%s3636 + $0x3fc] sm:$0xff]
    %v3791 = vld [vmem:[%s3636 + $0x404] sm:$0xff]
    %v3792 = vld [vmem:[%s3636 + $0x40c] sm:$0xf]
    %v3793 = vld [vmem:[%s3636 + $0x410] sm:$0xff]
    %v3794 = vld [vmem:[%s3636 + $0x418] sm:$0xff]
    %v3795 = vld [vmem:[%s3636 + $0x420] sm:$0xf]
    %v3796 = vld [vmem:[%s3636 + $0x424] sm:$0xff]
    %v3797 = vld [vmem:[%s3636 + $0x42c] sm:$0xff]
    %v3798 = vld [vmem:[%s3636 + $0x434] sm:$0xf]
    %v3799 = vld [vmem:[%s3636 + $0x438] sm:$0xff]
    %v3800 = vld [vmem:[%s3636 + $0x440] sm:$0xff]
    %v3801 = vld [vmem:[%s3636 + $0x448] sm:$0xf]
    %v3802 = vld [vmem:[%s3636 + $0x44c] sm:$0xff]
    %v3803 = vld [vmem:[%s3636 + $0x454] sm:$0xff]
    %v3804 = vld [vmem:[%s3636 + $0x45c] sm:$0xf]
    %v3807 = vunpack.c.l.b16 %v3634
    %v3808 = vunpack.c.h.b16 %v3634
    %v3809 = vunpack.c.l.b16 %v3635
    %v3810 = vunpack.c.h.b16 %v3635
    %v3811 = vpack.c.b16 %v1133, %v3807
    %v3812 = vpack.c.b16 %v1134, %v3808
    %v3813 = vpack.c.b16 %v1135, %v3809
    %v3814 = vpack.c.b16 %v1136, %v3810
    %vm3815 = vcmask 1046528
    %v3816 = vrot.slane %v3811, 1
    %v3817 = vrot.slane %v1161, 1
    %v3818 = vsel %vm3815, %v3816, %v3817
    %v3819 = vrot.slane %v3812, 1
    %v3820 = vrot.slane %v1162, 1
    %v3821 = vsel %vm3815, %v3819, %v3820
    %v3822 = vrot.slane %v3813, 1
    %v3823 = vrot.slane %v1163, 1
    %v3824 = vsel %vm3815, %v3822, %v3823
    %v3825 = vrot.slane %v3814, 1
    %v3826 = vrot.slane %v1164, 1
    %v3827 = vsel %vm3815, %v3825, %v3826
    %v3828 = vrot.slane %v1165, 1
    %v3829 = vsel %vm3815, %v3817, %v3828
    %v3830 = vrot.slane %v1166, 1
    %v3831 = vsel %vm3815, %v3820, %v3830
    %v3832 = vrot.slane %v1167, 1
    %v3833 = vsel %vm3815, %v3823, %v3832
    %v3834 = vrot.slane %v1168, 1
    %v3835 = vsel %vm3815, %v3826, %v3834
    %v3836 = vrot.slane %v1169, 1
    %v3837 = vsel %vm3815, %v3828, %v3836
    %v3838 = vrot.slane %v1170, 1
    %v3839 = vsel %vm3815, %v3830, %v3838
    %v3840 = vrot.slane %v1171, 1
    %v3841 = vsel %vm3815, %v3832, %v3840
    %v3842 = vrot.slane %v1172, 1
    %v3843 = vsel %vm3815, %v3834, %v3842
    %v4024 = vunpack.c.l.b16 %v3637
    %v4025 = vunpack.c.h.b16 %v3637
    %v4026 = vunpack.c.l.b16 %v3638
    %v4027 = vunpack.c.h.b16 %v3638
    %v4028 = vunpack.c.l.b16 %v3639
    %v4029 = vunpack.c.l.b16 %v3640
    %v4030 = vunpack.c.h.b16 %v3640
    %v4031 = vunpack.c.l.b16 %v3641
    %v4032 = vunpack.c.h.b16 %v3641
    %v4033 = vunpack.c.l.b16 %v3642
    %v4034 = vunpack.c.l.b16 %v3643
    %v4035 = vunpack.c.h.b16 %v3643
    %v4036 = vunpack.c.l.b16 %v3644
    %v4037 = vunpack.c.h.b16 %v3644
    %v4038 = vunpack.c.l.b16 %v3645
    %v4039 = vunpack.c.l.b16 %v3646
    %v4040 = vunpack.c.h.b16 %v3646
    %v4041 = vunpack.c.l.b16 %v3647
    %v4042 = vunpack.c.h.b16 %v3647
    %v4043 = vunpack.c.l.b16 %v3648
    %v4044 = vunpack.c.l.b16 %v3649
    %v4045 = vunpack.c.h.b16 %v3649
    %v4046 = vunpack.c.l.b16 %v3650
    %v4047 = vunpack.c.h.b16 %v3650
    %v4048 = vunpack.c.l.b16 %v3651
    %v4049 = vunpack.c.l.b16 %v3652
    %v4050 = vunpack.c.h.b16 %v3652
    %v4051 = vunpack.c.l.b16 %v3653
    %v4052 = vunpack.c.h.b16 %v3653
    %v4053 = vunpack.c.l.b16 %v3654
    %v4054 = vunpack.c.l.b16 %v3655
    %v4055 = vunpack.c.h.b16 %v3655
    %v4056 = vunpack.c.l.b16 %v3656
    %v4057 = vunpack.c.h.b16 %v3656
    %v4058 = vunpack.c.l.b16 %v3657
    %v4059 = vunpack.c.l.b16 %v3658
    %v4060 = vunpack.c.h.b16 %v3658
    %v4061 = vunpack.c.l.b16 %v3659
    %v4062 = vunpack.c.h.b16 %v3659
    %v4063 = vunpack.c.l.b16 %v3660
    %v4064 = vunpack.c.l.b16 %v3661
    %v4065 = vunpack.c.h.b16 %v3661
    %v4066 = vunpack.c.l.b16 %v3662
    %v4067 = vunpack.c.h.b16 %v3662
    %v4068 = vunpack.c.l.b16 %v3663
    %v4069 = vunpack.c.l.b16 %v3664
    %v4070 = vunpack.c.h.b16 %v3664
    %v4071 = vunpack.c.l.b16 %v3665
    %v4072 = vunpack.c.h.b16 %v3665
    %v4073 = vunpack.c.l.b16 %v3666
    %v4074 = vunpack.c.l.b16 %v3667
    %v4075 = vunpack.c.h.b16 %v3667
    %v4076 = vunpack.c.l.b16 %v3668
    %v4077 = vunpack.c.h.b16 %v3668
    %v4078 = vunpack.c.l.b16 %v3669
    %v4079 = vunpack.c.l.b16 %v3670
    %v4080 = vunpack.c.h.b16 %v3670
    %v4081 = vunpack.c.l.b16 %v3671
    %v4082 = vunpack.c.h.b16 %v3671
    %v4083 = vunpack.c.l.b16 %v3672
    %v4084 = vunpack.c.l.b16 %v3673
    %v4085 = vunpack.c.h.b16 %v3673
    %v4086 = vunpack.c.l.b16 %v3674
    %v4087 = vunpack.c.h.b16 %v3674
    %v4088 = vunpack.c.l.b16 %v3675
    %v4089 = vunpack.c.l.b16 %v3676
    %v4090 = vunpack.c.h.b16 %v3676
    %v4091 = vunpack.c.l.b16 %v3677
    %v4092 = vunpack.c.h.b16 %v3677
    %v4093 = vunpack.c.l.b16 %v3678
    %v4094 = vunpack.c.l.b16 %v3679
    %v4095 = vunpack.c.h.b16 %v3679
    %v4096 = vunpack.c.l.b16 %v3680
    %v4097 = vunpack.c.h.b16 %v3680
    %v4098 = vunpack.c.l.b16 %v3681
    %v4099 = vunpack.c.l.b16 %v3682
    %v4100 = vunpack.c.h.b16 %v3682
    %v4101 = vunpack.c.l.b16 %v3683
    %v4102 = vunpack.c.h.b16 %v3683
    %v4103 = vunpack.c.l.b16 %v3684
    %v4104 = vunpack.c.l.b16 %v3685
    %v4105 = vunpack.c.h.b16 %v3685
    %v4106 = vunpack.c.l.b16 %v3686
    %v4107 = vunpack.c.h.b16 %v3686
    %v4108 = vunpack.c.l.b16 %v3687
    %v4109 = vunpack.c.l.b16 %v3688
    %v4110 = vunpack.c.h.b16 %v3688
    %v4111 = vunpack.c.l.b16 %v3689
    %v4112 = vunpack.c.h.b16 %v3689
    %v4113 = vunpack.c.l.b16 %v3690
    %v4114 = vunpack.c.l.b16 %v3691
    %v4115 = vunpack.c.h.b16 %v3691
    %v4116 = vunpack.c.l.b16 %v3692
    %v4117 = vunpack.c.h.b16 %v3692
    %v4118 = vunpack.c.l.b16 %v3693
    %v4119 = vunpack.c.l.b16 %v3694
    %v4120 = vunpack.c.h.b16 %v3694
    %v4121 = vunpack.c.l.b16 %v3695
    %v4122 = vunpack.c.h.b16 %v3695
    %v4123 = vunpack.c.l.b16 %v3696
    %v4124 = vunpack.c.l.b16 %v3697
    %v4125 = vunpack.c.h.b16 %v3697
    %v4126 = vunpack.c.l.b16 %v3698
    %v4127 = vunpack.c.h.b16 %v3698
    %v4128 = vunpack.c.l.b16 %v3699
    %v4129 = vunpack.c.l.b16 %v3700
    %v4130 = vunpack.c.h.b16 %v3700
    %v4131 = vunpack.c.l.b16 %v3701
    %v4132 = vunpack.c.h.b16 %v3701
    %v4133 = vunpack.c.l.b16 %v3702
    %v4134 = vunpack.c.l.b16 %v3703
    %v4135 = vunpack.c.h.b16 %v3703
    %v4136 = vunpack.c.l.b16 %v3704
    %v4137 = vunpack.c.h.b16 %v3704
    %v4138 = vunpack.c.l.b16 %v3705
    %v4139 = vunpack.c.l.b16 %v3706
    %v4140 = vunpack.c.h.b16 %v3706
    %v4141 = vunpack.c.l.b16 %v3707
    %v4142 = vunpack.c.h.b16 %v3707
    %v4143 = vunpack.c.l.b16 %v3708
    %v4144 = vunpack.c.l.b16 %v3709
    %v4145 = vunpack.c.h.b16 %v3709
    %v4146 = vunpack.c.l.b16 %v3710
    %v4147 = vunpack.c.h.b16 %v3710
    %v4148 = vunpack.c.l.b16 %v3711
    %v4149 = vunpack.c.l.b16 %v3712
    %v4150 = vunpack.c.h.b16 %v3712
    %v4151 = vunpack.c.l.b16 %v3713
    %v4152 = vunpack.c.h.b16 %v3713
    %v4153 = vunpack.c.l.b16 %v3714
    %v4154 = vunpack.c.l.b16 %v3715
    %v4155 = vunpack.c.h.b16 %v3715
    %v4156 = vunpack.c.l.b16 %v3716
    %v4157 = vunpack.c.h.b16 %v3716
    %v4158 = vunpack.c.l.b16 %v3717
    %v4159 = vunpack.c.l.b16 %v3718
    %v4160 = vunpack.c.h.b16 %v3718
    %v4161 = vunpack.c.l.b16 %v3719
    %v4162 = vunpack.c.h.b16 %v3719
    %v4163 = vunpack.c.l.b16 %v3720
    %v4164 = vunpack.c.l.b16 %v3721
    %v4165 = vunpack.c.h.b16 %v3721
    %v4166 = vunpack.c.l.b16 %v3722
    %v4167 = vunpack.c.h.b16 %v3722
    %v4168 = vunpack.c.l.b16 %v3723
    %v4169 = vunpack.c.l.b16 %v3724
    %v4170 = vunpack.c.h.b16 %v3724
    %v4171 = vunpack.c.l.b16 %v3725
    %v4172 = vunpack.c.h.b16 %v3725
    %v4173 = vunpack.c.l.b16 %v3726
    %v4174 = vunpack.c.l.b16 %v3727
    %v4175 = vunpack.c.h.b16 %v3727
    %v4176 = vunpack.c.l.b16 %v3728
    %v4177 = vunpack.c.h.b16 %v3728
    %v4178 = vunpack.c.l.b16 %v3729
    %v4179 = vunpack.c.l.b16 %v3730
    %v4180 = vunpack.c.h.b16 %v3730
    %v4181 = vunpack.c.l.b16 %v3731
    %v4182 = vunpack.c.h.b16 %v3731
    %v4183 = vunpack.c.l.b16 %v3732
    %v4184 = vunpack.c.l.b16 %v3733
    %v4185 = vunpack.c.h.b16 %v3733
    %v4186 = vunpack.c.l.b16 %v3734
    %v4187 = vunpack.c.h.b16 %v3734
    %v4188 = vunpack.c.l.b16 %v3735
    %v4189 = vunpack.c.l.b16 %v3736
    %v4190 = vunpack.c.h.b16 %v3736
    %v4191 = vunpack.c.l.b16 %v3737
    %v4192 = vunpack.c.h.b16 %v3737
    %v4193 = vunpack.c.l.b16 %v3738
    %v4194 = vunpack.c.l.b16 %v3739
    %v4195 = vunpack.c.h.b16 %v3739
    %v4196 = vunpack.c.l.b16 %v3740
    %v4197 = vunpack.c.h.b16 %v3740
    %v4198 = vunpack.c.l.b16 %v3741
    %v4199 = vunpack.c.l.b16 %v3742
    %v4200 = vunpack.c.h.b16 %v3742
    %v4201 = vunpack.c.l.b16 %v3743
    %v4202 = vunpack.c.h.b16 %v3743
    %v4203 = vunpack.c.l.b16 %v3744
    %v4204 = vunpack.c.l.b16 %v3745
    %v4205 = vunpack.c.h.b16 %v3745
    %v4206 = vunpack.c.l.b16 %v3746
    %v4207 = vunpack.c.h.b16 %v3746
    %v4208 = vunpack.c.l.b16 %v3747
    %v4209 = vunpack.c.l.b16 %v3748
    %v4210 = vunpack.c.h.b16 %v3748
    %v4211 = vunpack.c.l.b16 %v3749
    %v4212 = vunpack.c.h.b16 %v3749
    %v4213 = vunpack.c.l.b16 %v3750
    %v4214 = vunpack.c.l.b16 %v3751
    %v4215 = vunpack.c.h.b16 %v3751
    %v4216 = vunpack.c.l.b16 %v3752
    %v4217 = vunpack.c.h.b16 %v3752
    %v4218 = vunpack.c.l.b16 %v3753
    %v4219 = vunpack.c.l.b16 %v3754
    %v4220 = vunpack.c.h.b16 %v3754
    %v4221 = vunpack.c.l.b16 %v3755
    %v4222 = vunpack.c.h.b16 %v3755
    %v4223 = vunpack.c.l.b16 %v3756
    %v4224 = vunpack.c.l.b16 %v3757
    %v4225 = vunpack.c.h.b16 %v3757
    %v4226 = vunpack.c.l.b16 %v3758
    %v4227 = vunpack.c.h.b16 %v3758
    %v4228 = vunpack.c.l.b16 %v3759
    %v4229 = vunpack.c.l.b16 %v3760
    %v4230 = vunpack.c.h.b16 %v3760
    %v4231 = vunpack.c.l.b16 %v3761
    %v4232 = vunpack.c.h.b16 %v3761
    %v4233 = vunpack.c.l.b16 %v3762
    %v4234 = vunpack.c.l.b16 %v3763
    %v4235 = vunpack.c.h.b16 %v3763
    %v4236 = vunpack.c.l.b16 %v3764
    %v4237 = vunpack.c.h.b16 %v3764
    %v4238 = vunpack.c.l.b16 %v3765
    %v4239 = vunpack.c.l.b16 %v3766
    %v4240 = vunpack.c.h.b16 %v3766
    %v4241 = vunpack.c.l.b16 %v3767
    %v4242 = vunpack.c.h.b16 %v3767
    %v4243 = vunpack.c.l.b16 %v3768
    %v4244 = vunpack.c.l.b16 %v3769
    %v4245 = vunpack.c.h.b16 %v3769
    %v4246 = vunpack.c.l.b16 %v3770
    %v4247 = vunpack.c.h.b16 %v3770
    %v4248 = vunpack.c.l.b16 %v3771
    %v4249 = vunpack.c.l.b16 %v3772
    %v4250 = vunpack.c.h.b16 %v3772
    %v4251 = vunpack.c.l.b16 %v3773
    %v4252 = vunpack.c.h.b16 %v3773
    %v4253 = vunpack.c.l.b16 %v3774
    %v4254 = vunpack.c.l.b16 %v3775
    %v4255 = vunpack.c.h.b16 %v3775
    %v4256 = vunpack.c.l.b16 %v3776
    %v4257 = vunpack.c.h.b16 %v3776
    %v4258 = vunpack.c.l.b16 %v3777
    %v4259 = vunpack.c.l.b16 %v3778
    %v4260 = vunpack.c.h.b16 %v3778
    %v4261 = vunpack.c.l.b16 %v3779
    %v4262 = vunpack.c.h.b16 %v3779
    %v4263 = vunpack.c.l.b16 %v3780
    %v4264 = vunpack.c.l.b16 %v3781
    %v4265 = vunpack.c.h.b16 %v3781
    %v4266 = vunpack.c.l.b16 %v3782
    %v4267 = vunpack.c.h.b16 %v3782
    %v4268 = vunpack.c.l.b16 %v3783
    %v4269 = vunpack.c.l.b16 %v3784
    %v4270 = vunpack.c.h.b16 %v3784
    %v4271 = vunpack.c.l.b16 %v3785
    %v4272 = vunpack.c.h.b16 %v3785
    %v4273 = vunpack.c.l.b16 %v3786
    %v4274 = vunpack.c.l.b16 %v3787
    %v4275 = vunpack.c.h.b16 %v3787
    %v4276 = vunpack.c.l.b16 %v3788
    %v4277 = vunpack.c.h.b16 %v3788
    %v4278 = vunpack.c.l.b16 %v3789
    %v4279 = vunpack.c.l.b16 %v3790
    %v4280 = vunpack.c.h.b16 %v3790
    %v4281 = vunpack.c.l.b16 %v3791
    %v4282 = vunpack.c.h.b16 %v3791
    %v4283 = vunpack.c.l.b16 %v3792
    %v4284 = vunpack.c.l.b16 %v3793
    %v4285 = vunpack.c.h.b16 %v3793
    %v4286 = vunpack.c.l.b16 %v3794
    %v4287 = vunpack.c.h.b16 %v3794
    %v4288 = vunpack.c.l.b16 %v3795
    %v4289 = vunpack.c.l.b16 %v3796
    %v4290 = vunpack.c.h.b16 %v3796
    %v4291 = vunpack.c.l.b16 %v3797
    %v4292 = vunpack.c.h.b16 %v3797
    %v4293 = vunpack.c.l.b16 %v3798
    %v4294 = vunpack.c.l.b16 %v3799
    %v4295 = vunpack.c.h.b16 %v3799
    %v4296 = vunpack.c.l.b16 %v3800
    %v4297 = vunpack.c.h.b16 %v3800
    %v4298 = vunpack.c.l.b16 %v3801
    %v4299 = vunpack.c.l.b16 %v3802
    %v4300 = vunpack.c.h.b16 %v3802
    %v4301 = vunpack.c.l.b16 %v3803
    %v4302 = vunpack.c.h.b16 %v3803
    %v4303 = vunpack.c.l.b16 %v3804
    %v4304 = vpack.c.b16 %v4029, %v4024
    %v4305 = vpack.c.b16 %v4030, %v4025
    %v4306 = vpack.c.b16 %v4031, %v4026
    %v4307 = vpack.c.b16 %v4032, %v4027
    %v4308 = vpack.c.b16 %v4033, %v4028
    %v4309 = vpack.c.b16 %v4039, %v4034
    %v4310 = vpack.c.b16 %v4040, %v4035
    %v4311 = vpack.c.b16 %v4041, %v4036
    %v4312 = vpack.c.b16 %v4042, %v4037
    %v4313 = vpack.c.b16 %v4043, %v4038
    %v4314 = vpack.c.b16 %v4049, %v4044
    %v4315 = vpack.c.b16 %v4050, %v4045
    %v4316 = vpack.c.b16 %v4051, %v4046
    %v4317 = vpack.c.b16 %v4052, %v4047
    %v4318 = vpack.c.b16 %v4053, %v4048
    %v4319 = vpack.c.b16 %v4059, %v4054
    %v4320 = vpack.c.b16 %v4060, %v4055
    %v4321 = vpack.c.b16 %v4061, %v4056
    %v4322 = vpack.c.b16 %v4062, %v4057
    %v4323 = vpack.c.b16 %v4063, %v4058
    %v4324 = vpack.c.b16 %v4069, %v4064
    %v4325 = vpack.c.b16 %v4070, %v4065
    %v4326 = vpack.c.b16 %v4071, %v4066
    %v4327 = vpack.c.b16 %v4072, %v4067
    %v4328 = vpack.c.b16 %v4073, %v4068
    %v4329 = vpack.c.b16 %v4079, %v4074
    %v4330 = vpack.c.b16 %v4080, %v4075
    %v4331 = vpack.c.b16 %v4081, %v4076
    %v4332 = vpack.c.b16 %v4082, %v4077
    %v4333 = vpack.c.b16 %v4083, %v4078
    %v4334 = vpack.c.b16 %v4089, %v4084
    %v4335 = vpack.c.b16 %v4090, %v4085
    %v4336 = vpack.c.b16 %v4091, %v4086
    %v4337 = vpack.c.b16 %v4092, %v4087
    %v4338 = vpack.c.b16 %v4093, %v4088
    %v4339 = vpack.c.b16 %v4099, %v4094
    %v4340 = vpack.c.b16 %v4100, %v4095
    %v4341 = vpack.c.b16 %v4101, %v4096
    %v4342 = vpack.c.b16 %v4102, %v4097
    %v4343 = vpack.c.b16 %v4103, %v4098
    %v4344 = vpack.c.b16 %v4109, %v4104
    %v4345 = vpack.c.b16 %v4110, %v4105
    %v4346 = vpack.c.b16 %v4111, %v4106
    %v4347 = vpack.c.b16 %v4112, %v4107
    %v4348 = vpack.c.b16 %v4113, %v4108
    %v4349 = vpack.c.b16 %v4119, %v4114
    %v4350 = vpack.c.b16 %v4120, %v4115
    %v4351 = vpack.c.b16 %v4121, %v4116
    %v4352 = vpack.c.b16 %v4122, %v4117
    %v4353 = vpack.c.b16 %v4123, %v4118
    %v4354 = vpack.c.b16 %v4129, %v4124
    %v4355 = vpack.c.b16 %v4130, %v4125
    %v4356 = vpack.c.b16 %v4131, %v4126
    %v4357 = vpack.c.b16 %v4132, %v4127
    %v4358 = vpack.c.b16 %v4133, %v4128
    %v4359 = vpack.c.b16 %v4139, %v4134
    %v4360 = vpack.c.b16 %v4140, %v4135
    %v4361 = vpack.c.b16 %v4141, %v4136
    %v4362 = vpack.c.b16 %v4142, %v4137
    %v4363 = vpack.c.b16 %v4143, %v4138
    %v4364 = vpack.c.b16 %v4149, %v4144
    %v4365 = vpack.c.b16 %v4150, %v4145
    %v4366 = vpack.c.b16 %v4151, %v4146
    %v4367 = vpack.c.b16 %v4152, %v4147
    %v4368 = vpack.c.b16 %v4153, %v4148
    %v4369 = vpack.c.b16 %v4159, %v4154
    %v4370 = vpack.c.b16 %v4160, %v4155
    %v4371 = vpack.c.b16 %v4161, %v4156
    %v4372 = vpack.c.b16 %v4162, %v4157
    %v4373 = vpack.c.b16 %v4163, %v4158
    %v4374 = vpack.c.b16 %v4169, %v4164
    %v4375 = vpack.c.b16 %v4170, %v4165
    %v4376 = vpack.c.b16 %v4171, %v4166
    %v4377 = vpack.c.b16 %v4172, %v4167
    %v4378 = vpack.c.b16 %v4173, %v4168
    %v4379 = vpack.c.b16 %v4179, %v4174
    %v4380 = vpack.c.b16 %v4180, %v4175
    %v4381 = vpack.c.b16 %v4181, %v4176
    %v4382 = vpack.c.b16 %v4182, %v4177
    %v4383 = vpack.c.b16 %v4183, %v4178
    %v4384 = vpack.c.b16 %v4189, %v4184
    %v4385 = vpack.c.b16 %v4190, %v4185
    %v4386 = vpack.c.b16 %v4191, %v4186
    %v4387 = vpack.c.b16 %v4192, %v4187
    %v4388 = vpack.c.b16 %v4193, %v4188
    %v4389 = vpack.c.b16 %v4199, %v4194
    %v4390 = vpack.c.b16 %v4200, %v4195
    %v4391 = vpack.c.b16 %v4201, %v4196
    %v4392 = vpack.c.b16 %v4202, %v4197
    %v4393 = vpack.c.b16 %v4203, %v4198
    %v4394 = vpack.c.b16 %v4209, %v4204
    %v4395 = vpack.c.b16 %v4210, %v4205
    %v4396 = vpack.c.b16 %v4211, %v4206
    %v4397 = vpack.c.b16 %v4212, %v4207
    %v4398 = vpack.c.b16 %v4213, %v4208
    %v4399 = vpack.c.b16 %v4219, %v4214
    %v4400 = vpack.c.b16 %v4220, %v4215
    %v4401 = vpack.c.b16 %v4221, %v4216
    %v4402 = vpack.c.b16 %v4222, %v4217
    %v4403 = vpack.c.b16 %v4223, %v4218
    %v4404 = vpack.c.b16 %v4229, %v4224
    %v4405 = vpack.c.b16 %v4230, %v4225
    %v4406 = vpack.c.b16 %v4231, %v4226
    %v4407 = vpack.c.b16 %v4232, %v4227
    %v4408 = vpack.c.b16 %v4233, %v4228
    %v4409 = vpack.c.b16 %v4239, %v4234
    %v4410 = vpack.c.b16 %v4240, %v4235
    %v4411 = vpack.c.b16 %v4241, %v4236
    %v4412 = vpack.c.b16 %v4242, %v4237
    %v4413 = vpack.c.b16 %v4243, %v4238
    %v4414 = vpack.c.b16 %v4249, %v4244
    %v4415 = vpack.c.b16 %v4250, %v4245
    %v4416 = vpack.c.b16 %v4251, %v4246
    %v4417 = vpack.c.b16 %v4252, %v4247
    %v4418 = vpack.c.b16 %v4253, %v4248
    %v4419 = vpack.c.b16 %v4259, %v4254
    %v4420 = vpack.c.b16 %v4260, %v4255
    %v4421 = vpack.c.b16 %v4261, %v4256
    %v4422 = vpack.c.b16 %v4262, %v4257
    %v4423 = vpack.c.b16 %v4263, %v4258
    %v4424 = vpack.c.b16 %v4269, %v4264
    %v4425 = vpack.c.b16 %v4270, %v4265
    %v4426 = vpack.c.b16 %v4271, %v4266
    %v4427 = vpack.c.b16 %v4272, %v4267
    %v4428 = vpack.c.b16 %v4273, %v4268
    %v4429 = vpack.c.b16 %v4279, %v4274
    %v4430 = vpack.c.b16 %v4280, %v4275
    %v4431 = vpack.c.b16 %v4281, %v4276
    %v4432 = vpack.c.b16 %v4282, %v4277
    %v4433 = vpack.c.b16 %v4283, %v4278
    %v4434 = vpack.c.b16 %v4289, %v4284
    %v4435 = vpack.c.b16 %v4290, %v4285
    %v4436 = vpack.c.b16 %v4291, %v4286
    %v4437 = vpack.c.b16 %v4292, %v4287
    %v4438 = vpack.c.b16 %v4293, %v4288
    %v4439 = vpack.c.b16 %v4299, %v4294
    %v4440 = vpack.c.b16 %v4300, %v4295
    %v4441 = vpack.c.b16 %v4301, %v4296
    %v4442 = vpack.c.b16 %v4302, %v4297
    %v4443 = vpack.c.b16 %v4303, %v4298
    %v4585 = vsel %vm2038, %v3827, 0
    %v4588 = vsel %vm2038, %v3835, 0
    %v4591 = vsel %vm2038, %v3843, 0
    %v4594 = vsel %vm2038, %v3842, 0
    %4596 = vmatprep.subr.bf16.mxu0 %v4305
    %4597 = vmatpush1.bf16.msra.mxu0 %v4304
    %4598 = vmatprep.subr.bf16.mxu0 %v4310
    %4599 = vmatpush1.bf16.msra.mxu0 %v4309
    %4600 = vmatprep.subr.bf16.mxu0 %v4315
    %4601 = vmatpush1.bf16.msra.mxu0 %v4314
    %4602 = vmatprep.subr.bf16.mxu0 %v4320
    %4603 = vmatpush1.bf16.msra.mxu0 %v4319
    %4604 = vmatprep.subr.bf16.mxu0 %v4325
    %4605 = vmatpush1.bf16.msra.mxu0 %v4324
    %4606 = vmatprep.subr.bf16.mxu0 %v4330
    %4607 = vmatpush1.bf16.msra.mxu0 %v4329
    %4608 = vmatprep.subr.bf16.mxu0 %v4335
    %4609 = vmatpush1.bf16.msra.mxu0 %v4334
    %4610 = vmatprep.subr.bf16.mxu0 %v4340
    %4611 = vmatpush1.bf16.msra.mxu0 %v4339
    %4612 = vmatprep.subr.bf16.mxu0 %v4345
    %4613 = vmatpush1.bf16.msra.mxu0 %v4344
    %4614 = vmatprep.subr.bf16.mxu0 %v4350
    %4615 = vmatpush1.bf16.msra.mxu0 %v4349
    %4616 = vmatprep.subr.bf16.mxu0 %v4355
    %4617 = vmatpush1.bf16.msra.mxu0 %v4354
    %4618 = vmatprep.subr.bf16.mxu0 %v4360
    %4619 = vmatpush1.bf16.msra.mxu0 %v4359
    %4620 = vmatprep.subr.bf16.mxu0 %v4365
    %4621 = vmatpush1.bf16.msra.mxu0 %v4364
    %4622 = vmatprep.subr.bf16.mxu0 %v4370
    %4623 = vmatpush1.bf16.msra.mxu0 %v4369
    %4624 = vmatprep.subr.bf16.mxu0 %v4375
    %4625 = vmatpush1.bf16.msra.mxu0 %v4374
    %4626 = vmatprep.subr.bf16.mxu0 %v4380
    %4627 = vmatpush1.bf16.msra.mxu0 %v4379
    %4628 = vmatprep.mubr.bf16.mxu0 %v3821
    %4629 = vmatmul.mubr.bf16.gmra.mrb[0].mxu0 %v3818
    %v4630 = vpop.f32.mrb[0].mxu0
    %v4631 = vadd.f32 0.0, %v4630
    %v4632 = vpop.f32.mrb[0].mxu0
    %v4633 = vadd.f32 0.0, %v4632
    %v4634 = vpop.f32.mrb[0].mxu0
    %v4635 = vadd.f32 0.0, %v4634
    %v4636 = vpop.f32.mrb[0].mxu0
    %v4637 = vadd.f32 0.0, %v4636
    %4638 = vmatprep.mubr.bf16.mxu0 %v3831
    %4639 = vmatmul.mubr.bf16.gmra.mrb[0].mxu0 %v3829
    %v4640 = vpop.f32.mrb[0].mxu0
    %v4641 = vadd.f32 0.0, %v4640
    %v4642 = vpop.f32.mrb[0].mxu0
    %v4643 = vadd.f32 0.0, %v4642
    %v4644 = vpop.f32.mrb[0].mxu0
    %v4645 = vadd.f32 0.0, %v4644
    %v4646 = vpop.f32.mrb[0].mxu0
    %v4647 = vadd.f32 0.0, %v4646
    %4648 = vmatprep.mubr.bf16.mxu0 %v3839
    %4649 = vmatmul.mubr.bf16.gmra.mrb[0].mxu0 %v3837
    %v4650 = vpop.f32.mrb[0].mxu0
    %v4651 = vadd.f32 0.0, %v4650
    %v4652 = vpop.f32.mrb[0].mxu0
    %v4653 = vadd.f32 0.0, %v4652
    %v4654 = vpop.f32.mrb[0].mxu0
    %v4655 = vadd.f32 0.0, %v4654
    %v4656 = vpop.f32.mrb[0].mxu0
    %v4657 = vadd.f32 0.0, %v4656
    %4658 = vmatprep.mubr.bf16.mxu0 %v3838
    %4659 = vmatmul.mubr.bf16.gmra.mrb[0].mxu0 %v3836
    %v4660 = vpop.f32.mrb[0].mxu0
    %v4661 = vadd.f32 0.0, %v4660
    %v4662 = vpop.f32.mrb[0].mxu0
    %v4663 = vadd.f32 0.0, %v4662
    %v4664 = vpop.f32.mrb[0].mxu0
    %v4665 = vpop.f32.mrb[0].mxu0
    %4666 = vdwg.mxu0
    %4667 = vmatprep.subr.bf16.mxu0 %v4385
    %4668 = vmatpush1.bf16.msra.mxu0 %v4384
    %4669 = vmatprep.subr.bf16.mxu0 %v4390
    %4670 = vmatpush1.bf16.msra.mxu0 %v4389
    %4671 = vmatprep.subr.bf16.mxu0 %v4395
    %4672 = vmatpush1.bf16.msra.mxu0 %v4394
    %4673 = vmatprep.subr.bf16.mxu0 %v4400
    %4674 = vmatpush1.bf16.msra.mxu0 %v4399
    %4675 = vmatprep.subr.bf16.mxu0 %v4405
    %4676 = vmatpush1.bf16.msra.mxu0 %v4404
    %4677 = vmatprep.subr.bf16.mxu0 %v4410
    %4678 = vmatpush1.bf16.msra.mxu0 %v4409
    %4679 = vmatprep.subr.bf16.mxu0 %v4415
    %4680 = vmatpush1.bf16.msra.mxu0 %v4414
    %4681 = vmatprep.subr.bf16.mxu0 %v4420
    %4682 = vmatpush1.bf16.msra.mxu0 %v4419
    %4683 = vmatprep.subr.bf16.mxu0 %v4425
    %4684 = vmatpush1.bf16.msra.mxu0 %v4424
    %4685 = vmatprep.subr.bf16.mxu0 %v4430
    %4686 = vmatpush1.bf16.msra.mxu0 %v4429
    %4687 = vmatprep.subr.bf16.mxu0 %v4435
    %4688 = vmatpush1.bf16.msra.mxu0 %v4434
    %4689 = vmatprep.subr.bf16.mxu0 %v4440
    %4690 = vmatpush1.bf16.msra.mxu0 %v4439
    %4691 = vmatprep.subr.bf16.mxu0 0
    %4692 = vmatpush1.bf16.msra.mxu0 0
    %4693 = vmatprep.subr.bf16.mxu0 0
    %4694 = vmatpush1.bf16.msra.mxu0 0
    %4695 = vmatprep.subr.bf16.mxu0 0
    %4696 = vmatpush1.bf16.msra.mxu0 0
    %4697 = vmatprep.subr.bf16.mxu0 0
    %4698 = vmatpush1.bf16.msra.mxu0 0
    %4699 = vmatprep.mubr.bf16.mxu0 %v4585
    %4700 = vmatmul.mubr.bf16.gmra.mrb[0].mxu0 %v3824
    %v4701 = vpop.f32.mrb[0].mxu0
    %v4702 = vadd.f32 %v4631, %v4701
    %v4703 = vpop.f32.mrb[0].mxu0
    %v4704 = vadd.f32 %v4633, %v4703
    %v4705 = vpop.f32.mrb[0].mxu0
    %v4706 = vadd.f32 %v4635, %v4705
    %v4707 = vpop.f32.mrb[0].mxu0
    %v4708 = vadd.f32 %v4637, %v4707
    %4709 = vmatprep.mubr.bf16.mxu0 %v4588
    %4710 = vmatmul.mubr.bf16.gmra.mrb[0].mxu0 %v3833
    %v4711 = vpop.f32.mrb[0].mxu0
    %v4712 = vadd.f32 %v4641, %v4711
    %v4713 = vpop.f32.mrb[0].mxu0
    %v4714 = vadd.f32 %v4643, %v4713
    %v4715 = vpop.f32.mrb[0].mxu0
    %v4716 = vadd.f32 %v4645, %v4715
    %v4717 = vpop.f32.mrb[0].mxu0
    %v4718 = vadd.f32 %v4647, %v4717
    %4719 = vmatprep.mubr.bf16.mxu0 %v4591
    %4720 = vmatmul.mubr.bf16.gmra.mrb[0].mxu0 %v3841
    %v4721 = vpop.f32.mrb[0].mxu0
    %v4722 = vadd.f32 %v4651, %v4721
    %v4723 = vpop.f32.mrb[0].mxu0
    %v4724 = vadd.f32 %v4653, %v4723
    %v4725 = vpop.f32.mrb[0].mxu0
    %v4726 = vadd.f32 %v4655, %v4725
    %v4727 = vpop.f32.mrb[0].mxu0
    %v4728 = vadd.f32 %v4657, %v4727
    %4729 = vmatprep.mubr.bf16.mxu0 %v4594
    %4730 = vmatmul.mubr.bf16.gmra.mrb[0].mxu0 %v3840
    %v4731 = vpop.f32.mrb[0].mxu0
    %v4732 = vadd.f32 %v4661, %v4731
    %v4733 = vpop.f32.mrb[0].mxu0
    %v4734 = vadd.f32 %v4663, %v4733
    %v4735 = vpop.f32.mrb[0].mxu0
    %v4736 = vpop.f32.mrb[0].mxu0
    %4737 = vdwg.mxu0
    %4738 = vmatprep.subr.bf16.mxu0 %v4307
    %4739 = vmatpush1.bf16.msra.mxu0 %v4306
    %4740 = vmatprep.subr.bf16.mxu0 %v4312
    %4741 = vmatpush1.bf16.msra.mxu0 %v4311
    %4742 = vmatprep.subr.bf16.mxu0 %v4317
    %4743 = vmatpush1.bf16.msra.mxu0 %v4316
    %4744 = vmatprep.subr.bf16.mxu0 %v4322
    %4745 = vmatpush1.bf16.msra.mxu0 %v4321
    %4746 = vmatprep.subr.bf16.mxu0 %v4327
    %4747 = vmatpush1.bf16.msra.mxu0 %v4326
    %4748 = vmatprep.subr.bf16.mxu0 %v4332
    %4749 = vmatpush1.bf16.msra.mxu0 %v4331
    %4750 = vmatprep.subr.bf16.mxu0 %v4337
    %4751 = vmatpush1.bf16.msra.mxu0 %v4336
    %4752 = vmatprep.subr.bf16.mxu0 %v4342
    %4753 = vmatpush1.bf16.msra.mxu0 %v4341
    %4754 = vmatprep.subr.bf16.mxu0 %v4347
    %4755 = vmatpush1.bf16.msra.mxu0 %v4346
    %4756 = vmatprep.subr.bf16.mxu0 %v4352
    %4757 = vmatpush1.bf16.msra.mxu0 %v4351
    %4758 = vmatprep.subr.bf16.mxu0 %v4357
    %4759 = vmatpush1.bf16.msra.mxu0 %v4356
    %4760 = vmatprep.subr.bf16.mxu0 %v4362
    %4761 = vmatpush1.bf16.msra.mxu0 %v4361
    %4762 = vmatprep.subr.bf16.mxu0 %v4367
    %4763 = vmatpush1.bf16.msra.mxu0 %v4366
    %4764 = vmatprep.subr.bf16.mxu0 %v4372
    %4765 = vmatpush1.bf16.msra.mxu0 %v4371
    %4766 = vmatprep.subr.bf16.mxu0 %v4377
    %4767 = vmatpush1.bf16.msra.mxu0 %v4376
    %4768 = vmatprep.subr.bf16.mxu0 %v4382
    %4769 = vmatpush1.bf16.msra.mxu0 %v4381
    %4770 = vmatprep.mubr.bf16.mxu0 %v3821
    %4771 = vmatmul.mubr.bf16.gmra.mrb[0].mxu0 %v3818
    %v4772 = vpop.f32.mrb[0].mxu0
    %v4773 = vadd.f32 0.0, %v4772
    %v4774 = vpop.f32.mrb[0].mxu0
    %v4775 = vadd.f32 0.0, %v4774
    %v4776 = vpop.f32.mrb[0].mxu0
    %v4777 = vadd.f32 0.0, %v4776
    %v4778 = vpop.f32.mrb[0].mxu0
    %v4779 = vadd.f32 0.0, %v4778
    %4780 = vmatprep.mubr.bf16.mxu0 %v3831
    %4781 = vmatmul.mubr.bf16.gmra.mrb[0].mxu0 %v3829
    %v4782 = vpop.f32.mrb[0].mxu0
    %v4783 = vadd.f32 0.0, %v4782
    %v4784 = vpop.f32.mrb[0].mxu0
    %v4785 = vadd.f32 0.0, %v4784
    %v4786 = vpop.f32.mrb[0].mxu0
    %v4787 = vadd.f32 0.0, %v4786
    %v4788 = vpop.f32.mrb[0].mxu0
    %v4789 = vadd.f32 0.0, %v4788
    %4790 = vmatprep.mubr.bf16.mxu0 %v3839
    %4791 = vmatmul.mubr.bf16.gmra.mrb[0].mxu0 %v3837
    %v4792 = vpop.f32.mrb[0].mxu0
    %v4793 = vadd.f32 0.0, %v4792
    %v4794 = vpop.f32.mrb[0].mxu0
    %v4795 = vadd.f32 0.0, %v4794
    %v4796 = vpop.f32.mrb[0].mxu0
    %v4797 = vadd.f32 0.0, %v4796
    %v4798 = vpop.f32.mrb[0].mxu0
    %v4799 = vadd.f32 0.0, %v4798
    %4800 = vmatprep.mubr.bf16.mxu0 %v3838
    %4801 = vmatmul.mubr.bf16.gmra.mrb[0].mxu0 %v3836
    %v4802 = vpop.f32.mrb[0].mxu0
    %v4803 = vadd.f32 0.0, %v4802
    %v4804 = vpop.f32.mrb[0].mxu0
    %v4805 = vadd.f32 0.0, %v4804
    %v4806 = vpop.f32.mrb[0].mxu0
    %v4807 = vpop.f32.mrb[0].mxu0
    %4808 = vdwg.mxu0
    %4809 = vmatprep.subr.bf16.mxu0 %v4387
    %4810 = vmatpush1.bf16.msra.mxu0 %v4386
    %4811 = vmatprep.subr.bf16.mxu0 %v4392
    %4812 = vmatpush1.bf16.msra.mxu0 %v4391
    %4813 = vmatprep.subr.bf16.mxu0 %v4397
    %4814 = vmatpush1.bf16.msra.mxu0 %v4396
    %4815 = vmatprep.subr.bf16.mxu0 %v4402
    %4816 = vmatpush1.bf16.msra.mxu0 %v4401
    %4817 = vmatprep.subr.bf16.mxu0 %v4407
    %4818 = vmatpush1.bf16.msra.mxu0 %v4406
    %4819 = vmatprep.subr.bf16.mxu0 %v4412
    %4820 = vmatpush1.bf16.msra.mxu0 %v4411
    %4821 = vmatprep.subr.bf16.mxu0 %v4417
    %4822 = vmatpush1.bf16.msra.mxu0 %v4416
    %4823 = vmatprep.subr.bf16.mxu0 %v4422
    %4824 = vmatpush1.bf16.msra.mxu0 %v4421
    %4825 = vmatprep.subr.bf16.mxu0 %v4427
    %4826 = vmatpush1.bf16.msra.mxu0 %v4426
    %4827 = vmatprep.subr.bf16.mxu0 %v4432
    %4828 = vmatpush1.bf16.msra.mxu0 %v4431
    %4829 = vmatprep.subr.bf16.mxu0 %v4437
    %4830 = vmatpush1.bf16.msra.mxu0 %v4436
    %4831 = vmatprep.subr.bf16.mxu0 %v4442
    %4832 = vmatpush1.bf16.msra.mxu0 %v4441
    %4833 = vmatprep.subr.bf16.mxu0 0
    %4834 = vmatpush1.bf16.msra.mxu0 0
    %4835 = vmatprep.subr.bf16.mxu0 0
    %4836 = vmatpush1.bf16.msra.mxu0 0
    %4837 = vmatprep.subr.bf16.mxu0 0
    %4838 = vmatpush1.bf16.msra.mxu0 0
    %4839 = vmatprep.subr.bf16.mxu0 0
    %4840 = vmatpush1.bf16.msra.mxu0 0
    %4841 = vmatprep.mubr.bf16.mxu0 %v4585
    %4842 = vmatmul.mubr.bf16.gmra.mrb[0].mxu0 %v3824
    %v4843 = vpop.f32.mrb[0].mxu0
    %v4844 = vadd.f32 %v4773, %v4843
    %v4845 = vpop.f32.mrb[0].mxu0
    %v4846 = vadd.f32 %v4775, %v4845
    %v4847 = vpop.f32.mrb[0].mxu0
    %v4848 = vadd.f32 %v4777, %v4847
    %v4849 = vpop.f32.mrb[0].mxu0
    %v4850 = vadd.f32 %v4779, %v4849
    %4851 = vmatprep.mubr.bf16.mxu0 %v4588
    %4852 = vmatmul.mubr.bf16.gmra.mrb[0].mxu0 %v3833
    %v4853 = vpop.f32.mrb[0].mxu0
    %v4854 = vadd.f32 %v4783, %v4853
    %v4855 = vpop.f32.mrb[0].mxu0
    %v4856 = vadd.f32 %v4785, %v4855
    %v4857 = vpop.f32.mrb[0].mxu0
    %v4858 = vadd.f32 %v4787, %v4857
    %v4859 = vpop.f32.mrb[0].mxu0
    %v4860 = vadd.f32 %v4789, %v4859
    %4861 = vmatprep.mubr.bf16.mxu0 %v4591
    %4862 = vmatmul.mubr.bf16.gmra.mrb[0].mxu0 %v3841
    %v4863 = vpop.f32.mrb[0].mxu0
    %v4864 = vadd.f32 %v4793, %v4863
    %v4865 = vpop.f32.mrb[0].mxu0
    %v4866 = vadd.f32 %v4795, %v4865
    %v4867 = vpop.f32.mrb[0].mxu0
    %v4868 = vadd.f32 %v4797, %v4867
    %v4869 = vpop.f32.mrb[0].mxu0
    %v4870 = vadd.f32 %v4799, %v4869
    %4871 = vmatprep.mubr.bf16.mxu0 %v4594
    %4872 = vmatmul.mubr.bf16.gmra.mrb[0].mxu0 %v3840
    %v4873 = vpop.f32.mrb[0].mxu0
    %v4874 = vadd.f32 %v4803, %v4873
    %v4875 = vpop.f32.mrb[0].mxu0
    %v4876 = vadd.f32 %v4805, %v4875
    %v4877 = vpop.f32.mrb[0].mxu0
    %v4878 = vpop.f32.mrb[0].mxu0
    %4879 = vdwg.mxu0
    %4880 = vmatprep.subr.bf16.mxu0 0
    %4881 = vmatpush1.bf16.msra.mxu0 %v4308
    %4882 = vmatprep.subr.bf16.mxu0 0
    %4883 = vmatpush1.bf16.msra.mxu0 %v4313
    %4884 = vmatprep.subr.bf16.mxu0 0
    %4885 = vmatpush1.bf16.msra.mxu0 %v4318
    %4886 = vmatprep.subr.bf16.mxu0 0
    %4887 = vmatpush1.bf16.msra.mxu0 %v4323
    %4888 = vmatprep.subr.bf16.mxu0 0
    %4889 = vmatpush1.bf16.msra.mxu0 %v4328
    %4890 = vmatprep.subr.bf16.mxu0 0
    %4891 = vmatpush1.bf16.msra.mxu0 %v4333
    %4892 = vmatprep.subr.bf16.mxu0 0
    %4893 = vmatpush1.bf16.msra.mxu0 %v4338
    %4894 = vmatprep.subr.bf16.mxu0 0
    %4895 = vmatpush1.bf16.msra.mxu0 %v4343
    %4896 = vmatprep.subr.bf16.mxu0 0
    %4897 = vmatpush1.bf16.msra.mxu0 %v4348
    %4898 = vmatprep.subr.bf16.mxu0 0
    %4899 = vmatpush1.bf16.msra.mxu0 %v4353
    %4900 = vmatprep.subr.bf16.mxu0 0
    %4901 = vmatpush1.bf16.msra.mxu0 %v4358
    %4902 = vmatprep.subr.bf16.mxu0 0
    %4903 = vmatpush1.bf16.msra.mxu0 %v4363
    %4904 = vmatprep.subr.bf16.mxu0 0
    %4905 = vmatpush1.bf16.msra.mxu0 %v4368
    %4906 = vmatprep.subr.bf16.mxu0 0
    %4907 = vmatpush1.bf16.msra.mxu0 %v4373
    %4908 = vmatprep.subr.bf16.mxu0 0
    %4909 = vmatpush1.bf16.msra.mxu0 %v4378
    %4910 = vmatprep.subr.bf16.mxu0 0
    %4911 = vmatpush1.bf16.msra.mxu0 %v4383
    %4912 = vmatprep.mubr.bf16.mxu0 %v3821
    %4913 = vmatmul.mubr.bf16.gmra.mrb[0].mxu0 %v3818
    %v4914 = vpop.f32.mrb[0].mxu0
    %v4915 = vadd.f32 0.0, %v4914
    %v4916 = vpop.f32.mrb[0].mxu0
    %v4917 = vpop.f32.mrb[0].mxu0
    %v4918 = vadd.f32 0.0, %v4917
    %v4919 = vpop.f32.mrb[0].mxu0
    %4920 = vmatprep.mubr.bf16.mxu0 %v3831
    %4921 = vmatmul.mubr.bf16.gmra.mrb[0].mxu0 %v3829
    %v4922 = vpop.f32.mrb[0].mxu0
    %v4923 = vadd.f32 0.0, %v4922
    %v4924 = vpop.f32.mrb[0].mxu0
    %v4925 = vpop.f32.mrb[0].mxu0
    %v4926 = vadd.f32 0.0, %v4925
    %v4927 = vpop.f32.mrb[0].mxu0
    %4928 = vmatprep.mubr.bf16.mxu0 %v3839
    %4929 = vmatmul.mubr.bf16.gmra.mrb[0].mxu0 %v3837
    %v4930 = vpop.f32.mrb[0].mxu0
    %v4931 = vadd.f32 0.0, %v4930
    %v4932 = vpop.f32.mrb[0].mxu0
    %v4933 = vpop.f32.mrb[0].mxu0
    %v4934 = vadd.f32 0.0, %v4933
    %v4935 = vpop.f32.mrb[0].mxu0
    %4936 = vmatprep.mubr.bf16.mxu0 %v3838
    %4937 = vmatmul.mubr.bf16.gmra.mrb[0].mxu0 %v3836
    %v4938 = vpop.f32.mrb[0].mxu0
    %v4939 = vadd.f32 0.0, %v4938
    %v4940 = vpop.f32.mrb[0].mxu0
    %v4941 = vpop.f32.mrb[0].mxu0
    %v4942 = vpop.f32.mrb[0].mxu0
    %4943 = vdwg.mxu0
    %4944 = vmatprep.subr.bf16.mxu0 0
    %4945 = vmatpush1.bf16.msra.mxu0 %v4388
    %4946 = vmatprep.subr.bf16.mxu0 0
    %4947 = vmatpush1.bf16.msra.mxu0 %v4393
    %4948 = vmatprep.subr.bf16.mxu0 0
    %4949 = vmatpush1.bf16.msra.mxu0 %v4398
    %4950 = vmatprep.subr.bf16.mxu0 0
    %4951 = vmatpush1.bf16.msra.mxu0 %v4403
    %4952 = vmatprep.subr.bf16.mxu0 0
    %4953 = vmatpush1.bf16.msra.mxu0 %v4408
    %4954 = vmatprep.subr.bf16.mxu0 0
    %4955 = vmatpush1.bf16.msra.mxu0 %v4413
    %4956 = vmatprep.subr.bf16.mxu0 0
    %4957 = vmatpush1.bf16.msra.mxu0 %v4418
    %4958 = vmatprep.subr.bf16.mxu0 0
    %4959 = vmatpush1.bf16.msra.mxu0 %v4423
    %4960 = vmatprep.subr.bf16.mxu0 0
    %4961 = vmatpush1.bf16.msra.mxu0 %v4428
    %4962 = vmatprep.subr.bf16.mxu0 0
    %4963 = vmatpush1.bf16.msra.mxu0 %v4433
    %4964 = vmatprep.subr.bf16.mxu0 0
    %4965 = vmatpush1.bf16.msra.mxu0 %v4438
    %4966 = vmatprep.subr.bf16.mxu0 0
    %4967 = vmatpush1.bf16.msra.mxu0 %v4443
    %4968 = vmatprep.subr.bf16.mxu0 0
    %4969 = vmatpush1.bf16.msra.mxu0 0
    %4970 = vmatprep.subr.bf16.mxu0 0
    %4971 = vmatpush1.bf16.msra.mxu0 0
    %4972 = vmatprep.subr.bf16.mxu0 0
    %4973 = vmatpush1.bf16.msra.mxu0 0
    %4974 = vmatprep.subr.bf16.mxu0 0
    %4975 = vmatpush1.bf16.msra.mxu0 0
    %4976 = vmatprep.mubr.bf16.mxu0 %v4585
    %4977 = vmatmul.mubr.bf16.gmra.mrb[0].mxu0 %v3824
    %v4978 = vpop.f32.mrb[0].mxu0
    %v4979 = vadd.f32 %v4915, %v4978
    %v4980 = vpop.f32.mrb[0].mxu0
    %v4981 = vpop.f32.mrb[0].mxu0
    %v4982 = vadd.f32 %v4918, %v4981
    %v4983 = vpop.f32.mrb[0].mxu0
    %4984 = vmatprep.mubr.bf16.mxu0 %v4588
    %4985 = vmatmul.mubr.bf16.gmra.mrb[0].mxu0 %v3833
    %v4986 = vpop.f32.mrb[0].mxu0
    %v4987 = vadd.f32 %v4923, %v4986
    %v4988 = vpop.f32.mrb[0].mxu0
    %v4989 = vpop.f32.mrb[0].mxu0
    %v4990 = vadd.f32 %v4926, %v4989
    %v4991 = vpop.f32.mrb[0].mxu0
    %4992 = vmatprep.mubr.bf16.mxu0 %v4591
    %4993 = vmatmul.mubr.bf16.gmra.mrb[0].mxu0 %v3841
    %v4994 = vpop.f32.mrb[0].mxu0
    %v4995 = vadd.f32 %v4931, %v4994
    %v4996 = vpop.f32.mrb[0].mxu0
    %v4997 = vpop.f32.mrb[0].mxu0
    %v4998 = vadd.f32 %v4934, %v4997
    %v4999 = vpop.f32.mrb[0].mxu0
    %5000 = vmatprep.mubr.bf16.mxu0 %v4594
    %5001 = vmatmul.mubr.bf16.gmra.mrb[0].mxu0 %v3840
    %v5002 = vpop.f32.mrb[0].mxu0
    %v5003 = vadd.f32 %v4939, %v5002
    %v5004 = vpop.f32.mrb[0].mxu0
    %v5005 = vpop.f32.mrb[0].mxu0
    %v5006 = vpop.f32.mrb[0].mxu0
    %5007 = vdwg.mxu0
    %v5008 = vadd.f32 %v3328, %v4702
    %v5009 = vadd.f32 %v3330, %v4704
    %v5010 = vadd.f32 %v3470, %v4844
    %v5011 = vadd.f32 %v3472, %v4846
    %v5012 = vadd.f32 %v3605, %v4979
    %v5013 = vadd.f32 %v3332, %v4706
    %v5014 = vadd.f32 %v3334, %v4708
    %v5015 = vadd.f32 %v3474, %v4848
    %v5016 = vadd.f32 %v3476, %v4850
    %v5017 = vadd.f32 %v3608, %v4982
    %v5018 = vadd.f32 %v3338, %v4712
    %v5019 = vadd.f32 %v3340, %v4714
    %v5020 = vadd.f32 %v3480, %v4854
    %v5021 = vadd.f32 %v3482, %v4856
    %v5022 = vadd.f32 %v3613, %v4987
    %v5023 = vadd.f32 %v3342, %v4716
    %v5024 = vadd.f32 %v3344, %v4718
    %v5025 = vadd.f32 %v3484, %v4858
    %v5026 = vadd.f32 %v3486, %v4860
    %v5027 = vadd.f32 %v3616, %v4990
    %v5028 = vadd.f32 %v3348, %v4722
    %v5029 = vadd.f32 %v3350, %v4724
    %v5030 = vadd.f32 %v3490, %v4864
    %v5031 = vadd.f32 %v3492, %v4866
    %v5032 = vadd.f32 %v3621, %v4995
    %v5033 = vadd.f32 %v3352, %v4726
    %v5034 = vadd.f32 %v3354, %v4728
    %v5035 = vadd.f32 %v3494, %v4868
    %v5036 = vadd.f32 %v3496, %v4870
    %v5037 = vadd.f32 %v3624, %v4998
    %v5038 = vadd.f32 %v3358, %v4732
    %v5039 = vadd.f32 %v3360, %v4734
    %v5040 = vadd.f32 %v3500, %v4874
    %v5041 = vadd.f32 %v3502, %v4876
    %v5042 = vadd.f32 %v3629, %v5003
    %v5043 = vld [vmem:[%s4] sm:$0x1f]
    %v5045 = vlaneseq
    %v5046 = vshrl.u32 %v5045, 7
    %v5047 = vsub.s32 0, %v5046
    %v5048 = vrot.slane %v5043, %v5047
    %v5049 = vlaneseq
    %v5050 = vshrl.u32 %v5049, 7
    %v5051 = vsub.s32 1, %v5050
    %v5052 = vrot.slane %v5043, %v5051
    %v5053 = vlaneseq
    %v5054 = vshrl.u32 %v5053, 7
    %v5055 = vsub.s32 2, %v5054
    %v5056 = vrot.slane %v5043, %v5055
    %v5057 = vlaneseq
    %v5058 = vshrl.u32 %v5057, 7
    %v5059 = vsub.s32 3, %v5058
    %v5060 = vrot.slane %v5043, %v5059
    %v5061 = vlaneseq
    %v5062 = vshrl.u32 %v5061, 7
    %v5063 = vsub.s32 4, %v5062
    %v5064 = vrot.slane %v5043, %v5063
    %v5070 = vadd.f32 %v5008, %v5048
    %v5071 = vadd.f32 %v5009, %v5052
    %v5072 = vadd.f32 %v5010, %v5056
    %v5073 = vadd.f32 %v5011, %v5060
    %v5074 = vadd.f32 %v5012, %v5064
    %v5075 = vadd.f32 %v5013, %v5048
    %v5076 = vadd.f32 %v5014, %v5052
    %v5077 = vadd.f32 %v5015, %v5056
    %v5078 = vadd.f32 %v5016, %v5060
    %v5079 = vadd.f32 %v5017, %v5064
    %v5080 = vadd.f32 %v5018, %v5048
    %v5081 = vadd.f32 %v5019, %v5052
    %v5082 = vadd.f32 %v5020, %v5056
    %v5083 = vadd.f32 %v5021, %v5060
    %v5084 = vadd.f32 %v5022, %v5064
    %v5085 = vadd.f32 %v5023, %v5048
    %v5086 = vadd.f32 %v5024, %v5052
    %v5087 = vadd.f32 %v5025, %v5056
    %v5088 = vadd.f32 %v5026, %v5060
    %v5089 = vadd.f32 %v5027, %v5064
    %v5090 = vadd.f32 %v5028, %v5048
    %v5091 = vadd.f32 %v5029, %v5052
    %v5092 = vadd.f32 %v5030, %v5056
    %v5093 = vadd.f32 %v5031, %v5060
    %v5094 = vadd.f32 %v5032, %v5064
    %v5095 = vadd.f32 %v5033, %v5048
    %v5096 = vadd.f32 %v5034, %v5052
    %v5097 = vadd.f32 %v5035, %v5056
    %v5098 = vadd.f32 %v5036, %v5060
    %v5099 = vadd.f32 %v5037, %v5064
    %v5100 = vadd.f32 %v5038, %v5048
    %v5101 = vadd.f32 %v5039, %v5052
    %v5102 = vadd.f32 %v5040, %v5056
    %v5103 = vadd.f32 %v5041, %v5060
    %v5104 = vadd.f32 %v5042, %v5064
    %vm5105 = vcmp.gt.f32.partialorder %v5070, 0.0
    %vm5106 = vcmp.gt.f32.partialorder %v5071, 0.0
    %vm5107 = vcmp.gt.f32.partialorder %v5072, 0.0
    %vm5108 = vcmp.gt.f32.partialorder %v5073, 0.0
    %vm5109 = vcmp.gt.f32.partialorder %v5074, 0.0
    %vm5110 = vcmp.gt.f32.partialorder %v5075, 0.0
    %vm5111 = vcmp.gt.f32.partialorder %v5076, 0.0
    %vm5112 = vcmp.gt.f32.partialorder %v5077, 0.0
    %vm5113 = vcmp.gt.f32.partialorder %v5078, 0.0
    %vm5114 = vcmp.gt.f32.partialorder %v5079, 0.0
    %vm5115 = vcmp.gt.f32.partialorder %v5080, 0.0
    %vm5116 = vcmp.gt.f32.partialorder %v5081, 0.0
    %vm5117 = vcmp.gt.f32.partialorder %v5082, 0.0
    %vm5118 = vcmp.gt.f32.partialorder %v5083, 0.0
    %vm5119 = vcmp.gt.f32.partialorder %v5084, 0.0
    %vm5120 = vcmp.gt.f32.partialorder %v5085, 0.0
    %vm5121 = vcmp.gt.f32.partialorder %v5086, 0.0
    %vm5122 = vcmp.gt.f32.partialorder %v5087, 0.0
    %vm5123 = vcmp.gt.f32.partialorder %v5088, 0.0
    %vm5124 = vcmp.gt.f32.partialorder %v5089, 0.0
    %vm5125 = vcmp.gt.f32.partialorder %v5090, 0.0
    %vm5126 = vcmp.gt.f32.partialorder %v5091, 0.0
    %vm5127 = vcmp.gt.f32.partialorder %v5092, 0.0
    %vm5128 = vcmp.gt.f32.partialorder %v5093, 0.0
    %vm5129 = vcmp.gt.f32.partialorder %v5094, 0.0
    %vm5130 = vcmp.gt.f32.partialorder %v5095, 0.0
    %vm5131 = vcmp.gt.f32.partialorder %v5096, 0.0
    %vm5132 = vcmp.gt.f32.partialorder %v5097, 0.0
    %vm5133 = vcmp.gt.f32.partialorder %v5098, 0.0
    %vm5134 = vcmp.gt.f32.partialorder %v5099, 0.0
    %vm5135 = vcmp.gt.f32.partialorder %v5100, 0.0
    %vm5136 = vcmp.gt.f32.partialorder %v5101, 0.0
    %vm5137 = vcmp.gt.f32.partialorder %v5102, 0.0
    %vm5138 = vcmp.gt.f32.partialorder %v5103, 0.0
    %vm5139 = vcmp.gt.f32.partialorder %v5104, 0.0
    %v5140 = vmul.f32 %v5070, 0.01
    %v5141 = vmul.f32 %v5071, 0.01
    %v5142 = vmul.f32 %v5072, 0.01
    %v5143 = vmul.f32 %v5073, 0.01
    %v5144 = vmul.f32 %v5074, 0.01
    %v5145 = vmul.f32 %v5075, 0.01
    %v5146 = vmul.f32 %v5076, 0.01
    %v5147 = vmul.f32 %v5077, 0.01
    %v5148 = vmul.f32 %v5078, 0.01
    %v5149 = vmul.f32 %v5079, 0.01
    %v5150 = vmul.f32 %v5080, 0.01
    %v5151 = vmul.f32 %v5081, 0.01
    %v5152 = vmul.f32 %v5082, 0.01
    %v5153 = vmul.f32 %v5083, 0.01
    %v5154 = vmul.f32 %v5084, 0.01
    %v5155 = vmul.f32 %v5085, 0.01
    %v5156 = vmul.f32 %v5086, 0.01
    %v5157 = vmul.f32 %v5087, 0.01
    %v5158 = vmul.f32 %v5088, 0.01
    %v5159 = vmul.f32 %v5089, 0.01
    %v5160 = vmul.f32 %v5090, 0.01
    %v5161 = vmul.f32 %v5091, 0.01
    %v5162 = vmul.f32 %v5092, 0.01
    %v5163 = vmul.f32 %v5093, 0.01
    %v5164 = vmul.f32 %v5094, 0.01
    %v5165 = vmul.f32 %v5095, 0.01
    %v5166 = vmul.f32 %v5096, 0.01
    %v5167 = vmul.f32 %v5097, 0.01
    %v5168 = vmul.f32 %v5098, 0.01
    %v5169 = vmul.f32 %v5099, 0.01
    %v5170 = vmul.f32 %v5100, 0.01
    %v5171 = vmul.f32 %v5101, 0.01
    %v5172 = vmul.f32 %v5102, 0.01
    %v5173 = vmul.f32 %v5103, 0.01
    %v5174 = vmul.f32 %v5104, 0.01
    %v5175 = vsel %vm5105, %v5070, %v5140
    %v5176 = vsel %vm5106, %v5071, %v5141
    %v5177 = vsel %vm5107, %v5072, %v5142
    %v5178 = vsel %vm5108, %v5073, %v5143
    %v5179 = vsel %vm5109, %v5074, %v5144
    %v5180 = vsel %vm5110, %v5075, %v5145
    %v5181 = vsel %vm5111, %v5076, %v5146
    %v5182 = vsel %vm5112, %v5077, %v5147
    %v5183 = vsel %vm5113, %v5078, %v5148
    %v5184 = vsel %vm5114, %v5079, %v5149
    %v5185 = vsel %vm5115, %v5080, %v5150
    %v5186 = vsel %vm5116, %v5081, %v5151
    %v5187 = vsel %vm5117, %v5082, %v5152
    %v5188 = vsel %vm5118, %v5083, %v5153
    %v5189 = vsel %vm5119, %v5084, %v5154
    %v5190 = vsel %vm5120, %v5085, %v5155
    %v5191 = vsel %vm5121, %v5086, %v5156
    %v5192 = vsel %vm5122, %v5087, %v5157
    %v5193 = vsel %vm5123, %v5088, %v5158
    %v5194 = vsel %vm5124, %v5089, %v5159
    %v5195 = vsel %vm5125, %v5090, %v5160
    %v5196 = vsel %vm5126, %v5091, %v5161
    %v5197 = vsel %vm5127, %v5092, %v5162
    %v5198 = vsel %vm5128, %v5093, %v5163
    %v5199 = vsel %vm5129, %v5094, %v5164
    %v5200 = vsel %vm5130, %v5095, %v5165
    %v5201 = vsel %vm5131, %v5096, %v5166
    %v5202 = vsel %vm5132, %v5097, %v5167
    %v5203 = vsel %vm5133, %v5098, %v5168
    %v5204 = vsel %vm5134, %v5099, %v5169
    %v5205 = vsel %vm5135, %v5100, %v5170
    %v5206 = vsel %vm5136, %v5101, %v5171
    %v5207 = vsel %vm5137, %v5102, %v5172
    %v5208 = vsel %vm5138, %v5103, %v5173
    %v5209 = vsel %vm5139, %v5104, %v5174
    %v5210 = vpack.c.bf16 %v5180, %v5175
    %v5211 = vpack.c.bf16 %v5181, %v5176
    %v5212 = vpack.c.bf16 %v5182, %v5177
    %v5213 = vpack.c.bf16 %v5183, %v5178
    %v5214 = vpack.c.bf16 %v5184, %v5179
    %v5215 = vpack.c.bf16 %v5190, %v5185
    %v5216 = vpack.c.bf16 %v5191, %v5186
    %v5217 = vpack.c.bf16 %v5192, %v5187
    %v5218 = vpack.c.bf16 %v5193, %v5188
    %v5219 = vpack.c.bf16 %v5194, %v5189
    %v5220 = vpack.c.bf16 %v5200, %v5195
    %v5221 = vpack.c.bf16 %v5201, %v5196
    %v5222 = vpack.c.bf16 %v5202, %v5197
    %v5223 = vpack.c.bf16 %v5203, %v5198
    %v5224 = vpack.c.bf16 %v5204, %v5199
    %v5225 = vpack.c.bf16 %v5205, %v5205
    %v5226 = vpack.c.bf16 %v5206, %v5206
    %v5227 = vpack.c.bf16 %v5207, %v5207
    %v5228 = vpack.c.bf16 %v5208, %v5208
    %v5229 = vpack.c.bf16 %v5209, %v5209
    %v5250 = vunpack.c.l.b16 %v5210
    %v5251 = vunpack.c.l.b16 %v5211
    %v5252 = vunpack.c.l.b16 %v5212
    %v5253 = vunpack.c.l.b16 %v5213
    %v5254 = vunpack.c.l.b16 %v5214
    %v5255 = vunpack.c.h.b16 %v5210
    %v5256 = vunpack.c.h.b16 %v5211
    %v5257 = vunpack.c.h.b16 %v5212
    %v5258 = vunpack.c.h.b16 %v5213
    %v5259 = vunpack.c.h.b16 %v5214
    %v5260 = vunpack.c.l.b16 %v5215
    %v5261 = vunpack.c.l.b16 %v5216
    %v5262 = vunpack.c.l.b16 %v5217
    %v5263 = vunpack.c.l.b16 %v5218
    %v5264 = vunpack.c.l.b16 %v5219
    %v5265 = vunpack.c.h.b16 %v5215
    %v5266 = vunpack.c.h.b16 %v5216
    %v5267 = vunpack.c.h.b16 %v5217
    %v5268 = vunpack.c.h.b16 %v5218
    %v5269 = vunpack.c.h.b16 %v5219
    %v5270 = vunpack.c.l.b16 %v5220
    %v5271 = vunpack.c.l.b16 %v5221
    %v5272 = vunpack.c.l.b16 %v5222
    %v5273 = vunpack.c.l.b16 %v5223
    %v5274 = vunpack.c.l.b16 %v5224
    %v5275 = vunpack.c.h.b16 %v5220
    %v5276 = vunpack.c.h.b16 %v5221
    %v5277 = vunpack.c.h.b16 %v5222
    %v5278 = vunpack.c.h.b16 %v5223
    %v5279 = vunpack.c.h.b16 %v5224
    %v5280 = vunpack.c.l.b16 %v5225
    %v5281 = vunpack.c.l.b16 %v5226
    %v5282 = vunpack.c.l.b16 %v5227
    %v5283 = vunpack.c.l.b16 %v5228
    %v5284 = vunpack.c.l.b16 %v5229
    %v5285 = vpack.c.b16 %v5251, %v5250
    %v5286 = vpack.c.b16 %v5253, %v5252
    %v5287 = vpack.c.b16 %v5254, %v5254
    %v5288 = vpack.c.b16 %v5256, %v5255
    %v5289 = vpack.c.b16 %v5258, %v5257
    %v5290 = vpack.c.b16 %v5259, %v5259
    %v5291 = vpack.c.b16 %v5261, %v5260
    %v5292 = vpack.c.b16 %v5263, %v5262
    %v5293 = vpack.c.b16 %v5264, %v5264
    %v5294 = vpack.c.b16 %v5266, %v5265
    %v5295 = vpack.c.b16 %v5268, %v5267
    %v5296 = vpack.c.b16 %v5269, %v5269
    %v5297 = vpack.c.b16 %v5271, %v5270
    %v5298 = vpack.c.b16 %v5273, %v5272
    %v5299 = vpack.c.b16 %v5274, %v5274
    %v5300 = vpack.c.b16 %v5276, %v5275
    %v5301 = vpack.c.b16 %v5278, %v5277
    %v5302 = vpack.c.b16 %v5279, %v5279
    %v5303 = vpack.c.b16 %v5281, %v5280
    %v5304 = vpack.c.b16 %v5283, %v5282
    %v5305 = vpack.c.b16 %v5284, %v5284
    %5327 = vst [vmem:[#allocation3] sm:$0xff] %v5285
    %5328 = vst [vmem:[#allocation3 + $0x8] sm:$0xff] %v5286
    %5329 = vst [vmem:[#allocation3 + $0x10] sm:$0xf] %v5287
    %5330 = vst [vmem:[#allocation3 + $0x14] sm:$0xff] %v5288
    %5331 = vst [vmem:[#allocation3 + $0x1c] sm:$0xff] %v5289
    %5332 = vst [vmem:[#allocation3 + $0x24] sm:$0xf] %v5290
    %5333 = vst [vmem:[#allocation3 + $0x28] sm:$0xff] %v5291
    %5334 = vst [vmem:[#allocation3 + $0x30] sm:$0xff] %v5292
    %5335 = vst [vmem:[#allocation3 + $0x38] sm:$0xf] %v5293
    %5336 = vst [vmem:[#allocation3 + $0x3c] sm:$0xff] %v5294
    %5337 = vst [vmem:[#allocation3 + $0x44] sm:$0xff] %v5295
    %5338 = vst [vmem:[#allocation3 + $0x4c] sm:$0xf] %v5296
    %5339 = vst [vmem:[#allocation3 + $0x50] sm:$0xff] %v5297
    %5340 = vst [vmem:[#allocation3 + $0x58] sm:$0xff] %v5298
    %5341 = vst [vmem:[#allocation3 + $0x60] sm:$0xf] %v5299
    %5342 = vst [vmem:[#allocation3 + $0x64] sm:$0xff] %v5300
    %5343 = vst [vmem:[#allocation3 + $0x6c] sm:$0xff] %v5301
    %5344 = vst [vmem:[#allocation3 + $0x74] sm:$0xf] %v5302
    %5345 = vst [vmem:[#allocation3 + $0x78] sm:$0x77] %v5303
    %5346 = vst [vmem:[#allocation3 + $0x80] sm:$0x77] %v5304
    %5347 = vst [vmem:[#allocation3 + $0x88] sm:$0x7] %v5305
    %v5348 = vld [vmem:[#allocation3] sm:$0xff]
    %v5349 = vld [vmem:[#allocation3 + $0x8] sm:$0xff]
    %v5350 = vld [vmem:[#allocation3 + $0x10] sm:$0xf]
    %v5351 = vld [vmem:[#allocation3 + $0x14] sm:$0xff]
    %v5352 = vld [vmem:[#allocation3 + $0x1c] sm:$0xff]
    %v5353 = vld [vmem:[#allocation3 + $0x24] sm:$0xf]
    %v5354 = vld [vmem:[#allocation3 + $0x28] sm:$0xff]
    %v5355 = vld [vmem:[#allocation3 + $0x30] sm:$0xff]
    %v5356 = vld [vmem:[#allocation3 + $0x38] sm:$0xf]
    %v5357 = vld [vmem:[#allocation3 + $0x3c] sm:$0xff]
    %v5358 = vld [vmem:[#allocation3 + $0x44] sm:$0xff]
    %v5359 = vld [vmem:[#allocation3 + $0x4c] sm:$0xf]
    %v5360 = vld [vmem:[#allocation3 + $0x50] sm:$0xff]
    %v5361 = vld [vmem:[#allocation3 + $0x58] sm:$0xff]
    %v5362 = vld [vmem:[#allocation3 + $0x60] sm:$0xf]
    %v5363 = vld [vmem:[#allocation3 + $0x64] sm:$0xff]
    %v5364 = vld [vmem:[#allocation3 + $0x6c] sm:$0xff]
    %v5365 = vld [vmem:[#allocation3 + $0x74] sm:$0xf]
    %v5366 = vld [vmem:[#allocation3 + $0x78] sm:$0x33]
    %v5367 = vld [vmem:[#allocation3 + $0x80] sm:$0x33]
    %v5368 = vld [vmem:[#allocation3 + $0x88] sm:$0x3]
    %v5369 = vld [vmem:[#allocation4] sm:$0xff]
    %v5370 = vld [vmem:[#allocation4 + $0x8] sm:$0xf]
    %v5371 = vld [vmem:[#allocation4 + $0xc] sm:$0xff]
    %v5372 = vld [vmem:[#allocation4 + $0x14] sm:$0xf]
    %v5373 = vld [vmem:[#allocation4 + $0x18] sm:$0xff]
    %v5374 = vld [vmem:[#allocation4 + $0x20] sm:$0xf]
    %v5375 = vld [vmem:[#allocation4 + $0x24] sm:$0xff]
    %v5376 = vld [vmem:[#allocation4 + $0x2c] sm:$0xf]
    %v5377 = vld [vmem:[#allocation4 + $0x30] sm:$0xff]
    %v5378 = vld [vmem:[#allocation4 + $0x38] sm:$0xf]
    %v5379 = vld [vmem:[#allocation4 + $0x3c] sm:$0xff]
    %v5380 = vld [vmem:[#allocation4 + $0x44] sm:$0xf]
    %v5381 = vld [vmem:[#allocation4 + $0x48] sm:$0xff]
    %v5382 = vld [vmem:[#allocation4 + $0x50] sm:$0xf]
    %v5383 = vld [vmem:[#allocation4 + $0x54] sm:$0xff]
    %v5384 = vld [vmem:[#allocation4 + $0x5c] sm:$0xf]
    %v5385 = vld [vmem:[#allocation4 + $0x60] sm:$0xff]
    %v5386 = vld [vmem:[#allocation4 + $0x68] sm:$0xf]
    %v5387 = vld [vmem:[#allocation4 + $0x6c] sm:$0xff]
    %v5388 = vld [vmem:[#allocation4 + $0x74] sm:$0xf]
    %v5389 = vld [vmem:[#allocation4 + $0x78] sm:$0xff]
    %v5390 = vld [vmem:[#allocation4 + $0x80] sm:$0xf]
    %v5391 = vld [vmem:[#allocation4 + $0x84] sm:$0xff]
    %v5392 = vld [vmem:[#allocation4 + $0x8c] sm:$0xf]
    %v5393 = vld [vmem:[#allocation4 + $0x90] sm:$0xff]
    %v5394 = vld [vmem:[#allocation4 + $0x98] sm:$0xf]
    %v5395 = vld [vmem:[#allocation4 + $0x9c] sm:$0xff]
    %v5396 = vld [vmem:[#allocation4 + $0xa4] sm:$0xf]
    %v5397 = vld [vmem:[#allocation4 + $0xa8] sm:$0xff]
    %v5398 = vld [vmem:[#allocation4 + $0xb0] sm:$0xf]
    %v5399 = vld [vmem:[#allocation4 + $0xb4] sm:$0xff]
    %v5400 = vld [vmem:[#allocation4 + $0xbc] sm:$0xf]
    %v5401 = vld [vmem:[#allocation4 + $0xc0] sm:$0xff]
    %v5402 = vld [vmem:[#allocation4 + $0xc8] sm:$0xf]
    %v5403 = vld [vmem:[#allocation4 + $0xcc] sm:$0xff]
    %v5404 = vld [vmem:[#allocation4 + $0xd4] sm:$0xf]
    %v5405 = vld [vmem:[#allocation4 + $0xd8] sm:$0xff]
    %v5406 = vld [vmem:[#allocation4 + $0xe0] sm:$0xf]
    %v5407 = vld [vmem:[#allocation4 + $0xe4] sm:$0xff]
    %v5408 = vld [vmem:[#allocation4 + $0xec] sm:$0xf]
    %v5409 = vld [vmem:[#allocation4 + $0xf0] sm:$0xff]
    %v5410 = vld [vmem:[#allocation4 + $0xf8] sm:$0xf]
    %v5411 = vld [vmem:[#allocation4 + $0xfc] sm:$0xff]
    %v5412 = vld [vmem:[#allocation4 + $0x104] sm:$0xf]
    %v5413 = vld [vmem:[#allocation4 + $0x108] sm:$0xff]
    %v5414 = vld [vmem:[#allocation4 + $0x110] sm:$0xf]
    %v5415 = vld [vmem:[#allocation4 + $0x114] sm:$0xff]
    %v5416 = vld [vmem:[#allocation4 + $0x11c] sm:$0xf]
    %v5417 = vld [vmem:[#allocation4 + $0x120] sm:$0xff]
    %v5418 = vld [vmem:[#allocation4 + $0x128] sm:$0xf]
    %v5419 = vld [vmem:[#allocation4 + $0x12c] sm:$0xff]
    %v5420 = vld [vmem:[#allocation4 + $0x134] sm:$0xf]
    %v5421 = vld [vmem:[#allocation4 + $0x138] sm:$0xff]
    %v5422 = vld [vmem:[#allocation4 + $0x140] sm:$0xf]
    %v5423 = vld [vmem:[#allocation4 + $0x144] sm:$0xff]
    %v5424 = vld [vmem:[#allocation4 + $0x14c] sm:$0xf]
    %v5425 = vld [vmem:[#allocation4 + $0x150] sm:$0xff]
    %v5426 = vld [vmem:[#allocation4 + $0x158] sm:$0xf]
    %v5427 = vld [vmem:[#allocation4 + $0x15c] sm:$0xff]
    %v5428 = vld [vmem:[#allocation4 + $0x164] sm:$0xf]
    %v5429 = vld [vmem:[#allocation4 + $0x168] sm:$0xff]
    %v5430 = vld [vmem:[#allocation4 + $0x170] sm:$0xf]
    %v5431 = vld [vmem:[#allocation4 + $0x174] sm:$0xff]
    %v5432 = vld [vmem:[#allocation4 + $0x17c] sm:$0xf]
    %v5433 = vld [vmem:[#allocation4 + $0x180] sm:$0xff]
    %v5434 = vld [vmem:[#allocation4 + $0x188] sm:$0xf]
    %v5435 = vld [vmem:[#allocation4 + $0x18c] sm:$0xff]
    %v5436 = vld [vmem:[#allocation4 + $0x194] sm:$0xf]
    %v5437 = vld [vmem:[#allocation4 + $0x198] sm:$0xff]
    %v5438 = vld [vmem:[#allocation4 + $0x1a0] sm:$0xf]
    %v5439 = vld [vmem:[#allocation4 + $0x1a4] sm:$0xff]
    %v5440 = vld [vmem:[#allocation4 + $0x1ac] sm:$0xf]
    %v5441 = vld [vmem:[#allocation4 + $0x1b0] sm:$0xff]
    %v5442 = vld [vmem:[#allocation4 + $0x1b8] sm:$0xf]
    %v5443 = vld [vmem:[#allocation4 + $0x1bc] sm:$0xff]
    %v5444 = vld [vmem:[#allocation4 + $0x1c4] sm:$0xf]
    %v5445 = vld [vmem:[#allocation4 + $0x1c8] sm:$0xff]
    %v5446 = vld [vmem:[#allocation4 + $0x1d0] sm:$0xf]
    %v5447 = vld [vmem:[#allocation4 + $0x1d4] sm:$0xff]
    %v5448 = vld [vmem:[#allocation4 + $0x1dc] sm:$0xf]
    %v5449 = vld [vmem:[#allocation4 + $0x1e0] sm:$0xff]
    %v5450 = vld [vmem:[#allocation4 + $0x1e8] sm:$0xf]
    %v5451 = vld [vmem:[#allocation4 + $0x1ec] sm:$0xff]
    %v5452 = vld [vmem:[#allocation4 + $0x1f4] sm:$0xf]
    %v5453 = vld [vmem:[#allocation4 + $0x1f8] sm:$0xff]
    %v5454 = vld [vmem:[#allocation4 + $0x200] sm:$0xf]
    %v5455 = vld [vmem:[#allocation4 + $0x204] sm:$0xff]
    %v5456 = vld [vmem:[#allocation4 + $0x20c] sm:$0xf]
    %v5457 = vld [vmem:[#allocation4 + $0x210] sm:$0xff]
    %v5458 = vld [vmem:[#allocation4 + $0x218] sm:$0xf]
    %v5459 = vld [vmem:[#allocation4 + $0x21c] sm:$0xff]
    %v5460 = vld [vmem:[#allocation4 + $0x224] sm:$0xf]
    %v5461 = vld [vmem:[#allocation4 + $0x228] sm:$0xff]
    %v5462 = vld [vmem:[#allocation4 + $0x230] sm:$0xf]
    %v5463 = vld [vmem:[#allocation4 + $0x234] sm:$0xff]
    %v5464 = vld [vmem:[#allocation4 + $0x23c] sm:$0xf]
    %v5465 = vld [vmem:[#allocation4 + $0x240] sm:$0xff]
    %v5466 = vld [vmem:[#allocation4 + $0x248] sm:$0xf]
    %v5467 = vld [vmem:[#allocation4 + $0x24c] sm:$0xff]
    %v5468 = vld [vmem:[#allocation4 + $0x254] sm:$0xf]
    %v5469 = vld [vmem:[#allocation4 + $0x258] sm:$0xff]
    %v5470 = vld [vmem:[#allocation4 + $0x260] sm:$0xf]
    %v5471 = vld [vmem:[#allocation4 + $0x264] sm:$0xff]
    %v5472 = vld [vmem:[#allocation4 + $0x26c] sm:$0xf]
    %v5473 = vld [vmem:[#allocation4 + $0x270] sm:$0xff]
    %v5474 = vld [vmem:[#allocation4 + $0x278] sm:$0xf]
    %v5475 = vld [vmem:[#allocation4 + $0x27c] sm:$0xff]
    %v5476 = vld [vmem:[#allocation4 + $0x284] sm:$0xf]
    %v5477 = vld [vmem:[#allocation4 + $0x288] sm:$0xff]
    %v5478 = vld [vmem:[#allocation4 + $0x290] sm:$0xf]
    %v5479 = vld [vmem:[#allocation4 + $0x294] sm:$0xff]
    %v5480 = vld [vmem:[#allocation4 + $0x29c] sm:$0xf]
    %v5481 = vld [vmem:[#allocation4 + $0x2a0] sm:$0xff]
    %v5482 = vld [vmem:[#allocation4 + $0x2a8] sm:$0xf]
    %v5483 = vld [vmem:[#allocation4 + $0x2ac] sm:$0xff]
    %v5484 = vld [vmem:[#allocation4 + $0x2b4] sm:$0xf]
    %v5485 = vld [vmem:[#allocation4 + $0x2b8] sm:$0xff]
    %v5486 = vld [vmem:[#allocation4 + $0x2c0] sm:$0xf]
    %v5487 = vld [vmem:[#allocation4 + $0x2c4] sm:$0xff]
    %v5488 = vld [vmem:[#allocation4 + $0x2cc] sm:$0xf]
    %v5489 = vld [vmem:[#allocation4 + $0x2d0] sm:$0xff]
    %v5490 = vld [vmem:[#allocation4 + $0x2d8] sm:$0xf]
    %v5491 = vld [vmem:[#allocation4 + $0x2dc] sm:$0xff]
    %v5492 = vld [vmem:[#allocation4 + $0x2e4] sm:$0xf]
    %v5493 = vld [vmem:[#allocation4 + $0x2e8] sm:$0xff]
    %v5494 = vld [vmem:[#allocation4 + $0x2f0] sm:$0xf]
    %v5495 = vld [vmem:[#allocation4 + $0x2f4] sm:$0xff]
    %v5496 = vld [vmem:[#allocation4 + $0x2fc] sm:$0xf]
    %v5497 = vld [vmem:[#allocation4 + $0x300] sm:$0xff]
    %v5498 = vld [vmem:[#allocation4 + $0x308] sm:$0xf]
    %v5499 = vld [vmem:[#allocation4 + $0x30c] sm:$0xff]
    %v5500 = vld [vmem:[#allocation4 + $0x314] sm:$0xf]
    %v5501 = vld [vmem:[#allocation4 + $0x318] sm:$0xff]
    %v5502 = vld [vmem:[#allocation4 + $0x320] sm:$0xf]
    %v5503 = vld [vmem:[#allocation4 + $0x324] sm:$0xff]
    %v5504 = vld [vmem:[#allocation4 + $0x32c] sm:$0xf]
    %v5505 = vld [vmem:[#allocation4 + $0x330] sm:$0xff]
    %v5506 = vld [vmem:[#allocation4 + $0x338] sm:$0xf]
    %v5507 = vld [vmem:[#allocation4 + $0x33c] sm:$0xff]
    %v5508 = vld [vmem:[#allocation4 + $0x344] sm:$0xf]
    %v5509 = vld [vmem:[#allocation4 + $0x348] sm:$0xff]
    %v5510 = vld [vmem:[#allocation4 + $0x350] sm:$0xf]
    %v5511 = vld [vmem:[#allocation4 + $0x354] sm:$0xff]
    %v5512 = vld [vmem:[#allocation4 + $0x35c] sm:$0xf]
    %v5513 = vld [vmem:[#allocation4 + $0x360] sm:$0xff]
    %v5514 = vld [vmem:[#allocation4 + $0x368] sm:$0xf]
    %v5515 = vld [vmem:[#allocation4 + $0x36c] sm:$0xff]
    %v5516 = vld [vmem:[#allocation4 + $0x374] sm:$0xf]
    %v5517 = vld [vmem:[#allocation4 + $0x378] sm:$0xff]
    %v5518 = vld [vmem:[#allocation4 + $0x380] sm:$0xf]
    %v5519 = vld [vmem:[#allocation4 + $0x384] sm:$0xff]
    %v5520 = vld [vmem:[#allocation4 + $0x38c] sm:$0xf]
    %v5521 = vld [vmem:[#allocation4 + $0x390] sm:$0xff]
    %v5522 = vld [vmem:[#allocation4 + $0x398] sm:$0xf]
    %v5523 = vld [vmem:[#allocation4 + $0x39c] sm:$0xff]
    %v5524 = vld [vmem:[#allocation4 + $0x3a4] sm:$0xf]
    %v5525 = vld [vmem:[#allocation4 + $0x3a8] sm:$0xff]
    %v5526 = vld [vmem:[#allocation4 + $0x3b0] sm:$0xf]
    %v5527 = vld [vmem:[#allocation4 + $0x3b4] sm:$0xff]
    %v5528 = vld [vmem:[#allocation4 + $0x3bc] sm:$0xf]
    %v5529 = vld [vmem:[#allocation3 + $0x78] sm:$0x77]
    %v5530 = vld [vmem:[#allocation3 + $0x80] sm:$0x77]
    %v5531 = vld [vmem:[#allocation3 + $0x88] sm:$0x7]
    %s5532 = scalar_lea.vmem [#allocation4], 960
    %v5533 = vld [vmem:[%s5532] sm:$0xff]
    %v5534 = vld [vmem:[%s5532 + $0x8] sm:$0xf]
    %v5535 = vld [vmem:[%s5532 + $0xc] sm:$0xff]
    %v5536 = vld [vmem:[%s5532 + $0x14] sm:$0xf]
    %v5537 = vld [vmem:[%s5532 + $0x18] sm:$0xff]
    %v5538 = vld [vmem:[%s5532 + $0x20] sm:$0xf]
    %v5539 = vld [vmem:[%s5532 + $0x24] sm:$0xff]
    %v5540 = vld [vmem:[%s5532 + $0x2c] sm:$0xf]
    %v5541 = vld [vmem:[%s5532 + $0x30] sm:$0xff]
    %v5542 = vld [vmem:[%s5532 + $0x38] sm:$0xf]
    %v5543 = vld [vmem:[%s5532 + $0x3c] sm:$0xff]
    %v5544 = vld [vmem:[%s5532 + $0x44] sm:$0xf]
    %v5545 = vld [vmem:[%s5532 + $0x48] sm:$0xff]
    %v5546 = vld [vmem:[%s5532 + $0x50] sm:$0xf]
    %v5547 = vld [vmem:[%s5532 + $0x54] sm:$0xff]
    %v5548 = vld [vmem:[%s5532 + $0x5c] sm:$0xf]
    %v5549 = vld [vmem:[%s5532 + $0x60] sm:$0xff]
    %v5550 = vld [vmem:[%s5532 + $0x68] sm:$0xf]
    %v5551 = vld [vmem:[%s5532 + $0x6c] sm:$0xff]
    %v5552 = vld [vmem:[%s5532 + $0x74] sm:$0xf]
    %v5553 = vld [vmem:[%s5532 + $0x78] sm:$0xff]
    %v5554 = vld [vmem:[%s5532 + $0x80] sm:$0xf]
    %v5555 = vld [vmem:[%s5532 + $0x84] sm:$0xff]
    %v5556 = vld [vmem:[%s5532 + $0x8c] sm:$0xf]
    %v5557 = vld [vmem:[%s5532 + $0x90] sm:$0xff]
    %v5558 = vld [vmem:[%s5532 + $0x98] sm:$0xf]
    %v5559 = vld [vmem:[%s5532 + $0x9c] sm:$0xff]
    %v5560 = vld [vmem:[%s5532 + $0xa4] sm:$0xf]
    %v5561 = vld [vmem:[%s5532 + $0xa8] sm:$0xff]
    %v5562 = vld [vmem:[%s5532 + $0xb0] sm:$0xf]
    %v5563 = vld [vmem:[%s5532 + $0xb4] sm:$0xff]
    %v5564 = vld [vmem:[%s5532 + $0xbc] sm:$0xf]
    %v5565 = vld [vmem:[%s5532 + $0xc0] sm:$0xff]
    %v5566 = vld [vmem:[%s5532 + $0xc8] sm:$0xf]
    %v5567 = vld [vmem:[%s5532 + $0xcc] sm:$0xff]
    %v5568 = vld [vmem:[%s5532 + $0xd4] sm:$0xf]
    %v5569 = vld [vmem:[%s5532 + $0xd8] sm:$0xff]
    %v5570 = vld [vmem:[%s5532 + $0xe0] sm:$0xf]
    %v5571 = vld [vmem:[%s5532 + $0xe4] sm:$0xff]
    %v5572 = vld [vmem:[%s5532 + $0xec] sm:$0xf]
    %v5573 = vld [vmem:[%s5532 + $0xf0] sm:$0xff]
    %v5574 = vld [vmem:[%s5532 + $0xf8] sm:$0xf]
    %v5575 = vld [vmem:[%s5532 + $0xfc] sm:$0xff]
    %v5576 = vld [vmem:[%s5532 + $0x104] sm:$0xf]
    %v5577 = vld [vmem:[%s5532 + $0x108] sm:$0xff]
    %v5578 = vld [vmem:[%s5532 + $0x110] sm:$0xf]
    %v5579 = vld [vmem:[%s5532 + $0x114] sm:$0xff]
    %v5580 = vld [vmem:[%s5532 + $0x11c] sm:$0xf]
    %v5581 = vld [vmem:[%s5532 + $0x120] sm:$0xff]
    %v5582 = vld [vmem:[%s5532 + $0x128] sm:$0xf]
    %v5583 = vld [vmem:[%s5532 + $0x12c] sm:$0xff]
    %v5584 = vld [vmem:[%s5532 + $0x134] sm:$0xf]
    %v5585 = vld [vmem:[%s5532 + $0x138] sm:$0xff]
    %v5586 = vld [vmem:[%s5532 + $0x140] sm:$0xf]
    %v5587 = vld [vmem:[%s5532 + $0x144] sm:$0xff]
    %v5588 = vld [vmem:[%s5532 + $0x14c] sm:$0xf]
    %v5589 = vld [vmem:[%s5532 + $0x150] sm:$0xff]
    %v5590 = vld [vmem:[%s5532 + $0x158] sm:$0xf]
    %v5591 = vld [vmem:[%s5532 + $0x15c] sm:$0xff]
    %v5592 = vld [vmem:[%s5532 + $0x164] sm:$0xf]
    %v5593 = vld [vmem:[%s5532 + $0x168] sm:$0xff]
    %v5594 = vld [vmem:[%s5532 + $0x170] sm:$0xf]
    %v5595 = vld [vmem:[%s5532 + $0x174] sm:$0xff]
    %v5596 = vld [vmem:[%s5532 + $0x17c] sm:$0xf]
    %v5597 = vld [vmem:[%s5532 + $0x180] sm:$0xff]
    %v5598 = vld [vmem:[%s5532 + $0x188] sm:$0xf]
    %v5599 = vld [vmem:[%s5532 + $0x18c] sm:$0xff]
    %v5600 = vld [vmem:[%s5532 + $0x194] sm:$0xf]
    %v5601 = vld [vmem:[%s5532 + $0x198] sm:$0xff]
    %v5602 = vld [vmem:[%s5532 + $0x1a0] sm:$0xf]
    %v5603 = vld [vmem:[%s5532 + $0x1a4] sm:$0xff]
    %v5604 = vld [vmem:[%s5532 + $0x1ac] sm:$0xf]
    %v5605 = vld [vmem:[%s5532 + $0x1b0] sm:$0xff]
    %v5606 = vld [vmem:[%s5532 + $0x1b8] sm:$0xf]
    %v5607 = vld [vmem:[%s5532 + $0x1bc] sm:$0xff]
    %v5608 = vld [vmem:[%s5532 + $0x1c4] sm:$0xf]
    %v5609 = vld [vmem:[%s5532 + $0x1c8] sm:$0xff]
    %v5610 = vld [vmem:[%s5532 + $0x1d0] sm:$0xf]
    %v5611 = vld [vmem:[%s5532 + $0x1d4] sm:$0xff]
    %v5612 = vld [vmem:[%s5532 + $0x1dc] sm:$0xf]
    %v5613 = vld [vmem:[%s5532 + $0x1e0] sm:$0xff]
    %v5614 = vld [vmem:[%s5532 + $0x1e8] sm:$0xf]
    %v5615 = vld [vmem:[%s5532 + $0x1ec] sm:$0xff]
    %v5616 = vld [vmem:[%s5532 + $0x1f4] sm:$0xf]
    %v5617 = vld [vmem:[%s5532 + $0x1f8] sm:$0xff]
    %v5618 = vld [vmem:[%s5532 + $0x200] sm:$0xf]
    %v5619 = vld [vmem:[%s5532 + $0x204] sm:$0xff]
    %v5620 = vld [vmem:[%s5532 + $0x20c] sm:$0xf]
    %v5621 = vld [vmem:[%s5532 + $0x210] sm:$0xff]
    %v5622 = vld [vmem:[%s5532 + $0x218] sm:$0xf]
    %v5623 = vld [vmem:[%s5532 + $0x21c] sm:$0xff]
    %v5624 = vld [vmem:[%s5532 + $0x224] sm:$0xf]
    %v5625 = vld [vmem:[%s5532 + $0x228] sm:$0xff]
    %v5626 = vld [vmem:[%s5532 + $0x230] sm:$0xf]
    %v5627 = vld [vmem:[%s5532 + $0x234] sm:$0xff]
    %v5628 = vld [vmem:[%s5532 + $0x23c] sm:$0xf]
    %v5629 = vld [vmem:[%s5532 + $0x240] sm:$0xff]
    %v5630 = vld [vmem:[%s5532 + $0x248] sm:$0xf]
    %v5631 = vld [vmem:[%s5532 + $0x24c] sm:$0xff]
    %v5632 = vld [vmem:[%s5532 + $0x254] sm:$0xf]
    %v5633 = vld [vmem:[%s5532 + $0x258] sm:$0xff]
    %v5634 = vld [vmem:[%s5532 + $0x260] sm:$0xf]
    %v5635 = vld [vmem:[%s5532 + $0x264] sm:$0xff]
    %v5636 = vld [vmem:[%s5532 + $0x26c] sm:$0xf]
    %v5637 = vld [vmem:[%s5532 + $0x270] sm:$0xff]
    %v5638 = vld [vmem:[%s5532 + $0x278] sm:$0xf]
    %v5639 = vld [vmem:[%s5532 + $0x27c] sm:$0xff]
    %v5640 = vld [vmem:[%s5532 + $0x284] sm:$0xf]
    %v5641 = vld [vmem:[%s5532 + $0x288] sm:$0xff]
    %v5642 = vld [vmem:[%s5532 + $0x290] sm:$0xf]
    %v5643 = vld [vmem:[%s5532 + $0x294] sm:$0xff]
    %v5644 = vld [vmem:[%s5532 + $0x29c] sm:$0xf]
    %v5645 = vld [vmem:[%s5532 + $0x2a0] sm:$0xff]
    %v5646 = vld [vmem:[%s5532 + $0x2a8] sm:$0xf]
    %v5647 = vld [vmem:[%s5532 + $0x2ac] sm:$0xff]
    %v5648 = vld [vmem:[%s5532 + $0x2b4] sm:$0xf]
    %v5649 = vld [vmem:[%s5532 + $0x2b8] sm:$0xff]
    %v5650 = vld [vmem:[%s5532 + $0x2c0] sm:$0xf]
    %v5651 = vld [vmem:[%s5532 + $0x2c4] sm:$0xff]
    %v5652 = vld [vmem:[%s5532 + $0x2cc] sm:$0xf]
    %v5653 = vld [vmem:[%s5532 + $0x2d0] sm:$0xff]
    %v5654 = vld [vmem:[%s5532 + $0x2d8] sm:$0xf]
    %v5655 = vld [vmem:[%s5532 + $0x2dc] sm:$0xff]
    %v5656 = vld [vmem:[%s5532 + $0x2e4] sm:$0xf]
    %v5657 = vld [vmem:[%s5532 + $0x2e8] sm:$0xff]
    %v5658 = vld [vmem:[%s5532 + $0x2f0] sm:$0xf]
    %v5659 = vld [vmem:[%s5532 + $0x2f4] sm:$0xff]
    %v5660 = vld [vmem:[%s5532 + $0x2fc] sm:$0xf]
    %v5661 = vld [vmem:[%s5532 + $0x300] sm:$0xff]
    %v5662 = vld [vmem:[%s5532 + $0x308] sm:$0xf]
    %v5663 = vld [vmem:[%s5532 + $0x30c] sm:$0xff]
    %v5664 = vld [vmem:[%s5532 + $0x314] sm:$0xf]
    %v5665 = vld [vmem:[%s5532 + $0x318] sm:$0xff]
    %v5666 = vld [vmem:[%s5532 + $0x320] sm:$0xf]
    %v5667 = vld [vmem:[%s5532 + $0x324] sm:$0xff]
    %v5668 = vld [vmem:[%s5532 + $0x32c] sm:$0xf]
    %v5669 = vld [vmem:[%s5532 + $0x330] sm:$0xff]
    %v5670 = vld [vmem:[%s5532 + $0x338] sm:$0xf]
    %v5671 = vld [vmem:[%s5532 + $0x33c] sm:$0xff]
    %v5672 = vld [vmem:[%s5532 + $0x344] sm:$0xf]
    %v5673 = vld [vmem:[%s5532 + $0x348] sm:$0xff]
    %v5674 = vld [vmem:[%s5532 + $0x350] sm:$0xf]
    %v5675 = vld [vmem:[%s5532 + $0x354] sm:$0xff]
    %v5676 = vld [vmem:[%s5532 + $0x35c] sm:$0xf]
    %v5677 = vld [vmem:[%s5532 + $0x360] sm:$0xff]
    %v5678 = vld [vmem:[%s5532 + $0x368] sm:$0xf]
    %v5679 = vld [vmem:[%s5532 + $0x36c] sm:$0xff]
    %v5680 = vld [vmem:[%s5532 + $0x374] sm:$0xf]
    %v5681 = vld [vmem:[%s5532 + $0x378] sm:$0xff]
    %v5682 = vld [vmem:[%s5532 + $0x380] sm:$0xf]
    %v5683 = vld [vmem:[%s5532 + $0x384] sm:$0xff]
    %v5684 = vld [vmem:[%s5532 + $0x38c] sm:$0xf]
    %v5685 = vld [vmem:[%s5532 + $0x390] sm:$0xff]
    %v5686 = vld [vmem:[%s5532 + $0x398] sm:$0xf]
    %v5687 = vld [vmem:[%s5532 + $0x39c] sm:$0xff]
    %v5688 = vld [vmem:[%s5532 + $0x3a4] sm:$0xf]
    %v5689 = vld [vmem:[%s5532 + $0x3a8] sm:$0xff]
    %v5690 = vld [vmem:[%s5532 + $0x3b0] sm:$0xf]
    %v5691 = vld [vmem:[%s5532 + $0x3b4] sm:$0xff]
    %v5692 = vld [vmem:[%s5532 + $0x3bc] sm:$0xf]
    %v5714 = vunpack.c.l.b16 %v5348
    %v5715 = vunpack.c.h.b16 %v5348
    %v5716 = vunpack.c.l.b16 %v5349
    %v5717 = vunpack.c.h.b16 %v5349
    %v5718 = vunpack.c.l.b16 %v5350
    %v5719 = vunpack.c.l.b16 %v5351
    %v5720 = vunpack.c.h.b16 %v5351
    %v5721 = vunpack.c.l.b16 %v5352
    %v5722 = vunpack.c.h.b16 %v5352
    %v5723 = vunpack.c.l.b16 %v5353
    %v5724 = vunpack.c.l.b16 %v5354
    %v5725 = vunpack.c.h.b16 %v5354
    %v5726 = vunpack.c.l.b16 %v5355
    %v5727 = vunpack.c.h.b16 %v5355
    %v5728 = vunpack.c.l.b16 %v5356
    %v5729 = vunpack.c.l.b16 %v5357
    %v5730 = vunpack.c.h.b16 %v5357
    %v5731 = vunpack.c.l.b16 %v5358
    %v5732 = vunpack.c.h.b16 %v5358
    %v5733 = vunpack.c.l.b16 %v5359
    %v5734 = vunpack.c.l.b16 %v5360
    %v5735 = vunpack.c.h.b16 %v5360
    %v5736 = vunpack.c.l.b16 %v5361
    %v5737 = vunpack.c.h.b16 %v5361
    %v5738 = vunpack.c.l.b16 %v5362
    %v5739 = vunpack.c.l.b16 %v5363
    %v5740 = vunpack.c.h.b16 %v5363
    %v5741 = vunpack.c.l.b16 %v5364
    %v5742 = vunpack.c.h.b16 %v5364
    %v5743 = vunpack.c.l.b16 %v5365
    %v5744 = vunpack.c.l.b16 %v5529
    %v5745 = vunpack.c.h.b16 %v5529
    %v5746 = vunpack.c.l.b16 %v5530
    %v5747 = vunpack.c.h.b16 %v5530
    %v5748 = vunpack.c.l.b16 %v5531
    %v5749 = vpack.c.b16 %v5719, %v5714
    %v5750 = vpack.c.b16 %v5720, %v5715
    %v5751 = vpack.c.b16 %v5721, %v5716
    %v5752 = vpack.c.b16 %v5722, %v5717
    %v5753 = vpack.c.b16 %v5723, %v5718
    %v5754 = vpack.c.b16 %v5729, %v5724
    %v5755 = vpack.c.b16 %v5730, %v5725
    %v5756 = vpack.c.b16 %v5731, %v5726
    %v5757 = vpack.c.b16 %v5732, %v5727
    %v5758 = vpack.c.b16 %v5733, %v5728
    %v5759 = vpack.c.b16 %v5739, %v5734
    %v5760 = vpack.c.b16 %v5740, %v5735
    %v5761 = vpack.c.b16 %v5741, %v5736
    %v5762 = vpack.c.b16 %v5742, %v5737
    %v5763 = vpack.c.b16 %v5743, %v5738
    %v5764 = vpack.c.b16 %v5744, %v5744
    %v5765 = vpack.c.b16 %v5745, %v5745
    %v5766 = vpack.c.b16 %v5746, %v5746
    %v5767 = vpack.c.b16 %v5747, %v5747
    %v5768 = vpack.c.b16 %v5748, %v5748
    %v5770 = vshrl.u32 %v5749, 16
    %v5772 = vshll.u32 %v5749, 16
    %v5774 = vrot.slane %v5772, 1
    %v5775 = vor.u32 %v5770, %v5774
    %v5777 = vshll.u32 %v5754, 16
    %v5779 = vrot.slane %v5777, 1
    %v5780 = vsel %vm1173, %v5775, %v5779
    %v5782 = vshrl.u32 %v5750, 16
    %v5784 = vshll.u32 %v5750, 16
    %v5786 = vrot.slane %v5784, 1
    %v5787 = vor.u32 %v5782, %v5786
    %v5789 = vshll.u32 %v5755, 16
    %v5791 = vrot.slane %v5789, 1
    %v5792 = vsel %vm1173, %v5787, %v5791
    %v5794 = vshrl.u32 %v5751, 16
    %v5796 = vshll.u32 %v5751, 16
    %v5798 = vrot.slane %v5796, 1
    %v5799 = vor.u32 %v5794, %v5798
    %v5801 = vshll.u32 %v5756, 16
    %v5803 = vrot.slane %v5801, 1
    %v5804 = vsel %vm1173, %v5799, %v5803
    %v5806 = vshrl.u32 %v5752, 16
    %v5808 = vshll.u32 %v5752, 16
    %v5810 = vrot.slane %v5808, 1
    %v5811 = vor.u32 %v5806, %v5810
    %v5813 = vshll.u32 %v5757, 16
    %v5815 = vrot.slane %v5813, 1
    %v5816 = vsel %vm1173, %v5811, %v5815
    %v5818 = vshrl.u32 %v5753, 16
    %v5820 = vshll.u32 %v5753, 16
    %v5822 = vrot.slane %v5820, 1
    %v5823 = vor.u32 %v5818, %v5822
    %v5825 = vshll.u32 %v5758, 16
    %v5827 = vrot.slane %v5825, 1
    %v5828 = vsel %vm1173, %v5823, %v5827
    %v5829 = vshrl.u32 %v5754, 16
    %v5831 = vor.u32 %v5829, %v5779
    %v5833 = vshll.u32 %v5759, 16
    %v5835 = vrot.slane %v5833, 1
    %v5836 = vsel %vm1173, %v5831, %v5835
    %v5837 = vshrl.u32 %v5755, 16
    %v5839 = vor.u32 %v5837, %v5791
    %v5841 = vshll.u32 %v5760, 16
    %v5843 = vrot.slane %v5841, 1
    %v5844 = vsel %vm1173, %v5839, %v5843
    %v5845 = vshrl.u32 %v5756, 16
    %v5847 = vor.u32 %v5845, %v5803
    %v5849 = vshll.u32 %v5761, 16
    %v5851 = vrot.slane %v5849, 1
    %v5852 = vsel %vm1173, %v5847, %v5851
    %v5853 = vshrl.u32 %v5757, 16
    %v5855 = vor.u32 %v5853, %v5815
    %v5857 = vshll.u32 %v5762, 16
    %v5859 = vrot.slane %v5857, 1
    %v5860 = vsel %vm1173, %v5855, %v5859
    %v5861 = vshrl.u32 %v5758, 16
    %v5863 = vor.u32 %v5861, %v5827
    %v5865 = vshll.u32 %v5763, 16
    %v5867 = vrot.slane %v5865, 1
    %v5868 = vsel %vm1173, %v5863, %v5867
    %v5869 = vshrl.u32 %v5759, 16
    %v5871 = vor.u32 %v5869, %v5835
    %v5873 = vshll.u32 %v5764, 16
    %v5875 = vrot.slane %v5873, 1
    %v5876 = vsel %vm1173, %v5871, %v5875
    %v5877 = vshrl.u32 %v5760, 16
    %v5879 = vor.u32 %v5877, %v5843
    %v5881 = vshll.u32 %v5765, 16
    %v5883 = vrot.slane %v5881, 1
    %v5884 = vsel %vm1173, %v5879, %v5883
    %v5885 = vshrl.u32 %v5761, 16
    %v5887 = vor.u32 %v5885, %v5851
    %v5889 = vshll.u32 %v5766, 16
    %v5891 = vrot.slane %v5889, 1
    %v5892 = vsel %vm1173, %v5887, %v5891
    %v5893 = vshrl.u32 %v5762, 16
    %v5895 = vor.u32 %v5893, %v5859
    %v5897 = vshll.u32 %v5767, 16
    %v5899 = vrot.slane %v5897, 1
    %v5900 = vsel %vm1173, %v5895, %v5899
    %v5901 = vshrl.u32 %v5763, 16
    %v5903 = vor.u32 %v5901, %v5867
    %v5905 = vshll.u32 %v5768, 16
    %v5907 = vrot.slane %v5905, 1
    %v5908 = vsel %vm1173, %v5903, %v5907
    %v5909 = vshrl.u32 %v5764, 16
    %v5911 = vor.u32 %v5909, %v5875
    %v5912 = vshrl.u32 %v5765, 16
    %v5914 = vor.u32 %v5912, %v5883
    %v5915 = vshrl.u32 %v5766, 16
    %v5917 = vor.u32 %v5915, %v5891
    %v5918 = vshrl.u32 %v5767, 16
    %v5920 = vor.u32 %v5918, %v5899
    %v5921 = vshrl.u32 %v5768, 16
    %v5923 = vor.u32 %v5921, %v5907
    %v6104 = vunpack.c.l.b16 %v5533
    %v6105 = vunpack.c.h.b16 %v5533
    %v6106 = vunpack.c.l.b16 %v5534
    %v6107 = vunpack.c.l.b16 %v5535
    %v6108 = vunpack.c.h.b16 %v5535
    %v6109 = vunpack.c.l.b16 %v5536
    %v6110 = vunpack.c.l.b16 %v5537
    %v6111 = vunpack.c.h.b16 %v5537
    %v6112 = vunpack.c.l.b16 %v5538
    %v6113 = vunpack.c.l.b16 %v5539
    %v6114 = vunpack.c.h.b16 %v5539
    %v6115 = vunpack.c.l.b16 %v5540
    %v6116 = vunpack.c.l.b16 %v5541
    %v6117 = vunpack.c.h.b16 %v5541
    %v6118 = vunpack.c.l.b16 %v5542
    %v6119 = vunpack.c.l.b16 %v5543
    %v6120 = vunpack.c.h.b16 %v5543
    %v6121 = vunpack.c.l.b16 %v5544
    %v6122 = vunpack.c.l.b16 %v5545
    %v6123 = vunpack.c.h.b16 %v5545
    %v6124 = vunpack.c.l.b16 %v5546
    %v6125 = vunpack.c.l.b16 %v5547
    %v6126 = vunpack.c.h.b16 %v5547
    %v6127 = vunpack.c.l.b16 %v5548
    %v6128 = vunpack.c.l.b16 %v5549
    %v6129 = vunpack.c.h.b16 %v5549
    %v6130 = vunpack.c.l.b16 %v5550
    %v6131 = vunpack.c.l.b16 %v5551
    %v6132 = vunpack.c.h.b16 %v5551
    %v6133 = vunpack.c.l.b16 %v5552
    %v6134 = vunpack.c.l.b16 %v5553
    %v6135 = vunpack.c.h.b16 %v5553
    %v6136 = vunpack.c.l.b16 %v5554
    %v6137 = vunpack.c.l.b16 %v5555
    %v6138 = vunpack.c.h.b16 %v5555
    %v6139 = vunpack.c.l.b16 %v5556
    %v6140 = vunpack.c.l.b16 %v5557
    %v6141 = vunpack.c.h.b16 %v5557
    %v6142 = vunpack.c.l.b16 %v5558
    %v6143 = vunpack.c.l.b16 %v5559
    %v6144 = vunpack.c.h.b16 %v5559
    %v6145 = vunpack.c.l.b16 %v5560
    %v6146 = vunpack.c.l.b16 %v5561
    %v6147 = vunpack.c.h.b16 %v5561
    %v6148 = vunpack.c.l.b16 %v5562
    %v6149 = vunpack.c.l.b16 %v5563
    %v6150 = vunpack.c.h.b16 %v5563
    %v6151 = vunpack.c.l.b16 %v5564
    %v6152 = vunpack.c.l.b16 %v5565
    %v6153 = vunpack.c.h.b16 %v5565
    %v6154 = vunpack.c.l.b16 %v5566
    %v6155 = vunpack.c.l.b16 %v5567
    %v6156 = vunpack.c.h.b16 %v5567
    %v6157 = vunpack.c.l.b16 %v5568
    %v6158 = vunpack.c.l.b16 %v5569
    %v6159 = vunpack.c.h.b16 %v5569
    %v6160 = vunpack.c.l.b16 %v5570
    %v6161 = vunpack.c.l.b16 %v5571
    %v6162 = vunpack.c.h.b16 %v5571
    %v6163 = vunpack.c.l.b16 %v5572
    %v6164 = vunpack.c.l.b16 %v5573
    %v6165 = vunpack.c.h.b16 %v5573
    %v6166 = vunpack.c.l.b16 %v5574
    %v6167 = vunpack.c.l.b16 %v5575
    %v6168 = vunpack.c.h.b16 %v5575
    %v6169 = vunpack.c.l.b16 %v5576
    %v6170 = vunpack.c.l.b16 %v5577
    %v6171 = vunpack.c.h.b16 %v5577
    %v6172 = vunpack.c.l.b16 %v5578
    %v6173 = vunpack.c.l.b16 %v5579
    %v6174 = vunpack.c.h.b16 %v5579
    %v6175 = vunpack.c.l.b16 %v5580
    %v6176 = vunpack.c.l.b16 %v5581
    %v6177 = vunpack.c.h.b16 %v5581
    %v6178 = vunpack.c.l.b16 %v5582
    %v6179 = vunpack.c.l.b16 %v5583
    %v6180 = vunpack.c.h.b16 %v5583
    %v6181 = vunpack.c.l.b16 %v5584
    %v6182 = vunpack.c.l.b16 %v5585
    %v6183 = vunpack.c.h.b16 %v5585
    %v6184 = vunpack.c.l.b16 %v5586
    %v6185 = vunpack.c.l.b16 %v5587
    %v6186 = vunpack.c.h.b16 %v5587
    %v6187 = vunpack.c.l.b16 %v5588
    %v6188 = vunpack.c.l.b16 %v5589
    %v6189 = vunpack.c.h.b16 %v5589
    %v6190 = vunpack.c.l.b16 %v5590
    %v6191 = vunpack.c.l.b16 %v5591
    %v6192 = vunpack.c.h.b16 %v5591
    %v6193 = vunpack.c.l.b16 %v5592
    %v6194 = vunpack.c.l.b16 %v5593
    %v6195 = vunpack.c.h.b16 %v5593
    %v6196 = vunpack.c.l.b16 %v5594
    %v6197 = vunpack.c.l.b16 %v5595
    %v6198 = vunpack.c.h.b16 %v5595
    %v6199 = vunpack.c.l.b16 %v5596
    %v6200 = vunpack.c.l.b16 %v5597
    %v6201 = vunpack.c.h.b16 %v5597
    %v6202 = vunpack.c.l.b16 %v5598
    %v6203 = vunpack.c.l.b16 %v5599
    %v6204 = vunpack.c.h.b16 %v5599
    %v6205 = vunpack.c.l.b16 %v5600
    %v6206 = vunpack.c.l.b16 %v5601
    %v6207 = vunpack.c.h.b16 %v5601
    %v6208 = vunpack.c.l.b16 %v5602
    %v6209 = vunpack.c.l.b16 %v5603
    %v6210 = vunpack.c.h.b16 %v5603
    %v6211 = vunpack.c.l.b16 %v5604
    %v6212 = vunpack.c.l.b16 %v5605
    %v6213 = vunpack.c.h.b16 %v5605
    %v6214 = vunpack.c.l.b16 %v5606
    %v6215 = vunpack.c.l.b16 %v5607
    %v6216 = vunpack.c.h.b16 %v5607
    %v6217 = vunpack.c.l.b16 %v5608
    %v6218 = vunpack.c.l.b16 %v5609
    %v6219 = vunpack.c.h.b16 %v5609
    %v6220 = vunpack.c.l.b16 %v5610
    %v6221 = vunpack.c.l.b16 %v5611
    %v6222 = vunpack.c.h.b16 %v5611
    %v6223 = vunpack.c.l.b16 %v5612
    %v6224 = vunpack.c.l.b16 %v5613
    %v6225 = vunpack.c.h.b16 %v5613
    %v6226 = vunpack.c.l.b16 %v5614
    %v6227 = vunpack.c.l.b16 %v5615
    %v6228 = vunpack.c.h.b16 %v5615
    %v6229 = vunpack.c.l.b16 %v5616
    %v6230 = vunpack.c.l.b16 %v5617
    %v6231 = vunpack.c.h.b16 %v5617
    %v6232 = vunpack.c.l.b16 %v5618
    %v6233 = vunpack.c.l.b16 %v5619
    %v6234 = vunpack.c.h.b16 %v5619
    %v6235 = vunpack.c.l.b16 %v5620
    %v6236 = vunpack.c.l.b16 %v5621
    %v6237 = vunpack.c.h.b16 %v5621
    %v6238 = vunpack.c.l.b16 %v5622
    %v6239 = vunpack.c.l.b16 %v5623
    %v6240 = vunpack.c.h.b16 %v5623
    %v6241 = vunpack.c.l.b16 %v5624
    %v6242 = vunpack.c.l.b16 %v5625
    %v6243 = vunpack.c.h.b16 %v5625
    %v6244 = vunpack.c.l.b16 %v5626
    %v6245 = vunpack.c.l.b16 %v5627
    %v6246 = vunpack.c.h.b16 %v5627
    %v6247 = vunpack.c.l.b16 %v5628
    %v6248 = vunpack.c.l.b16 %v5629
    %v6249 = vunpack.c.h.b16 %v5629
    %v6250 = vunpack.c.l.b16 %v5630
    %v6251 = vunpack.c.l.b16 %v5631
    %v6252 = vunpack.c.h.b16 %v5631
    %v6253 = vunpack.c.l.b16 %v5632
    %v6254 = vunpack.c.l.b16 %v5633
    %v6255 = vunpack.c.h.b16 %v5633
    %v6256 = vunpack.c.l.b16 %v5634
    %v6257 = vunpack.c.l.b16 %v5635
    %v6258 = vunpack.c.h.b16 %v5635
    %v6259 = vunpack.c.l.b16 %v5636
    %v6260 = vunpack.c.l.b16 %v5637
    %v6261 = vunpack.c.h.b16 %v5637
    %v6262 = vunpack.c.l.b16 %v5638
    %v6263 = vunpack.c.l.b16 %v5639
    %v6264 = vunpack.c.h.b16 %v5639
    %v6265 = vunpack.c.l.b16 %v5640
    %v6266 = vunpack.c.l.b16 %v5641
    %v6267 = vunpack.c.h.b16 %v5641
    %v6268 = vunpack.c.l.b16 %v5642
    %v6269 = vunpack.c.l.b16 %v5643
    %v6270 = vunpack.c.h.b16 %v5643
    %v6271 = vunpack.c.l.b16 %v5644
    %v6272 = vunpack.c.l.b16 %v5645
    %v6273 = vunpack.c.h.b16 %v5645
    %v6274 = vunpack.c.l.b16 %v5646
    %v6275 = vunpack.c.l.b16 %v5647
    %v6276 = vunpack.c.h.b16 %v5647
    %v6277 = vunpack.c.l.b16 %v5648
    %v6278 = vunpack.c.l.b16 %v5649
    %v6279 = vunpack.c.h.b16 %v5649
    %v6280 = vunpack.c.l.b16 %v5650
    %v6281 = vunpack.c.l.b16 %v5651
    %v6282 = vunpack.c.h.b16 %v5651
    %v6283 = vunpack.c.l.b16 %v5652
    %v6284 = vunpack.c.l.b16 %v5653
    %v6285 = vunpack.c.h.b16 %v5653
    %v6286 = vunpack.c.l.b16 %v5654
    %v6287 = vunpack.c.l.b16 %v5655
    %v6288 = vunpack.c.h.b16 %v5655
    %v6289 = vunpack.c.l.b16 %v5656
    %v6290 = vunpack.c.l.b16 %v5657
    %v6291 = vunpack.c.h.b16 %v5657
    %v6292 = vunpack.c.l.b16 %v5658
    %v6293 = vunpack.c.l.b16 %v5659
    %v6294 = vunpack.c.h.b16 %v5659
    %v6295 = vunpack.c.l.b16 %v5660
    %v6296 = vunpack.c.l.b16 %v5661
    %v6297 = vunpack.c.h.b16 %v5661
    %v6298 = vunpack.c.l.b16 %v5662
    %v6299 = vunpack.c.l.b16 %v5663
    %v6300 = vunpack.c.h.b16 %v5663
    %v6301 = vunpack.c.l.b16 %v5664
    %v6302 = vunpack.c.l.b16 %v5665
    %v6303 = vunpack.c.h.b16 %v5665
    %v6304 = vunpack.c.l.b16 %v5666
    %v6305 = vunpack.c.l.b16 %v5667
    %v6306 = vunpack.c.h.b16 %v5667
    %v6307 = vunpack.c.l.b16 %v5668
    %v6308 = vunpack.c.l.b16 %v5669
    %v6309 = vunpack.c.h.b16 %v5669
    %v6310 = vunpack.c.l.b16 %v5670
    %v6311 = vunpack.c.l.b16 %v5671
    %v6312 = vunpack.c.h.b16 %v5671
    %v6313 = vunpack.c.l.b16 %v5672
    %v6314 = vunpack.c.l.b16 %v5673
    %v6315 = vunpack.c.h.b16 %v5673
    %v6316 = vunpack.c.l.b16 %v5674
    %v6317 = vunpack.c.l.b16 %v5675
    %v6318 = vunpack.c.h.b16 %v5675
    %v6319 = vunpack.c.l.b16 %v5676
    %v6320 = vunpack.c.l.b16 %v5677
    %v6321 = vunpack.c.h.b16 %v5677
    %v6322 = vunpack.c.l.b16 %v5678
    %v6323 = vunpack.c.l.b16 %v5679
    %v6324 = vunpack.c.h.b16 %v5679
    %v6325 = vunpack.c.l.b16 %v5680
    %v6326 = vunpack.c.l.b16 %v5681
    %v6327 = vunpack.c.h.b16 %v5681
    %v6328 = vunpack.c.l.b16 %v5682
    %v6329 = vunpack.c.l.b16 %v5683
    %v6330 = vunpack.c.h.b16 %v5683
    %v6331 = vunpack.c.l.b16 %v5684
    %v6332 = vunpack.c.l.b16 %v5685
    %v6333 = vunpack.c.h.b16 %v5685
    %v6334 = vunpack.c.l.b16 %v5686
    %v6335 = vunpack.c.l.b16 %v5687
    %v6336 = vunpack.c.h.b16 %v5687
    %v6337 = vunpack.c.l.b16 %v5688
    %v6338 = vunpack.c.l.b16 %v5689
    %v6339 = vunpack.c.h.b16 %v5689
    %v6340 = vunpack.c.l.b16 %v5690
    %v6341 = vunpack.c.l.b16 %v5691
    %v6342 = vunpack.c.h.b16 %v5691
    %v6343 = vunpack.c.l.b16 %v5692
    %v6344 = vpack.c.b16 %v6107, %v6104
    %v6345 = vpack.c.b16 %v6108, %v6105
    %v6346 = vpack.c.b16 %v6109, %v6106
    %v6347 = vpack.c.b16 %v6113, %v6110
    %v6348 = vpack.c.b16 %v6114, %v6111
    %v6349 = vpack.c.b16 %v6115, %v6112
    %v6350 = vpack.c.b16 %v6119, %v6116
    %v6351 = vpack.c.b16 %v6120, %v6117
    %v6352 = vpack.c.b16 %v6121, %v6118
    %v6353 = vpack.c.b16 %v6125, %v6122
    %v6354 = vpack.c.b16 %v6126, %v6123
    %v6355 = vpack.c.b16 %v6127, %v6124
    %v6356 = vpack.c.b16 %v6131, %v6128
    %v6357 = vpack.c.b16 %v6132, %v6129
    %v6358 = vpack.c.b16 %v6133, %v6130
    %v6359 = vpack.c.b16 %v6137, %v6134
    %v6360 = vpack.c.b16 %v6138, %v6135
    %v6361 = vpack.c.b16 %v6139, %v6136
    %v6362 = vpack.c.b16 %v6143, %v6140
    %v6363 = vpack.c.b16 %v6144, %v6141
    %v6364 = vpack.c.b16 %v6145, %v6142
    %v6365 = vpack.c.b16 %v6149, %v6146
    %v6366 = vpack.c.b16 %v6150, %v6147
    %v6367 = vpack.c.b16 %v6151, %v6148
    %v6368 = vpack.c.b16 %v6155, %v6152
    %v6369 = vpack.c.b16 %v6156, %v6153
    %v6370 = vpack.c.b16 %v6157, %v6154
    %v6371 = vpack.c.b16 %v6161, %v6158
    %v6372 = vpack.c.b16 %v6162, %v6159
    %v6373 = vpack.c.b16 %v6163, %v6160
    %v6374 = vpack.c.b16 %v6167, %v6164
    %v6375 = vpack.c.b16 %v6168, %v6165
    %v6376 = vpack.c.b16 %v6169, %v6166
    %v6377 = vpack.c.b16 %v6173, %v6170
    %v6378 = vpack.c.b16 %v6174, %v6171
    %v6379 = vpack.c.b16 %v6175, %v6172
    %v6380 = vpack.c.b16 %v6179, %v6176
    %v6381 = vpack.c.b16 %v6180, %v6177
    %v6382 = vpack.c.b16 %v6181, %v6178
    %v6383 = vpack.c.b16 %v6185, %v6182
    %v6384 = vpack.c.b16 %v6186, %v6183
    %v6385 = vpack.c.b16 %v6187, %v6184
    %v6386 = vpack.c.b16 %v6191, %v6188
    %v6387 = vpack.c.b16 %v6192, %v6189
    %v6388 = vpack.c.b16 %v6193, %v6190
    %v6389 = vpack.c.b16 %v6197, %v6194
    %v6390 = vpack.c.b16 %v6198, %v6195
    %v6391 = vpack.c.b16 %v6199, %v6196
    %v6392 = vpack.c.b16 %v6203, %v6200
    %v6393 = vpack.c.b16 %v6204, %v6201
    %v6394 = vpack.c.b16 %v6205, %v6202
    %v6395 = vpack.c.b16 %v6209, %v6206
    %v6396 = vpack.c.b16 %v6210, %v6207
    %v6397 = vpack.c.b16 %v6211, %v6208
    %v6398 = vpack.c.b16 %v6215, %v6212
    %v6399 = vpack.c.b16 %v6216, %v6213
    %v6400 = vpack.c.b16 %v6217, %v6214
    %v6401 = vpack.c.b16 %v6221, %v6218
    %v6402 = vpack.c.b16 %v6222, %v6219
    %v6403 = vpack.c.b16 %v6223, %v6220
    %v6404 = vpack.c.b16 %v6227, %v6224
    %v6405 = vpack.c.b16 %v6228, %v6225
    %v6406 = vpack.c.b16 %v6229, %v6226
    %v6407 = vpack.c.b16 %v6233, %v6230
    %v6408 = vpack.c.b16 %v6234, %v6231
    %v6409 = vpack.c.b16 %v6235, %v6232
    %v6410 = vpack.c.b16 %v6239, %v6236
    %v6411 = vpack.c.b16 %v6240, %v6237
    %v6412 = vpack.c.b16 %v6241, %v6238
    %v6413 = vpack.c.b16 %v6245, %v6242
    %v6414 = vpack.c.b16 %v6246, %v6243
    %v6415 = vpack.c.b16 %v6247, %v6244
    %v6416 = vpack.c.b16 %v6251, %v6248
    %v6417 = vpack.c.b16 %v6252, %v6249
    %v6418 = vpack.c.b16 %v6253, %v6250
    %v6419 = vpack.c.b16 %v6257, %v6254
    %v6420 = vpack.c.b16 %v6258, %v6255
    %v6421 = vpack.c.b16 %v6259, %v6256
    %v6422 = vpack.c.b16 %v6263, %v6260
    %v6423 = vpack.c.b16 %v6264, %v6261
    %v6424 = vpack.c.b16 %v6265, %v6262
    %v6425 = vpack.c.b16 %v6269, %v6266
    %v6426 = vpack.c.b16 %v6270, %v6267
    %v6427 = vpack.c.b16 %v6271, %v6268
    %v6428 = vpack.c.b16 %v6275, %v6272
    %v6429 = vpack.c.b16 %v6276, %v6273
    %v6430 = vpack.c.b16 %v6277, %v6274
    %v6431 = vpack.c.b16 %v6281, %v6278
    %v6432 = vpack.c.b16 %v6282, %v6279
    %v6433 = vpack.c.b16 %v6283, %v6280
    %v6434 = vpack.c.b16 %v6287, %v6284
    %v6435 = vpack.c.b16 %v6288, %v6285
    %v6436 = vpack.c.b16 %v6289, %v6286
    %v6437 = vpack.c.b16 %v6293, %v6290
    %v6438 = vpack.c.b16 %v6294, %v6291
    %v6439 = vpack.c.b16 %v6295, %v6292
    %v6440 = vpack.c.b16 %v6299, %v6296
    %v6441 = vpack.c.b16 %v6300, %v6297
    %v6442 = vpack.c.b16 %v6301, %v6298
    %v6443 = vpack.c.b16 %v6305, %v6302
    %v6444 = vpack.c.b16 %v6306, %v6303
    %v6445 = vpack.c.b16 %v6307, %v6304
    %v6446 = vpack.c.b16 %v6311, %v6308
    %v6447 = vpack.c.b16 %v6312, %v6309
    %v6448 = vpack.c.b16 %v6313, %v6310
    %v6449 = vpack.c.b16 %v6317, %v6314
    %v6450 = vpack.c.b16 %v6318, %v6315
    %v6451 = vpack.c.b16 %v6319, %v6316
    %v6452 = vpack.c.b16 %v6323, %v6320
    %v6453 = vpack.c.b16 %v6324, %v6321
    %v6454 = vpack.c.b16 %v6325, %v6322
    %v6455 = vpack.c.b16 %v6329, %v6326
    %v6456 = vpack.c.b16 %v6330, %v6327
    %v6457 = vpack.c.b16 %v6331, %v6328
    %v6458 = vpack.c.b16 %v6335, %v6332
    %v6459 = vpack.c.b16 %v6336, %v6333
    %v6460 = vpack.c.b16 %v6337, %v6334
    %v6461 = vpack.c.b16 %v6341, %v6338
    %v6462 = vpack.c.b16 %v6342, %v6339
    %v6463 = vpack.c.b16 %v6343, %v6340
    %6584 = vmatprep.subr.bf16.mxu0 %v6345
    %6585 = vmatpush1.bf16.msra.mxu0 %v6344
    %6586 = vmatprep.subr.bf16.mxu0 %v6348
    %6587 = vmatpush1.bf16.msra.mxu0 %v6347
    %6588 = vmatprep.subr.bf16.mxu0 %v6351
    %6589 = vmatpush1.bf16.msra.mxu0 %v6350
    %6590 = vmatprep.subr.bf16.mxu0 %v6354
    %6591 = vmatpush1.bf16.msra.mxu0 %v6353
    %6592 = vmatprep.subr.bf16.mxu0 %v6357
    %6593 = vmatpush1.bf16.msra.mxu0 %v6356
    %6594 = vmatprep.subr.bf16.mxu0 %v6360
    %6595 = vmatpush1.bf16.msra.mxu0 %v6359
    %6596 = vmatprep.subr.bf16.mxu0 %v6363
    %6597 = vmatpush1.bf16.msra.mxu0 %v6362
    %6598 = vmatprep.subr.bf16.mxu0 %v6366
    %6599 = vmatpush1.bf16.msra.mxu0 %v6365
    %6600 = vmatprep.subr.bf16.mxu0 %v6369
    %6601 = vmatpush1.bf16.msra.mxu0 %v6368
    %6602 = vmatprep.subr.bf16.mxu0 %v6372
    %6603 = vmatpush1.bf16.msra.mxu0 %v6371
    %6604 = vmatprep.subr.bf16.mxu0 %v6375
    %6605 = vmatpush1.bf16.msra.mxu0 %v6374
    %6606 = vmatprep.subr.bf16.mxu0 %v6378
    %6607 = vmatpush1.bf16.msra.mxu0 %v6377
    %6608 = vmatprep.subr.bf16.mxu0 %v6381
    %6609 = vmatpush1.bf16.msra.mxu0 %v6380
    %6610 = vmatprep.subr.bf16.mxu0 %v6384
    %6611 = vmatpush1.bf16.msra.mxu0 %v6383
    %6612 = vmatprep.subr.bf16.mxu0 %v6387
    %6613 = vmatpush1.bf16.msra.mxu0 %v6386
    %6614 = vmatprep.subr.bf16.mxu0 %v6390
    %6615 = vmatpush1.bf16.msra.mxu0 %v6389
    %6616 = vmatprep.mubr.bf16.mxu0 %v5792
    %6617 = vmatmul.mubr.bf16.gmra.mrb[0].mxu0 %v5780
    %v6618 = vpop.f32.mrb[0].mxu0
    %v6619 = vadd.f32 0.0, %v6618
    %v6620 = vpop.f32.mrb[0].mxu0
    %v6621 = vadd.f32 0.0, %v6620
    %v6622 = vpop.f32.mrb[0].mxu0
    %v6623 = vadd.f32 0.0, %v6622
    %v6624 = vpop.f32.mrb[0].mxu0
    %v6625 = vadd.f32 0.0, %v6624
    %6626 = vmatprep.mubr.bf16.mxu0 %v5844
    %6627 = vmatmul.mubr.bf16.gmra.mrb[0].mxu0 %v5836
    %v6628 = vpop.f32.mrb[0].mxu0
    %v6629 = vadd.f32 0.0, %v6628
    %v6630 = vpop.f32.mrb[0].mxu0
    %v6631 = vadd.f32 0.0, %v6630
    %v6632 = vpop.f32.mrb[0].mxu0
    %v6633 = vadd.f32 0.0, %v6632
    %v6634 = vpop.f32.mrb[0].mxu0
    %v6635 = vadd.f32 0.0, %v6634
    %6636 = vmatprep.mubr.bf16.mxu0 %v5884
    %6637 = vmatmul.mubr.bf16.gmra.mrb[0].mxu0 %v5876
    %v6638 = vpop.f32.mrb[0].mxu0
    %v6639 = vadd.f32 0.0, %v6638
    %v6640 = vpop.f32.mrb[0].mxu0
    %v6641 = vadd.f32 0.0, %v6640
    %v6642 = vpop.f32.mrb[0].mxu0
    %v6643 = vadd.f32 0.0, %v6642
    %v6644 = vpop.f32.mrb[0].mxu0
    %v6645 = vadd.f32 0.0, %v6644
    %6646 = vmatprep.mubr.bf16.mxu0 %v5914
    %6647 = vmatmul.mubr.bf16.gmra.mrb[0].mxu0 %v5911
    %v6648 = vpop.f32.mrb[0].mxu0
    %v6649 = vadd.f32 0.0, %v6648
    %v6650 = vpop.f32.mrb[0].mxu0
    %v6651 = vadd.f32 0.0, %v6650
    %v6652 = vpop.f32.mrb[0].mxu0
    %v6653 = vpop.f32.mrb[0].mxu0
    %6654 = vdwg.mxu0
    %6655 = vmatprep.subr.bf16.mxu0 %v6393
    %6656 = vmatpush1.bf16.msra.mxu0 %v6392
    %6657 = vmatprep.subr.bf16.mxu0 %v6396
    %6658 = vmatpush1.bf16.msra.mxu0 %v6395
    %6659 = vmatprep.subr.bf16.mxu0 %v6399
    %6660 = vmatpush1.bf16.msra.mxu0 %v6398
    %6661 = vmatprep.subr.bf16.mxu0 %v6402
    %6662 = vmatpush1.bf16.msra.mxu0 %v6401
    %6663 = vmatprep.subr.bf16.mxu0 %v6405
    %6664 = vmatpush1.bf16.msra.mxu0 %v6404
    %6665 = vmatprep.subr.bf16.mxu0 %v6408
    %6666 = vmatpush1.bf16.msra.mxu0 %v6407
    %6667 = vmatprep.subr.bf16.mxu0 %v6411
    %6668 = vmatpush1.bf16.msra.mxu0 %v6410
    %6669 = vmatprep.subr.bf16.mxu0 %v6414
    %6670 = vmatpush1.bf16.msra.mxu0 %v6413
    %6671 = vmatprep.subr.bf16.mxu0 %v6417
    %6672 = vmatpush1.bf16.msra.mxu0 %v6416
    %6673 = vmatprep.subr.bf16.mxu0 %v6420
    %6674 = vmatpush1.bf16.msra.mxu0 %v6419
    %6675 = vmatprep.subr.bf16.mxu0 %v6423
    %6676 = vmatpush1.bf16.msra.mxu0 %v6422
    %6677 = vmatprep.subr.bf16.mxu0 %v6426
    %6678 = vmatpush1.bf16.msra.mxu0 %v6425
    %6679 = vmatprep.subr.bf16.mxu0 %v6429
    %6680 = vmatpush1.bf16.msra.mxu0 %v6428
    %6681 = vmatprep.subr.bf16.mxu0 %v6432
    %6682 = vmatpush1.bf16.msra.mxu0 %v6431
    %6683 = vmatprep.subr.bf16.mxu0 %v6435
    %6684 = vmatpush1.bf16.msra.mxu0 %v6434
    %6685 = vmatprep.subr.bf16.mxu0 %v6438
    %6686 = vmatpush1.bf16.msra.mxu0 %v6437
    %6687 = vmatprep.mubr.bf16.mxu0 %v5816
    %6688 = vmatmul.mubr.bf16.gmra.mrb[0].mxu0 %v5804
    %v6689 = vpop.f32.mrb[0].mxu0
    %v6690 = vadd.f32 %v6619, %v6689
    %v6691 = vpop.f32.mrb[0].mxu0
    %v6692 = vadd.f32 %v6621, %v6691
    %v6693 = vpop.f32.mrb[0].mxu0
    %v6694 = vadd.f32 %v6623, %v6693
    %v6695 = vpop.f32.mrb[0].mxu0
    %v6696 = vadd.f32 %v6625, %v6695
    %6697 = vmatprep.mubr.bf16.mxu0 %v5860
    %6698 = vmatmul.mubr.bf16.gmra.mrb[0].mxu0 %v5852
    %v6699 = vpop.f32.mrb[0].mxu0
    %v6700 = vadd.f32 %v6629, %v6699
    %v6701 = vpop.f32.mrb[0].mxu0
    %v6702 = vadd.f32 %v6631, %v6701
    %v6703 = vpop.f32.mrb[0].mxu0
    %v6704 = vadd.f32 %v6633, %v6703
    %v6705 = vpop.f32.mrb[0].mxu0
    %v6706 = vadd.f32 %v6635, %v6705
    %6707 = vmatprep.mubr.bf16.mxu0 %v5900
    %6708 = vmatmul.mubr.bf16.gmra.mrb[0].mxu0 %v5892
    %v6709 = vpop.f32.mrb[0].mxu0
    %v6710 = vadd.f32 %v6639, %v6709
    %v6711 = vpop.f32.mrb[0].mxu0
    %v6712 = vadd.f32 %v6641, %v6711
    %v6713 = vpop.f32.mrb[0].mxu0
    %v6714 = vadd.f32 %v6643, %v6713
    %v6715 = vpop.f32.mrb[0].mxu0
    %v6716 = vadd.f32 %v6645, %v6715
    %6717 = vmatprep.mubr.bf16.mxu0 %v5920
    %6718 = vmatmul.mubr.bf16.gmra.mrb[0].mxu0 %v5917
    %v6719 = vpop.f32.mrb[0].mxu0
    %v6720 = vadd.f32 %v6649, %v6719
    %v6721 = vpop.f32.mrb[0].mxu0
    %v6722 = vadd.f32 %v6651, %v6721
    %v6723 = vpop.f32.mrb[0].mxu0
    %v6724 = vpop.f32.mrb[0].mxu0
    %6725 = vdwg.mxu0
    %6726 = vmatprep.subr.bf16.mxu0 %v6441
    %6727 = vmatpush1.bf16.msra.mxu0 %v6440
    %6728 = vmatprep.subr.bf16.mxu0 %v6444
    %6729 = vmatpush1.bf16.msra.mxu0 %v6443
    %6730 = vmatprep.subr.bf16.mxu0 %v6447
    %6731 = vmatpush1.bf16.msra.mxu0 %v6446
    %6732 = vmatprep.subr.bf16.mxu0 %v6450
    %6733 = vmatpush1.bf16.msra.mxu0 %v6449
    %6734 = vmatprep.subr.bf16.mxu0 %v6453
    %6735 = vmatpush1.bf16.msra.mxu0 %v6452
    %6736 = vmatprep.subr.bf16.mxu0 %v6456
    %6737 = vmatpush1.bf16.msra.mxu0 %v6455
    %6738 = vmatprep.subr.bf16.mxu0 %v6459
    %6739 = vmatpush1.bf16.msra.mxu0 %v6458
    %6740 = vmatprep.subr.bf16.mxu0 %v6462
    %6741 = vmatpush1.bf16.msra.mxu0 %v6461
    %6742 = vmatprep.subr.bf16.mxu0 0
    %6743 = vmatpush1.bf16.msra.mxu0 0
    %6744 = vmatprep.subr.bf16.mxu0 0
    %6745 = vmatpush1.bf16.msra.mxu0 0
    %6746 = vmatprep.subr.bf16.mxu0 0
    %6747 = vmatpush1.bf16.msra.mxu0 0
    %6748 = vmatprep.subr.bf16.mxu0 0
    %6749 = vmatpush1.bf16.msra.mxu0 0
    %6750 = vmatprep.subr.bf16.mxu0 0
    %6751 = vmatpush1.bf16.msra.mxu0 0
    %6752 = vmatprep.subr.bf16.mxu0 0
    %6753 = vmatpush1.bf16.msra.mxu0 0
    %6754 = vmatprep.subr.bf16.mxu0 0
    %6755 = vmatpush1.bf16.msra.mxu0 0
    %6756 = vmatprep.subr.bf16.mxu0 0
    %6757 = vmatpush1.bf16.msra.mxu0 0
    %6758 = vmatprep.mubr.bf16.mxu0 0
    %6759 = vmatmul.mubr.bf16.gmra.mrb[0].mxu0 %v5828
    %v6760 = vpop.f32.mrb[0].mxu0
    %v6761 = vadd.f32 %v6690, %v6760
    %v6762 = vpop.f32.mrb[0].mxu0
    %v6763 = vadd.f32 %v6692, %v6762
    %v6764 = vpop.f32.mrb[0].mxu0
    %v6765 = vadd.f32 %v6694, %v6764
    %v6766 = vpop.f32.mrb[0].mxu0
    %v6767 = vadd.f32 %v6696, %v6766
    %6768 = vmatprep.mubr.bf16.mxu0 0
    %6769 = vmatmul.mubr.bf16.gmra.mrb[0].mxu0 %v5868
    %v6770 = vpop.f32.mrb[0].mxu0
    %v6771 = vadd.f32 %v6700, %v6770
    %v6772 = vpop.f32.mrb[0].mxu0
    %v6773 = vadd.f32 %v6702, %v6772
    %v6774 = vpop.f32.mrb[0].mxu0
    %v6775 = vadd.f32 %v6704, %v6774
    %v6776 = vpop.f32.mrb[0].mxu0
    %v6777 = vadd.f32 %v6706, %v6776
    %6778 = vmatprep.mubr.bf16.mxu0 0
    %6779 = vmatmul.mubr.bf16.gmra.mrb[0].mxu0 %v5908
    %v6780 = vpop.f32.mrb[0].mxu0
    %v6781 = vadd.f32 %v6710, %v6780
    %v6782 = vpop.f32.mrb[0].mxu0
    %v6783 = vadd.f32 %v6712, %v6782
    %v6784 = vpop.f32.mrb[0].mxu0
    %v6785 = vadd.f32 %v6714, %v6784
    %v6786 = vpop.f32.mrb[0].mxu0
    %v6787 = vadd.f32 %v6716, %v6786
    %6788 = vmatprep.mubr.bf16.mxu0 0
    %6789 = vmatmul.mubr.bf16.gmra.mrb[0].mxu0 %v5923
    %v6790 = vpop.f32.mrb[0].mxu0
    %v6791 = vadd.f32 %v6720, %v6790
    %v6792 = vpop.f32.mrb[0].mxu0
    %v6793 = vadd.f32 %v6722, %v6792
    %v6794 = vpop.f32.mrb[0].mxu0
    %v6795 = vpop.f32.mrb[0].mxu0
    %6796 = vdwg.mxu0
    %6797 = vmatprep.subr.bf16.mxu0 0
    %6798 = vmatpush1.bf16.msra.mxu0 %v6346
    %6799 = vmatprep.subr.bf16.mxu0 0
    %6800 = vmatpush1.bf16.msra.mxu0 %v6349
    %6801 = vmatprep.subr.bf16.mxu0 0
    %6802 = vmatpush1.bf16.msra.mxu0 %v6352
    %6803 = vmatprep.subr.bf16.mxu0 0
    %6804 = vmatpush1.bf16.msra.mxu0 %v6355
    %6805 = vmatprep.subr.bf16.mxu0 0
    %6806 = vmatpush1.bf16.msra.mxu0 %v6358
    %6807 = vmatprep.subr.bf16.mxu0 0
    %6808 = vmatpush1.bf16.msra.mxu0 %v6361
    %6809 = vmatprep.subr.bf16.mxu0 0
    %6810 = vmatpush1.bf16.msra.mxu0 %v6364
    %6811 = vmatprep.subr.bf16.mxu0 0
    %6812 = vmatpush1.bf16.msra.mxu0 %v6367
    %6813 = vmatprep.subr.bf16.mxu0 0
    %6814 = vmatpush1.bf16.msra.mxu0 %v6370
    %6815 = vmatprep.subr.bf16.mxu0 0
    %6816 = vmatpush1.bf16.msra.mxu0 %v6373
    %6817 = vmatprep.subr.bf16.mxu0 0
    %6818 = vmatpush1.bf16.msra.mxu0 %v6376
    %6819 = vmatprep.subr.bf16.mxu0 0
    %6820 = vmatpush1.bf16.msra.mxu0 %v6379
    %6821 = vmatprep.subr.bf16.mxu0 0
    %6822 = vmatpush1.bf16.msra.mxu0 %v6382
    %6823 = vmatprep.subr.bf16.mxu0 0
    %6824 = vmatpush1.bf16.msra.mxu0 %v6385
    %6825 = vmatprep.subr.bf16.mxu0 0
    %6826 = vmatpush1.bf16.msra.mxu0 %v6388
    %6827 = vmatprep.subr.bf16.mxu0 0
    %6828 = vmatpush1.bf16.msra.mxu0 %v6391
    %6829 = vmatprep.mubr.bf16.mxu0 %v5792
    %6830 = vmatmul.mubr.bf16.gmra.mrb[0].mxu0 %v5780
    %v6831 = vpop.f32.mrb[0].mxu0
    %v6832 = vadd.f32 0.0, %v6831
    %v6833 = vpop.f32.mrb[0].mxu0
    %v6834 = vpop.f32.mrb[0].mxu0
    %v6835 = vadd.f32 0.0, %v6834
    %v6836 = vpop.f32.mrb[0].mxu0
    %6837 = vmatprep.mubr.bf16.mxu0 %v5844
    %6838 = vmatmul.mubr.bf16.gmra.mrb[0].mxu0 %v5836
    %v6839 = vpop.f32.mrb[0].mxu0
    %v6840 = vadd.f32 0.0, %v6839
    %v6841 = vpop.f32.mrb[0].mxu0
    %v6842 = vpop.f32.mrb[0].mxu0
    %v6843 = vadd.f32 0.0, %v6842
    %v6844 = vpop.f32.mrb[0].mxu0
    %6845 = vmatprep.mubr.bf16.mxu0 %v5884
    %6846 = vmatmul.mubr.bf16.gmra.mrb[0].mxu0 %v5876
    %v6847 = vpop.f32.mrb[0].mxu0
    %v6848 = vadd.f32 0.0, %v6847
    %v6849 = vpop.f32.mrb[0].mxu0
    %v6850 = vpop.f32.mrb[0].mxu0
    %v6851 = vadd.f32 0.0, %v6850
    %v6852 = vpop.f32.mrb[0].mxu0
    %6853 = vmatprep.mubr.bf16.mxu0 %v5914
    %6854 = vmatmul.mubr.bf16.gmra.mrb[0].mxu0 %v5911
    %v6855 = vpop.f32.mrb[0].mxu0
    %v6856 = vadd.f32 0.0, %v6855
    %v6857 = vpop.f32.mrb[0].mxu0
    %v6858 = vpop.f32.mrb[0].mxu0
    %v6859 = vpop.f32.mrb[0].mxu0
    %6860 = vdwg.mxu0
    %6861 = vmatprep.subr.bf16.mxu0 0
    %6862 = vmatpush1.bf16.msra.mxu0 %v6394
    %6863 = vmatprep.subr.bf16.mxu0 0
    %6864 = vmatpush1.bf16.msra.mxu0 %v6397
    %6865 = vmatprep.subr.bf16.mxu0 0
    %6866 = vmatpush1.bf16.msra.mxu0 %v6400
    %6867 = vmatprep.subr.bf16.mxu0 0
    %6868 = vmatpush1.bf16.msra.mxu0 %v6403
    %6869 = vmatprep.subr.bf16.mxu0 0
    %6870 = vmatpush1.bf16.msra.mxu0 %v6406
    %6871 = vmatprep.subr.bf16.mxu0 0
    %6872 = vmatpush1.bf16.msra.mxu0 %v6409
    %6873 = vmatprep.subr.bf16.mxu0 0
    %6874 = vmatpush1.bf16.msra.mxu0 %v6412
    %6875 = vmatprep.subr.bf16.mxu0 0
    %6876 = vmatpush1.bf16.msra.mxu0 %v6415
    %6877 = vmatprep.subr.bf16.mxu0 0
    %6878 = vmatpush1.bf16.msra.mxu0 %v6418
    %6879 = vmatprep.subr.bf16.mxu0 0
    %6880 = vmatpush1.bf16.msra.mxu0 %v6421
    %6881 = vmatprep.subr.bf16.mxu0 0
    %6882 = vmatpush1.bf16.msra.mxu0 %v6424
    %6883 = vmatprep.subr.bf16.mxu0 0
    %6884 = vmatpush1.bf16.msra.mxu0 %v6427
    %6885 = vmatprep.subr.bf16.mxu0 0
    %6886 = vmatpush1.bf16.msra.mxu0 %v6430
    %6887 = vmatprep.subr.bf16.mxu0 0
    %6888 = vmatpush1.bf16.msra.mxu0 %v6433
    %6889 = vmatprep.subr.bf16.mxu0 0
    %6890 = vmatpush1.bf16.msra.mxu0 %v6436
    %6891 = vmatprep.subr.bf16.mxu0 0
    %6892 = vmatpush1.bf16.msra.mxu0 %v6439
    %6893 = vmatprep.mubr.bf16.mxu0 %v5816
    %6894 = vmatmul.mubr.bf16.gmra.mrb[0].mxu0 %v5804
    %v6895 = vpop.f32.mrb[0].mxu0
    %v6896 = vadd.f32 %v6832, %v6895
    %v6897 = vpop.f32.mrb[0].mxu0
    %v6898 = vpop.f32.mrb[0].mxu0
    %v6899 = vadd.f32 %v6835, %v6898
    %v6900 = vpop.f32.mrb[0].mxu0
    %6901 = vmatprep.mubr.bf16.mxu0 %v5860
    %6902 = vmatmul.mubr.bf16.gmra.mrb[0].mxu0 %v5852
    %v6903 = vpop.f32.mrb[0].mxu0
    %v6904 = vadd.f32 %v6840, %v6903
    %v6905 = vpop.f32.mrb[0].mxu0
    %v6906 = vpop.f32.mrb[0].mxu0
    %v6907 = vadd.f32 %v6843, %v6906
    %v6908 = vpop.f32.mrb[0].mxu0
    %6909 = vmatprep.mubr.bf16.mxu0 %v5900
    %6910 = vmatmul.mubr.bf16.gmra.mrb[0].mxu0 %v5892
    %v6911 = vpop.f32.mrb[0].mxu0
    %v6912 = vadd.f32 %v6848, %v6911
    %v6913 = vpop.f32.mrb[0].mxu0
    %v6914 = vpop.f32.mrb[0].mxu0
    %v6915 = vadd.f32 %v6851, %v6914
    %v6916 = vpop.f32.mrb[0].mxu0
    %6917 = vmatprep.mubr.bf16.mxu0 %v5920
    %6918 = vmatmul.mubr.bf16.gmra.mrb[0].mxu0 %v5917
    %v6919 = vpop.f32.mrb[0].mxu0
    %v6920 = vadd.f32 %v6856, %v6919
    %v6921 = vpop.f32.mrb[0].mxu0
    %v6922 = vpop.f32.mrb[0].mxu0
    %v6923 = vpop.f32.mrb[0].mxu0
    %6924 = vdwg.mxu0
    %6925 = vmatprep.subr.bf16.mxu0 0
    %6926 = vmatpush1.bf16.msra.mxu0 %v6442
    %6927 = vmatprep.subr.bf16.mxu0 0
    %6928 = vmatpush1.bf16.msra.mxu0 %v6445
    %6929 = vmatprep.subr.bf16.mxu0 0
    %6930 = vmatpush1.bf16.msra.mxu0 %v6448
    %6931 = vmatprep.subr.bf16.mxu0 0
    %6932 = vmatpush1.bf16.msra.mxu0 %v6451
    %6933 = vmatprep.subr.bf16.mxu0 0
    %6934 = vmatpush1.bf16.msra.mxu0 %v6454
    %6935 = vmatprep.subr.bf16.mxu0 0
    %6936 = vmatpush1.bf16.msra.mxu0 %v6457
    %6937 = vmatprep.subr.bf16.mxu0 0
    %6938 = vmatpush1.bf16.msra.mxu0 %v6460
    %6939 = vmatprep.subr.bf16.mxu0 0
    %6940 = vmatpush1.bf16.msra.mxu0 %v6463
    %6941 = vmatprep.subr.bf16.mxu0 0
    %6942 = vmatpush1.bf16.msra.mxu0 0
    %6943 = vmatprep.subr.bf16.mxu0 0
    %6944 = vmatpush1.bf16.msra.mxu0 0
    %6945 = vmatprep.subr.bf16.mxu0 0
    %6946 = vmatpush1.bf16.msra.mxu0 0
    %6947 = vmatprep.subr.bf16.mxu0 0
    %6948 = vmatpush1.bf16.msra.mxu0 0
    %6949 = vmatprep.subr.bf16.mxu0 0
    %6950 = vmatpush1.bf16.msra.mxu0 0
    %6951 = vmatprep.subr.bf16.mxu0 0
    %6952 = vmatpush1.bf16.msra.mxu0 0
    %6953 = vmatprep.subr.bf16.mxu0 0
    %6954 = vmatpush1.bf16.msra.mxu0 0
    %6955 = vmatprep.subr.bf16.mxu0 0
    %6956 = vmatpush1.bf16.msra.mxu0 0
    %6957 = vmatprep.mubr.bf16.mxu0 0
    %6958 = vmatmul.mubr.bf16.gmra.mrb[0].mxu0 %v5828
    %v6959 = vpop.f32.mrb[0].mxu0
    %v6960 = vadd.f32 %v6896, %v6959
    %v6961 = vpop.f32.mrb[0].mxu0
    %v6962 = vpop.f32.mrb[0].mxu0
    %v6963 = vadd.f32 %v6899, %v6962
    %v6964 = vpop.f32.mrb[0].mxu0
    %6965 = vmatprep.mubr.bf16.mxu0 0
    %6966 = vmatmul.mubr.bf16.gmra.mrb[0].mxu0 %v5868
    %v6967 = vpop.f32.mrb[0].mxu0
    %v6968 = vadd.f32 %v6904, %v6967
    %v6969 = vpop.f32.mrb[0].mxu0
    %v6970 = vpop.f32.mrb[0].mxu0
    %v6971 = vadd.f32 %v6907, %v6970
    %v6972 = vpop.f32.mrb[0].mxu0
    %6973 = vmatprep.mubr.bf16.mxu0 0
    %6974 = vmatmul.mubr.bf16.gmra.mrb[0].mxu0 %v5908
    %v6975 = vpop.f32.mrb[0].mxu0
    %v6976 = vadd.f32 %v6912, %v6975
    %v6977 = vpop.f32.mrb[0].mxu0
    %v6978 = vpop.f32.mrb[0].mxu0
    %v6979 = vadd.f32 %v6915, %v6978
    %v6980 = vpop.f32.mrb[0].mxu0
    %6981 = vmatprep.mubr.bf16.mxu0 0
    %6982 = vmatmul.mubr.bf16.gmra.mrb[0].mxu0 %v5923
    %v6983 = vpop.f32.mrb[0].mxu0
    %v6984 = vadd.f32 %v6920, %v6983
    %v6985 = vpop.f32.mrb[0].mxu0
    %v6986 = vpop.f32.mrb[0].mxu0
    %v6987 = vpop.f32.mrb[0].mxu0
    %6988 = vdwg.mxu0
    %v6992 = vunpack.c.l.b16 %v5366
    %v6993 = vunpack.c.h.b16 %v5366
    %v6994 = vunpack.c.l.b16 %v5367
    %v6995 = vunpack.c.h.b16 %v5367
    %v6996 = vunpack.c.l.b16 %v5368
    %v6997 = vpack.c.b16 %v6992, %v6992
    %v6998 = vpack.c.b16 %v6993, %v6993
    %v6999 = vpack.c.b16 %v6994, %v6994
    %v7000 = vpack.c.b16 %v6995, %v6995
    %v7001 = vpack.c.b16 %v6996, %v6996
    %v7182 = vunpack.c.l.b16 %v5369
    %v7183 = vunpack.c.h.b16 %v5369
    %v7184 = vunpack.c.l.b16 %v5370
    %v7185 = vunpack.c.l.b16 %v5371
    %v7186 = vunpack.c.h.b16 %v5371
    %v7187 = vunpack.c.l.b16 %v5372
    %v7188 = vunpack.c.l.b16 %v5373
    %v7189 = vunpack.c.h.b16 %v5373
    %v7190 = vunpack.c.l.b16 %v5374
    %v7191 = vunpack.c.l.b16 %v5375
    %v7192 = vunpack.c.h.b16 %v5375
    %v7193 = vunpack.c.l.b16 %v5376
    %v7194 = vunpack.c.l.b16 %v5377
    %v7195 = vunpack.c.h.b16 %v5377
    %v7196 = vunpack.c.l.b16 %v5378
    %v7197 = vunpack.c.l.b16 %v5379
    %v7198 = vunpack.c.h.b16 %v5379
    %v7199 = vunpack.c.l.b16 %v5380
    %v7200 = vunpack.c.l.b16 %v5381
    %v7201 = vunpack.c.h.b16 %v5381
    %v7202 = vunpack.c.l.b16 %v5382
    %v7203 = vunpack.c.l.b16 %v5383
    %v7204 = vunpack.c.h.b16 %v5383
    %v7205 = vunpack.c.l.b16 %v5384
    %v7206 = vunpack.c.l.b16 %v5385
    %v7207 = vunpack.c.h.b16 %v5385
    %v7208 = vunpack.c.l.b16 %v5386
    %v7209 = vunpack.c.l.b16 %v5387
    %v7210 = vunpack.c.h.b16 %v5387
    %v7211 = vunpack.c.l.b16 %v5388
    %v7212 = vunpack.c.l.b16 %v5389
    %v7213 = vunpack.c.h.b16 %v5389
    %v7214 = vunpack.c.l.b16 %v5390
    %v7215 = vunpack.c.l.b16 %v5391
    %v7216 = vunpack.c.h.b16 %v5391
    %v7217 = vunpack.c.l.b16 %v5392
    %v7218 = vunpack.c.l.b16 %v5393
    %v7219 = vunpack.c.h.b16 %v5393
    %v7220 = vunpack.c.l.b16 %v5394
    %v7221 = vunpack.c.l.b16 %v5395
    %v7222 = vunpack.c.h.b16 %v5395
    %v7223 = vunpack.c.l.b16 %v5396
    %v7224 = vunpack.c.l.b16 %v5397
    %v7225 = vunpack.c.h.b16 %v5397
    %v7226 = vunpack.c.l.b16 %v5398
    %v7227 = vunpack.c.l.b16 %v5399
    %v7228 = vunpack.c.h.b16 %v5399
    %v7229 = vunpack.c.l.b16 %v5400
    %v7230 = vunpack.c.l.b16 %v5401
    %v7231 = vunpack.c.h.b16 %v5401
    %v7232 = vunpack.c.l.b16 %v5402
    %v7233 = vunpack.c.l.b16 %v5403
    %v7234 = vunpack.c.h.b16 %v5403
    %v7235 = vunpack.c.l.b16 %v5404
    %v7236 = vunpack.c.l.b16 %v5405
    %v7237 = vunpack.c.h.b16 %v5405
    %v7238 = vunpack.c.l.b16 %v5406
    %v7239 = vunpack.c.l.b16 %v5407
    %v7240 = vunpack.c.h.b16 %v5407
    %v7241 = vunpack.c.l.b16 %v5408
    %v7242 = vunpack.c.l.b16 %v5409
    %v7243 = vunpack.c.h.b16 %v5409
    %v7244 = vunpack.c.l.b16 %v5410
    %v7245 = vunpack.c.l.b16 %v5411
    %v7246 = vunpack.c.h.b16 %v5411
    %v7247 = vunpack.c.l.b16 %v5412
    %v7248 = vunpack.c.l.b16 %v5413
    %v7249 = vunpack.c.h.b16 %v5413
    %v7250 = vunpack.c.l.b16 %v5414
    %v7251 = vunpack.c.l.b16 %v5415
    %v7252 = vunpack.c.h.b16 %v5415
    %v7253 = vunpack.c.l.b16 %v5416
    %v7254 = vunpack.c.l.b16 %v5417
    %v7255 = vunpack.c.h.b16 %v5417
    %v7256 = vunpack.c.l.b16 %v5418
    %v7257 = vunpack.c.l.b16 %v5419
    %v7258 = vunpack.c.h.b16 %v5419
    %v7259 = vunpack.c.l.b16 %v5420
    %v7260 = vunpack.c.l.b16 %v5421
    %v7261 = vunpack.c.h.b16 %v5421
    %v7262 = vunpack.c.l.b16 %v5422
    %v7263 = vunpack.c.l.b16 %v5423
    %v7264 = vunpack.c.h.b16 %v5423
    %v7265 = vunpack.c.l.b16 %v5424
    %v7266 = vunpack.c.l.b16 %v5425
    %v7267 = vunpack.c.h.b16 %v5425
    %v7268 = vunpack.c.l.b16 %v5426
    %v7269 = vunpack.c.l.b16 %v5427
    %v7270 = vunpack.c.h.b16 %v5427
    %v7271 = vunpack.c.l.b16 %v5428
    %v7272 = vunpack.c.l.b16 %v5429
    %v7273 = vunpack.c.h.b16 %v5429
    %v7274 = vunpack.c.l.b16 %v5430
    %v7275 = vunpack.c.l.b16 %v5431
    %v7276 = vunpack.c.h.b16 %v5431
    %v7277 = vunpack.c.l.b16 %v5432
    %v7278 = vunpack.c.l.b16 %v5433
    %v7279 = vunpack.c.h.b16 %v5433
    %v7280 = vunpack.c.l.b16 %v5434
    %v7281 = vunpack.c.l.b16 %v5435
    %v7282 = vunpack.c.h.b16 %v5435
    %v7283 = vunpack.c.l.b16 %v5436
    %v7284 = vunpack.c.l.b16 %v5437
    %v7285 = vunpack.c.h.b16 %v5437
    %v7286 = vunpack.c.l.b16 %v5438
    %v7287 = vunpack.c.l.b16 %v5439
    %v7288 = vunpack.c.h.b16 %v5439
    %v7289 = vunpack.c.l.b16 %v5440
    %v7290 = vunpack.c.l.b16 %v5441
    %v7291 = vunpack.c.h.b16 %v5441
    %v7292 = vunpack.c.l.b16 %v5442
    %v7293 = vunpack.c.l.b16 %v5443
    %v7294 = vunpack.c.h.b16 %v5443
    %v7295 = vunpack.c.l.b16 %v5444
    %v7296 = vunpack.c.l.b16 %v5445
    %v7297 = vunpack.c.h.b16 %v5445
    %v7298 = vunpack.c.l.b16 %v5446
    %v7299 = vunpack.c.l.b16 %v5447
    %v7300 = vunpack.c.h.b16 %v5447
    %v7301 = vunpack.c.l.b16 %v5448
    %v7302 = vunpack.c.l.b16 %v5449
    %v7303 = vunpack.c.h.b16 %v5449
    %v7304 = vunpack.c.l.b16 %v5450
    %v7305 = vunpack.c.l.b16 %v5451
    %v7306 = vunpack.c.h.b16 %v5451
    %v7307 = vunpack.c.l.b16 %v5452
    %v7308 = vunpack.c.l.b16 %v5453
    %v7309 = vunpack.c.h.b16 %v5453
    %v7310 = vunpack.c.l.b16 %v5454
    %v7311 = vunpack.c.l.b16 %v5455
    %v7312 = vunpack.c.h.b16 %v5455
    %v7313 = vunpack.c.l.b16 %v5456
    %v7314 = vunpack.c.l.b16 %v5457
    %v7315 = vunpack.c.h.b16 %v5457
    %v7316 = vunpack.c.l.b16 %v5458
    %v7317 = vunpack.c.l.b16 %v5459
    %v7318 = vunpack.c.h.b16 %v5459
    %v7319 = vunpack.c.l.b16 %v5460
    %v7320 = vunpack.c.l.b16 %v5461
    %v7321 = vunpack.c.h.b16 %v5461
    %v7322 = vunpack.c.l.b16 %v5462
    %v7323 = vunpack.c.l.b16 %v5463
    %v7324 = vunpack.c.h.b16 %v5463
    %v7325 = vunpack.c.l.b16 %v5464
    %v7326 = vunpack.c.l.b16 %v5465
    %v7327 = vunpack.c.h.b16 %v5465
    %v7328 = vunpack.c.l.b16 %v5466
    %v7329 = vunpack.c.l.b16 %v5467
    %v7330 = vunpack.c.h.b16 %v5467
    %v7331 = vunpack.c.l.b16 %v5468
    %v7332 = vunpack.c.l.b16 %v5469
    %v7333 = vunpack.c.h.b16 %v5469
    %v7334 = vunpack.c.l.b16 %v5470
    %v7335 = vunpack.c.l.b16 %v5471
    %v7336 = vunpack.c.h.b16 %v5471
    %v7337 = vunpack.c.l.b16 %v5472
    %v7338 = vunpack.c.l.b16 %v5473
    %v7339 = vunpack.c.h.b16 %v5473
    %v7340 = vunpack.c.l.b16 %v5474
    %v7341 = vunpack.c.l.b16 %v5475
    %v7342 = vunpack.c.h.b16 %v5475
    %v7343 = vunpack.c.l.b16 %v5476
    %v7344 = vunpack.c.l.b16 %v5477
    %v7345 = vunpack.c.h.b16 %v5477
    %v7346 = vunpack.c.l.b16 %v5478
    %v7347 = vunpack.c.l.b16 %v5479
    %v7348 = vunpack.c.h.b16 %v5479
    %v7349 = vunpack.c.l.b16 %v5480
    %v7350 = vunpack.c.l.b16 %v5481
    %v7351 = vunpack.c.h.b16 %v5481
    %v7352 = vunpack.c.l.b16 %v5482
    %v7353 = vunpack.c.l.b16 %v5483
    %v7354 = vunpack.c.h.b16 %v5483
    %v7355 = vunpack.c.l.b16 %v5484
    %v7356 = vunpack.c.l.b16 %v5485
    %v7357 = vunpack.c.h.b16 %v5485
    %v7358 = vunpack.c.l.b16 %v5486
    %v7359 = vunpack.c.l.b16 %v5487
    %v7360 = vunpack.c.h.b16 %v5487
    %v7361 = vunpack.c.l.b16 %v5488
    %v7362 = vunpack.c.l.b16 %v5489
    %v7363 = vunpack.c.h.b16 %v5489
    %v7364 = vunpack.c.l.b16 %v5490
    %v7365 = vunpack.c.l.b16 %v5491
    %v7366 = vunpack.c.h.b16 %v5491
    %v7367 = vunpack.c.l.b16 %v5492
    %v7368 = vunpack.c.l.b16 %v5493
    %v7369 = vunpack.c.h.b16 %v5493
    %v7370 = vunpack.c.l.b16 %v5494
    %v7371 = vunpack.c.l.b16 %v5495
    %v7372 = vunpack.c.h.b16 %v5495
    %v7373 = vunpack.c.l.b16 %v5496
    %v7374 = vunpack.c.l.b16 %v5497
    %v7375 = vunpack.c.h.b16 %v5497
    %v7376 = vunpack.c.l.b16 %v5498
    %v7377 = vunpack.c.l.b16 %v5499
    %v7378 = vunpack.c.h.b16 %v5499
    %v7379 = vunpack.c.l.b16 %v5500
    %v7380 = vunpack.c.l.b16 %v5501
    %v7381 = vunpack.c.h.b16 %v5501
    %v7382 = vunpack.c.l.b16 %v5502
    %v7383 = vunpack.c.l.b16 %v5503
    %v7384 = vunpack.c.h.b16 %v5503
    %v7385 = vunpack.c.l.b16 %v5504
    %v7386 = vunpack.c.l.b16 %v5505
    %v7387 = vunpack.c.h.b16 %v5505
    %v7388 = vunpack.c.l.b16 %v5506
    %v7389 = vunpack.c.l.b16 %v5507
    %v7390 = vunpack.c.h.b16 %v5507
    %v7391 = vunpack.c.l.b16 %v5508
    %v7392 = vunpack.c.l.b16 %v5509
    %v7393 = vunpack.c.h.b16 %v5509
    %v7394 = vunpack.c.l.b16 %v5510
    %v7395 = vunpack.c.l.b16 %v5511
    %v7396 = vunpack.c.h.b16 %v5511
    %v7397 = vunpack.c.l.b16 %v5512
    %v7398 = vunpack.c.l.b16 %v5513
    %v7399 = vunpack.c.h.b16 %v5513
    %v7400 = vunpack.c.l.b16 %v5514
    %v7401 = vunpack.c.l.b16 %v5515
    %v7402 = vunpack.c.h.b16 %v5515
    %v7403 = vunpack.c.l.b16 %v5516
    %v7404 = vunpack.c.l.b16 %v5517
    %v7405 = vunpack.c.h.b16 %v5517
    %v7406 = vunpack.c.l.b16 %v5518
    %v7407 = vunpack.c.l.b16 %v5519
    %v7408 = vunpack.c.h.b16 %v5519
    %v7409 = vunpack.c.l.b16 %v5520
    %v7410 = vunpack.c.l.b16 %v5521
    %v7411 = vunpack.c.h.b16 %v5521
    %v7412 = vunpack.c.l.b16 %v5522
    %v7413 = vunpack.c.l.b16 %v5523
    %v7414 = vunpack.c.h.b16 %v5523
    %v7415 = vunpack.c.l.b16 %v5524
    %v7416 = vunpack.c.l.b16 %v5525
    %v7417 = vunpack.c.h.b16 %v5525
    %v7418 = vunpack.c.l.b16 %v5526
    %v7419 = vunpack.c.l.b16 %v5527
    %v7420 = vunpack.c.h.b16 %v5527
    %v7421 = vunpack.c.l.b16 %v5528
    %v7422 = vpack.c.b16 %v7185, %v7182
    %v7423 = vpack.c.b16 %v7186, %v7183
    %v7424 = vpack.c.b16 %v7187, %v7184
    %v7425 = vpack.c.b16 %v7191, %v7188
    %v7426 = vpack.c.b16 %v7192, %v7189
    %v7427 = vpack.c.b16 %v7193, %v7190
    %v7428 = vpack.c.b16 %v7197, %v7194
    %v7429 = vpack.c.b16 %v7198, %v7195
    %v7430 = vpack.c.b16 %v7199, %v7196
    %v7431 = vpack.c.b16 %v7203, %v7200
    %v7432 = vpack.c.b16 %v7204, %v7201
    %v7433 = vpack.c.b16 %v7205, %v7202
    %v7434 = vpack.c.b16 %v7209, %v7206
    %v7435 = vpack.c.b16 %v7210, %v7207
    %v7436 = vpack.c.b16 %v7211, %v7208
    %v7437 = vpack.c.b16 %v7215, %v7212
    %v7438 = vpack.c.b16 %v7216, %v7213
    %v7439 = vpack.c.b16 %v7217, %v7214
    %v7440 = vpack.c.b16 %v7221, %v7218
    %v7441 = vpack.c.b16 %v7222, %v7219
    %v7442 = vpack.c.b16 %v7223, %v7220
    %v7443 = vpack.c.b16 %v7227, %v7224
    %v7444 = vpack.c.b16 %v7228, %v7225
    %v7445 = vpack.c.b16 %v7229, %v7226
    %v7446 = vpack.c.b16 %v7233, %v7230
    %v7447 = vpack.c.b16 %v7234, %v7231
    %v7448 = vpack.c.b16 %v7235, %v7232
    %v7449 = vpack.c.b16 %v7239, %v7236
    %v7450 = vpack.c.b16 %v7240, %v7237
    %v7451 = vpack.c.b16 %v7241, %v7238
    %v7452 = vpack.c.b16 %v7245, %v7242
    %v7453 = vpack.c.b16 %v7246, %v7243
    %v7454 = vpack.c.b16 %v7247, %v7244
    %v7455 = vpack.c.b16 %v7251, %v7248
    %v7456 = vpack.c.b16 %v7252, %v7249
    %v7457 = vpack.c.b16 %v7253, %v7250
    %v7458 = vpack.c.b16 %v7257, %v7254
    %v7459 = vpack.c.b16 %v7258, %v7255
    %v7460 = vpack.c.b16 %v7259, %v7256
    %v7461 = vpack.c.b16 %v7263, %v7260
    %v7462 = vpack.c.b16 %v7264, %v7261
    %v7463 = vpack.c.b16 %v7265, %v7262
    %v7464 = vpack.c.b16 %v7269, %v7266
    %v7465 = vpack.c.b16 %v7270, %v7267
    %v7466 = vpack.c.b16 %v7271, %v7268
    %v7467 = vpack.c.b16 %v7275, %v7272
    %v7468 = vpack.c.b16 %v7276, %v7273
    %v7469 = vpack.c.b16 %v7277, %v7274
    %v7470 = vpack.c.b16 %v7281, %v7278
    %v7471 = vpack.c.b16 %v7282, %v7279
    %v7472 = vpack.c.b16 %v7283, %v7280
    %v7473 = vpack.c.b16 %v7287, %v7284
    %v7474 = vpack.c.b16 %v7288, %v7285
    %v7475 = vpack.c.b16 %v7289, %v7286
    %v7476 = vpack.c.b16 %v7293, %v7290
    %v7477 = vpack.c.b16 %v7294, %v7291
    %v7478 = vpack.c.b16 %v7295, %v7292
    %v7479 = vpack.c.b16 %v7299, %v7296
    %v7480 = vpack.c.b16 %v7300, %v7297
    %v7481 = vpack.c.b16 %v7301, %v7298
    %v7482 = vpack.c.b16 %v7305, %v7302
    %v7483 = vpack.c.b16 %v7306, %v7303
    %v7484 = vpack.c.b16 %v7307, %v7304
    %v7485 = vpack.c.b16 %v7311, %v7308
    %v7486 = vpack.c.b16 %v7312, %v7309
    %v7487 = vpack.c.b16 %v7313, %v7310
    %v7488 = vpack.c.b16 %v7317, %v7314
    %v7489 = vpack.c.b16 %v7318, %v7315
    %v7490 = vpack.c.b16 %v7319, %v7316
    %v7491 = vpack.c.b16 %v7323, %v7320
    %v7492 = vpack.c.b16 %v7324, %v7321
    %v7493 = vpack.c.b16 %v7325, %v7322
    %v7494 = vpack.c.b16 %v7329, %v7326
    %v7495 = vpack.c.b16 %v7330, %v7327
    %v7496 = vpack.c.b16 %v7331, %v7328
    %v7497 = vpack.c.b16 %v7335, %v7332
    %v7498 = vpack.c.b16 %v7336, %v7333
    %v7499 = vpack.c.b16 %v7337, %v7334
    %v7500 = vpack.c.b16 %v7341, %v7338
    %v7501 = vpack.c.b16 %v7342, %v7339
    %v7502 = vpack.c.b16 %v7343, %v7340
    %v7503 = vpack.c.b16 %v7347, %v7344
    %v7504 = vpack.c.b16 %v7348, %v7345
    %v7505 = vpack.c.b16 %v7349, %v7346
    %v7506 = vpack.c.b16 %v7353, %v7350
    %v7507 = vpack.c.b16 %v7354, %v7351
    %v7508 = vpack.c.b16 %v7355, %v7352
    %v7509 = vpack.c.b16 %v7359, %v7356
    %v7510 = vpack.c.b16 %v7360, %v7357
    %v7511 = vpack.c.b16 %v7361, %v7358
    %v7512 = vpack.c.b16 %v7365, %v7362
    %v7513 = vpack.c.b16 %v7366, %v7363
    %v7514 = vpack.c.b16 %v7367, %v7364
    %v7515 = vpack.c.b16 %v7371, %v7368
    %v7516 = vpack.c.b16 %v7372, %v7369
    %v7517 = vpack.c.b16 %v7373, %v7370
    %v7518 = vpack.c.b16 %v7377, %v7374
    %v7519 = vpack.c.b16 %v7378, %v7375
    %v7520 = vpack.c.b16 %v7379, %v7376
    %v7521 = vpack.c.b16 %v7383, %v7380
    %v7522 = vpack.c.b16 %v7384, %v7381
    %v7523 = vpack.c.b16 %v7385, %v7382
    %v7524 = vpack.c.b16 %v7389, %v7386
    %v7525 = vpack.c.b16 %v7390, %v7387
    %v7526 = vpack.c.b16 %v7391, %v7388
    %v7527 = vpack.c.b16 %v7395, %v7392
    %v7528 = vpack.c.b16 %v7396, %v7393
    %v7529 = vpack.c.b16 %v7397, %v7394
    %v7530 = vpack.c.b16 %v7401, %v7398
    %v7531 = vpack.c.b16 %v7402, %v7399
    %v7532 = vpack.c.b16 %v7403, %v7400
    %v7533 = vpack.c.b16 %v7407, %v7404
    %v7534 = vpack.c.b16 %v7408, %v7405
    %v7535 = vpack.c.b16 %v7409, %v7406
    %v7536 = vpack.c.b16 %v7413, %v7410
    %v7537 = vpack.c.b16 %v7414, %v7411
    %v7538 = vpack.c.b16 %v7415, %v7412
    %v7539 = vpack.c.b16 %v7419, %v7416
    %v7540 = vpack.c.b16 %v7420, %v7417
    %v7541 = vpack.c.b16 %v7421, %v7418
    %7662 = vmatprep.subr.bf16.mxu0 %v7423
    %7663 = vmatpush1.bf16.msra.mxu0 %v7422
    %7664 = vmatprep.subr.bf16.mxu0 %v7426
    %7665 = vmatpush1.bf16.msra.mxu0 %v7425
    %7666 = vmatprep.subr.bf16.mxu0 %v7429
    %7667 = vmatpush1.bf16.msra.mxu0 %v7428
    %7668 = vmatprep.subr.bf16.mxu0 %v7432
    %7669 = vmatpush1.bf16.msra.mxu0 %v7431
    %7670 = vmatprep.subr.bf16.mxu0 %v7435
    %7671 = vmatpush1.bf16.msra.mxu0 %v7434
    %7672 = vmatprep.subr.bf16.mxu0 %v7438
    %7673 = vmatpush1.bf16.msra.mxu0 %v7437
    %7674 = vmatprep.subr.bf16.mxu0 %v7441
    %7675 = vmatpush1.bf16.msra.mxu0 %v7440
    %7676 = vmatprep.subr.bf16.mxu0 %v7444
    %7677 = vmatpush1.bf16.msra.mxu0 %v7443
    %7678 = vmatprep.subr.bf16.mxu0 %v7447
    %7679 = vmatpush1.bf16.msra.mxu0 %v7446
    %7680 = vmatprep.subr.bf16.mxu0 %v7450
    %7681 = vmatpush1.bf16.msra.mxu0 %v7449
    %7682 = vmatprep.subr.bf16.mxu0 %v7453
    %7683 = vmatpush1.bf16.msra.mxu0 %v7452
    %7684 = vmatprep.subr.bf16.mxu0 %v7456
    %7685 = vmatpush1.bf16.msra.mxu0 %v7455
    %7686 = vmatprep.subr.bf16.mxu0 %v7459
    %7687 = vmatpush1.bf16.msra.mxu0 %v7458
    %7688 = vmatprep.subr.bf16.mxu0 %v7462
    %7689 = vmatpush1.bf16.msra.mxu0 %v7461
    %7690 = vmatprep.subr.bf16.mxu0 %v7465
    %7691 = vmatpush1.bf16.msra.mxu0 %v7464
    %7692 = vmatprep.subr.bf16.mxu0 %v7468
    %7693 = vmatpush1.bf16.msra.mxu0 %v7467
    %7694 = vmatprep.mubr.bf16.mxu0 %v5750
    %7695 = vmatmul.mubr.bf16.gmra.mrb[0].mxu0 %v5749
    %v7696 = vpop.f32.mrb[0].mxu0
    %v7697 = vadd.f32 %v6761, %v7696
    %v7698 = vpop.f32.mrb[0].mxu0
    %v7699 = vadd.f32 %v6763, %v7698
    %v7700 = vpop.f32.mrb[0].mxu0
    %v7701 = vadd.f32 %v6765, %v7700
    %v7702 = vpop.f32.mrb[0].mxu0
    %v7703 = vadd.f32 %v6767, %v7702
    %7704 = vmatprep.mubr.bf16.mxu0 %v5755
    %7705 = vmatmul.mubr.bf16.gmra.mrb[0].mxu0 %v5754
    %v7706 = vpop.f32.mrb[0].mxu0
    %v7707 = vadd.f32 %v6771, %v7706
    %v7708 = vpop.f32.mrb[0].mxu0
    %v7709 = vadd.f32 %v6773, %v7708
    %v7710 = vpop.f32.mrb[0].mxu0
    %v7711 = vadd.f32 %v6775, %v7710
    %v7712 = vpop.f32.mrb[0].mxu0
    %v7713 = vadd.f32 %v6777, %v7712
    %7714 = vmatprep.mubr.bf16.mxu0 %v5760
    %7715 = vmatmul.mubr.bf16.gmra.mrb[0].mxu0 %v5759
    %v7716 = vpop.f32.mrb[0].mxu0
    %v7717 = vadd.f32 %v6781, %v7716
    %v7718 = vpop.f32.mrb[0].mxu0
    %v7719 = vadd.f32 %v6783, %v7718
    %v7720 = vpop.f32.mrb[0].mxu0
    %v7721 = vadd.f32 %v6785, %v7720
    %v7722 = vpop.f32.mrb[0].mxu0
    %v7723 = vadd.f32 %v6787, %v7722
    %7724 = vmatprep.mubr.bf16.mxu0 %v6998
    %7725 = vmatmul.mubr.bf16.gmra.mrb[0].mxu0 %v6997
    %v7726 = vpop.f32.mrb[0].mxu0
    %v7727 = vadd.f32 %v6791, %v7726
    %v7728 = vpop.f32.mrb[0].mxu0
    %v7729 = vadd.f32 %v6793, %v7728
    %v7730 = vpop.f32.mrb[0].mxu0
    %v7731 = vpop.f32.mrb[0].mxu0
    %7732 = vdwg.mxu0
    %7733 = vmatprep.subr.bf16.mxu0 %v7471
    %7734 = vmatpush1.bf16.msra.mxu0 %v7470
    %7735 = vmatprep.subr.bf16.mxu0 %v7474
    %7736 = vmatpush1.bf16.msra.mxu0 %v7473
    %7737 = vmatprep.subr.bf16.mxu0 %v7477
    %7738 = vmatpush1.bf16.msra.mxu0 %v7476
    %7739 = vmatprep.subr.bf16.mxu0 %v7480
    %7740 = vmatpush1.bf16.msra.mxu0 %v7479
    %7741 = vmatprep.subr.bf16.mxu0 %v7483
    %7742 = vmatpush1.bf16.msra.mxu0 %v7482
    %7743 = vmatprep.subr.bf16.mxu0 %v7486
    %7744 = vmatpush1.bf16.msra.mxu0 %v7485
    %7745 = vmatprep.subr.bf16.mxu0 %v7489
    %7746 = vmatpush1.bf16.msra.mxu0 %v7488
    %7747 = vmatprep.subr.bf16.mxu0 %v7492
    %7748 = vmatpush1.bf16.msra.mxu0 %v7491
    %7749 = vmatprep.subr.bf16.mxu0 %v7495
    %7750 = vmatpush1.bf16.msra.mxu0 %v7494
    %7751 = vmatprep.subr.bf16.mxu0 %v7498
    %7752 = vmatpush1.bf16.msra.mxu0 %v7497
    %7753 = vmatprep.subr.bf16.mxu0 %v7501
    %7754 = vmatpush1.bf16.msra.mxu0 %v7500
    %7755 = vmatprep.subr.bf16.mxu0 %v7504
    %7756 = vmatpush1.bf16.msra.mxu0 %v7503
    %7757 = vmatprep.subr.bf16.mxu0 %v7507
    %7758 = vmatpush1.bf16.msra.mxu0 %v7506
    %7759 = vmatprep.subr.bf16.mxu0 %v7510
    %7760 = vmatpush1.bf16.msra.mxu0 %v7509
    %7761 = vmatprep.subr.bf16.mxu0 %v7513
    %7762 = vmatpush1.bf16.msra.mxu0 %v7512
    %7763 = vmatprep.subr.bf16.mxu0 %v7516
    %7764 = vmatpush1.bf16.msra.mxu0 %v7515
    %7765 = vmatprep.mubr.bf16.mxu0 %v5752
    %7766 = vmatmul.mubr.bf16.gmra.mrb[0].mxu0 %v5751
    %v7767 = vpop.f32.mrb[0].mxu0
    %v7768 = vadd.f32 %v7697, %v7767
    %v7769 = vpop.f32.mrb[0].mxu0
    %v7770 = vadd.f32 %v7699, %v7769
    %v7771 = vpop.f32.mrb[0].mxu0
    %v7772 = vadd.f32 %v7701, %v7771
    %v7773 = vpop.f32.mrb[0].mxu0
    %v7774 = vadd.f32 %v7703, %v7773
    %7775 = vmatprep.mubr.bf16.mxu0 %v5757
    %7776 = vmatmul.mubr.bf16.gmra.mrb[0].mxu0 %v5756
    %v7777 = vpop.f32.mrb[0].mxu0
    %v7778 = vadd.f32 %v7707, %v7777
    %v7779 = vpop.f32.mrb[0].mxu0
    %v7780 = vadd.f32 %v7709, %v7779
    %v7781 = vpop.f32.mrb[0].mxu0
    %v7782 = vadd.f32 %v7711, %v7781
    %v7783 = vpop.f32.mrb[0].mxu0
    %v7784 = vadd.f32 %v7713, %v7783
    %7785 = vmatprep.mubr.bf16.mxu0 %v5762
    %7786 = vmatmul.mubr.bf16.gmra.mrb[0].mxu0 %v5761
    %v7787 = vpop.f32.mrb[0].mxu0
    %v7788 = vadd.f32 %v7717, %v7787
    %v7789 = vpop.f32.mrb[0].mxu0
    %v7790 = vadd.f32 %v7719, %v7789
    %v7791 = vpop.f32.mrb[0].mxu0
    %v7792 = vadd.f32 %v7721, %v7791
    %v7793 = vpop.f32.mrb[0].mxu0
    %v7794 = vadd.f32 %v7723, %v7793
    %7795 = vmatprep.mubr.bf16.mxu0 %v7000
    %7796 = vmatmul.mubr.bf16.gmra.mrb[0].mxu0 %v6999
    %v7797 = vpop.f32.mrb[0].mxu0
    %v7798 = vadd.f32 %v7727, %v7797
    %v7799 = vpop.f32.mrb[0].mxu0
    %v7800 = vadd.f32 %v7729, %v7799
    %v7801 = vpop.f32.mrb[0].mxu0
    %v7802 = vpop.f32.mrb[0].mxu0
    %7803 = vdwg.mxu0
    %7804 = vmatprep.subr.bf16.mxu0 %v7519
    %7805 = vmatpush1.bf16.msra.mxu0 %v7518
    %7806 = vmatprep.subr.bf16.mxu0 %v7522
    %7807 = vmatpush1.bf16.msra.mxu0 %v7521
    %7808 = vmatprep.subr.bf16.mxu0 %v7525
    %7809 = vmatpush1.bf16.msra.mxu0 %v7524
    %7810 = vmatprep.subr.bf16.mxu0 %v7528
    %7811 = vmatpush1.bf16.msra.mxu0 %v7527
    %7812 = vmatprep.subr.bf16.mxu0 %v7531
    %7813 = vmatpush1.bf16.msra.mxu0 %v7530
    %7814 = vmatprep.subr.bf16.mxu0 %v7534
    %7815 = vmatpush1.bf16.msra.mxu0 %v7533
    %7816 = vmatprep.subr.bf16.mxu0 %v7537
    %7817 = vmatpush1.bf16.msra.mxu0 %v7536
    %7818 = vmatprep.subr.bf16.mxu0 %v7540
    %7819 = vmatpush1.bf16.msra.mxu0 %v7539
    %7820 = vmatprep.subr.bf16.mxu0 0
    %7821 = vmatpush1.bf16.msra.mxu0 0
    %7822 = vmatprep.subr.bf16.mxu0 0
    %7823 = vmatpush1.bf16.msra.mxu0 0
    %7824 = vmatprep.subr.bf16.mxu0 0
    %7825 = vmatpush1.bf16.msra.mxu0 0
    %7826 = vmatprep.subr.bf16.mxu0 0
    %7827 = vmatpush1.bf16.msra.mxu0 0
    %7828 = vmatprep.subr.bf16.mxu0 0
    %7829 = vmatpush1.bf16.msra.mxu0 0
    %7830 = vmatprep.subr.bf16.mxu0 0
    %7831 = vmatpush1.bf16.msra.mxu0 0
    %7832 = vmatprep.subr.bf16.mxu0 0
    %7833 = vmatpush1.bf16.msra.mxu0 0
    %7834 = vmatprep.subr.bf16.mxu0 0
    %7835 = vmatpush1.bf16.msra.mxu0 0
    %7836 = vmatprep.mubr.bf16.mxu0 0
    %7837 = vmatmul.mubr.bf16.gmra.mrb[0].mxu0 %v5753
    %v7838 = vpop.f32.mrb[0].mxu0
    %v7839 = vadd.f32 %v7768, %v7838
    %v7840 = vpop.f32.mrb[0].mxu0
    %v7841 = vadd.f32 %v7770, %v7840
    %v7842 = vpop.f32.mrb[0].mxu0
    %v7843 = vadd.f32 %v7772, %v7842
    %v7844 = vpop.f32.mrb[0].mxu0
    %v7845 = vadd.f32 %v7774, %v7844
    %7846 = vmatprep.mubr.bf16.mxu0 0
    %7847 = vmatmul.mubr.bf16.gmra.mrb[0].mxu0 %v5758
    %v7848 = vpop.f32.mrb[0].mxu0
    %v7849 = vadd.f32 %v7778, %v7848
    %v7850 = vpop.f32.mrb[0].mxu0
    %v7851 = vadd.f32 %v7780, %v7850
    %v7852 = vpop.f32.mrb[0].mxu0
    %v7853 = vadd.f32 %v7782, %v7852
    %v7854 = vpop.f32.mrb[0].mxu0
    %v7855 = vadd.f32 %v7784, %v7854
    %7856 = vmatprep.mubr.bf16.mxu0 0
    %7857 = vmatmul.mubr.bf16.gmra.mrb[0].mxu0 %v5763
    %v7858 = vpop.f32.mrb[0].mxu0
    %v7859 = vadd.f32 %v7788, %v7858
    %v7860 = vpop.f32.mrb[0].mxu0
    %v7861 = vadd.f32 %v7790, %v7860
    %v7862 = vpop.f32.mrb[0].mxu0
    %v7863 = vadd.f32 %v7792, %v7862
    %v7864 = vpop.f32.mrb[0].mxu0
    %v7865 = vadd.f32 %v7794, %v7864
    %7866 = vmatprep.mubr.bf16.mxu0 0
    %7867 = vmatmul.mubr.bf16.gmra.mrb[0].mxu0 %v7001
    %v7868 = vpop.f32.mrb[0].mxu0
    %v7869 = vadd.f32 %v7798, %v7868
    %v7870 = vpop.f32.mrb[0].mxu0
    %v7871 = vadd.f32 %v7800, %v7870
    %v7872 = vpop.f32.mrb[0].mxu0
    %v7873 = vpop.f32.mrb[0].mxu0
    %7874 = vdwg.mxu0
    %7875 = vmatprep.subr.bf16.mxu0 0
    %7876 = vmatpush1.bf16.msra.mxu0 %v7424
    %7877 = vmatprep.subr.bf16.mxu0 0
    %7878 = vmatpush1.bf16.msra.mxu0 %v7427
    %7879 = vmatprep.subr.bf16.mxu0 0
    %7880 = vmatpush1.bf16.msra.mxu0 %v7430
    %7881 = vmatprep.subr.bf16.mxu0 0
    %7882 = vmatpush1.bf16.msra.mxu0 %v7433
    %7883 = vmatprep.subr.bf16.mxu0 0
    %7884 = vmatpush1.bf16.msra.mxu0 %v7436
    %7885 = vmatprep.subr.bf16.mxu0 0
    %7886 = vmatpush1.bf16.msra.mxu0 %v7439
    %7887 = vmatprep.subr.bf16.mxu0 0
    %7888 = vmatpush1.bf16.msra.mxu0 %v7442
    %7889 = vmatprep.subr.bf16.mxu0 0
    %7890 = vmatpush1.bf16.msra.mxu0 %v7445
    %7891 = vmatprep.subr.bf16.mxu0 0
    %7892 = vmatpush1.bf16.msra.mxu0 %v7448
    %7893 = vmatprep.subr.bf16.mxu0 0
    %7894 = vmatpush1.bf16.msra.mxu0 %v7451
    %7895 = vmatprep.subr.bf16.mxu0 0
    %7896 = vmatpush1.bf16.msra.mxu0 %v7454
    %7897 = vmatprep.subr.bf16.mxu0 0
    %7898 = vmatpush1.bf16.msra.mxu0 %v7457
    %7899 = vmatprep.subr.bf16.mxu0 0
    %7900 = vmatpush1.bf16.msra.mxu0 %v7460
    %7901 = vmatprep.subr.bf16.mxu0 0
    %7902 = vmatpush1.bf16.msra.mxu0 %v7463
    %7903 = vmatprep.subr.bf16.mxu0 0
    %7904 = vmatpush1.bf16.msra.mxu0 %v7466
    %7905 = vmatprep.subr.bf16.mxu0 0
    %7906 = vmatpush1.bf16.msra.mxu0 %v7469
    %7907 = vmatprep.mubr.bf16.mxu0 %v5750
    %7908 = vmatmul.mubr.bf16.gmra.mrb[0].mxu0 %v5749
    %v7909 = vpop.f32.mrb[0].mxu0
    %v7910 = vadd.f32 %v6960, %v7909
    %v7911 = vpop.f32.mrb[0].mxu0
    %v7912 = vpop.f32.mrb[0].mxu0
    %v7913 = vadd.f32 %v6963, %v7912
    %v7914 = vpop.f32.mrb[0].mxu0
    %7915 = vmatprep.mubr.bf16.mxu0 %v5755
    %7916 = vmatmul.mubr.bf16.gmra.mrb[0].mxu0 %v5754
    %v7917 = vpop.f32.mrb[0].mxu0
    %v7918 = vadd.f32 %v6968, %v7917
    %v7919 = vpop.f32.mrb[0].mxu0
    %v7920 = vpop.f32.mrb[0].mxu0
    %v7921 = vadd.f32 %v6971, %v7920
    %v7922 = vpop.f32.mrb[0].mxu0
    %7923 = vmatprep.mubr.bf16.mxu0 %v5760
    %7924 = vmatmul.mubr.bf16.gmra.mrb[0].mxu0 %v5759
    %v7925 = vpop.f32.mrb[0].mxu0
    %v7926 = vadd.f32 %v6976, %v7925
    %v7927 = vpop.f32.mrb[0].mxu0
    %v7928 = vpop.f32.mrb[0].mxu0
    %v7929 = vadd.f32 %v6979, %v7928
    %v7930 = vpop.f32.mrb[0].mxu0
    %7931 = vmatprep.mubr.bf16.mxu0 %v6998
    %7932 = vmatmul.mubr.bf16.gmra.mrb[0].mxu0 %v6997
    %v7933 = vpop.f32.mrb[0].mxu0
    %v7934 = vadd.f32 %v6984, %v7933
    %v7935 = vpop.f32.mrb[0].mxu0
    %v7936 = vpop.f32.mrb[0].mxu0
    %v7937 = vpop.f32.mrb[0].mxu0
    %7938 = vdwg.mxu0
    %7939 = vmatprep.subr.bf16.mxu0 0
    %7940 = vmatpush1.bf16.msra.mxu0 %v7472
    %7941 = vmatprep.subr.bf16.mxu0 0
    %7942 = vmatpush1.bf16.msra.mxu0 %v7475
    %7943 = vmatprep.subr.bf16.mxu0 0
    %7944 = vmatpush1.bf16.msra.mxu0 %v7478
    %7945 = vmatprep.subr.bf16.mxu0 0
    %7946 = vmatpush1.bf16.msra.mxu0 %v7481
    %7947 = vmatprep.subr.bf16.mxu0 0
    %7948 = vmatpush1.bf16.msra.mxu0 %v7484
    %7949 = vmatprep.subr.bf16.mxu0 0
    %7950 = vmatpush1.bf16.msra.mxu0 %v7487
    %7951 = vmatprep.subr.bf16.mxu0 0
    %7952 = vmatpush1.bf16.msra.mxu0 %v7490
    %7953 = vmatprep.subr.bf16.mxu0 0
    %7954 = vmatpush1.bf16.msra.mxu0 %v7493
    %7955 = vmatprep.subr.bf16.mxu0 0
    %7956 = vmatpush1.bf16.msra.mxu0 %v7496
    %7957 = vmatprep.subr.bf16.mxu0 0
    %7958 = vmatpush1.bf16.msra.mxu0 %v7499
    %7959 = vmatprep.subr.bf16.mxu0 0
    %7960 = vmatpush1.bf16.msra.mxu0 %v7502
    %7961 = vmatprep.subr.bf16.mxu0 0
    %7962 = vmatpush1.bf16.msra.mxu0 %v7505
    %7963 = vmatprep.subr.bf16.mxu0 0
    %7964 = vmatpush1.bf16.msra.mxu0 %v7508
    %7965 = vmatprep.subr.bf16.mxu0 0
    %7966 = vmatpush1.bf16.msra.mxu0 %v7511
    %7967 = vmatprep.subr.bf16.mxu0 0
    %7968 = vmatpush1.bf16.msra.mxu0 %v7514
    %7969 = vmatprep.subr.bf16.mxu0 0
    %7970 = vmatpush1.bf16.msra.mxu0 %v7517
    %7971 = vmatprep.mubr.bf16.mxu0 %v5752
    %7972 = vmatmul.mubr.bf16.gmra.mrb[0].mxu0 %v5751
    %v7973 = vpop.f32.mrb[0].mxu0
    %v7974 = vadd.f32 %v7910, %v7973
    %v7975 = vpop.f32.mrb[0].mxu0
    %v7976 = vpop.f32.mrb[0].mxu0
    %v7977 = vadd.f32 %v7913, %v7976
    %v7978 = vpop.f32.mrb[0].mxu0
    %7979 = vmatprep.mubr.bf16.mxu0 %v5757
    %7980 = vmatmul.mubr.bf16.gmra.mrb[0].mxu0 %v5756
    %v7981 = vpop.f32.mrb[0].mxu0
    %v7982 = vadd.f32 %v7918, %v7981
    %v7983 = vpop.f32.mrb[0].mxu0
    %v7984 = vpop.f32.mrb[0].mxu0
    %v7985 = vadd.f32 %v7921, %v7984
    %v7986 = vpop.f32.mrb[0].mxu0
    %7987 = vmatprep.mubr.bf16.mxu0 %v5762
    %7988 = vmatmul.mubr.bf16.gmra.mrb[0].mxu0 %v5761
    %v7989 = vpop.f32.mrb[0].mxu0
    %v7990 = vadd.f32 %v7926, %v7989
    %v7991 = vpop.f32.mrb[0].mxu0
    %v7992 = vpop.f32.mrb[0].mxu0
    %v7993 = vadd.f32 %v7929, %v7992
    %v7994 = vpop.f32.mrb[0].mxu0
    %7995 = vmatprep.mubr.bf16.mxu0 %v7000
    %7996 = vmatmul.mubr.bf16.gmra.mrb[0].mxu0 %v6999
    %v7997 = vpop.f32.mrb[0].mxu0
    %v7998 = vadd.f32 %v7934, %v7997
    %v7999 = vpop.f32.mrb[0].mxu0
    %v8000 = vpop.f32.mrb[0].mxu0
    %v8001 = vpop.f32.mrb[0].mxu0
    %8002 = vdwg.mxu0
    %8003 = vmatprep.subr.bf16.mxu0 0
    %8004 = vmatpush1.bf16.msra.mxu0 %v7520
    %8005 = vmatprep.subr.bf16.mxu0 0
    %8006 = vmatpush1.bf16.msra.mxu0 %v7523
    %8007 = vmatprep.subr.bf16.mxu0 0
    %8008 = vmatpush1.bf16.msra.mxu0 %v7526
    %8009 = vmatprep.subr.bf16.mxu0 0
    %8010 = vmatpush1.bf16.msra.mxu0 %v7529
    %8011 = vmatprep.subr.bf16.mxu0 0
    %8012 = vmatpush1.bf16.msra.mxu0 %v7532
    %8013 = vmatprep.subr.bf16.mxu0 0
    %8014 = vmatpush1.bf16.msra.mxu0 %v7535
    %8015 = vmatprep.subr.bf16.mxu0 0
    %8016 = vmatpush1.bf16.msra.mxu0 %v7538
    %8017 = vmatprep.subr.bf16.mxu0 0
    %8018 = vmatpush1.bf16.msra.mxu0 %v7541
    %8019 = vmatprep.subr.bf16.mxu0 0
    %8020 = vmatpush1.bf16.msra.mxu0 0
    %8021 = vmatprep.subr.bf16.mxu0 0
    %8022 = vmatpush1.bf16.msra.mxu0 0
    %8023 = vmatprep.subr.bf16.mxu0 0
    %8024 = vmatpush1.bf16.msra.mxu0 0
    %8025 = vmatprep.subr.bf16.mxu0 0
    %8026 = vmatpush1.bf16.msra.mxu0 0
    %8027 = vmatprep.subr.bf16.mxu0 0
    %8028 = vmatpush1.bf16.msra.mxu0 0
    %8029 = vmatprep.subr.bf16.mxu0 0
    %8030 = vmatpush1.bf16.msra.mxu0 0
    %8031 = vmatprep.subr.bf16.mxu0 0
    %8032 = vmatpush1.bf16.msra.mxu0 0
    %8033 = vmatprep.subr.bf16.mxu0 0
    %8034 = vmatpush1.bf16.msra.mxu0 0
    %8035 = vmatprep.mubr.bf16.mxu0 0
    %8036 = vmatmul.mubr.bf16.gmra.mrb[0].mxu0 %v5753
    %v8037 = vpop.f32.mrb[0].mxu0
    %v8038 = vadd.f32 %v7974, %v8037
    %v8039 = vpop.f32.mrb[0].mxu0
    %v8040 = vpop.f32.mrb[0].mxu0
    %v8041 = vadd.f32 %v7977, %v8040
    %v8042 = vpop.f32.mrb[0].mxu0
    %8043 = vmatprep.mubr.bf16.mxu0 0
    %8044 = vmatmul.mubr.bf16.gmra.mrb[0].mxu0 %v5758
    %v8045 = vpop.f32.mrb[0].mxu0
    %v8046 = vadd.f32 %v7982, %v8045
    %v8047 = vpop.f32.mrb[0].mxu0
    %v8048 = vpop.f32.mrb[0].mxu0
    %v8049 = vadd.f32 %v7985, %v8048
    %v8050 = vpop.f32.mrb[0].mxu0
    %8051 = vmatprep.mubr.bf16.mxu0 0
    %8052 = vmatmul.mubr.bf16.gmra.mrb[0].mxu0 %v5763
    %v8053 = vpop.f32.mrb[0].mxu0
    %v8054 = vadd.f32 %v7990, %v8053
    %v8055 = vpop.f32.mrb[0].mxu0
    %v8056 = vpop.f32.mrb[0].mxu0
    %v8057 = vadd.f32 %v7993, %v8056
    %v8058 = vpop.f32.mrb[0].mxu0
    %8059 = vmatprep.mubr.bf16.mxu0 0
    %8060 = vmatmul.mubr.bf16.gmra.mrb[0].mxu0 %v7001
    %v8061 = vpop.f32.mrb[0].mxu0
    %v8062 = vadd.f32 %v7998, %v8061
    %v8063 = vpop.f32.mrb[0].mxu0
    %v8064 = vpop.f32.mrb[0].mxu0
    %v8065 = vpop.f32.mrb[0].mxu0
    %8066 = vdwg.mxu0
    %v8067 = vld [vmem:[#allocation3] sm:$0xee]
    %v8068 = vld [vmem:[#allocation3 + $0x8] sm:$0xee]
    %v8069 = vld [vmem:[#allocation3 + $0x10] sm:$0xe]
    %s8070 = scalar_lea.vmem [#allocation4], 1920
    %v8071 = vld [vmem:[%s8070] sm:$0xff]
    %v8072 = vld [vmem:[%s8070 + $0x8] sm:$0xf]
    %v8073 = vld [vmem:[%s8070 + $0xc] sm:$0xff]
    %v8074 = vld [vmem:[%s8070 + $0x14] sm:$0xf]
    %v8075 = vld [vmem:[%s8070 + $0x18] sm:$0xff]
    %v8076 = vld [vmem:[%s8070 + $0x20] sm:$0xf]
    %v8077 = vld [vmem:[%s8070 + $0x24] sm:$0xff]
    %v8078 = vld [vmem:[%s8070 + $0x2c] sm:$0xf]
    %v8079 = vld [vmem:[%s8070 + $0x30] sm:$0xff]
    %v8080 = vld [vmem:[%s8070 + $0x38] sm:$0xf]
    %v8081 = vld [vmem:[%s8070 + $0x3c] sm:$0xff]
    %v8082 = vld [vmem:[%s8070 + $0x44] sm:$0xf]
    %v8083 = vld [vmem:[%s8070 + $0x48] sm:$0xff]
    %v8084 = vld [vmem:[%s8070 + $0x50] sm:$0xf]
    %v8085 = vld [vmem:[%s8070 + $0x54] sm:$0xff]
    %v8086 = vld [vmem:[%s8070 + $0x5c] sm:$0xf]
    %v8087 = vld [vmem:[%s8070 + $0x60] sm:$0xff]
    %v8088 = vld [vmem:[%s8070 + $0x68] sm:$0xf]
    %v8089 = vld [vmem:[%s8070 + $0x6c] sm:$0xff]
    %v8090 = vld [vmem:[%s8070 + $0x74] sm:$0xf]
    %v8091 = vld [vmem:[%s8070 + $0x78] sm:$0xff]
    %v8092 = vld [vmem:[%s8070 + $0x80] sm:$0xf]
    %v8093 = vld [vmem:[%s8070 + $0x84] sm:$0xff]
    %v8094 = vld [vmem:[%s8070 + $0x8c] sm:$0xf]
    %v8095 = vld [vmem:[%s8070 + $0x90] sm:$0xff]
    %v8096 = vld [vmem:[%s8070 + $0x98] sm:$0xf]
    %v8097 = vld [vmem:[%s8070 + $0x9c] sm:$0xff]
    %v8098 = vld [vmem:[%s8070 + $0xa4] sm:$0xf]
    %v8099 = vld [vmem:[%s8070 + $0xa8] sm:$0xff]
    %v8100 = vld [vmem:[%s8070 + $0xb0] sm:$0xf]
    %v8101 = vld [vmem:[%s8070 + $0xb4] sm:$0xff]
    %v8102 = vld [vmem:[%s8070 + $0xbc] sm:$0xf]
    %v8103 = vld [vmem:[%s8070 + $0xc0] sm:$0xff]
    %v8104 = vld [vmem:[%s8070 + $0xc8] sm:$0xf]
    %v8105 = vld [vmem:[%s8070 + $0xcc] sm:$0xff]
    %v8106 = vld [vmem:[%s8070 + $0xd4] sm:$0xf]
    %v8107 = vld [vmem:[%s8070 + $0xd8] sm:$0xff]
    %v8108 = vld [vmem:[%s8070 + $0xe0] sm:$0xf]
    %v8109 = vld [vmem:[%s8070 + $0xe4] sm:$0xff]
    %v8110 = vld [vmem:[%s8070 + $0xec] sm:$0xf]
    %v8111 = vld [vmem:[%s8070 + $0xf0] sm:$0xff]
    %v8112 = vld [vmem:[%s8070 + $0xf8] sm:$0xf]
    %v8113 = vld [vmem:[%s8070 + $0xfc] sm:$0xff]
    %v8114 = vld [vmem:[%s8070 + $0x104] sm:$0xf]
    %v8115 = vld [vmem:[%s8070 + $0x108] sm:$0xff]
    %v8116 = vld [vmem:[%s8070 + $0x110] sm:$0xf]
    %v8117 = vld [vmem:[%s8070 + $0x114] sm:$0xff]
    %v8118 = vld [vmem:[%s8070 + $0x11c] sm:$0xf]
    %v8119 = vld [vmem:[%s8070 + $0x120] sm:$0xff]
    %v8120 = vld [vmem:[%s8070 + $0x128] sm:$0xf]
    %v8121 = vld [vmem:[%s8070 + $0x12c] sm:$0xff]
    %v8122 = vld [vmem:[%s8070 + $0x134] sm:$0xf]
    %v8123 = vld [vmem:[%s8070 + $0x138] sm:$0xff]
    %v8124 = vld [vmem:[%s8070 + $0x140] sm:$0xf]
    %v8125 = vld [vmem:[%s8070 + $0x144] sm:$0xff]
    %v8126 = vld [vmem:[%s8070 + $0x14c] sm:$0xf]
    %v8127 = vld [vmem:[%s8070 + $0x150] sm:$0xff]
    %v8128 = vld [vmem:[%s8070 + $0x158] sm:$0xf]
    %v8129 = vld [vmem:[%s8070 + $0x15c] sm:$0xff]
    %v8130 = vld [vmem:[%s8070 + $0x164] sm:$0xf]
    %v8131 = vld [vmem:[%s8070 + $0x168] sm:$0xff]
    %v8132 = vld [vmem:[%s8070 + $0x170] sm:$0xf]
    %v8133 = vld [vmem:[%s8070 + $0x174] sm:$0xff]
    %v8134 = vld [vmem:[%s8070 + $0x17c] sm:$0xf]
    %v8135 = vld [vmem:[%s8070 + $0x180] sm:$0xff]
    %v8136 = vld [vmem:[%s8070 + $0x188] sm:$0xf]
    %v8137 = vld [vmem:[%s8070 + $0x18c] sm:$0xff]
    %v8138 = vld [vmem:[%s8070 + $0x194] sm:$0xf]
    %v8139 = vld [vmem:[%s8070 + $0x198] sm:$0xff]
    %v8140 = vld [vmem:[%s8070 + $0x1a0] sm:$0xf]
    %v8141 = vld [vmem:[%s8070 + $0x1a4] sm:$0xff]
    %v8142 = vld [vmem:[%s8070 + $0x1ac] sm:$0xf]
    %v8143 = vld [vmem:[%s8070 + $0x1b0] sm:$0xff]
    %v8144 = vld [vmem:[%s8070 + $0x1b8] sm:$0xf]
    %v8145 = vld [vmem:[%s8070 + $0x1bc] sm:$0xff]
    %v8146 = vld [vmem:[%s8070 + $0x1c4] sm:$0xf]
    %v8147 = vld [vmem:[%s8070 + $0x1c8] sm:$0xff]
    %v8148 = vld [vmem:[%s8070 + $0x1d0] sm:$0xf]
    %v8149 = vld [vmem:[%s8070 + $0x1d4] sm:$0xff]
    %v8150 = vld [vmem:[%s8070 + $0x1dc] sm:$0xf]
    %v8151 = vld [vmem:[%s8070 + $0x1e0] sm:$0xff]
    %v8152 = vld [vmem:[%s8070 + $0x1e8] sm:$0xf]
    %v8153 = vld [vmem:[%s8070 + $0x1ec] sm:$0xff]
    %v8154 = vld [vmem:[%s8070 + $0x1f4] sm:$0xf]
    %v8155 = vld [vmem:[%s8070 + $0x1f8] sm:$0xff]
    %v8156 = vld [vmem:[%s8070 + $0x200] sm:$0xf]
    %v8157 = vld [vmem:[%s8070 + $0x204] sm:$0xff]
    %v8158 = vld [vmem:[%s8070 + $0x20c] sm:$0xf]
    %v8159 = vld [vmem:[%s8070 + $0x210] sm:$0xff]
    %v8160 = vld [vmem:[%s8070 + $0x218] sm:$0xf]
    %v8161 = vld [vmem:[%s8070 + $0x21c] sm:$0xff]
    %v8162 = vld [vmem:[%s8070 + $0x224] sm:$0xf]
    %v8163 = vld [vmem:[%s8070 + $0x228] sm:$0xff]
    %v8164 = vld [vmem:[%s8070 + $0x230] sm:$0xf]
    %v8165 = vld [vmem:[%s8070 + $0x234] sm:$0xff]
    %v8166 = vld [vmem:[%s8070 + $0x23c] sm:$0xf]
    %v8167 = vld [vmem:[%s8070 + $0x240] sm:$0xff]
    %v8168 = vld [vmem:[%s8070 + $0x248] sm:$0xf]
    %v8169 = vld [vmem:[%s8070 + $0x24c] sm:$0xff]
    %v8170 = vld [vmem:[%s8070 + $0x254] sm:$0xf]
    %v8171 = vld [vmem:[%s8070 + $0x258] sm:$0xff]
    %v8172 = vld [vmem:[%s8070 + $0x260] sm:$0xf]
    %v8173 = vld [vmem:[%s8070 + $0x264] sm:$0xff]
    %v8174 = vld [vmem:[%s8070 + $0x26c] sm:$0xf]
    %v8175 = vld [vmem:[%s8070 + $0x270] sm:$0xff]
    %v8176 = vld [vmem:[%s8070 + $0x278] sm:$0xf]
    %v8177 = vld [vmem:[%s8070 + $0x27c] sm:$0xff]
    %v8178 = vld [vmem:[%s8070 + $0x284] sm:$0xf]
    %v8179 = vld [vmem:[%s8070 + $0x288] sm:$0xff]
    %v8180 = vld [vmem:[%s8070 + $0x290] sm:$0xf]
    %v8181 = vld [vmem:[%s8070 + $0x294] sm:$0xff]
    %v8182 = vld [vmem:[%s8070 + $0x29c] sm:$0xf]
    %v8183 = vld [vmem:[%s8070 + $0x2a0] sm:$0xff]
    %v8184 = vld [vmem:[%s8070 + $0x2a8] sm:$0xf]
    %v8185 = vld [vmem:[%s8070 + $0x2ac] sm:$0xff]
    %v8186 = vld [vmem:[%s8070 + $0x2b4] sm:$0xf]
    %v8187 = vld [vmem:[%s8070 + $0x2b8] sm:$0xff]
    %v8188 = vld [vmem:[%s8070 + $0x2c0] sm:$0xf]
    %v8189 = vld [vmem:[%s8070 + $0x2c4] sm:$0xff]
    %v8190 = vld [vmem:[%s8070 + $0x2cc] sm:$0xf]
    %v8191 = vld [vmem:[%s8070 + $0x2d0] sm:$0xff]
    %v8192 = vld [vmem:[%s8070 + $0x2d8] sm:$0xf]
    %v8193 = vld [vmem:[%s8070 + $0x2dc] sm:$0xff]
    %v8194 = vld [vmem:[%s8070 + $0x2e4] sm:$0xf]
    %v8195 = vld [vmem:[%s8070 + $0x2e8] sm:$0xff]
    %v8196 = vld [vmem:[%s8070 + $0x2f0] sm:$0xf]
    %v8197 = vld [vmem:[%s8070 + $0x2f4] sm:$0xff]
    %v8198 = vld [vmem:[%s8070 + $0x2fc] sm:$0xf]
    %v8199 = vld [vmem:[%s8070 + $0x300] sm:$0xff]
    %v8200 = vld [vmem:[%s8070 + $0x308] sm:$0xf]
    %v8201 = vld [vmem:[%s8070 + $0x30c] sm:$0xff]
    %v8202 = vld [vmem:[%s8070 + $0x314] sm:$0xf]
    %v8203 = vld [vmem:[%s8070 + $0x318] sm:$0xff]
    %v8204 = vld [vmem:[%s8070 + $0x320] sm:$0xf]
    %v8205 = vld [vmem:[%s8070 + $0x324] sm:$0xff]
    %v8206 = vld [vmem:[%s8070 + $0x32c] sm:$0xf]
    %v8207 = vld [vmem:[%s8070 + $0x330] sm:$0xff]
    %v8208 = vld [vmem:[%s8070 + $0x338] sm:$0xf]
    %v8209 = vld [vmem:[%s8070 + $0x33c] sm:$0xff]
    %v8210 = vld [vmem:[%s8070 + $0x344] sm:$0xf]
    %v8211 = vld [vmem:[%s8070 + $0x348] sm:$0xff]
    %v8212 = vld [vmem:[%s8070 + $0x350] sm:$0xf]
    %v8213 = vld [vmem:[%s8070 + $0x354] sm:$0xff]
    %v8214 = vld [vmem:[%s8070 + $0x35c] sm:$0xf]
    %v8215 = vld [vmem:[%s8070 + $0x360] sm:$0xff]
    %v8216 = vld [vmem:[%s8070 + $0x368] sm:$0xf]
    %v8217 = vld [vmem:[%s8070 + $0x36c] sm:$0xff]
    %v8218 = vld [vmem:[%s8070 + $0x374] sm:$0xf]
    %v8219 = vld [vmem:[%s8070 + $0x378] sm:$0xff]
    %v8220 = vld [vmem:[%s8070 + $0x380] sm:$0xf]
    %v8221 = vld [vmem:[%s8070 + $0x384] sm:$0xff]
    %v8222 = vld [vmem:[%s8070 + $0x38c] sm:$0xf]
    %v8223 = vld [vmem:[%s8070 + $0x390] sm:$0xff]
    %v8224 = vld [vmem:[%s8070 + $0x398] sm:$0xf]
    %v8225 = vld [vmem:[%s8070 + $0x39c] sm:$0xff]
    %v8226 = vld [vmem:[%s8070 + $0x3a4] sm:$0xf]
    %v8227 = vld [vmem:[%s8070 + $0x3a8] sm:$0xff]
    %v8228 = vld [vmem:[%s8070 + $0x3b0] sm:$0xf]
    %v8229 = vld [vmem:[%s8070 + $0x3b4] sm:$0xff]
    %v8230 = vld [vmem:[%s8070 + $0x3bc] sm:$0xf]
    %v8234 = vunpack.c.l.b16 %v8067
    %v8235 = vunpack.c.h.b16 %v8067
    %v8236 = vunpack.c.l.b16 %v8068
    %v8237 = vunpack.c.h.b16 %v8068
    %v8238 = vunpack.c.l.b16 %v8069
    %v8239 = vpack.c.b16 %v5719, %v8234
    %v8240 = vpack.c.b16 %v5720, %v8235
    %v8241 = vpack.c.b16 %v5721, %v8236
    %v8242 = vpack.c.b16 %v5722, %v8237
    %v8243 = vpack.c.b16 %v5723, %v8238
    %v8244 = vrot.slane %v8239, 1
    %v8245 = vrot.slane %v5754, 1
    %v8246 = vsel %vm3815, %v8244, %v8245
    %v8247 = vrot.slane %v8240, 1
    %v8248 = vrot.slane %v5755, 1
    %v8249 = vsel %vm3815, %v8247, %v8248
    %v8250 = vrot.slane %v8241, 1
    %v8251 = vrot.slane %v5756, 1
    %v8252 = vsel %vm3815, %v8250, %v8251
    %v8253 = vrot.slane %v8242, 1
    %v8254 = vrot.slane %v5757, 1
    %v8255 = vsel %vm3815, %v8253, %v8254
    %v8256 = vrot.slane %v8243, 1
    %v8257 = vrot.slane %v5758, 1
    %v8258 = vsel %vm3815, %v8256, %v8257
    %v8259 = vrot.slane %v5759, 1
    %v8260 = vsel %vm3815, %v8245, %v8259
    %v8261 = vrot.slane %v5760, 1
    %v8262 = vsel %vm3815, %v8248, %v8261
    %v8263 = vrot.slane %v5761, 1
    %v8264 = vsel %vm3815, %v8251, %v8263
    %v8265 = vrot.slane %v5762, 1
    %v8266 = vsel %vm3815, %v8254, %v8265
    %v8267 = vrot.slane %v5763, 1
    %v8268 = vsel %vm3815, %v8257, %v8267
    %v8269 = vrot.slane %v5764, 1
    %v8270 = vsel %vm3815, %v8259, %v8269
    %v8271 = vrot.slane %v5765, 1
    %v8272 = vsel %vm3815, %v8261, %v8271
    %v8273 = vrot.slane %v5766, 1
    %v8274 = vsel %vm3815, %v8263, %v8273
    %v8275 = vrot.slane %v5767, 1
    %v8276 = vsel %vm3815, %v8265, %v8275
    %v8277 = vrot.slane %v5768, 1
    %v8278 = vsel %vm3815, %v8267, %v8277
    %v8459 = vunpack.c.l.b16 %v8071
    %v8460 = vunpack.c.h.b16 %v8071
    %v8461 = vunpack.c.l.b16 %v8072
    %v8462 = vunpack.c.l.b16 %v8073
    %v8463 = vunpack.c.h.b16 %v8073
    %v8464 = vunpack.c.l.b16 %v8074
    %v8465 = vunpack.c.l.b16 %v8075
    %v8466 = vunpack.c.h.b16 %v8075
    %v8467 = vunpack.c.l.b16 %v8076
    %v8468 = vunpack.c.l.b16 %v8077
    %v8469 = vunpack.c.h.b16 %v8077
    %v8470 = vunpack.c.l.b16 %v8078
    %v8471 = vunpack.c.l.b16 %v8079
    %v8472 = vunpack.c.h.b16 %v8079
    %v8473 = vunpack.c.l.b16 %v8080
    %v8474 = vunpack.c.l.b16 %v8081
    %v8475 = vunpack.c.h.b16 %v8081
    %v8476 = vunpack.c.l.b16 %v8082
    %v8477 = vunpack.c.l.b16 %v8083
    %v8478 = vunpack.c.h.b16 %v8083
    %v8479 = vunpack.c.l.b16 %v8084
    %v8480 = vunpack.c.l.b16 %v8085
    %v8481 = vunpack.c.h.b16 %v8085
    %v8482 = vunpack.c.l.b16 %v8086
    %v8483 = vunpack.c.l.b16 %v8087
    %v8484 = vunpack.c.h.b16 %v8087
    %v8485 = vunpack.c.l.b16 %v8088
    %v8486 = vunpack.c.l.b16 %v8089
    %v8487 = vunpack.c.h.b16 %v8089
    %v8488 = vunpack.c.l.b16 %v8090
    %v8489 = vunpack.c.l.b16 %v8091
    %v8490 = vunpack.c.h.b16 %v8091
    %v8491 = vunpack.c.l.b16 %v8092
    %v8492 = vunpack.c.l.b16 %v8093
    %v8493 = vunpack.c.h.b16 %v8093
    %v8494 = vunpack.c.l.b16 %v8094
    %v8495 = vunpack.c.l.b16 %v8095
    %v8496 = vunpack.c.h.b16 %v8095
    %v8497 = vunpack.c.l.b16 %v8096
    %v8498 = vunpack.c.l.b16 %v8097
    %v8499 = vunpack.c.h.b16 %v8097
    %v8500 = vunpack.c.l.b16 %v8098
    %v8501 = vunpack.c.l.b16 %v8099
    %v8502 = vunpack.c.h.b16 %v8099
    %v8503 = vunpack.c.l.b16 %v8100
    %v8504 = vunpack.c.l.b16 %v8101
    %v8505 = vunpack.c.h.b16 %v8101
    %v8506 = vunpack.c.l.b16 %v8102
    %v8507 = vunpack.c.l.b16 %v8103
    %v8508 = vunpack.c.h.b16 %v8103
    %v8509 = vunpack.c.l.b16 %v8104
    %v8510 = vunpack.c.l.b16 %v8105
    %v8511 = vunpack.c.h.b16 %v8105
    %v8512 = vunpack.c.l.b16 %v8106
    %v8513 = vunpack.c.l.b16 %v8107
    %v8514 = vunpack.c.h.b16 %v8107
    %v8515 = vunpack.c.l.b16 %v8108
    %v8516 = vunpack.c.l.b16 %v8109
    %v8517 = vunpack.c.h.b16 %v8109
    %v8518 = vunpack.c.l.b16 %v8110
    %v8519 = vunpack.c.l.b16 %v8111
    %v8520 = vunpack.c.h.b16 %v8111
    %v8521 = vunpack.c.l.b16 %v8112
    %v8522 = vunpack.c.l.b16 %v8113
    %v8523 = vunpack.c.h.b16 %v8113
    %v8524 = vunpack.c.l.b16 %v8114
    %v8525 = vunpack.c.l.b16 %v8115
    %v8526 = vunpack.c.h.b16 %v8115
    %v8527 = vunpack.c.l.b16 %v8116
    %v8528 = vunpack.c.l.b16 %v8117
    %v8529 = vunpack.c.h.b16 %v8117
    %v8530 = vunpack.c.l.b16 %v8118
    %v8531 = vunpack.c.l.b16 %v8119
    %v8532 = vunpack.c.h.b16 %v8119
    %v8533 = vunpack.c.l.b16 %v8120
    %v8534 = vunpack.c.l.b16 %v8121
    %v8535 = vunpack.c.h.b16 %v8121
    %v8536 = vunpack.c.l.b16 %v8122
    %v8537 = vunpack.c.l.b16 %v8123
    %v8538 = vunpack.c.h.b16 %v8123
    %v8539 = vunpack.c.l.b16 %v8124
    %v8540 = vunpack.c.l.b16 %v8125
    %v8541 = vunpack.c.h.b16 %v8125
    %v8542 = vunpack.c.l.b16 %v8126
    %v8543 = vunpack.c.l.b16 %v8127
    %v8544 = vunpack.c.h.b16 %v8127
    %v8545 = vunpack.c.l.b16 %v8128
    %v8546 = vunpack.c.l.b16 %v8129
    %v8547 = vunpack.c.h.b16 %v8129
    %v8548 = vunpack.c.l.b16 %v8130
    %v8549 = vunpack.c.l.b16 %v8131
    %v8550 = vunpack.c.h.b16 %v8131
    %v8551 = vunpack.c.l.b16 %v8132
    %v8552 = vunpack.c.l.b16 %v8133
    %v8553 = vunpack.c.h.b16 %v8133
    %v8554 = vunpack.c.l.b16 %v8134
    %v8555 = vunpack.c.l.b16 %v8135
    %v8556 = vunpack.c.h.b16 %v8135
    %v8557 = vunpack.c.l.b16 %v8136
    %v8558 = vunpack.c.l.b16 %v8137
    %v8559 = vunpack.c.h.b16 %v8137
    %v8560 = vunpack.c.l.b16 %v8138
    %v8561 = vunpack.c.l.b16 %v8139
    %v8562 = vunpack.c.h.b16 %v8139
    %v8563 = vunpack.c.l.b16 %v8140
    %v8564 = vunpack.c.l.b16 %v8141
    %v8565 = vunpack.c.h.b16 %v8141
    %v8566 = vunpack.c.l.b16 %v8142
    %v8567 = vunpack.c.l.b16 %v8143
    %v8568 = vunpack.c.h.b16 %v8143
    %v8569 = vunpack.c.l.b16 %v8144
    %v8570 = vunpack.c.l.b16 %v8145
    %v8571 = vunpack.c.h.b16 %v8145
    %v8572 = vunpack.c.l.b16 %v8146
    %v8573 = vunpack.c.l.b16 %v8147
    %v8574 = vunpack.c.h.b16 %v8147
    %v8575 = vunpack.c.l.b16 %v8148
    %v8576 = vunpack.c.l.b16 %v8149
    %v8577 = vunpack.c.h.b16 %v8149
    %v8578 = vunpack.c.l.b16 %v8150
    %v8579 = vunpack.c.l.b16 %v8151
    %v8580 = vunpack.c.h.b16 %v8151
    %v8581 = vunpack.c.l.b16 %v8152
    %v8582 = vunpack.c.l.b16 %v8153
    %v8583 = vunpack.c.h.b16 %v8153
    %v8584 = vunpack.c.l.b16 %v8154
    %v8585 = vunpack.c.l.b16 %v8155
    %v8586 = vunpack.c.h.b16 %v8155
    %v8587 = vunpack.c.l.b16 %v8156
    %v8588 = vunpack.c.l.b16 %v8157
    %v8589 = vunpack.c.h.b16 %v8157
    %v8590 = vunpack.c.l.b16 %v8158
    %v8591 = vunpack.c.l.b16 %v8159
    %v8592 = vunpack.c.h.b16 %v8159
    %v8593 = vunpack.c.l.b16 %v8160
    %v8594 = vunpack.c.l.b16 %v8161
    %v8595 = vunpack.c.h.b16 %v8161
    %v8596 = vunpack.c.l.b16 %v8162
    %v8597 = vunpack.c.l.b16 %v8163
    %v8598 = vunpack.c.h.b16 %v8163
    %v8599 = vunpack.c.l.b16 %v8164
    %v8600 = vunpack.c.l.b16 %v8165
    %v8601 = vunpack.c.h.b16 %v8165
    %v8602 = vunpack.c.l.b16 %v8166
    %v8603 = vunpack.c.l.b16 %v8167
    %v8604 = vunpack.c.h.b16 %v8167
    %v8605 = vunpack.c.l.b16 %v8168
    %v8606 = vunpack.c.l.b16 %v8169
    %v8607 = vunpack.c.h.b16 %v8169
    %v8608 = vunpack.c.l.b16 %v8170
    %v8609 = vunpack.c.l.b16 %v8171
    %v8610 = vunpack.c.h.b16 %v8171
    %v8611 = vunpack.c.l.b16 %v8172
    %v8612 = vunpack.c.l.b16 %v8173
    %v8613 = vunpack.c.h.b16 %v8173
    %v8614 = vunpack.c.l.b16 %v8174
    %v8615 = vunpack.c.l.b16 %v8175
    %v8616 = vunpack.c.h.b16 %v8175
    %v8617 = vunpack.c.l.b16 %v8176
    %v8618 = vunpack.c.l.b16 %v8177
    %v8619 = vunpack.c.h.b16 %v8177
    %v8620 = vunpack.c.l.b16 %v8178
    %v8621 = vunpack.c.l.b16 %v8179
    %v8622 = vunpack.c.h.b16 %v8179
    %v8623 = vunpack.c.l.b16 %v8180
    %v8624 = vunpack.c.l.b16 %v8181
    %v8625 = vunpack.c.h.b16 %v8181
    %v8626 = vunpack.c.l.b16 %v8182
    %v8627 = vunpack.c.l.b16 %v8183
    %v8628 = vunpack.c.h.b16 %v8183
    %v8629 = vunpack.c.l.b16 %v8184
    %v8630 = vunpack.c.l.b16 %v8185
    %v8631 = vunpack.c.h.b16 %v8185
    %v8632 = vunpack.c.l.b16 %v8186
    %v8633 = vunpack.c.l.b16 %v8187
    %v8634 = vunpack.c.h.b16 %v8187
    %v8635 = vunpack.c.l.b16 %v8188
    %v8636 = vunpack.c.l.b16 %v8189
    %v8637 = vunpack.c.h.b16 %v8189
    %v8638 = vunpack.c.l.b16 %v8190
    %v8639 = vunpack.c.l.b16 %v8191
    %v8640 = vunpack.c.h.b16 %v8191
    %v8641 = vunpack.c.l.b16 %v8192
    %v8642 = vunpack.c.l.b16 %v8193
    %v8643 = vunpack.c.h.b16 %v8193
    %v8644 = vunpack.c.l.b16 %v8194
    %v8645 = vunpack.c.l.b16 %v8195
    %v8646 = vunpack.c.h.b16 %v8195
    %v8647 = vunpack.c.l.b16 %v8196
    %v8648 = vunpack.c.l.b16 %v8197
    %v8649 = vunpack.c.h.b16 %v8197
    %v8650 = vunpack.c.l.b16 %v8198
    %v8651 = vunpack.c.l.b16 %v8199
    %v8652 = vunpack.c.h.b16 %v8199
    %v8653 = vunpack.c.l.b16 %v8200
    %v8654 = vunpack.c.l.b16 %v8201
    %v8655 = vunpack.c.h.b16 %v8201
    %v8656 = vunpack.c.l.b16 %v8202
    %v8657 = vunpack.c.l.b16 %v8203
    %v8658 = vunpack.c.h.b16 %v8203
    %v8659 = vunpack.c.l.b16 %v8204
    %v8660 = vunpack.c.l.b16 %v8205
    %v8661 = vunpack.c.h.b16 %v8205
    %v8662 = vunpack.c.l.b16 %v8206
    %v8663 = vunpack.c.l.b16 %v8207
    %v8664 = vunpack.c.h.b16 %v8207
    %v8665 = vunpack.c.l.b16 %v8208
    %v8666 = vunpack.c.l.b16 %v8209
    %v8667 = vunpack.c.h.b16 %v8209
    %v8668 = vunpack.c.l.b16 %v8210
    %v8669 = vunpack.c.l.b16 %v8211
    %v8670 = vunpack.c.h.b16 %v8211
    %v8671 = vunpack.c.l.b16 %v8212
    %v8672 = vunpack.c.l.b16 %v8213
    %v8673 = vunpack.c.h.b16 %v8213
    %v8674 = vunpack.c.l.b16 %v8214
    %v8675 = vunpack.c.l.b16 %v8215
    %v8676 = vunpack.c.h.b16 %v8215
    %v8677 = vunpack.c.l.b16 %v8216
    %v8678 = vunpack.c.l.b16 %v8217
    %v8679 = vunpack.c.h.b16 %v8217
    %v8680 = vunpack.c.l.b16 %v8218
    %v8681 = vunpack.c.l.b16 %v8219
    %v8682 = vunpack.c.h.b16 %v8219
    %v8683 = vunpack.c.l.b16 %v8220
    %v8684 = vunpack.c.l.b16 %v8221
    %v8685 = vunpack.c.h.b16 %v8221
    %v8686 = vunpack.c.l.b16 %v8222
    %v8687 = vunpack.c.l.b16 %v8223
    %v8688 = vunpack.c.h.b16 %v8223
    %v8689 = vunpack.c.l.b16 %v8224
    %v8690 = vunpack.c.l.b16 %v8225
    %v8691 = vunpack.c.h.b16 %v8225
    %v8692 = vunpack.c.l.b16 %v8226
    %v8693 = vunpack.c.l.b16 %v8227
    %v8694 = vunpack.c.h.b16 %v8227
    %v8695 = vunpack.c.l.b16 %v8228
    %v8696 = vunpack.c.l.b16 %v8229
    %v8697 = vunpack.c.h.b16 %v8229
    %v8698 = vunpack.c.l.b16 %v8230
    %v8699 = vpack.c.b16 %v8462, %v8459
    %v8700 = vpack.c.b16 %v8463, %v8460
    %v8701 = vpack.c.b16 %v8464, %v8461
    %v8702 = vpack.c.b16 %v8468, %v8465
    %v8703 = vpack.c.b16 %v8469, %v8466
    %v8704 = vpack.c.b16 %v8470, %v8467
    %v8705 = vpack.c.b16 %v8474, %v8471
    %v8706 = vpack.c.b16 %v8475, %v8472
    %v8707 = vpack.c.b16 %v8476, %v8473
    %v8708 = vpack.c.b16 %v8480, %v8477
    %v8709 = vpack.c.b16 %v8481, %v8478
    %v8710 = vpack.c.b16 %v8482, %v8479
    %v8711 = vpack.c.b16 %v8486, %v8483
    %v8712 = vpack.c.b16 %v8487, %v8484
    %v8713 = vpack.c.b16 %v8488, %v8485
    %v8714 = vpack.c.b16 %v8492, %v8489
    %v8715 = vpack.c.b16 %v8493, %v8490
    %v8716 = vpack.c.b16 %v8494, %v8491
    %v8717 = vpack.c.b16 %v8498, %v8495
    %v8718 = vpack.c.b16 %v8499, %v8496
    %v8719 = vpack.c.b16 %v8500, %v8497
    %v8720 = vpack.c.b16 %v8504, %v8501
    %v8721 = vpack.c.b16 %v8505, %v8502
    %v8722 = vpack.c.b16 %v8506, %v8503
    %v8723 = vpack.c.b16 %v8510, %v8507
    %v8724 = vpack.c.b16 %v8511, %v8508
    %v8725 = vpack.c.b16 %v8512, %v8509
    %v8726 = vpack.c.b16 %v8516, %v8513
    %v8727 = vpack.c.b16 %v8517, %v8514
    %v8728 = vpack.c.b16 %v8518, %v8515
    %v8729 = vpack.c.b16 %v8522, %v8519
    %v8730 = vpack.c.b16 %v8523, %v8520
    %v8731 = vpack.c.b16 %v8524, %v8521
    %v8732 = vpack.c.b16 %v8528, %v8525
    %v8733 = vpack.c.b16 %v8529, %v8526
    %v8734 = vpack.c.b16 %v8530, %v8527
    %v8735 = vpack.c.b16 %v8534, %v8531
    %v8736 = vpack.c.b16 %v8535, %v8532
    %v8737 = vpack.c.b16 %v8536, %v8533
    %v8738 = vpack.c.b16 %v8540, %v8537
    %v8739 = vpack.c.b16 %v8541, %v8538
    %v8740 = vpack.c.b16 %v8542, %v8539
    %v8741 = vpack.c.b16 %v8546, %v8543
    %v8742 = vpack.c.b16 %v8547, %v8544
    %v8743 = vpack.c.b16 %v8548, %v8545
    %v8744 = vpack.c.b16 %v8552, %v8549
    %v8745 = vpack.c.b16 %v8553, %v8550
    %v8746 = vpack.c.b16 %v8554, %v8551
    %v8747 = vpack.c.b16 %v8558, %v8555
    %v8748 = vpack.c.b16 %v8559, %v8556
    %v8749 = vpack.c.b16 %v8560, %v8557
    %v8750 = vpack.c.b16 %v8564, %v8561
    %v8751 = vpack.c.b16 %v8565, %v8562
    %v8752 = vpack.c.b16 %v8566, %v8563
    %v8753 = vpack.c.b16 %v8570, %v8567
    %v8754 = vpack.c.b16 %v8571, %v8568
    %v8755 = vpack.c.b16 %v8572, %v8569
    %v8756 = vpack.c.b16 %v8576, %v8573
    %v8757 = vpack.c.b16 %v8577, %v8574
    %v8758 = vpack.c.b16 %v8578, %v8575
    %v8759 = vpack.c.b16 %v8582, %v8579
    %v8760 = vpack.c.b16 %v8583, %v8580
    %v8761 = vpack.c.b16 %v8584, %v8581
    %v8762 = vpack.c.b16 %v8588, %v8585
    %v8763 = vpack.c.b16 %v8589, %v8586
    %v8764 = vpack.c.b16 %v8590, %v8587
    %v8765 = vpack.c.b16 %v8594, %v8591
    %v8766 = vpack.c.b16 %v8595, %v8592
    %v8767 = vpack.c.b16 %v8596, %v8593
    %v8768 = vpack.c.b16 %v8600, %v8597
    %v8769 = vpack.c.b16 %v8601, %v8598
    %v8770 = vpack.c.b16 %v8602, %v8599
    %v8771 = vpack.c.b16 %v8606, %v8603
    %v8772 = vpack.c.b16 %v8607, %v8604
    %v8773 = vpack.c.b16 %v8608, %v8605
    %v8774 = vpack.c.b16 %v8612, %v8609
    %v8775 = vpack.c.b16 %v8613, %v8610
    %v8776 = vpack.c.b16 %v8614, %v8611
    %v8777 = vpack.c.b16 %v8618, %v8615
    %v8778 = vpack.c.b16 %v8619, %v8616
    %v8779 = vpack.c.b16 %v8620, %v8617
    %v8780 = vpack.c.b16 %v8624, %v8621
    %v8781 = vpack.c.b16 %v8625, %v8622
    %v8782 = vpack.c.b16 %v8626, %v8623
    %v8783 = vpack.c.b16 %v8630, %v8627
    %v8784 = vpack.c.b16 %v8631, %v8628
    %v8785 = vpack.c.b16 %v8632, %v8629
    %v8786 = vpack.c.b16 %v8636, %v8633
    %v8787 = vpack.c.b16 %v8637, %v8634
    %v8788 = vpack.c.b16 %v8638, %v8635
    %v8789 = vpack.c.b16 %v8642, %v8639
    %v8790 = vpack.c.b16 %v8643, %v8640
    %v8791 = vpack.c.b16 %v8644, %v8641
    %v8792 = vpack.c.b16 %v8648, %v8645
    %v8793 = vpack.c.b16 %v8649, %v8646
    %v8794 = vpack.c.b16 %v8650, %v8647
    %v8795 = vpack.c.b16 %v8654, %v8651
    %v8796 = vpack.c.b16 %v8655, %v8652
    %v8797 = vpack.c.b16 %v8656, %v8653
    %v8798 = vpack.c.b16 %v8660, %v8657
    %v8799 = vpack.c.b16 %v8661, %v8658
    %v8800 = vpack.c.b16 %v8662, %v8659
    %v8801 = vpack.c.b16 %v8666, %v8663
    %v8802 = vpack.c.b16 %v8667, %v8664
    %v8803 = vpack.c.b16 %v8668, %v8665
    %v8804 = vpack.c.b16 %v8672, %v8669
    %v8805 = vpack.c.b16 %v8673, %v8670
    %v8806 = vpack.c.b16 %v8674, %v8671
    %v8807 = vpack.c.b16 %v8678, %v8675
    %v8808 = vpack.c.b16 %v8679, %v8676
    %v8809 = vpack.c.b16 %v8680, %v8677
    %v8810 = vpack.c.b16 %v8684, %v8681
    %v8811 = vpack.c.b16 %v8685, %v8682
    %v8812 = vpack.c.b16 %v8686, %v8683
    %v8813 = vpack.c.b16 %v8690, %v8687
    %v8814 = vpack.c.b16 %v8691, %v8688
    %v8815 = vpack.c.b16 %v8692, %v8689
    %v8816 = vpack.c.b16 %v8696, %v8693
    %v8817 = vpack.c.b16 %v8697, %v8694
    %v8818 = vpack.c.b16 %v8698, %v8695
    %8939 = vmatprep.subr.bf16.mxu0 %v8700
    %8940 = vmatpush1.bf16.msra.mxu0 %v8699
    %8941 = vmatprep.subr.bf16.mxu0 %v8703
    %8942 = vmatpush1.bf16.msra.mxu0 %v8702
    %8943 = vmatprep.subr.bf16.mxu0 %v8706
    %8944 = vmatpush1.bf16.msra.mxu0 %v8705
    %8945 = vmatprep.subr.bf16.mxu0 %v8709
    %8946 = vmatpush1.bf16.msra.mxu0 %v8708
    %8947 = vmatprep.subr.bf16.mxu0 %v8712
    %8948 = vmatpush1.bf16.msra.mxu0 %v8711
    %8949 = vmatprep.subr.bf16.mxu0 %v8715
    %8950 = vmatpush1.bf16.msra.mxu0 %v8714
    %8951 = vmatprep.subr.bf16.mxu0 %v8718
    %8952 = vmatpush1.bf16.msra.mxu0 %v8717
    %8953 = vmatprep.subr.bf16.mxu0 %v8721
    %8954 = vmatpush1.bf16.msra.mxu0 %v8720
    %8955 = vmatprep.subr.bf16.mxu0 %v8724
    %8956 = vmatpush1.bf16.msra.mxu0 %v8723
    %8957 = vmatprep.subr.bf16.mxu0 %v8727
    %8958 = vmatpush1.bf16.msra.mxu0 %v8726
    %8959 = vmatprep.subr.bf16.mxu0 %v8730
    %8960 = vmatpush1.bf16.msra.mxu0 %v8729
    %8961 = vmatprep.subr.bf16.mxu0 %v8733
    %8962 = vmatpush1.bf16.msra.mxu0 %v8732
    %8963 = vmatprep.subr.bf16.mxu0 %v8736
    %8964 = vmatpush1.bf16.msra.mxu0 %v8735
    %8965 = vmatprep.subr.bf16.mxu0 %v8739
    %8966 = vmatpush1.bf16.msra.mxu0 %v8738
    %8967 = vmatprep.subr.bf16.mxu0 %v8742
    %8968 = vmatpush1.bf16.msra.mxu0 %v8741
    %8969 = vmatprep.subr.bf16.mxu0 %v8745
    %8970 = vmatpush1.bf16.msra.mxu0 %v8744
    %8971 = vmatprep.mubr.bf16.mxu0 %v8249
    %8972 = vmatmul.mubr.bf16.gmra.mrb[0].mxu0 %v8246
    %v8973 = vpop.f32.mrb[0].mxu0
    %v8974 = vadd.f32 0.0, %v8973
    %v8975 = vpop.f32.mrb[0].mxu0
    %v8976 = vadd.f32 0.0, %v8975
    %v8977 = vpop.f32.mrb[0].mxu0
    %v8978 = vadd.f32 0.0, %v8977
    %v8979 = vpop.f32.mrb[0].mxu0
    %v8980 = vadd.f32 0.0, %v8979
    %8981 = vmatprep.mubr.bf16.mxu0 %v8262
    %8982 = vmatmul.mubr.bf16.gmra.mrb[0].mxu0 %v8260
    %v8983 = vpop.f32.mrb[0].mxu0
    %v8984 = vadd.f32 0.0, %v8983
    %v8985 = vpop.f32.mrb[0].mxu0
    %v8986 = vadd.f32 0.0, %v8985
    %v8987 = vpop.f32.mrb[0].mxu0
    %v8988 = vadd.f32 0.0, %v8987
    %v8989 = vpop.f32.mrb[0].mxu0
    %v8990 = vadd.f32 0.0, %v8989
    %8991 = vmatprep.mubr.bf16.mxu0 %v8272
    %8992 = vmatmul.mubr.bf16.gmra.mrb[0].mxu0 %v8270
    %v8993 = vpop.f32.mrb[0].mxu0
    %v8994 = vadd.f32 0.0, %v8993
    %v8995 = vpop.f32.mrb[0].mxu0
    %v8996 = vadd.f32 0.0, %v8995
    %v8997 = vpop.f32.mrb[0].mxu0
    %v8998 = vadd.f32 0.0, %v8997
    %v8999 = vpop.f32.mrb[0].mxu0
    %v9000 = vadd.f32 0.0, %v8999
    %9001 = vmatprep.mubr.bf16.mxu0 %v8271
    %9002 = vmatmul.mubr.bf16.gmra.mrb[0].mxu0 %v8269
    %v9003 = vpop.f32.mrb[0].mxu0
    %v9004 = vadd.f32 0.0, %v9003
    %v9005 = vpop.f32.mrb[0].mxu0
    %v9006 = vadd.f32 0.0, %v9005
    %v9007 = vpop.f32.mrb[0].mxu0
    %v9008 = vpop.f32.mrb[0].mxu0
    %9009 = vdwg.mxu0
    %9010 = vmatprep.subr.bf16.mxu0 %v8748
    %9011 = vmatpush1.bf16.msra.mxu0 %v8747
    %9012 = vmatprep.subr.bf16.mxu0 %v8751
    %9013 = vmatpush1.bf16.msra.mxu0 %v8750
    %9014 = vmatprep.subr.bf16.mxu0 %v8754
    %9015 = vmatpush1.bf16.msra.mxu0 %v8753
    %9016 = vmatprep.subr.bf16.mxu0 %v8757
    %9017 = vmatpush1.bf16.msra.mxu0 %v8756
    %9018 = vmatprep.subr.bf16.mxu0 %v8760
    %9019 = vmatpush1.bf16.msra.mxu0 %v8759
    %9020 = vmatprep.subr.bf16.mxu0 %v8763
    %9021 = vmatpush1.bf16.msra.mxu0 %v8762
    %9022 = vmatprep.subr.bf16.mxu0 %v8766
    %9023 = vmatpush1.bf16.msra.mxu0 %v8765
    %9024 = vmatprep.subr.bf16.mxu0 %v8769
    %9025 = vmatpush1.bf16.msra.mxu0 %v8768
    %9026 = vmatprep.subr.bf16.mxu0 %v8772
    %9027 = vmatpush1.bf16.msra.mxu0 %v8771
    %9028 = vmatprep.subr.bf16.mxu0 %v8775
    %9029 = vmatpush1.bf16.msra.mxu0 %v8774
    %9030 = vmatprep.subr.bf16.mxu0 %v8778
    %9031 = vmatpush1.bf16.msra.mxu0 %v8777
    %9032 = vmatprep.subr.bf16.mxu0 %v8781
    %9033 = vmatpush1.bf16.msra.mxu0 %v8780
    %9034 = vmatprep.subr.bf16.mxu0 %v8784
    %9035 = vmatpush1.bf16.msra.mxu0 %v8783
    %9036 = vmatprep.subr.bf16.mxu0 %v8787
    %9037 = vmatpush1.bf16.msra.mxu0 %v8786
    %9038 = vmatprep.subr.bf16.mxu0 %v8790
    %9039 = vmatpush1.bf16.msra.mxu0 %v8789
    %9040 = vmatprep.subr.bf16.mxu0 %v8793
    %9041 = vmatpush1.bf16.msra.mxu0 %v8792
    %9042 = vmatprep.mubr.bf16.mxu0 %v8255
    %9043 = vmatmul.mubr.bf16.gmra.mrb[0].mxu0 %v8252
    %v9044 = vpop.f32.mrb[0].mxu0
    %v9045 = vadd.f32 %v8974, %v9044
    %v9046 = vpop.f32.mrb[0].mxu0
    %v9047 = vadd.f32 %v8976, %v9046
    %v9048 = vpop.f32.mrb[0].mxu0
    %v9049 = vadd.f32 %v8978, %v9048
    %v9050 = vpop.f32.mrb[0].mxu0
    %v9051 = vadd.f32 %v8980, %v9050
    %9052 = vmatprep.mubr.bf16.mxu0 %v8266
    %9053 = vmatmul.mubr.bf16.gmra.mrb[0].mxu0 %v8264
    %v9054 = vpop.f32.mrb[0].mxu0
    %v9055 = vadd.f32 %v8984, %v9054
    %v9056 = vpop.f32.mrb[0].mxu0
    %v9057 = vadd.f32 %v8986, %v9056
    %v9058 = vpop.f32.mrb[0].mxu0
    %v9059 = vadd.f32 %v8988, %v9058
    %v9060 = vpop.f32.mrb[0].mxu0
    %v9061 = vadd.f32 %v8990, %v9060
    %9062 = vmatprep.mubr.bf16.mxu0 %v8276
    %9063 = vmatmul.mubr.bf16.gmra.mrb[0].mxu0 %v8274
    %v9064 = vpop.f32.mrb[0].mxu0
    %v9065 = vadd.f32 %v8994, %v9064
    %v9066 = vpop.f32.mrb[0].mxu0
    %v9067 = vadd.f32 %v8996, %v9066
    %v9068 = vpop.f32.mrb[0].mxu0
    %v9069 = vadd.f32 %v8998, %v9068
    %v9070 = vpop.f32.mrb[0].mxu0
    %v9071 = vadd.f32 %v9000, %v9070
    %9072 = vmatprep.mubr.bf16.mxu0 %v8275
    %9073 = vmatmul.mubr.bf16.gmra.mrb[0].mxu0 %v8273
    %v9074 = vpop.f32.mrb[0].mxu0
    %v9075 = vadd.f32 %v9004, %v9074
    %v9076 = vpop.f32.mrb[0].mxu0
    %v9077 = vadd.f32 %v9006, %v9076
    %v9078 = vpop.f32.mrb[0].mxu0
    %v9079 = vpop.f32.mrb[0].mxu0
    %9080 = vdwg.mxu0
    %9081 = vmatprep.subr.bf16.mxu0 %v8796
    %9082 = vmatpush1.bf16.msra.mxu0 %v8795
    %9083 = vmatprep.subr.bf16.mxu0 %v8799
    %9084 = vmatpush1.bf16.msra.mxu0 %v8798
    %9085 = vmatprep.subr.bf16.mxu0 %v8802
    %9086 = vmatpush1.bf16.msra.mxu0 %v8801
    %9087 = vmatprep.subr.bf16.mxu0 %v8805
    %9088 = vmatpush1.bf16.msra.mxu0 %v8804
    %9089 = vmatprep.subr.bf16.mxu0 %v8808
    %9090 = vmatpush1.bf16.msra.mxu0 %v8807
    %9091 = vmatprep.subr.bf16.mxu0 %v8811
    %9092 = vmatpush1.bf16.msra.mxu0 %v8810
    %9093 = vmatprep.subr.bf16.mxu0 %v8814
    %9094 = vmatpush1.bf16.msra.mxu0 %v8813
    %9095 = vmatprep.subr.bf16.mxu0 %v8817
    %9096 = vmatpush1.bf16.msra.mxu0 %v8816
    %9097 = vmatprep.subr.bf16.mxu0 0
    %9098 = vmatpush1.bf16.msra.mxu0 0
    %9099 = vmatprep.subr.bf16.mxu0 0
    %9100 = vmatpush1.bf16.msra.mxu0 0
    %9101 = vmatprep.subr.bf16.mxu0 0
    %9102 = vmatpush1.bf16.msra.mxu0 0
    %9103 = vmatprep.subr.bf16.mxu0 0
    %9104 = vmatpush1.bf16.msra.mxu0 0
    %9105 = vmatprep.subr.bf16.mxu0 0
    %9106 = vmatpush1.bf16.msra.mxu0 0
    %9107 = vmatprep.subr.bf16.mxu0 0
    %9108 = vmatpush1.bf16.msra.mxu0 0
    %9109 = vmatprep.subr.bf16.mxu0 0
    %9110 = vmatpush1.bf16.msra.mxu0 0
    %9111 = vmatprep.subr.bf16.mxu0 0
    %9112 = vmatpush1.bf16.msra.mxu0 0
    %9113 = vmatprep.mubr.bf16.mxu0 0
    %9114 = vmatmul.mubr.bf16.gmra.mrb[0].mxu0 %v8258
    %v9115 = vpop.f32.mrb[0].mxu0
    %v9116 = vadd.f32 %v9045, %v9115
    %v9117 = vpop.f32.mrb[0].mxu0
    %v9118 = vadd.f32 %v9047, %v9117
    %v9119 = vpop.f32.mrb[0].mxu0
    %v9120 = vadd.f32 %v9049, %v9119
    %v9121 = vpop.f32.mrb[0].mxu0
    %v9122 = vadd.f32 %v9051, %v9121
    %9123 = vmatprep.mubr.bf16.mxu0 0
    %9124 = vmatmul.mubr.bf16.gmra.mrb[0].mxu0 %v8268
    %v9125 = vpop.f32.mrb[0].mxu0
    %v9126 = vadd.f32 %v9055, %v9125
    %v9127 = vpop.f32.mrb[0].mxu0
    %v9128 = vadd.f32 %v9057, %v9127
    %v9129 = vpop.f32.mrb[0].mxu0
    %v9130 = vadd.f32 %v9059, %v9129
    %v9131 = vpop.f32.mrb[0].mxu0
    %v9132 = vadd.f32 %v9061, %v9131
    %9133 = vmatprep.mubr.bf16.mxu0 0
    %9134 = vmatmul.mubr.bf16.gmra.mrb[0].mxu0 %v8278
    %v9135 = vpop.f32.mrb[0].mxu0
    %v9136 = vadd.f32 %v9065, %v9135
    %v9137 = vpop.f32.mrb[0].mxu0
    %v9138 = vadd.f32 %v9067, %v9137
    %v9139 = vpop.f32.mrb[0].mxu0
    %v9140 = vadd.f32 %v9069, %v9139
    %v9141 = vpop.f32.mrb[0].mxu0
    %v9142 = vadd.f32 %v9071, %v9141
    %9143 = vmatprep.mubr.bf16.mxu0 0
    %9144 = vmatmul.mubr.bf16.gmra.mrb[0].mxu0 %v8277
    %v9145 = vpop.f32.mrb[0].mxu0
    %v9146 = vadd.f32 %v9075, %v9145
    %v9147 = vpop.f32.mrb[0].mxu0
    %v9148 = vadd.f32 %v9077, %v9147
    %v9149 = vpop.f32.mrb[0].mxu0
    %v9150 = vpop.f32.mrb[0].mxu0
    %9151 = vdwg.mxu0
    %9152 = vmatprep.subr.bf16.mxu0 0
    %9153 = vmatpush1.bf16.msra.mxu0 %v8701
    %9154 = vmatprep.subr.bf16.mxu0 0
    %9155 = vmatpush1.bf16.msra.mxu0 %v8704
    %9156 = vmatprep.subr.bf16.mxu0 0
    %9157 = vmatpush1.bf16.msra.mxu0 %v8707
    %9158 = vmatprep.subr.bf16.mxu0 0
    %9159 = vmatpush1.bf16.msra.mxu0 %v8710
    %9160 = vmatprep.subr.bf16.mxu0 0
    %9161 = vmatpush1.bf16.msra.mxu0 %v8713
    %9162 = vmatprep.subr.bf16.mxu0 0
    %9163 = vmatpush1.bf16.msra.mxu0 %v8716
    %9164 = vmatprep.subr.bf16.mxu0 0
    %9165 = vmatpush1.bf16.msra.mxu0 %v8719
    %9166 = vmatprep.subr.bf16.mxu0 0
    %9167 = vmatpush1.bf16.msra.mxu0 %v8722
    %9168 = vmatprep.subr.bf16.mxu0 0
    %9169 = vmatpush1.bf16.msra.mxu0 %v8725
    %9170 = vmatprep.subr.bf16.mxu0 0
    %9171 = vmatpush1.bf16.msra.mxu0 %v8728
    %9172 = vmatprep.subr.bf16.mxu0 0
    %9173 = vmatpush1.bf16.msra.mxu0 %v8731
    %9174 = vmatprep.subr.bf16.mxu0 0
    %9175 = vmatpush1.bf16.msra.mxu0 %v8734
    %9176 = vmatprep.subr.bf16.mxu0 0
    %9177 = vmatpush1.bf16.msra.mxu0 %v8737
    %9178 = vmatprep.subr.bf16.mxu0 0
    %9179 = vmatpush1.bf16.msra.mxu0 %v8740
    %9180 = vmatprep.subr.bf16.mxu0 0
    %9181 = vmatpush1.bf16.msra.mxu0 %v8743
    %9182 = vmatprep.subr.bf16.mxu0 0
    %9183 = vmatpush1.bf16.msra.mxu0 %v8746
    %9184 = vmatprep.mubr.bf16.mxu0 %v8249
    %9185 = vmatmul.mubr.bf16.gmra.mrb[0].mxu0 %v8246
    %v9186 = vpop.f32.mrb[0].mxu0
    %v9187 = vadd.f32 0.0, %v9186
    %v9188 = vpop.f32.mrb[0].mxu0
    %v9189 = vpop.f32.mrb[0].mxu0
    %v9190 = vadd.f32 0.0, %v9189
    %v9191 = vpop.f32.mrb[0].mxu0
    %9192 = vmatprep.mubr.bf16.mxu0 %v8262
    %9193 = vmatmul.mubr.bf16.gmra.mrb[0].mxu0 %v8260
    %v9194 = vpop.f32.mrb[0].mxu0
    %v9195 = vadd.f32 0.0, %v9194
    %v9196 = vpop.f32.mrb[0].mxu0
    %v9197 = vpop.f32.mrb[0].mxu0
    %v9198 = vadd.f32 0.0, %v9197
    %v9199 = vpop.f32.mrb[0].mxu0
    %9200 = vmatprep.mubr.bf16.mxu0 %v8272
    %9201 = vmatmul.mubr.bf16.gmra.mrb[0].mxu0 %v8270
    %v9202 = vpop.f32.mrb[0].mxu0
    %v9203 = vadd.f32 0.0, %v9202
    %v9204 = vpop.f32.mrb[0].mxu0
    %v9205 = vpop.f32.mrb[0].mxu0
    %v9206 = vadd.f32 0.0, %v9205
    %v9207 = vpop.f32.mrb[0].mxu0
    %9208 = vmatprep.mubr.bf16.mxu0 %v8271
    %9209 = vmatmul.mubr.bf16.gmra.mrb[0].mxu0 %v8269
    %v9210 = vpop.f32.mrb[0].mxu0
    %v9211 = vadd.f32 0.0, %v9210
    %v9212 = vpop.f32.mrb[0].mxu0
    %v9213 = vpop.f32.mrb[0].mxu0
    %v9214 = vpop.f32.mrb[0].mxu0
    %9215 = vdwg.mxu0
    %9216 = vmatprep.subr.bf16.mxu0 0
    %9217 = vmatpush1.bf16.msra.mxu0 %v8749
    %9218 = vmatprep.subr.bf16.mxu0 0
    %9219 = vmatpush1.bf16.msra.mxu0 %v8752
    %9220 = vmatprep.subr.bf16.mxu0 0
    %9221 = vmatpush1.bf16.msra.mxu0 %v8755
    %9222 = vmatprep.subr.bf16.mxu0 0
    %9223 = vmatpush1.bf16.msra.mxu0 %v8758
    %9224 = vmatprep.subr.bf16.mxu0 0
    %9225 = vmatpush1.bf16.msra.mxu0 %v8761
    %9226 = vmatprep.subr.bf16.mxu0 0
    %9227 = vmatpush1.bf16.msra.mxu0 %v8764
    %9228 = vmatprep.subr.bf16.mxu0 0
    %9229 = vmatpush1.bf16.msra.mxu0 %v8767
    %9230 = vmatprep.subr.bf16.mxu0 0
    %9231 = vmatpush1.bf16.msra.mxu0 %v8770
    %9232 = vmatprep.subr.bf16.mxu0 0
    %9233 = vmatpush1.bf16.msra.mxu0 %v8773
    %9234 = vmatprep.subr.bf16.mxu0 0
    %9235 = vmatpush1.bf16.msra.mxu0 %v8776
    %9236 = vmatprep.subr.bf16.mxu0 0
    %9237 = vmatpush1.bf16.msra.mxu0 %v8779
    %9238 = vmatprep.subr.bf16.mxu0 0
    %9239 = vmatpush1.bf16.msra.mxu0 %v8782
    %9240 = vmatprep.subr.bf16.mxu0 0
    %9241 = vmatpush1.bf16.msra.mxu0 %v8785
    %9242 = vmatprep.subr.bf16.mxu0 0
    %9243 = vmatpush1.bf16.msra.mxu0 %v8788
    %9244 = vmatprep.subr.bf16.mxu0 0
    %9245 = vmatpush1.bf16.msra.mxu0 %v8791
    %9246 = vmatprep.subr.bf16.mxu0 0
    %9247 = vmatpush1.bf16.msra.mxu0 %v8794
    %9248 = vmatprep.mubr.bf16.mxu0 %v8255
    %9249 = vmatmul.mubr.bf16.gmra.mrb[0].mxu0 %v8252
    %v9250 = vpop.f32.mrb[0].mxu0
    %v9251 = vadd.f32 %v9187, %v9250
    %v9252 = vpop.f32.mrb[0].mxu0
    %v9253 = vpop.f32.mrb[0].mxu0
    %v9254 = vadd.f32 %v9190, %v9253
    %v9255 = vpop.f32.mrb[0].mxu0
    %9256 = vmatprep.mubr.bf16.mxu0 %v8266
    %9257 = vmatmul.mubr.bf16.gmra.mrb[0].mxu0 %v8264
    %v9258 = vpop.f32.mrb[0].mxu0
    %v9259 = vadd.f32 %v9195, %v9258
    %v9260 = vpop.f32.mrb[0].mxu0
    %v9261 = vpop.f32.mrb[0].mxu0
    %v9262 = vadd.f32 %v9198, %v9261
    %v9263 = vpop.f32.mrb[0].mxu0
    %9264 = vmatprep.mubr.bf16.mxu0 %v8276
    %9265 = vmatmul.mubr.bf16.gmra.mrb[0].mxu0 %v8274
    %v9266 = vpop.f32.mrb[0].mxu0
    %v9267 = vadd.f32 %v9203, %v9266
    %v9268 = vpop.f32.mrb[0].mxu0
    %v9269 = vpop.f32.mrb[0].mxu0
    %v9270 = vadd.f32 %v9206, %v9269
    %v9271 = vpop.f32.mrb[0].mxu0
    %9272 = vmatprep.mubr.bf16.mxu0 %v8275
    %9273 = vmatmul.mubr.bf16.gmra.mrb[0].mxu0 %v8273
    %v9274 = vpop.f32.mrb[0].mxu0
    %v9275 = vadd.f32 %v9211, %v9274
    %v9276 = vpop.f32.mrb[0].mxu0
    %v9277 = vpop.f32.mrb[0].mxu0
    %v9278 = vpop.f32.mrb[0].mxu0
    %9279 = vdwg.mxu0
    %9280 = vmatprep.subr.bf16.mxu0 0
    %9281 = vmatpush1.bf16.msra.mxu0 %v8797
    %9282 = vmatprep.subr.bf16.mxu0 0
    %9283 = vmatpush1.bf16.msra.mxu0 %v8800
    %9284 = vmatprep.subr.bf16.mxu0 0
    %9285 = vmatpush1.bf16.msra.mxu0 %v8803
    %9286 = vmatprep.subr.bf16.mxu0 0
    %9287 = vmatpush1.bf16.msra.mxu0 %v8806
    %9288 = vmatprep.subr.bf16.mxu0 0
    %9289 = vmatpush1.bf16.msra.mxu0 %v8809
    %9290 = vmatprep.subr.bf16.mxu0 0
    %9291 = vmatpush1.bf16.msra.mxu0 %v8812
    %9292 = vmatprep.subr.bf16.mxu0 0
    %9293 = vmatpush1.bf16.msra.mxu0 %v8815
    %9294 = vmatprep.subr.bf16.mxu0 0
    %9295 = vmatpush1.bf16.msra.mxu0 %v8818
    %9296 = vmatprep.subr.bf16.mxu0 0
    %9297 = vmatpush1.bf16.msra.mxu0 0
    %9298 = vmatprep.subr.bf16.mxu0 0
    %9299 = vmatpush1.bf16.msra.mxu0 0
    %9300 = vmatprep.subr.bf16.mxu0 0
    %9301 = vmatpush1.bf16.msra.mxu0 0
    %9302 = vmatprep.subr.bf16.mxu0 0
    %9303 = vmatpush1.bf16.msra.mxu0 0
    %9304 = vmatprep.subr.bf16.mxu0 0
    %9305 = vmatpush1.bf16.msra.mxu0 0
    %9306 = vmatprep.subr.bf16.mxu0 0
    %9307 = vmatpush1.bf16.msra.mxu0 0
    %9308 = vmatprep.subr.bf16.mxu0 0
    %9309 = vmatpush1.bf16.msra.mxu0 0
    %9310 = vmatprep.subr.bf16.mxu0 0
    %9311 = vmatpush1.bf16.msra.mxu0 0
    %9312 = vmatprep.mubr.bf16.mxu0 0
    %9313 = vmatmul.mubr.bf16.gmra.mrb[0].mxu0 %v8258
    %v9314 = vpop.f32.mrb[0].mxu0
    %v9315 = vadd.f32 %v9251, %v9314
    %v9316 = vpop.f32.mrb[0].mxu0
    %v9317 = vpop.f32.mrb[0].mxu0
    %v9318 = vadd.f32 %v9254, %v9317
    %v9319 = vpop.f32.mrb[0].mxu0
    %9320 = vmatprep.mubr.bf16.mxu0 0
    %9321 = vmatmul.mubr.bf16.gmra.mrb[0].mxu0 %v8268
    %v9322 = vpop.f32.mrb[0].mxu0
    %v9323 = vadd.f32 %v9259, %v9322
    %v9324 = vpop.f32.mrb[0].mxu0
    %v9325 = vpop.f32.mrb[0].mxu0
    %v9326 = vadd.f32 %v9262, %v9325
    %v9327 = vpop.f32.mrb[0].mxu0
    %9328 = vmatprep.mubr.bf16.mxu0 0
    %9329 = vmatmul.mubr.bf16.gmra.mrb[0].mxu0 %v8278
    %v9330 = vpop.f32.mrb[0].mxu0
    %v9331 = vadd.f32 %v9267, %v9330
    %v9332 = vpop.f32.mrb[0].mxu0
    %v9333 = vpop.f32.mrb[0].mxu0
    %v9334 = vadd.f32 %v9270, %v9333
    %v9335 = vpop.f32.mrb[0].mxu0
    %9336 = vmatprep.mubr.bf16.mxu0 0
    %9337 = vmatmul.mubr.bf16.gmra.mrb[0].mxu0 %v8277
    %v9338 = vpop.f32.mrb[0].mxu0
    %v9339 = vadd.f32 %v9275, %v9338
    %v9340 = vpop.f32.mrb[0].mxu0
    %v9341 = vpop.f32.mrb[0].mxu0
    %v9342 = vpop.f32.mrb[0].mxu0
    %9343 = vdwg.mxu0
    %v9344 = vadd.f32 %v7839, %v9116
    %v9345 = vadd.f32 %v7841, %v9118
    %v9346 = vadd.f32 %v8038, %v9315
    %v9347 = vadd.f32 %v7843, %v9120
    %v9348 = vadd.f32 %v7845, %v9122
    %v9349 = vadd.f32 %v8041, %v9318
    %v9350 = vadd.f32 %v7849, %v9126
    %v9351 = vadd.f32 %v7851, %v9128
    %v9352 = vadd.f32 %v8046, %v9323
    %v9353 = vadd.f32 %v7853, %v9130
    %v9354 = vadd.f32 %v7855, %v9132
    %v9355 = vadd.f32 %v8049, %v9326
    %v9356 = vadd.f32 %v7859, %v9136
    %v9357 = vadd.f32 %v7861, %v9138
    %v9358 = vadd.f32 %v8054, %v9331
    %v9359 = vadd.f32 %v7863, %v9140
    %v9360 = vadd.f32 %v7865, %v9142
    %v9361 = vadd.f32 %v8057, %v9334
    %v9362 = vadd.f32 %v7869, %v9146
    %v9363 = vadd.f32 %v7871, %v9148
    %v9364 = vadd.f32 %v8062, %v9339
    %v9365 = vld [vmem:[%s6] sm:$0x7]
    %v9367 = vlaneseq
    %v9368 = vshrl.u32 %v9367, 7
    %v9369 = vsub.s32 0, %v9368
    %v9370 = vrot.slane %v9365, %v9369
    %v9371 = vlaneseq
    %v9372 = vshrl.u32 %v9371, 7
    %v9373 = vsub.s32 1, %v9372
    %v9374 = vrot.slane %v9365, %v9373
    %v9375 = vlaneseq
    %v9376 = vshrl.u32 %v9375, 7
    %v9377 = vsub.s32 2, %v9376
    %v9378 = vrot.slane %v9365, %v9377
    %v9382 = vadd.f32 %v9344, %v9370
    %v9383 = vadd.f32 %v9345, %v9374
    %v9384 = vadd.f32 %v9346, %v9378
    %v9385 = vadd.f32 %v9347, %v9370
    %v9386 = vadd.f32 %v9348, %v9374
    %v9387 = vadd.f32 %v9349, %v9378
    %v9388 = vadd.f32 %v9350, %v9370
    %v9389 = vadd.f32 %v9351, %v9374
    %v9390 = vadd.f32 %v9352, %v9378
    %v9391 = vadd.f32 %v9353, %v9370
    %v9392 = vadd.f32 %v9354, %v9374
    %v9393 = vadd.f32 %v9355, %v9378
    %v9394 = vadd.f32 %v9356, %v9370
    %v9395 = vadd.f32 %v9357, %v9374
    %v9396 = vadd.f32 %v9358, %v9378
    %v9397 = vadd.f32 %v9359, %v9370
    %v9398 = vadd.f32 %v9360, %v9374
    %v9399 = vadd.f32 %v9361, %v9378
    %v9400 = vadd.f32 %v9362, %v9370
    %v9401 = vadd.f32 %v9363, %v9374
    %v9402 = vadd.f32 %v9364, %v9378
    %vm9403 = vcmp.gt.f32.partialorder %v9382, 0.0
    %vm9404 = vcmp.gt.f32.partialorder %v9383, 0.0
    %vm9405 = vcmp.gt.f32.partialorder %v9384, 0.0
    %vm9406 = vcmp.gt.f32.partialorder %v9385, 0.0
    %vm9407 = vcmp.gt.f32.partialorder %v9386, 0.0
    %vm9408 = vcmp.gt.f32.partialorder %v9387, 0.0
    %vm9409 = vcmp.gt.f32.partialorder %v9388, 0.0
    %vm9410 = vcmp.gt.f32.partialorder %v9389, 0.0
    %vm9411 = vcmp.gt.f32.partialorder %v9390, 0.0
    %vm9412 = vcmp.gt.f32.partialorder %v9391, 0.0
    %vm9413 = vcmp.gt.f32.partialorder %v9392, 0.0
    %vm9414 = vcmp.gt.f32.partialorder %v9393, 0.0
    %vm9415 = vcmp.gt.f32.partialorder %v9394, 0.0
    %vm9416 = vcmp.gt.f32.partialorder %v9395, 0.0
    %vm9417 = vcmp.gt.f32.partialorder %v9396, 0.0
    %vm9418 = vcmp.gt.f32.partialorder %v9397, 0.0
    %vm9419 = vcmp.gt.f32.partialorder %v9398, 0.0
    %vm9420 = vcmp.gt.f32.partialorder %v9399, 0.0
    %vm9421 = vcmp.gt.f32.partialorder %v9400, 0.0
    %vm9422 = vcmp.gt.f32.partialorder %v9401, 0.0
    %vm9423 = vcmp.gt.f32.partialorder %v9402, 0.0
    %v9424 = vmul.f32 %v9382, 0.01
    %v9425 = vmul.f32 %v9383, 0.01
    %v9426 = vmul.f32 %v9384, 0.01
    %v9427 = vmul.f32 %v9385, 0.01
    %v9428 = vmul.f32 %v9386, 0.01
    %v9429 = vmul.f32 %v9387, 0.01
    %v9430 = vmul.f32 %v9388, 0.01
    %v9431 = vmul.f32 %v9389, 0.01
    %v9432 = vmul.f32 %v9390, 0.01
    %v9433 = vmul.f32 %v9391, 0.01
    %v9434 = vmul.f32 %v9392, 0.01
    %v9435 = vmul.f32 %v9393, 0.01
    %v9436 = vmul.f32 %v9394, 0.01
    %v9437 = vmul.f32 %v9395, 0.01
    %v9438 = vmul.f32 %v9396, 0.01
    %v9439 = vmul.f32 %v9397, 0.01
    %v9440 = vmul.f32 %v9398, 0.01
    %v9441 = vmul.f32 %v9399, 0.01
    %v9442 = vmul.f32 %v9400, 0.01
    %v9443 = vmul.f32 %v9401, 0.01
    %v9444 = vmul.f32 %v9402, 0.01
    %v9445 = vsel %vm9403, %v9382, %v9424
    %v9446 = vsel %vm9404, %v9383, %v9425
    %v9447 = vsel %vm9405, %v9384, %v9426
    %v9448 = vsel %vm9406, %v9385, %v9427
    %v9449 = vsel %vm9407, %v9386, %v9428
    %v9450 = vsel %vm9408, %v9387, %v9429
    %v9451 = vsel %vm9409, %v9388, %v9430
    %v9452 = vsel %vm9410, %v9389, %v9431
    %v9453 = vsel %vm9411, %v9390, %v9432
    %v9454 = vsel %vm9412, %v9391, %v9433
    %v9455 = vsel %vm9413, %v9392, %v9434
    %v9456 = vsel %vm9414, %v9393, %v9435
    %v9457 = vsel %vm9415, %v9394, %v9436
    %v9458 = vsel %vm9416, %v9395, %v9437
    %v9459 = vsel %vm9417, %v9396, %v9438
    %v9460 = vsel %vm9418, %v9397, %v9439
    %v9461 = vsel %vm9419, %v9398, %v9440
    %v9462 = vsel %vm9420, %v9399, %v9441
    %v9463 = vsel %vm9421, %v9400, %v9442
    %v9464 = vsel %vm9422, %v9401, %v9443
    %v9465 = vsel %vm9423, %v9402, %v9444
    %v9466 = vpack.c.bf16 %v9448, %v9445
    %v9467 = vpack.c.bf16 %v9449, %v9446
    %v9468 = vpack.c.bf16 %v9450, %v9447
    %v9469 = vpack.c.bf16 %v9454, %v9451
    %v9470 = vpack.c.bf16 %v9455, %v9452
    %v9471 = vpack.c.bf16 %v9456, %v9453
    %v9472 = vpack.c.bf16 %v9460, %v9457
    %v9473 = vpack.c.bf16 %v9461, %v9458
    %v9474 = vpack.c.bf16 %v9462, %v9459
    %v9475 = vpack.c.bf16 %v9463, %v9463
    %v9476 = vpack.c.bf16 %v9464, %v9464
    %v9477 = vpack.c.bf16 %v9465, %v9465
    %v9478 = vld [vmem:[%s11] sm:$0xf]
    %vm9479 = vcmask 424960
    %v9481 = vsel %vm9479, %v9478, 0
    %vm9483 = vcmask 1041408
    %v9485 = vsel %vm9483, %v9475, 0
    %v9488 = vsel %vm9483, %v9476, 0
    %v9491 = vsel %vm9483, %v9477, 0
    %9493 = vmatprep.subr.bf16.mxu0 %v9467
    %9494 = vmatpush1.bf16.msra.mxu0 %v9466
    %9495 = vmatprep.subr.bf16.mxu0 %v9470
    %9496 = vmatpush1.bf16.msra.mxu0 %v9469
    %9497 = vmatprep.subr.bf16.mxu0 %v9473
    %9498 = vmatpush1.bf16.msra.mxu0 %v9472
    %9499 = vmatprep.subr.bf16.mxu0 %v9488
    %9500 = vmatpush1.bf16.msra.mxu0 %v9485
    %9501 = vmatprep.subr.bf16.mxu0 0
    %9502 = vmatpush1.bf16.msra.mxu0 0
    %9503 = vmatprep.subr.bf16.mxu0 0
    %9504 = vmatpush1.bf16.msra.mxu0 0
    %9505 = vmatprep.subr.bf16.mxu0 0
    %9506 = vmatpush1.bf16.msra.mxu0 0
    %9507 = vmatprep.subr.bf16.mxu0 0
    %9508 = vmatpush1.bf16.msra.mxu0 0
    %9509 = vmatprep.subr.bf16.mxu0 0
    %9510 = vmatpush1.bf16.msra.mxu0 0
    %9511 = vmatprep.subr.bf16.mxu0 0
    %9512 = vmatpush1.bf16.msra.mxu0 0
    %9513 = vmatprep.subr.bf16.mxu0 0
    %9514 = vmatpush1.bf16.msra.mxu0 0
    %9515 = vmatprep.subr.bf16.mxu0 0
    %9516 = vmatpush1.bf16.msra.mxu0 0
    %9517 = vmatprep.subr.bf16.mxu0 0
    %9518 = vmatpush1.bf16.msra.mxu0 0
    %9519 = vmatprep.subr.bf16.mxu0 0
    %9520 = vmatpush1.bf16.msra.mxu0 0
    %9521 = vmatprep.subr.bf16.mxu0 0
    %9522 = vmatpush1.bf16.msra.mxu0 0
    %9523 = vmatprep.subr.bf16.mxu0 0
    %9524 = vmatpush1.bf16.msra.mxu0 0
    %9525 = vmatprep.mubr.bf16.mxu0 0
    %9526 = vmatmul.mubr.bf16.gmra.mrb[0].mxu0 %v9481
    %v9527 = vpop.f32.mrb[0].mxu0
    %v9528 = vadd.f32 0.0, %v9527
    %v9529 = vpop.f32.mrb[0].mxu0
    %v9530 = vadd.f32 0.0, %v9529
    %v9531 = vpop.f32.mrb[0].mxu0
    %v9532 = vpop.f32.mrb[0].mxu0
    %9533 = vdwg.mxu0
    %9534 = vmatprep.subr.bf16.mxu0 0
    %9535 = vmatpush1.bf16.msra.mxu0 %v9468
    %9536 = vmatprep.subr.bf16.mxu0 0
    %9537 = vmatpush1.bf16.msra.mxu0 %v9471
    %9538 = vmatprep.subr.bf16.mxu0 0
    %9539 = vmatpush1.bf16.msra.mxu0 %v9474
    %9540 = vmatprep.subr.bf16.mxu0 0
    %9541 = vmatpush1.bf16.msra.mxu0 %v9491
    %9542 = vmatprep.subr.bf16.mxu0 0
    %9543 = vmatpush1.bf16.msra.mxu0 0
    %9544 = vmatprep.subr.bf16.mxu0 0
    %9545 = vmatpush1.bf16.msra.mxu0 0
    %9546 = vmatprep.subr.bf16.mxu0 0
    %9547 = vmatpush1.bf16.msra.mxu0 0
    %9548 = vmatprep.subr.bf16.mxu0 0
    %9549 = vmatpush1.bf16.msra.mxu0 0
    %9550 = vmatprep.subr.bf16.mxu0 0
    %9551 = vmatpush1.bf16.msra.mxu0 0
    %9552 = vmatprep.subr.bf16.mxu0 0
    %9553 = vmatpush1.bf16.msra.mxu0 0
    %9554 = vmatprep.subr.bf16.mxu0 0
    %9555 = vmatpush1.bf16.msra.mxu0 0
    %9556 = vmatprep.subr.bf16.mxu0 0
    %9557 = vmatpush1.bf16.msra.mxu0 0
    %9558 = vmatprep.subr.bf16.mxu0 0
    %9559 = vmatpush1.bf16.msra.mxu0 0
    %9560 = vmatprep.subr.bf16.mxu0 0
    %9561 = vmatpush1.bf16.msra.mxu0 0
    %9562 = vmatprep.subr.bf16.mxu0 0
    %9563 = vmatpush1.bf16.msra.mxu0 0
    %9564 = vmatprep.subr.bf16.mxu0 0
    %9565 = vmatpush1.bf16.msra.mxu0 0
    %9566 = vmatprep.mubr.bf16.mxu0 0
    %9567 = vmatmul.mubr.bf16.gmra.mrb[0].mxu0 %v9481
    %v9568 = vpop.f32.mrb[0].mxu0
    %v9569 = vadd.f32 0.0, %v9568
    %v9570 = vpop.f32.mrb[0].mxu0
    %v9571 = vpop.f32.mrb[0].mxu0
    %v9572 = vpop.f32.mrb[0].mxu0
    %9573 = vdwg.mxu0
    %v9574 = vpack.c.bf16 %v9528, %v9528
    %v9575 = vpack.c.bf16 %v9530, %v9530
    %v9576 = vpack.c.bf16 %v9569, %v9569
    %v9577 = vld [vmem:[%s7] sm:$0xff]
    %v9578 = vld [vmem:[%s7 + $0x8] sm:$0xf]
    %v9579 = vld [vmem:[%s7 + $0xc] sm:$0xff]
    %v9580 = vld [vmem:[%s7 + $0x14] sm:$0xf]
    %v9581 = vld [vmem:[%s7 + $0x18] sm:$0xff]
    %v9582 = vld [vmem:[%s7 + $0x20] sm:$0xf]
    %v9583 = vld [vmem:[%s7 + $0x24] sm:$0xff]
    %v9584 = vld [vmem:[%s7 + $0x2c] sm:$0xf]
    %v9585 = vld [vmem:[%s7 + $0x30] sm:$0xff]
    %v9586 = vld [vmem:[%s7 + $0x38] sm:$0xf]
    %v9587 = vld [vmem:[%s7 + $0x3c] sm:$0xff]
    %v9588 = vld [vmem:[%s7 + $0x44] sm:$0xf]
    %v9589 = vld [vmem:[%s7 + $0x48] sm:$0xff]
    %v9590 = vld [vmem:[%s7 + $0x50] sm:$0xf]
    %v9591 = vld [vmem:[%s7 + $0x54] sm:$0xff]
    %v9592 = vld [vmem:[%s7 + $0x5c] sm:$0xf]
    %v9593 = vld [vmem:[%s7 + $0x60] sm:$0xff]
    %v9594 = vld [vmem:[%s7 + $0x68] sm:$0xf]
    %v9595 = vld [vmem:[%s7 + $0x6c] sm:$0xff]
    %v9596 = vld [vmem:[%s7 + $0x74] sm:$0xf]
    %v9597 = vld [vmem:[%s7 + $0x78] sm:$0xff]
    %v9598 = vld [vmem:[%s7 + $0x80] sm:$0xf]
    %v9599 = vld [vmem:[%s7 + $0x84] sm:$0xff]
    %v9600 = vld [vmem:[%s7 + $0x8c] sm:$0xf]
    %v9601 = vld [vmem:[%s7 + $0x90] sm:$0xff]
    %v9602 = vld [vmem:[%s7 + $0x98] sm:$0xf]
    %v9603 = vld [vmem:[%s7 + $0x9c] sm:$0xff]
    %v9604 = vld [vmem:[%s7 + $0xa4] sm:$0xf]
    %v9605 = vld [vmem:[%s7 + $0xa8] sm:$0xff]
    %v9606 = vld [vmem:[%s7 + $0xb0] sm:$0xf]
    %v9607 = vld [vmem:[%s7 + $0xb4] sm:$0xff]
    %v9608 = vld [vmem:[%s7 + $0xbc] sm:$0xf]
    %v9609 = vld [vmem:[%s7 + $0xc0] sm:$0xff]
    %v9610 = vld [vmem:[%s7 + $0xc8] sm:$0xf]
    %v9611 = vld [vmem:[%s7 + $0xcc] sm:$0xff]
    %v9612 = vld [vmem:[%s7 + $0xd4] sm:$0xf]
    %v9613 = vld [vmem:[%s7 + $0xd8] sm:$0xff]
    %v9614 = vld [vmem:[%s7 + $0xe0] sm:$0xf]
    %v9615 = vld [vmem:[%s7 + $0xe4] sm:$0xff]
    %v9616 = vld [vmem:[%s7 + $0xec] sm:$0xf]
    %v9617 = vld [vmem:[%s7 + $0xf0] sm:$0xff]
    %v9618 = vld [vmem:[%s7 + $0xf8] sm:$0xf]
    %v9619 = vld [vmem:[%s7 + $0xfc] sm:$0xff]
    %v9620 = vld [vmem:[%s7 + $0x104] sm:$0xf]
    %v9621 = vld [vmem:[%s7 + $0x108] sm:$0xff]
    %v9622 = vld [vmem:[%s7 + $0x110] sm:$0xf]
    %v9623 = vld [vmem:[%s7 + $0x114] sm:$0xff]
    %v9624 = vld [vmem:[%s7 + $0x11c] sm:$0xf]
    %v9625 = vld [vmem:[%s7 + $0x120] sm:$0xff]
    %v9626 = vld [vmem:[%s7 + $0x128] sm:$0xf]
    %v9627 = vld [vmem:[%s7 + $0x12c] sm:$0xff]
    %v9628 = vld [vmem:[%s7 + $0x134] sm:$0xf]
    %v9629 = vld [vmem:[%s7 + $0x138] sm:$0xff]
    %v9630 = vld [vmem:[%s7 + $0x140] sm:$0xf]
    %v9631 = vld [vmem:[%s7 + $0x144] sm:$0xff]
    %v9632 = vld [vmem:[%s7 + $0x14c] sm:$0xf]
    %v9633 = vld [vmem:[%s7 + $0x150] sm:$0xff]
    %v9634 = vld [vmem:[%s7 + $0x158] sm:$0xf]
    %v9635 = vld [vmem:[%s7 + $0x15c] sm:$0xff]
    %v9636 = vld [vmem:[%s7 + $0x164] sm:$0xf]
    %v9637 = vld [vmem:[%s7 + $0x168] sm:$0xff]
    %v9638 = vld [vmem:[%s7 + $0x170] sm:$0xf]
    %v9639 = vld [vmem:[%s7 + $0x174] sm:$0xff]
    %v9640 = vld [vmem:[%s7 + $0x17c] sm:$0xf]
    %v9641 = vld [vmem:[%s7 + $0x180] sm:$0xff]
    %v9642 = vld [vmem:[%s7 + $0x188] sm:$0xf]
    %v9643 = vld [vmem:[%s7 + $0x18c] sm:$0xff]
    %v9644 = vld [vmem:[%s7 + $0x194] sm:$0xf]
    %v9645 = vld [vmem:[%s7 + $0x198] sm:$0xff]
    %v9646 = vld [vmem:[%s7 + $0x1a0] sm:$0xf]
    %v9647 = vld [vmem:[%s7 + $0x1a4] sm:$0xff]
    %v9648 = vld [vmem:[%s7 + $0x1ac] sm:$0xf]
    %v9649 = vld [vmem:[%s7 + $0x1b0] sm:$0xff]
    %v9650 = vld [vmem:[%s7 + $0x1b8] sm:$0xf]
    %v9651 = vld [vmem:[%s7 + $0x1bc] sm:$0xff]
    %v9652 = vld [vmem:[%s7 + $0x1c4] sm:$0xf]
    %v9653 = vld [vmem:[%s7 + $0x1c8] sm:$0xff]
    %v9654 = vld [vmem:[%s7 + $0x1d0] sm:$0xf]
    %v9655 = vld [vmem:[%s7 + $0x1d4] sm:$0xff]
    %v9656 = vld [vmem:[%s7 + $0x1dc] sm:$0xf]
    %v9657 = vld [vmem:[%s7 + $0x1e0] sm:$0xff]
    %v9658 = vld [vmem:[%s7 + $0x1e8] sm:$0xf]
    %v9659 = vld [vmem:[%s7 + $0x1ec] sm:$0xff]
    %v9660 = vld [vmem:[%s7 + $0x1f4] sm:$0xf]
    %v9661 = vld [vmem:[%s7 + $0x1f8] sm:$0xff]
    %v9662 = vld [vmem:[%s7 + $0x200] sm:$0xf]
    %v9663 = vld [vmem:[%s7 + $0x204] sm:$0xff]
    %v9664 = vld [vmem:[%s7 + $0x20c] sm:$0xf]
    %v9665 = vld [vmem:[%s7 + $0x210] sm:$0xff]
    %v9666 = vld [vmem:[%s7 + $0x218] sm:$0xf]
    %v9667 = vld [vmem:[%s7 + $0x21c] sm:$0xff]
    %v9668 = vld [vmem:[%s7 + $0x224] sm:$0xf]
    %v9669 = vld [vmem:[%s7 + $0x228] sm:$0xff]
    %v9670 = vld [vmem:[%s7 + $0x230] sm:$0xf]
    %v9671 = vld [vmem:[%s7 + $0x234] sm:$0xff]
    %v9672 = vld [vmem:[%s7 + $0x23c] sm:$0xf]
    %s9673 = scalar_lea.vmem %s11, 4
    %v9674 = vld [vmem:[%s9673] sm:$0xf]
    %v9676 = vsel %vm9479, %v9674, 0
    %9678 = vmatprep.subr.bf16.mxu0 %v9467
    %9679 = vmatpush1.bf16.msra.mxu0 %v9466
    %9680 = vmatprep.subr.bf16.mxu0 %v9470
    %9681 = vmatpush1.bf16.msra.mxu0 %v9469
    %9682 = vmatprep.subr.bf16.mxu0 %v9473
    %9683 = vmatpush1.bf16.msra.mxu0 %v9472
    %9684 = vmatprep.subr.bf16.mxu0 %v9488
    %9685 = vmatpush1.bf16.msra.mxu0 %v9485
    %9686 = vmatprep.subr.bf16.mxu0 0
    %9687 = vmatpush1.bf16.msra.mxu0 0
    %9688 = vmatprep.subr.bf16.mxu0 0
    %9689 = vmatpush1.bf16.msra.mxu0 0
    %9690 = vmatprep.subr.bf16.mxu0 0
    %9691 = vmatpush1.bf16.msra.mxu0 0
    %9692 = vmatprep.subr.bf16.mxu0 0
    %9693 = vmatpush1.bf16.msra.mxu0 0
    %9694 = vmatprep.subr.bf16.mxu0 0
    %9695 = vmatpush1.bf16.msra.mxu0 0
    %9696 = vmatprep.subr.bf16.mxu0 0
    %9697 = vmatpush1.bf16.msra.mxu0 0
    %9698 = vmatprep.subr.bf16.mxu0 0
    %9699 = vmatpush1.bf16.msra.mxu0 0
    %9700 = vmatprep.subr.bf16.mxu0 0
    %9701 = vmatpush1.bf16.msra.mxu0 0
    %9702 = vmatprep.subr.bf16.mxu0 0
    %9703 = vmatpush1.bf16.msra.mxu0 0
    %9704 = vmatprep.subr.bf16.mxu0 0
    %9705 = vmatpush1.bf16.msra.mxu0 0
    %9706 = vmatprep.subr.bf16.mxu0 0
    %9707 = vmatpush1.bf16.msra.mxu0 0
    %9708 = vmatprep.subr.bf16.mxu0 0
    %9709 = vmatpush1.bf16.msra.mxu0 0
    %9710 = vmatprep.mubr.bf16.mxu0 0
    %9711 = vmatmul.mubr.bf16.gmra.mrb[0].mxu0 %v9676
    %v9712 = vpop.f32.mrb[0].mxu0
    %v9713 = vadd.f32 0.0, %v9712
    %v9714 = vpop.f32.mrb[0].mxu0
    %v9715 = vadd.f32 0.0, %v9714
    %v9716 = vpop.f32.mrb[0].mxu0
    %v9717 = vpop.f32.mrb[0].mxu0
    %9718 = vdwg.mxu0
    %9719 = vmatprep.subr.bf16.mxu0 0
    %9720 = vmatpush1.bf16.msra.mxu0 %v9468
    %9721 = vmatprep.subr.bf16.mxu0 0
    %9722 = vmatpush1.bf16.msra.mxu0 %v9471
    %9723 = vmatprep.subr.bf16.mxu0 0
    %9724 = vmatpush1.bf16.msra.mxu0 %v9474
    %9725 = vmatprep.subr.bf16.mxu0 0
    %9726 = vmatpush1.bf16.msra.mxu0 %v9491
    %9727 = vmatprep.subr.bf16.mxu0 0
    %9728 = vmatpush1.bf16.msra.mxu0 0
    %9729 = vmatprep.subr.bf16.mxu0 0
    %9730 = vmatpush1.bf16.msra.mxu0 0
    %9731 = vmatprep.subr.bf16.mxu0 0
    %9732 = vmatpush1.bf16.msra.mxu0 0
    %9733 = vmatprep.subr.bf16.mxu0 0
    %9734 = vmatpush1.bf16.msra.mxu0 0
    %9735 = vmatprep.subr.bf16.mxu0 0
    %9736 = vmatpush1.bf16.msra.mxu0 0
    %9737 = vmatprep.subr.bf16.mxu0 0
    %9738 = vmatpush1.bf16.msra.mxu0 0
    %9739 = vmatprep.subr.bf16.mxu0 0
    %9740 = vmatpush1.bf16.msra.mxu0 0
    %9741 = vmatprep.subr.bf16.mxu0 0
    %9742 = vmatpush1.bf16.msra.mxu0 0
    %9743 = vmatprep.subr.bf16.mxu0 0
    %9744 = vmatpush1.bf16.msra.mxu0 0
    %9745 = vmatprep.subr.bf16.mxu0 0
    %9746 = vmatpush1.bf16.msra.mxu0 0
    %9747 = vmatprep.subr.bf16.mxu0 0
    %9748 = vmatpush1.bf16.msra.mxu0 0
    %9749 = vmatprep.subr.bf16.mxu0 0
    %9750 = vmatpush1.bf16.msra.mxu0 0
    %9751 = vmatprep.mubr.bf16.mxu0 0
    %9752 = vmatmul.mubr.bf16.gmra.mrb[0].mxu0 %v9676
    %v9753 = vpop.f32.mrb[0].mxu0
    %v9754 = vadd.f32 0.0, %v9753
    %v9755 = vpop.f32.mrb[0].mxu0
    %v9756 = vpop.f32.mrb[0].mxu0
    %v9757 = vpop.f32.mrb[0].mxu0
    %9758 = vdwg.mxu0
    %v9759 = vpack.c.bf16 %v9713, %v9713
    %v9760 = vpack.c.bf16 %v9715, %v9715
    %v9761 = vpack.c.bf16 %v9754, %v9754
    %s9762 = scalar_lea.vmem %s7, 576
    %v9763 = vld [vmem:[%s9762] sm:$0xff]
    %v9764 = vld [vmem:[%s9762 + $0x8] sm:$0xf]
    %v9765 = vld [vmem:[%s9762 + $0xc] sm:$0xff]
    %v9766 = vld [vmem:[%s9762 + $0x14] sm:$0xf]
    %v9767 = vld [vmem:[%s9762 + $0x18] sm:$0xff]
    %v9768 = vld [vmem:[%s9762 + $0x20] sm:$0xf]
    %v9769 = vld [vmem:[%s9762 + $0x24] sm:$0xff]
    %v9770 = vld [vmem:[%s9762 + $0x2c] sm:$0xf]
    %v9771 = vld [vmem:[%s9762 + $0x30] sm:$0xff]
    %v9772 = vld [vmem:[%s9762 + $0x38] sm:$0xf]
    %v9773 = vld [vmem:[%s9762 + $0x3c] sm:$0xff]
    %v9774 = vld [vmem:[%s9762 + $0x44] sm:$0xf]
    %v9775 = vld [vmem:[%s9762 + $0x48] sm:$0xff]
    %v9776 = vld [vmem:[%s9762 + $0x50] sm:$0xf]
    %v9777 = vld [vmem:[%s9762 + $0x54] sm:$0xff]
    %v9778 = vld [vmem:[%s9762 + $0x5c] sm:$0xf]
    %v9779 = vld [vmem:[%s9762 + $0x60] sm:$0xff]
    %v9780 = vld [vmem:[%s9762 + $0x68] sm:$0xf]
    %v9781 = vld [vmem:[%s9762 + $0x6c] sm:$0xff]
    %v9782 = vld [vmem:[%s9762 + $0x74] sm:$0xf]
    %v9783 = vld [vmem:[%s9762 + $0x78] sm:$0xff]
    %v9784 = vld [vmem:[%s9762 + $0x80] sm:$0xf]
    %v9785 = vld [vmem:[%s9762 + $0x84] sm:$0xff]
    %v9786 = vld [vmem:[%s9762 + $0x8c] sm:$0xf]
    %v9787 = vld [vmem:[%s9762 + $0x90] sm:$0xff]
    %v9788 = vld [vmem:[%s9762 + $0x98] sm:$0xf]
    %v9789 = vld [vmem:[%s9762 + $0x9c] sm:$0xff]
    %v9790 = vld [vmem:[%s9762 + $0xa4] sm:$0xf]
    %v9791 = vld [vmem:[%s9762 + $0xa8] sm:$0xff]
    %v9792 = vld [vmem:[%s9762 + $0xb0] sm:$0xf]
    %v9793 = vld [vmem:[%s9762 + $0xb4] sm:$0xff]
    %v9794 = vld [vmem:[%s9762 + $0xbc] sm:$0xf]
    %v9795 = vld [vmem:[%s9762 + $0xc0] sm:$0xff]
    %v9796 = vld [vmem:[%s9762 + $0xc8] sm:$0xf]
    %v9797 = vld [vmem:[%s9762 + $0xcc] sm:$0xff]
    %v9798 = vld [vmem:[%s9762 + $0xd4] sm:$0xf]
    %v9799 = vld [vmem:[%s9762 + $0xd8] sm:$0xff]
    %v9800 = vld [vmem:[%s9762 + $0xe0] sm:$0xf]
    %v9801 = vld [vmem:[%s9762 + $0xe4] sm:$0xff]
    %v9802 = vld [vmem:[%s9762 + $0xec] sm:$0xf]
    %v9803 = vld [vmem:[%s9762 + $0xf0] sm:$0xff]
    %v9804 = vld [vmem:[%s9762 + $0xf8] sm:$0xf]
    %v9805 = vld [vmem:[%s9762 + $0xfc] sm:$0xff]
    %v9806 = vld [vmem:[%s9762 + $0x104] sm:$0xf]
    %v9807 = vld [vmem:[%s9762 + $0x108] sm:$0xff]
    %v9808 = vld [vmem:[%s9762 + $0x110] sm:$0xf]
    %v9809 = vld [vmem:[%s9762 + $0x114] sm:$0xff]
    %v9810 = vld [vmem:[%s9762 + $0x11c] sm:$0xf]
    %v9811 = vld [vmem:[%s9762 + $0x120] sm:$0xff]
    %v9812 = vld [vmem:[%s9762 + $0x128] sm:$0xf]
    %v9813 = vld [vmem:[%s9762 + $0x12c] sm:$0xff]
    %v9814 = vld [vmem:[%s9762 + $0x134] sm:$0xf]
    %v9815 = vld [vmem:[%s9762 + $0x138] sm:$0xff]
    %v9816 = vld [vmem:[%s9762 + $0x140] sm:$0xf]
    %v9817 = vld [vmem:[%s9762 + $0x144] sm:$0xff]
    %v9818 = vld [vmem:[%s9762 + $0x14c] sm:$0xf]
    %v9819 = vld [vmem:[%s9762 + $0x150] sm:$0xff]
    %v9820 = vld [vmem:[%s9762 + $0x158] sm:$0xf]
    %v9821 = vld [vmem:[%s9762 + $0x15c] sm:$0xff]
    %v9822 = vld [vmem:[%s9762 + $0x164] sm:$0xf]
    %v9823 = vld [vmem:[%s9762 + $0x168] sm:$0xff]
    %v9824 = vld [vmem:[%s9762 + $0x170] sm:$0xf]
    %v9825 = vld [vmem:[%s9762 + $0x174] sm:$0xff]
    %v9826 = vld [vmem:[%s9762 + $0x17c] sm:$0xf]
    %v9827 = vld [vmem:[%s9762 + $0x180] sm:$0xff]
    %v9828 = vld [vmem:[%s9762 + $0x188] sm:$0xf]
    %v9829 = vld [vmem:[%s9762 + $0x18c] sm:$0xff]
    %v9830 = vld [vmem:[%s9762 + $0x194] sm:$0xf]
    %v9831 = vld [vmem:[%s9762 + $0x198] sm:$0xff]
    %v9832 = vld [vmem:[%s9762 + $0x1a0] sm:$0xf]
    %v9833 = vld [vmem:[%s9762 + $0x1a4] sm:$0xff]
    %v9834 = vld [vmem:[%s9762 + $0x1ac] sm:$0xf]
    %v9835 = vld [vmem:[%s9762 + $0x1b0] sm:$0xff]
    %v9836 = vld [vmem:[%s9762 + $0x1b8] sm:$0xf]
    %v9837 = vld [vmem:[%s9762 + $0x1bc] sm:$0xff]
    %v9838 = vld [vmem:[%s9762 + $0x1c4] sm:$0xf]
    %v9839 = vld [vmem:[%s9762 + $0x1c8] sm:$0xff]
    %v9840 = vld [vmem:[%s9762 + $0x1d0] sm:$0xf]
    %v9841 = vld [vmem:[%s9762 + $0x1d4] sm:$0xff]
    %v9842 = vld [vmem:[%s9762 + $0x1dc] sm:$0xf]
    %v9843 = vld [vmem:[%s9762 + $0x1e0] sm:$0xff]
    %v9844 = vld [vmem:[%s9762 + $0x1e8] sm:$0xf]
    %v9845 = vld [vmem:[%s9762 + $0x1ec] sm:$0xff]
    %v9846 = vld [vmem:[%s9762 + $0x1f4] sm:$0xf]
    %v9847 = vld [vmem:[%s9762 + $0x1f8] sm:$0xff]
    %v9848 = vld [vmem:[%s9762 + $0x200] sm:$0xf]
    %v9849 = vld [vmem:[%s9762 + $0x204] sm:$0xff]
    %v9850 = vld [vmem:[%s9762 + $0x20c] sm:$0xf]
    %v9851 = vld [vmem:[%s9762 + $0x210] sm:$0xff]
    %v9852 = vld [vmem:[%s9762 + $0x218] sm:$0xf]
    %v9853 = vld [vmem:[%s9762 + $0x21c] sm:$0xff]
    %v9854 = vld [vmem:[%s9762 + $0x224] sm:$0xf]
    %v9855 = vld [vmem:[%s9762 + $0x228] sm:$0xff]
    %v9856 = vld [vmem:[%s9762 + $0x230] sm:$0xf]
    %v9857 = vld [vmem:[%s9762 + $0x234] sm:$0xff]
    %v9858 = vld [vmem:[%s9762 + $0x23c] sm:$0xf]
    %v9955 = vunpack.c.l.b16 %v9763
    %v9956 = vunpack.c.h.b16 %v9763
    %v9957 = vunpack.c.l.b16 %v9764
    %v9958 = vunpack.c.l.b16 %v9765
    %v9959 = vunpack.c.h.b16 %v9765
    %v9960 = vunpack.c.l.b16 %v9766
    %v9961 = vunpack.c.l.b16 %v9767
    %v9962 = vunpack.c.h.b16 %v9767
    %v9963 = vunpack.c.l.b16 %v9768
    %v9964 = vunpack.c.l.b16 %v9769
    %v9965 = vunpack.c.h.b16 %v9769
    %v9966 = vunpack.c.l.b16 %v9770
    %v9967 = vunpack.c.l.b16 %v9771
    %v9968 = vunpack.c.h.b16 %v9771
    %v9969 = vunpack.c.l.b16 %v9772
    %v9970 = vunpack.c.l.b16 %v9773
    %v9971 = vunpack.c.h.b16 %v9773
    %v9972 = vunpack.c.l.b16 %v9774
    %v9973 = vunpack.c.l.b16 %v9775
    %v9974 = vunpack.c.h.b16 %v9775
    %v9975 = vunpack.c.l.b16 %v9776
    %v9976 = vunpack.c.l.b16 %v9777
    %v9977 = vunpack.c.h.b16 %v9777
    %v9978 = vunpack.c.l.b16 %v9778
    %v9979 = vunpack.c.l.b16 %v9779
    %v9980 = vunpack.c.h.b16 %v9779
    %v9981 = vunpack.c.l.b16 %v9780
    %v9982 = vunpack.c.l.b16 %v9781
    %v9983 = vunpack.c.h.b16 %v9781
    %v9984 = vunpack.c.l.b16 %v9782
    %v9985 = vunpack.c.l.b16 %v9783
    %v9986 = vunpack.c.h.b16 %v9783
    %v9987 = vunpack.c.l.b16 %v9784
    %v9988 = vunpack.c.l.b16 %v9785
    %v9989 = vunpack.c.h.b16 %v9785
    %v9990 = vunpack.c.l.b16 %v9786
    %v9991 = vunpack.c.l.b16 %v9787
    %v9992 = vunpack.c.h.b16 %v9787
    %v9993 = vunpack.c.l.b16 %v9788
    %v9994 = vunpack.c.l.b16 %v9789
    %v9995 = vunpack.c.h.b16 %v9789
    %v9996 = vunpack.c.l.b16 %v9790
    %v9997 = vunpack.c.l.b16 %v9791
    %v9998 = vunpack.c.h.b16 %v9791
    %v9999 = vunpack.c.l.b16 %v9792
    %v10000 = vunpack.c.l.b16 %v9793
    %v10001 = vunpack.c.h.b16 %v9793
    %v10002 = vunpack.c.l.b16 %v9794
    %v10003 = vunpack.c.l.b16 %v9795
    %v10004 = vunpack.c.h.b16 %v9795
    %v10005 = vunpack.c.l.b16 %v9796
    %v10006 = vunpack.c.l.b16 %v9797
    %v10007 = vunpack.c.h.b16 %v9797
    %v10008 = vunpack.c.l.b16 %v9798
    %v10009 = vunpack.c.l.b16 %v9799
    %v10010 = vunpack.c.h.b16 %v9799
    %v10011 = vunpack.c.l.b16 %v9800
    %v10012 = vunpack.c.l.b16 %v9801
    %v10013 = vunpack.c.h.b16 %v9801
    %v10014 = vunpack.c.l.b16 %v9802
    %v10015 = vunpack.c.l.b16 %v9803
    %v10016 = vunpack.c.h.b16 %v9803
    %v10017 = vunpack.c.l.b16 %v9804
    %v10018 = vunpack.c.l.b16 %v9805
    %v10019 = vunpack.c.h.b16 %v9805
    %v10020 = vunpack.c.l.b16 %v9806
    %v10021 = vunpack.c.l.b16 %v9807
    %v10022 = vunpack.c.h.b16 %v9807
    %v10023 = vunpack.c.l.b16 %v9808
    %v10024 = vunpack.c.l.b16 %v9809
    %v10025 = vunpack.c.h.b16 %v9809
    %v10026 = vunpack.c.l.b16 %v9810
    %v10027 = vunpack.c.l.b16 %v9811
    %v10028 = vunpack.c.h.b16 %v9811
    %v10029 = vunpack.c.l.b16 %v9812
    %v10030 = vunpack.c.l.b16 %v9813
    %v10031 = vunpack.c.h.b16 %v9813
    %v10032 = vunpack.c.l.b16 %v9814
    %v10033 = vunpack.c.l.b16 %v9815
    %v10034 = vunpack.c.h.b16 %v9815
    %v10035 = vunpack.c.l.b16 %v9816
    %v10036 = vunpack.c.l.b16 %v9817
    %v10037 = vunpack.c.h.b16 %v9817
    %v10038 = vunpack.c.l.b16 %v9818
    %v10039 = vunpack.c.l.b16 %v9819
    %v10040 = vunpack.c.h.b16 %v9819
    %v10041 = vunpack.c.l.b16 %v9820
    %v10042 = vunpack.c.l.b16 %v9821
    %v10043 = vunpack.c.h.b16 %v9821
    %v10044 = vunpack.c.l.b16 %v9822
    %v10045 = vunpack.c.l.b16 %v9823
    %v10046 = vunpack.c.h.b16 %v9823
    %v10047 = vunpack.c.l.b16 %v9824
    %v10048 = vunpack.c.l.b16 %v9825
    %v10049 = vunpack.c.h.b16 %v9825
    %v10050 = vunpack.c.l.b16 %v9826
    %v10051 = vunpack.c.l.b16 %v9827
    %v10052 = vunpack.c.h.b16 %v9827
    %v10053 = vunpack.c.l.b16 %v9828
    %v10054 = vunpack.c.l.b16 %v9829
    %v10055 = vunpack.c.h.b16 %v9829
    %v10056 = vunpack.c.l.b16 %v9830
    %v10057 = vunpack.c.l.b16 %v9831
    %v10058 = vunpack.c.h.b16 %v9831
    %v10059 = vunpack.c.l.b16 %v9832
    %v10060 = vunpack.c.l.b16 %v9833
    %v10061 = vunpack.c.h.b16 %v9833
    %v10062 = vunpack.c.l.b16 %v9834
    %v10063 = vunpack.c.l.b16 %v9835
    %v10064 = vunpack.c.h.b16 %v9835
    %v10065 = vunpack.c.l.b16 %v9836
    %v10066 = vunpack.c.l.b16 %v9837
    %v10067 = vunpack.c.h.b16 %v9837
    %v10068 = vunpack.c.l.b16 %v9838
    %v10069 = vunpack.c.l.b16 %v9839
    %v10070 = vunpack.c.h.b16 %v9839
    %v10071 = vunpack.c.l.b16 %v9840
    %v10072 = vunpack.c.l.b16 %v9841
    %v10073 = vunpack.c.h.b16 %v9841
    %v10074 = vunpack.c.l.b16 %v9842
    %v10075 = vunpack.c.l.b16 %v9843
    %v10076 = vunpack.c.h.b16 %v9843
    %v10077 = vunpack.c.l.b16 %v9844
    %v10078 = vunpack.c.l.b16 %v9845
    %v10079 = vunpack.c.h.b16 %v9845
    %v10080 = vunpack.c.l.b16 %v9846
    %v10081 = vunpack.c.l.b16 %v9847
    %v10082 = vunpack.c.h.b16 %v9847
    %v10083 = vunpack.c.l.b16 %v9848
    %v10084 = vunpack.c.l.b16 %v9849
    %v10085 = vunpack.c.h.b16 %v9849
    %v10086 = vunpack.c.l.b16 %v9850
    %v10087 = vunpack.c.l.b16 %v9851
    %v10088 = vunpack.c.h.b16 %v9851
    %v10089 = vunpack.c.l.b16 %v9852
    %v10090 = vunpack.c.l.b16 %v9853
    %v10091 = vunpack.c.h.b16 %v9853
    %v10092 = vunpack.c.l.b16 %v9854
    %v10093 = vunpack.c.l.b16 %v9855
    %v10094 = vunpack.c.h.b16 %v9855
    %v10095 = vunpack.c.l.b16 %v9856
    %v10096 = vunpack.c.l.b16 %v9857
    %v10097 = vunpack.c.h.b16 %v9857
    %v10098 = vunpack.c.l.b16 %v9858
    %v10099 = vpack.c.b16 %v9958, %v9955
    %v10100 = vpack.c.b16 %v9959, %v9956
    %v10101 = vpack.c.b16 %v9960, %v9957
    %v10102 = vpack.c.b16 %v9964, %v9961
    %v10103 = vpack.c.b16 %v9965, %v9962
    %v10104 = vpack.c.b16 %v9966, %v9963
    %v10105 = vpack.c.b16 %v9970, %v9967
    %v10106 = vpack.c.b16 %v9971, %v9968
    %v10107 = vpack.c.b16 %v9972, %v9969
    %v10108 = vpack.c.b16 %v9976, %v9973
    %v10109 = vpack.c.b16 %v9977, %v9974
    %v10110 = vpack.c.b16 %v9978, %v9975
    %v10111 = vpack.c.b16 %v9982, %v9979
    %v10112 = vpack.c.b16 %v9983, %v9980
    %v10113 = vpack.c.b16 %v9984, %v9981
    %v10114 = vpack.c.b16 %v9988, %v9985
    %v10115 = vpack.c.b16 %v9989, %v9986
    %v10116 = vpack.c.b16 %v9990, %v9987
    %v10117 = vpack.c.b16 %v9994, %v9991
    %v10118 = vpack.c.b16 %v9995, %v9992
    %v10119 = vpack.c.b16 %v9996, %v9993
    %v10120 = vpack.c.b16 %v10000, %v9997
    %v10121 = vpack.c.b16 %v10001, %v9998
    %v10122 = vpack.c.b16 %v10002, %v9999
    %v10123 = vpack.c.b16 %v10006, %v10003
    %v10124 = vpack.c.b16 %v10007, %v10004
    %v10125 = vpack.c.b16 %v10008, %v10005
    %v10126 = vpack.c.b16 %v10012, %v10009
    %v10127 = vpack.c.b16 %v10013, %v10010
    %v10128 = vpack.c.b16 %v10014, %v10011
    %v10129 = vpack.c.b16 %v10018, %v10015
    %v10130 = vpack.c.b16 %v10019, %v10016
    %v10131 = vpack.c.b16 %v10020, %v10017
    %v10132 = vpack.c.b16 %v10024, %v10021
    %v10133 = vpack.c.b16 %v10025, %v10022
    %v10134 = vpack.c.b16 %v10026, %v10023
    %v10135 = vpack.c.b16 %v10030, %v10027
    %v10136 = vpack.c.b16 %v10031, %v10028
    %v10137 = vpack.c.b16 %v10032, %v10029
    %v10138 = vpack.c.b16 %v10036, %v10033
    %v10139 = vpack.c.b16 %v10037, %v10034
    %v10140 = vpack.c.b16 %v10038, %v10035
    %v10141 = vpack.c.b16 %v10042, %v10039
    %v10142 = vpack.c.b16 %v10043, %v10040
    %v10143 = vpack.c.b16 %v10044, %v10041
    %v10144 = vpack.c.b16 %v10048, %v10045
    %v10145 = vpack.c.b16 %v10049, %v10046
    %v10146 = vpack.c.b16 %v10050, %v10047
    %v10147 = vpack.c.b16 %v10054, %v10051
    %v10148 = vpack.c.b16 %v10055, %v10052
    %v10149 = vpack.c.b16 %v10056, %v10053
    %v10150 = vpack.c.b16 %v10060, %v10057
    %v10151 = vpack.c.b16 %v10061, %v10058
    %v10152 = vpack.c.b16 %v10062, %v10059
    %v10153 = vpack.c.b16 %v10066, %v10063
    %v10154 = vpack.c.b16 %v10067, %v10064
    %v10155 = vpack.c.b16 %v10068, %v10065
    %v10156 = vpack.c.b16 %v10072, %v10069
    %v10157 = vpack.c.b16 %v10073, %v10070
    %v10158 = vpack.c.b16 %v10074, %v10071
    %v10159 = vpack.c.b16 %v10078, %v10075
    %v10160 = vpack.c.b16 %v10079, %v10076
    %v10161 = vpack.c.b16 %v10080, %v10077
    %v10162 = vpack.c.b16 %v10084, %v10081
    %v10163 = vpack.c.b16 %v10085, %v10082
    %v10164 = vpack.c.b16 %v10086, %v10083
    %v10165 = vpack.c.b16 %v10090, %v10087
    %v10166 = vpack.c.b16 %v10091, %v10088
    %v10167 = vpack.c.b16 %v10092, %v10089
    %v10168 = vpack.c.b16 %v10096, %v10093
    %v10169 = vpack.c.b16 %v10097, %v10094
    %v10170 = vpack.c.b16 %v10098, %v10095
    %10243 = vmatprep.subr.bf16.mxu0 %v10100
    %10244 = vmatpush1.bf16.msra.mxu0 %v10099
    %10245 = vmatprep.subr.bf16.mxu0 %v10103
    %10246 = vmatpush1.bf16.msra.mxu0 %v10102
    %10247 = vmatprep.subr.bf16.mxu0 %v10106
    %10248 = vmatpush1.bf16.msra.mxu0 %v10105
    %10249 = vmatprep.subr.bf16.mxu0 %v10109
    %10250 = vmatpush1.bf16.msra.mxu0 %v10108
    %10251 = vmatprep.subr.bf16.mxu0 %v10112
    %10252 = vmatpush1.bf16.msra.mxu0 %v10111
    %10253 = vmatprep.subr.bf16.mxu0 %v10115
    %10254 = vmatpush1.bf16.msra.mxu0 %v10114
    %10255 = vmatprep.subr.bf16.mxu0 %v10118
    %10256 = vmatpush1.bf16.msra.mxu0 %v10117
    %10257 = vmatprep.subr.bf16.mxu0 %v10121
    %10258 = vmatpush1.bf16.msra.mxu0 %v10120
    %10259 = vmatprep.subr.bf16.mxu0 %v10124
    %10260 = vmatpush1.bf16.msra.mxu0 %v10123
    %10261 = vmatprep.subr.bf16.mxu0 %v10127
    %10262 = vmatpush1.bf16.msra.mxu0 %v10126
    %10263 = vmatprep.subr.bf16.mxu0 %v10130
    %10264 = vmatpush1.bf16.msra.mxu0 %v10129
    %10265 = vmatprep.subr.bf16.mxu0 %v10133
    %10266 = vmatpush1.bf16.msra.mxu0 %v10132
    %10267 = vmatprep.subr.bf16.mxu0 %v10136
    %10268 = vmatpush1.bf16.msra.mxu0 %v10135
    %10269 = vmatprep.subr.bf16.mxu0 %v10139
    %10270 = vmatpush1.bf16.msra.mxu0 %v10138
    %10271 = vmatprep.subr.bf16.mxu0 %v10142
    %10272 = vmatpush1.bf16.msra.mxu0 %v10141
    %10273 = vmatprep.subr.bf16.mxu0 %v10145
    %10274 = vmatpush1.bf16.msra.mxu0 %v10144
    %10275 = vmatprep.mubr.bf16.mxu0 %v9760
    %10276 = vmatmul.mubr.bf16.gmra.mrb[0].mxu0 %v9759
    %v10277 = vpop.f32.mrb[0].mxu0
    %v10278 = vadd.f32 0.0, %v10277
    %v10279 = vpop.f32.mrb[0].mxu0
    %v10280 = vadd.f32 0.0, %v10279
    %v10281 = vpop.f32.mrb[0].mxu0
    %v10282 = vpop.f32.mrb[0].mxu0
    %10283 = vdwg.mxu0
    %10284 = vmatprep.subr.bf16.mxu0 %v10148
    %10285 = vmatpush1.bf16.msra.mxu0 %v10147
    %10286 = vmatprep.subr.bf16.mxu0 %v10151
    %10287 = vmatpush1.bf16.msra.mxu0 %v10150
    %10288 = vmatprep.subr.bf16.mxu0 %v10154
    %10289 = vmatpush1.bf16.msra.mxu0 %v10153
    %10290 = vmatprep.subr.bf16.mxu0 %v10157
    %10291 = vmatpush1.bf16.msra.mxu0 %v10156
    %10292 = vmatprep.subr.bf16.mxu0 %v10160
    %10293 = vmatpush1.bf16.msra.mxu0 %v10159
    %10294 = vmatprep.subr.bf16.mxu0 %v10163
    %10295 = vmatpush1.bf16.msra.mxu0 %v10162
    %10296 = vmatprep.subr.bf16.mxu0 %v10166
    %10297 = vmatpush1.bf16.msra.mxu0 %v10165
    %10298 = vmatprep.subr.bf16.mxu0 %v10169
    %10299 = vmatpush1.bf16.msra.mxu0 %v10168
    %10300 = vmatprep.subr.bf16.mxu0 0
    %10301 = vmatpush1.bf16.msra.mxu0 0
    %10302 = vmatprep.subr.bf16.mxu0 0
    %10303 = vmatpush1.bf16.msra.mxu0 0
    %10304 = vmatprep.subr.bf16.mxu0 0
    %10305 = vmatpush1.bf16.msra.mxu0 0
    %10306 = vmatprep.subr.bf16.mxu0 0
    %10307 = vmatpush1.bf16.msra.mxu0 0
    %10308 = vmatprep.subr.bf16.mxu0 0
    %10309 = vmatpush1.bf16.msra.mxu0 0
    %10310 = vmatprep.subr.bf16.mxu0 0
    %10311 = vmatpush1.bf16.msra.mxu0 0
    %10312 = vmatprep.subr.bf16.mxu0 0
    %10313 = vmatpush1.bf16.msra.mxu0 0
    %10314 = vmatprep.subr.bf16.mxu0 0
    %10315 = vmatpush1.bf16.msra.mxu0 0
    %10316 = vmatprep.mubr.bf16.mxu0 0
    %10317 = vmatmul.mubr.bf16.gmra.mrb[0].mxu0 %v9761
    %v10318 = vpop.f32.mrb[0].mxu0
    %v10319 = vadd.f32 %v10278, %v10318
    %v10320 = vpop.f32.mrb[0].mxu0
    %v10321 = vadd.f32 %v10280, %v10320
    %v10322 = vpop.f32.mrb[0].mxu0
    %v10323 = vpop.f32.mrb[0].mxu0
    %10324 = vdwg.mxu0
    %10325 = vmatprep.subr.bf16.mxu0 0
    %10326 = vmatpush1.bf16.msra.mxu0 %v10101
    %10327 = vmatprep.subr.bf16.mxu0 0
    %10328 = vmatpush1.bf16.msra.mxu0 %v10104
    %10329 = vmatprep.subr.bf16.mxu0 0
    %10330 = vmatpush1.bf16.msra.mxu0 %v10107
    %10331 = vmatprep.subr.bf16.mxu0 0
    %10332 = vmatpush1.bf16.msra.mxu0 %v10110
    %10333 = vmatprep.subr.bf16.mxu0 0
    %10334 = vmatpush1.bf16.msra.mxu0 %v10113
    %10335 = vmatprep.subr.bf16.mxu0 0
    %10336 = vmatpush1.bf16.msra.mxu0 %v10116
    %10337 = vmatprep.subr.bf16.mxu0 0
    %10338 = vmatpush1.bf16.msra.mxu0 %v10119
    %10339 = vmatprep.subr.bf16.mxu0 0
    %10340 = vmatpush1.bf16.msra.mxu0 %v10122
    %10341 = vmatprep.subr.bf16.mxu0 0
    %10342 = vmatpush1.bf16.msra.mxu0 %v10125
    %10343 = vmatprep.subr.bf16.mxu0 0
    %10344 = vmatpush1.bf16.msra.mxu0 %v10128
    %10345 = vmatprep.subr.bf16.mxu0 0
    %10346 = vmatpush1.bf16.msra.mxu0 %v10131
    %10347 = vmatprep.subr.bf16.mxu0 0
    %10348 = vmatpush1.bf16.msra.mxu0 %v10134
    %10349 = vmatprep.subr.bf16.mxu0 0
    %10350 = vmatpush1.bf16.msra.mxu0 %v10137
    %10351 = vmatprep.subr.bf16.mxu0 0
    %10352 = vmatpush1.bf16.msra.mxu0 %v10140
    %10353 = vmatprep.subr.bf16.mxu0 0
    %10354 = vmatpush1.bf16.msra.mxu0 %v10143
    %10355 = vmatprep.subr.bf16.mxu0 0
    %10356 = vmatpush1.bf16.msra.mxu0 %v10146
    %10357 = vmatprep.mubr.bf16.mxu0 %v9760
    %10358 = vmatmul.mubr.bf16.gmra.mrb[0].mxu0 %v9759
    %v10359 = vpop.f32.mrb[0].mxu0
    %v10360 = vadd.f32 0.0, %v10359
    %v10361 = vpop.f32.mrb[0].mxu0
    %v10362 = vpop.f32.mrb[0].mxu0
    %v10363 = vpop.f32.mrb[0].mxu0
    %10364 = vdwg.mxu0
    %10365 = vmatprep.subr.bf16.mxu0 0
    %10366 = vmatpush1.bf16.msra.mxu0 %v10149
    %10367 = vmatprep.subr.bf16.mxu0 0
    %10368 = vmatpush1.bf16.msra.mxu0 %v10152
    %10369 = vmatprep.subr.bf16.mxu0 0
    %10370 = vmatpush1.bf16.msra.mxu0 %v10155
    %10371 = vmatprep.subr.bf16.mxu0 0
    %10372 = vmatpush1.bf16.msra.mxu0 %v10158
    %10373 = vmatprep.subr.bf16.mxu0 0
    %10374 = vmatpush1.bf16.msra.mxu0 %v10161
    %10375 = vmatprep.subr.bf16.mxu0 0
    %10376 = vmatpush1.bf16.msra.mxu0 %v10164
    %10377 = vmatprep.subr.bf16.mxu0 0
    %10378 = vmatpush1.bf16.msra.mxu0 %v10167
    %10379 = vmatprep.subr.bf16.mxu0 0
    %10380 = vmatpush1.bf16.msra.mxu0 %v10170
    %10381 = vmatprep.subr.bf16.mxu0 0
    %10382 = vmatpush1.bf16.msra.mxu0 0
    %10383 = vmatprep.subr.bf16.mxu0 0
    %10384 = vmatpush1.bf16.msra.mxu0 0
    %10385 = vmatprep.subr.bf16.mxu0 0
    %10386 = vmatpush1.bf16.msra.mxu0 0
    %10387 = vmatprep.subr.bf16.mxu0 0
    %10388 = vmatpush1.bf16.msra.mxu0 0
    %10389 = vmatprep.subr.bf16.mxu0 0
    %10390 = vmatpush1.bf16.msra.mxu0 0
    %10391 = vmatprep.subr.bf16.mxu0 0
    %10392 = vmatpush1.bf16.msra.mxu0 0
    %10393 = vmatprep.subr.bf16.mxu0 0
    %10394 = vmatpush1.bf16.msra.mxu0 0
    %10395 = vmatprep.subr.bf16.mxu0 0
    %10396 = vmatpush1.bf16.msra.mxu0 0
    %10397 = vmatprep.mubr.bf16.mxu0 0
    %10398 = vmatmul.mubr.bf16.gmra.mrb[0].mxu0 %v9761
    %v10399 = vpop.f32.mrb[0].mxu0
    %v10400 = vadd.f32 %v10360, %v10399
    %v10401 = vpop.f32.mrb[0].mxu0
    %v10402 = vpop.f32.mrb[0].mxu0
    %v10403 = vpop.f32.mrb[0].mxu0
    %10404 = vdwg.mxu0
    %v10501 = vunpack.c.l.b16 %v9577
    %v10502 = vunpack.c.h.b16 %v9577
    %v10503 = vunpack.c.l.b16 %v9578
    %v10504 = vunpack.c.l.b16 %v9579
    %v10505 = vunpack.c.h.b16 %v9579
    %v10506 = vunpack.c.l.b16 %v9580
    %v10507 = vunpack.c.l.b16 %v9581
    %v10508 = vunpack.c.h.b16 %v9581
    %v10509 = vunpack.c.l.b16 %v9582
    %v10510 = vunpack.c.l.b16 %v9583
    %v10511 = vunpack.c.h.b16 %v9583
    %v10512 = vunpack.c.l.b16 %v9584
    %v10513 = vunpack.c.l.b16 %v9585
    %v10514 = vunpack.c.h.b16 %v9585
    %v10515 = vunpack.c.l.b16 %v9586
    %v10516 = vunpack.c.l.b16 %v9587
    %v10517 = vunpack.c.h.b16 %v9587
    %v10518 = vunpack.c.l.b16 %v9588
    %v10519 = vunpack.c.l.b16 %v9589
    %v10520 = vunpack.c.h.b16 %v9589
    %v10521 = vunpack.c.l.b16 %v9590
    %v10522 = vunpack.c.l.b16 %v9591
    %v10523 = vunpack.c.h.b16 %v9591
    %v10524 = vunpack.c.l.b16 %v9592
    %v10525 = vunpack.c.l.b16 %v9593
    %v10526 = vunpack.c.h.b16 %v9593
    %v10527 = vunpack.c.l.b16 %v9594
    %v10528 = vunpack.c.l.b16 %v9595
    %v10529 = vunpack.c.h.b16 %v9595
    %v10530 = vunpack.c.l.b16 %v9596
    %v10531 = vunpack.c.l.b16 %v9597
    %v10532 = vunpack.c.h.b16 %v9597
    %v10533 = vunpack.c.l.b16 %v9598
    %v10534 = vunpack.c.l.b16 %v9599
    %v10535 = vunpack.c.h.b16 %v9599
    %v10536 = vunpack.c.l.b16 %v9600
    %v10537 = vunpack.c.l.b16 %v9601
    %v10538 = vunpack.c.h.b16 %v9601
    %v10539 = vunpack.c.l.b16 %v9602
    %v10540 = vunpack.c.l.b16 %v9603
    %v10541 = vunpack.c.h.b16 %v9603
    %v10542 = vunpack.c.l.b16 %v9604
    %v10543 = vunpack.c.l.b16 %v9605
    %v10544 = vunpack.c.h.b16 %v9605
    %v10545 = vunpack.c.l.b16 %v9606
    %v10546 = vunpack.c.l.b16 %v9607
    %v10547 = vunpack.c.h.b16 %v9607
    %v10548 = vunpack.c.l.b16 %v9608
    %v10549 = vunpack.c.l.b16 %v9609
    %v10550 = vunpack.c.h.b16 %v9609
    %v10551 = vunpack.c.l.b16 %v9610
    %v10552 = vunpack.c.l.b16 %v9611
    %v10553 = vunpack.c.h.b16 %v9611
    %v10554 = vunpack.c.l.b16 %v9612
    %v10555 = vunpack.c.l.b16 %v9613
    %v10556 = vunpack.c.h.b16 %v9613
    %v10557 = vunpack.c.l.b16 %v9614
    %v10558 = vunpack.c.l.b16 %v9615
    %v10559 = vunpack.c.h.b16 %v9615
    %v10560 = vunpack.c.l.b16 %v9616
    %v10561 = vunpack.c.l.b16 %v9617
    %v10562 = vunpack.c.h.b16 %v9617
    %v10563 = vunpack.c.l.b16 %v9618
    %v10564 = vunpack.c.l.b16 %v9619
    %v10565 = vunpack.c.h.b16 %v9619
    %v10566 = vunpack.c.l.b16 %v9620
    %v10567 = vunpack.c.l.b16 %v9621
    %v10568 = vunpack.c.h.b16 %v9621
    %v10569 = vunpack.c.l.b16 %v9622
    %v10570 = vunpack.c.l.b16 %v9623
    %v10571 = vunpack.c.h.b16 %v9623
    %v10572 = vunpack.c.l.b16 %v9624
    %v10573 = vunpack.c.l.b16 %v9625
    %v10574 = vunpack.c.h.b16 %v9625
    %v10575 = vunpack.c.l.b16 %v9626
    %v10576 = vunpack.c.l.b16 %v9627
    %v10577 = vunpack.c.h.b16 %v9627
    %v10578 = vunpack.c.l.b16 %v9628
    %v10579 = vunpack.c.l.b16 %v9629
    %v10580 = vunpack.c.h.b16 %v9629
    %v10581 = vunpack.c.l.b16 %v9630
    %v10582 = vunpack.c.l.b16 %v9631
    %v10583 = vunpack.c.h.b16 %v9631
    %v10584 = vunpack.c.l.b16 %v9632
    %v10585 = vunpack.c.l.b16 %v9633
    %v10586 = vunpack.c.h.b16 %v9633
    %v10587 = vunpack.c.l.b16 %v9634
    %v10588 = vunpack.c.l.b16 %v9635
    %v10589 = vunpack.c.h.b16 %v9635
    %v10590 = vunpack.c.l.b16 %v9636
    %v10591 = vunpack.c.l.b16 %v9637
    %v10592 = vunpack.c.h.b16 %v9637
    %v10593 = vunpack.c.l.b16 %v9638
    %v10594 = vunpack.c.l.b16 %v9639
    %v10595 = vunpack.c.h.b16 %v9639
    %v10596 = vunpack.c.l.b16 %v9640
    %v10597 = vunpack.c.l.b16 %v9641
    %v10598 = vunpack.c.h.b16 %v9641
    %v10599 = vunpack.c.l.b16 %v9642
    %v10600 = vunpack.c.l.b16 %v9643
    %v10601 = vunpack.c.h.b16 %v9643
    %v10602 = vunpack.c.l.b16 %v9644
    %v10603 = vunpack.c.l.b16 %v9645
    %v10604 = vunpack.c.h.b16 %v9645
    %v10605 = vunpack.c.l.b16 %v9646
    %v10606 = vunpack.c.l.b16 %v9647
    %v10607 = vunpack.c.h.b16 %v9647
    %v10608 = vunpack.c.l.b16 %v9648
    %v10609 = vunpack.c.l.b16 %v9649
    %v10610 = vunpack.c.h.b16 %v9649
    %v10611 = vunpack.c.l.b16 %v9650
    %v10612 = vunpack.c.l.b16 %v9651
    %v10613 = vunpack.c.h.b16 %v9651
    %v10614 = vunpack.c.l.b16 %v9652
    %v10615 = vunpack.c.l.b16 %v9653
    %v10616 = vunpack.c.h.b16 %v9653
    %v10617 = vunpack.c.l.b16 %v9654
    %v10618 = vunpack.c.l.b16 %v9655
    %v10619 = vunpack.c.h.b16 %v9655
    %v10620 = vunpack.c.l.b16 %v9656
    %v10621 = vunpack.c.l.b16 %v9657
    %v10622 = vunpack.c.h.b16 %v9657
    %v10623 = vunpack.c.l.b16 %v9658
    %v10624 = vunpack.c.l.b16 %v9659
    %v10625 = vunpack.c.h.b16 %v9659
    %v10626 = vunpack.c.l.b16 %v9660
    %v10627 = vunpack.c.l.b16 %v9661
    %v10628 = vunpack.c.h.b16 %v9661
    %v10629 = vunpack.c.l.b16 %v9662
    %v10630 = vunpack.c.l.b16 %v9663
    %v10631 = vunpack.c.h.b16 %v9663
    %v10632 = vunpack.c.l.b16 %v9664
    %v10633 = vunpack.c.l.b16 %v9665
    %v10634 = vunpack.c.h.b16 %v9665
    %v10635 = vunpack.c.l.b16 %v9666
    %v10636 = vunpack.c.l.b16 %v9667
    %v10637 = vunpack.c.h.b16 %v9667
    %v10638 = vunpack.c.l.b16 %v9668
    %v10639 = vunpack.c.l.b16 %v9669
    %v10640 = vunpack.c.h.b16 %v9669
    %v10641 = vunpack.c.l.b16 %v9670
    %v10642 = vunpack.c.l.b16 %v9671
    %v10643 = vunpack.c.h.b16 %v9671
    %v10644 = vunpack.c.l.b16 %v9672
    %v10645 = vpack.c.b16 %v10504, %v10501
    %v10646 = vpack.c.b16 %v10505, %v10502
    %v10647 = vpack.c.b16 %v10506, %v10503
    %v10648 = vpack.c.b16 %v10510, %v10507
    %v10649 = vpack.c.b16 %v10511, %v10508
    %v10650 = vpack.c.b16 %v10512, %v10509
    %v10651 = vpack.c.b16 %v10516, %v10513
    %v10652 = vpack.c.b16 %v10517, %v10514
    %v10653 = vpack.c.b16 %v10518, %v10515
    %v10654 = vpack.c.b16 %v10522, %v10519
    %v10655 = vpack.c.b16 %v10523, %v10520
    %v10656 = vpack.c.b16 %v10524, %v10521
    %v10657 = vpack.c.b16 %v10528, %v10525
    %v10658 = vpack.c.b16 %v10529, %v10526
    %v10659 = vpack.c.b16 %v10530, %v10527
    %v10660 = vpack.c.b16 %v10534, %v10531
    %v10661 = vpack.c.b16 %v10535, %v10532
    %v10662 = vpack.c.b16 %v10536, %v10533
    %v10663 = vpack.c.b16 %v10540, %v10537
    %v10664 = vpack.c.b16 %v10541, %v10538
    %v10665 = vpack.c.b16 %v10542, %v10539
    %v10666 = vpack.c.b16 %v10546, %v10543
    %v10667 = vpack.c.b16 %v10547, %v10544
    %v10668 = vpack.c.b16 %v10548, %v10545
    %v10669 = vpack.c.b16 %v10552, %v10549
    %v10670 = vpack.c.b16 %v10553, %v10550
    %v10671 = vpack.c.b16 %v10554, %v10551
    %v10672 = vpack.c.b16 %v10558, %v10555
    %v10673 = vpack.c.b16 %v10559, %v10556
    %v10674 = vpack.c.b16 %v10560, %v10557
    %v10675 = vpack.c.b16 %v10564, %v10561
    %v10676 = vpack.c.b16 %v10565, %v10562
    %v10677 = vpack.c.b16 %v10566, %v10563
    %v10678 = vpack.c.b16 %v10570, %v10567
    %v10679 = vpack.c.b16 %v10571, %v10568
    %v10680 = vpack.c.b16 %v10572, %v10569
    %v10681 = vpack.c.b16 %v10576, %v10573
    %v10682 = vpack.c.b16 %v10577, %v10574
    %v10683 = vpack.c.b16 %v10578, %v10575
    %v10684 = vpack.c.b16 %v10582, %v10579
    %v10685 = vpack.c.b16 %v10583, %v10580
    %v10686 = vpack.c.b16 %v10584, %v10581
    %v10687 = vpack.c.b16 %v10588, %v10585
    %v10688 = vpack.c.b16 %v10589, %v10586
    %v10689 = vpack.c.b16 %v10590, %v10587
    %v10690 = vpack.c.b16 %v10594, %v10591
    %v10691 = vpack.c.b16 %v10595, %v10592
    %v10692 = vpack.c.b16 %v10596, %v10593
    %v10693 = vpack.c.b16 %v10600, %v10597
    %v10694 = vpack.c.b16 %v10601, %v10598
    %v10695 = vpack.c.b16 %v10602, %v10599
    %v10696 = vpack.c.b16 %v10606, %v10603
    %v10697 = vpack.c.b16 %v10607, %v10604
    %v10698 = vpack.c.b16 %v10608, %v10605
    %v10699 = vpack.c.b16 %v10612, %v10609
    %v10700 = vpack.c.b16 %v10613, %v10610
    %v10701 = vpack.c.b16 %v10614, %v10611
    %v10702 = vpack.c.b16 %v10618, %v10615
    %v10703 = vpack.c.b16 %v10619, %v10616
    %v10704 = vpack.c.b16 %v10620, %v10617
    %v10705 = vpack.c.b16 %v10624, %v10621
    %v10706 = vpack.c.b16 %v10625, %v10622
    %v10707 = vpack.c.b16 %v10626, %v10623
    %v10708 = vpack.c.b16 %v10630, %v10627
    %v10709 = vpack.c.b16 %v10631, %v10628
    %v10710 = vpack.c.b16 %v10632, %v10629
    %v10711 = vpack.c.b16 %v10636, %v10633
    %v10712 = vpack.c.b16 %v10637, %v10634
    %v10713 = vpack.c.b16 %v10638, %v10635
    %v10714 = vpack.c.b16 %v10642, %v10639
    %v10715 = vpack.c.b16 %v10643, %v10640
    %v10716 = vpack.c.b16 %v10644, %v10641
    %10789 = vmatprep.subr.bf16.mxu0 %v10646
    %10790 = vmatpush1.bf16.msra.mxu0 %v10645
    %10791 = vmatprep.subr.bf16.mxu0 %v10649
    %10792 = vmatpush1.bf16.msra.mxu0 %v10648
    %10793 = vmatprep.subr.bf16.mxu0 %v10652
    %10794 = vmatpush1.bf16.msra.mxu0 %v10651
    %10795 = vmatprep.subr.bf16.mxu0 %v10655
    %10796 = vmatpush1.bf16.msra.mxu0 %v10654
    %10797 = vmatprep.subr.bf16.mxu0 %v10658
    %10798 = vmatpush1.bf16.msra.mxu0 %v10657
    %10799 = vmatprep.subr.bf16.mxu0 %v10661
    %10800 = vmatpush1.bf16.msra.mxu0 %v10660
    %10801 = vmatprep.subr.bf16.mxu0 %v10664
    %10802 = vmatpush1.bf16.msra.mxu0 %v10663
    %10803 = vmatprep.subr.bf16.mxu0 %v10667
    %10804 = vmatpush1.bf16.msra.mxu0 %v10666
    %10805 = vmatprep.subr.bf16.mxu0 %v10670
    %10806 = vmatpush1.bf16.msra.mxu0 %v10669
    %10807 = vmatprep.subr.bf16.mxu0 %v10673
    %10808 = vmatpush1.bf16.msra.mxu0 %v10672
    %10809 = vmatprep.subr.bf16.mxu0 %v10676
    %10810 = vmatpush1.bf16.msra.mxu0 %v10675
    %10811 = vmatprep.subr.bf16.mxu0 %v10679
    %10812 = vmatpush1.bf16.msra.mxu0 %v10678
    %10813 = vmatprep.subr.bf16.mxu0 %v10682
    %10814 = vmatpush1.bf16.msra.mxu0 %v10681
    %10815 = vmatprep.subr.bf16.mxu0 %v10685
    %10816 = vmatpush1.bf16.msra.mxu0 %v10684
    %10817 = vmatprep.subr.bf16.mxu0 %v10688
    %10818 = vmatpush1.bf16.msra.mxu0 %v10687
    %10819 = vmatprep.subr.bf16.mxu0 %v10691
    %10820 = vmatpush1.bf16.msra.mxu0 %v10690
    %10821 = vmatprep.mubr.bf16.mxu0 %v9575
    %10822 = vmatmul.mubr.bf16.gmra.mrb[0].mxu0 %v9574
    %v10823 = vpop.f32.mrb[0].mxu0
    %v10824 = vadd.f32 %v10319, %v10823
    %v10825 = vpop.f32.mrb[0].mxu0
    %v10826 = vadd.f32 %v10321, %v10825
    %v10827 = vpop.f32.mrb[0].mxu0
    %v10828 = vpop.f32.mrb[0].mxu0
    %10829 = vdwg.mxu0
    %10830 = vmatprep.subr.bf16.mxu0 %v10694
    %10831 = vmatpush1.bf16.msra.mxu0 %v10693
    %10832 = vmatprep.subr.bf16.mxu0 %v10697
    %10833 = vmatpush1.bf16.msra.mxu0 %v10696
    %10834 = vmatprep.subr.bf16.mxu0 %v10700
    %10835 = vmatpush1.bf16.msra.mxu0 %v10699
    %10836 = vmatprep.subr.bf16.mxu0 %v10703
    %10837 = vmatpush1.bf16.msra.mxu0 %v10702
    %10838 = vmatprep.subr.bf16.mxu0 %v10706
    %10839 = vmatpush1.bf16.msra.mxu0 %v10705
    %10840 = vmatprep.subr.bf16.mxu0 %v10709
    %10841 = vmatpush1.bf16.msra.mxu0 %v10708
    %10842 = vmatprep.subr.bf16.mxu0 %v10712
    %10843 = vmatpush1.bf16.msra.mxu0 %v10711
    %10844 = vmatprep.subr.bf16.mxu0 %v10715
    %10845 = vmatpush1.bf16.msra.mxu0 %v10714
    %10846 = vmatprep.subr.bf16.mxu0 0
    %10847 = vmatpush1.bf16.msra.mxu0 0
    %10848 = vmatprep.subr.bf16.mxu0 0
    %10849 = vmatpush1.bf16.msra.mxu0 0
    %10850 = vmatprep.subr.bf16.mxu0 0
    %10851 = vmatpush1.bf16.msra.mxu0 0
    %10852 = vmatprep.subr.bf16.mxu0 0
    %10853 = vmatpush1.bf16.msra.mxu0 0
    %10854 = vmatprep.subr.bf16.mxu0 0
    %10855 = vmatpush1.bf16.msra.mxu0 0
    %10856 = vmatprep.subr.bf16.mxu0 0
    %10857 = vmatpush1.bf16.msra.mxu0 0
    %10858 = vmatprep.subr.bf16.mxu0 0
    %10859 = vmatpush1.bf16.msra.mxu0 0
    %10860 = vmatprep.subr.bf16.mxu0 0
    %10861 = vmatpush1.bf16.msra.mxu0 0
    %10862 = vmatprep.mubr.bf16.mxu0 0
    %10863 = vmatmul.mubr.bf16.gmra.mrb[0].mxu0 %v9576
    %v10864 = vpop.f32.mrb[0].mxu0
    %v10865 = vadd.f32 %v10824, %v10864
    %v10866 = vpop.f32.mrb[0].mxu0
    %v10867 = vadd.f32 %v10826, %v10866
    %v10868 = vpop.f32.mrb[0].mxu0
    %v10869 = vpop.f32.mrb[0].mxu0
    %10870 = vdwg.mxu0
    %10871 = vmatprep.subr.bf16.mxu0 0
    %10872 = vmatpush1.bf16.msra.mxu0 %v10647
    %10873 = vmatprep.subr.bf16.mxu0 0
    %10874 = vmatpush1.bf16.msra.mxu0 %v10650
    %10875 = vmatprep.subr.bf16.mxu0 0
    %10876 = vmatpush1.bf16.msra.mxu0 %v10653
    %10877 = vmatprep.subr.bf16.mxu0 0
    %10878 = vmatpush1.bf16.msra.mxu0 %v10656
    %10879 = vmatprep.subr.bf16.mxu0 0
    %10880 = vmatpush1.bf16.msra.mxu0 %v10659
    %10881 = vmatprep.subr.bf16.mxu0 0
    %10882 = vmatpush1.bf16.msra.mxu0 %v10662
    %10883 = vmatprep.subr.bf16.mxu0 0
    %10884 = vmatpush1.bf16.msra.mxu0 %v10665
    %10885 = vmatprep.subr.bf16.mxu0 0
    %10886 = vmatpush1.bf16.msra.mxu0 %v10668
    %10887 = vmatprep.subr.bf16.mxu0 0
    %10888 = vmatpush1.bf16.msra.mxu0 %v10671
    %10889 = vmatprep.subr.bf16.mxu0 0
    %10890 = vmatpush1.bf16.msra.mxu0 %v10674
    %10891 = vmatprep.subr.bf16.mxu0 0
    %10892 = vmatpush1.bf16.msra.mxu0 %v10677
    %10893 = vmatprep.subr.bf16.mxu0 0
    %10894 = vmatpush1.bf16.msra.mxu0 %v10680
    %10895 = vmatprep.subr.bf16.mxu0 0
    %10896 = vmatpush1.bf16.msra.mxu0 %v10683
    %10897 = vmatprep.subr.bf16.mxu0 0
    %10898 = vmatpush1.bf16.msra.mxu0 %v10686
    %10899 = vmatprep.subr.bf16.mxu0 0
    %10900 = vmatpush1.bf16.msra.mxu0 %v10689
    %10901 = vmatprep.subr.bf16.mxu0 0
    %10902 = vmatpush1.bf16.msra.mxu0 %v10692
    %10903 = vmatprep.mubr.bf16.mxu0 %v9575
    %10904 = vmatmul.mubr.bf16.gmra.mrb[0].mxu0 %v9574
    %v10905 = vpop.f32.mrb[0].mxu0
    %v10906 = vadd.f32 %v10400, %v10905
    %v10907 = vpop.f32.mrb[0].mxu0
    %v10908 = vpop.f32.mrb[0].mxu0
    %v10909 = vpop.f32.mrb[0].mxu0
    %10910 = vdwg.mxu0
    %10911 = vmatprep.subr.bf16.mxu0 0
    %10912 = vmatpush1.bf16.msra.mxu0 %v10695
    %10913 = vmatprep.subr.bf16.mxu0 0
    %10914 = vmatpush1.bf16.msra.mxu0 %v10698
    %10915 = vmatprep.subr.bf16.mxu0 0
    %10916 = vmatpush1.bf16.msra.mxu0 %v10701
    %10917 = vmatprep.subr.bf16.mxu0 0
    %10918 = vmatpush1.bf16.msra.mxu0 %v10704
    %10919 = vmatprep.subr.bf16.mxu0 0
    %10920 = vmatpush1.bf16.msra.mxu0 %v10707
    %10921 = vmatprep.subr.bf16.mxu0 0
    %10922 = vmatpush1.bf16.msra.mxu0 %v10710
    %10923 = vmatprep.subr.bf16.mxu0 0
    %10924 = vmatpush1.bf16.msra.mxu0 %v10713
    %10925 = vmatprep.subr.bf16.mxu0 0
    %10926 = vmatpush1.bf16.msra.mxu0 %v10716
    %10927 = vmatprep.subr.bf16.mxu0 0
    %10928 = vmatpush1.bf16.msra.mxu0 0
    %10929 = vmatprep.subr.bf16.mxu0 0
    %10930 = vmatpush1.bf16.msra.mxu0 0
    %10931 = vmatprep.subr.bf16.mxu0 0
    %10932 = vmatpush1.bf16.msra.mxu0 0
    %10933 = vmatprep.subr.bf16.mxu0 0
    %10934 = vmatpush1.bf16.msra.mxu0 0
    %10935 = vmatprep.subr.bf16.mxu0 0
    %10936 = vmatpush1.bf16.msra.mxu0 0
    %10937 = vmatprep.subr.bf16.mxu0 0
    %10938 = vmatpush1.bf16.msra.mxu0 0
    %10939 = vmatprep.subr.bf16.mxu0 0
    %10940 = vmatpush1.bf16.msra.mxu0 0
    %10941 = vmatprep.subr.bf16.mxu0 0
    %10942 = vmatpush1.bf16.msra.mxu0 0
    %10943 = vmatprep.mubr.bf16.mxu0 0
    %10944 = vmatmul.mubr.bf16.gmra.mrb[0].mxu0 %v9576
    %v10945 = vpop.f32.mrb[0].mxu0
    %v10946 = vadd.f32 %v10906, %v10945
    %v10947 = vpop.f32.mrb[0].mxu0
    %v10948 = vpop.f32.mrb[0].mxu0
    %v10949 = vpop.f32.mrb[0].mxu0
    %10950 = vdwg.mxu0
    %s10951 = scalar_lea.vmem %s11, 8
    %v10952 = vld [vmem:[%s10951] sm:$0xf]
    %v10954 = vsel %vm9479, %v10952, 0
    %10956 = vmatprep.subr.bf16.mxu0 %v9467
    %10957 = vmatpush1.bf16.msra.mxu0 %v9466
    %10958 = vmatprep.subr.bf16.mxu0 %v9470
    %10959 = vmatpush1.bf16.msra.mxu0 %v9469
    %10960 = vmatprep.subr.bf16.mxu0 %v9473
    %10961 = vmatpush1.bf16.msra.mxu0 %v9472
    %10962 = vmatprep.subr.bf16.mxu0 %v9488
    %10963 = vmatpush1.bf16.msra.mxu0 %v9485
    %10964 = vmatprep.subr.bf16.mxu0 0
    %10965 = vmatpush1.bf16.msra.mxu0 0
    %10966 = vmatprep.subr.bf16.mxu0 0
    %10967 = vmatpush1.bf16.msra.mxu0 0
    %10968 = vmatprep.subr.bf16.mxu0 0
    %10969 = vmatpush1.bf16.msra.mxu0 0
    %10970 = vmatprep.subr.bf16.mxu0 0
    %10971 = vmatpush1.bf16.msra.mxu0 0
    %10972 = vmatprep.subr.bf16.mxu0 0
    %10973 = vmatpush1.bf16.msra.mxu0 0
    %10974 = vmatprep.subr.bf16.mxu0 0
    %10975 = vmatpush1.bf16.msra.mxu0 0
    %10976 = vmatprep.subr.bf16.mxu0 0
    %10977 = vmatpush1.bf16.msra.mxu0 0
    %10978 = vmatprep.subr.bf16.mxu0 0
    %10979 = vmatpush1.bf16.msra.mxu0 0
    %10980 = vmatprep.subr.bf16.mxu0 0
    %10981 = vmatpush1.bf16.msra.mxu0 0
    %10982 = vmatprep.subr.bf16.mxu0 0
    %10983 = vmatpush1.bf16.msra.mxu0 0
    %10984 = vmatprep.subr.bf16.mxu0 0
    %10985 = vmatpush1.bf16.msra.mxu0 0
    %10986 = vmatprep.subr.bf16.mxu0 0
    %10987 = vmatpush1.bf16.msra.mxu0 0
    %10988 = vmatprep.mubr.bf16.mxu0 0
    %10989 = vmatmul.mubr.bf16.gmra.mrb[0].mxu0 %v10954
    %v10990 = vpop.f32.mrb[0].mxu0
    %v10991 = vadd.f32 0.0, %v10990
    %v10992 = vpop.f32.mrb[0].mxu0
    %v10993 = vadd.f32 0.0, %v10992
    %v10994 = vpop.f32.mrb[0].mxu0
    %v10995 = vpop.f32.mrb[0].mxu0
    %10996 = vdwg.mxu0
    %10997 = vmatprep.subr.bf16.mxu0 0
    %10998 = vmatpush1.bf16.msra.mxu0 %v9468
    %10999 = vmatprep.subr.bf16.mxu0 0
    %11000 = vmatpush1.bf16.msra.mxu0 %v9471
    %11001 = vmatprep.subr.bf16.mxu0 0
    %11002 = vmatpush1.bf16.msra.mxu0 %v9474
    %11003 = vmatprep.subr.bf16.mxu0 0
    %11004 = vmatpush1.bf16.msra.mxu0 %v9491
    %11005 = vmatprep.subr.bf16.mxu0 0
    %11006 = vmatpush1.bf16.msra.mxu0 0
    %11007 = vmatprep.subr.bf16.mxu0 0
    %11008 = vmatpush1.bf16.msra.mxu0 0
    %11009 = vmatprep.subr.bf16.mxu0 0
    %11010 = vmatpush1.bf16.msra.mxu0 0
    %11011 = vmatprep.subr.bf16.mxu0 0
    %11012 = vmatpush1.bf16.msra.mxu0 0
    %11013 = vmatprep.subr.bf16.mxu0 0
    %11014 = vmatpush1.bf16.msra.mxu0 0
    %11015 = vmatprep.subr.bf16.mxu0 0
    %11016 = vmatpush1.bf16.msra.mxu0 0
    %11017 = vmatprep.subr.bf16.mxu0 0
    %11018 = vmatpush1.bf16.msra.mxu0 0
    %11019 = vmatprep.subr.bf16.mxu0 0
    %11020 = vmatpush1.bf16.msra.mxu0 0
    %11021 = vmatprep.subr.bf16.mxu0 0
    %11022 = vmatpush1.bf16.msra.mxu0 0
    %11023 = vmatprep.subr.bf16.mxu0 0
    %11024 = vmatpush1.bf16.msra.mxu0 0
    %11025 = vmatprep.subr.bf16.mxu0 0
    %11026 = vmatpush1.bf16.msra.mxu0 0
    %11027 = vmatprep.subr.bf16.mxu0 0
    %11028 = vmatpush1.bf16.msra.mxu0 0
    %11029 = vmatprep.mubr.bf16.mxu0 0
    %11030 = vmatmul.mubr.bf16.gmra.mrb[0].mxu0 %v10954
    %v11031 = vpop.f32.mrb[0].mxu0
    %v11032 = vadd.f32 0.0, %v11031
    %v11033 = vpop.f32.mrb[0].mxu0
    %v11034 = vpop.f32.mrb[0].mxu0
    %v11035 = vpop.f32.mrb[0].mxu0
    %11036 = vdwg.mxu0
    %v11037 = vpack.c.bf16 %v10991, %v10991
    %v11038 = vpack.c.bf16 %v10993, %v10993
    %v11039 = vpack.c.bf16 %v11032, %v11032
    %s11040 = scalar_lea.vmem %s7, 1152
    %v11041 = vld [vmem:[%s11040] sm:$0xff]
    %v11042 = vld [vmem:[%s11040 + $0x8] sm:$0xf]
    %v11043 = vld [vmem:[%s11040 + $0xc] sm:$0xff]
    %v11044 = vld [vmem:[%s11040 + $0x14] sm:$0xf]
    %v11045 = vld [vmem:[%s11040 + $0x18] sm:$0xff]
    %v11046 = vld [vmem:[%s11040 + $0x20] sm:$0xf]
    %v11047 = vld [vmem:[%s11040 + $0x24] sm:$0xff]
    %v11048 = vld [vmem:[%s11040 + $0x2c] sm:$0xf]
    %v11049 = vld [vmem:[%s11040 + $0x30] sm:$0xff]
    %v11050 = vld [vmem:[%s11040 + $0x38] sm:$0xf]
    %v11051 = vld [vmem:[%s11040 + $0x3c] sm:$0xff]
    %v11052 = vld [vmem:[%s11040 + $0x44] sm:$0xf]
    %v11053 = vld [vmem:[%s11040 + $0x48] sm:$0xff]
    %v11054 = vld [vmem:[%s11040 + $0x50] sm:$0xf]
    %v11055 = vld [vmem:[%s11040 + $0x54] sm:$0xff]
    %v11056 = vld [vmem:[%s11040 + $0x5c] sm:$0xf]
    %v11057 = vld [vmem:[%s11040 + $0x60] sm:$0xff]
    %v11058 = vld [vmem:[%s11040 + $0x68] sm:$0xf]
    %v11059 = vld [vmem:[%s11040 + $0x6c] sm:$0xff]
    %v11060 = vld [vmem:[%s11040 + $0x74] sm:$0xf]
    %v11061 = vld [vmem:[%s11040 + $0x78] sm:$0xff]
    %v11062 = vld [vmem:[%s11040 + $0x80] sm:$0xf]
    %v11063 = vld [vmem:[%s11040 + $0x84] sm:$0xff]
    %v11064 = vld [vmem:[%s11040 + $0x8c] sm:$0xf]
    %v11065 = vld [vmem:[%s11040 + $0x90] sm:$0xff]
    %v11066 = vld [vmem:[%s11040 + $0x98] sm:$0xf]
    %v11067 = vld [vmem:[%s11040 + $0x9c] sm:$0xff]
    %v11068 = vld [vmem:[%s11040 + $0xa4] sm:$0xf]
    %v11069 = vld [vmem:[%s11040 + $0xa8] sm:$0xff]
    %v11070 = vld [vmem:[%s11040 + $0xb0] sm:$0xf]
    %v11071 = vld [vmem:[%s11040 + $0xb4] sm:$0xff]
    %v11072 = vld [vmem:[%s11040 + $0xbc] sm:$0xf]
    %v11073 = vld [vmem:[%s11040 + $0xc0] sm:$0xff]
    %v11074 = vld [vmem:[%s11040 + $0xc8] sm:$0xf]
    %v11075 = vld [vmem:[%s11040 + $0xcc] sm:$0xff]
    %v11076 = vld [vmem:[%s11040 + $0xd4] sm:$0xf]
    %v11077 = vld [vmem:[%s11040 + $0xd8] sm:$0xff]
    %v11078 = vld [vmem:[%s11040 + $0xe0] sm:$0xf]
    %v11079 = vld [vmem:[%s11040 + $0xe4] sm:$0xff]
    %v11080 = vld [vmem:[%s11040 + $0xec] sm:$0xf]
    %v11081 = vld [vmem:[%s11040 + $0xf0] sm:$0xff]
    %v11082 = vld [vmem:[%s11040 + $0xf8] sm:$0xf]
    %v11083 = vld [vmem:[%s11040 + $0xfc] sm:$0xff]
    %v11084 = vld [vmem:[%s11040 + $0x104] sm:$0xf]
    %v11085 = vld [vmem:[%s11040 + $0x108] sm:$0xff]
    %v11086 = vld [vmem:[%s11040 + $0x110] sm:$0xf]
    %v11087 = vld [vmem:[%s11040 + $0x114] sm:$0xff]
    %v11088 = vld [vmem:[%s11040 + $0x11c] sm:$0xf]
    %v11089 = vld [vmem:[%s11040 + $0x120] sm:$0xff]
    %v11090 = vld [vmem:[%s11040 + $0x128] sm:$0xf]
    %v11091 = vld [vmem:[%s11040 + $0x12c] sm:$0xff]
    %v11092 = vld [vmem:[%s11040 + $0x134] sm:$0xf]
    %v11093 = vld [vmem:[%s11040 + $0x138] sm:$0xff]
    %v11094 = vld [vmem:[%s11040 + $0x140] sm:$0xf]
    %v11095 = vld [vmem:[%s11040 + $0x144] sm:$0xff]
    %v11096 = vld [vmem:[%s11040 + $0x14c] sm:$0xf]
    %v11097 = vld [vmem:[%s11040 + $0x150] sm:$0xff]
    %v11098 = vld [vmem:[%s11040 + $0x158] sm:$0xf]
    %v11099 = vld [vmem:[%s11040 + $0x15c] sm:$0xff]
    %v11100 = vld [vmem:[%s11040 + $0x164] sm:$0xf]
    %v11101 = vld [vmem:[%s11040 + $0x168] sm:$0xff]
    %v11102 = vld [vmem:[%s11040 + $0x170] sm:$0xf]
    %v11103 = vld [vmem:[%s11040 + $0x174] sm:$0xff]
    %v11104 = vld [vmem:[%s11040 + $0x17c] sm:$0xf]
    %v11105 = vld [vmem:[%s11040 + $0x180] sm:$0xff]
    %v11106 = vld [vmem:[%s11040 + $0x188] sm:$0xf]
    %v11107 = vld [vmem:[%s11040 + $0x18c] sm:$0xff]
    %v11108 = vld [vmem:[%s11040 + $0x194] sm:$0xf]
    %v11109 = vld [vmem:[%s11040 + $0x198] sm:$0xff]
    %v11110 = vld [vmem:[%s11040 + $0x1a0] sm:$0xf]
    %v11111 = vld [vmem:[%s11040 + $0x1a4] sm:$0xff]
    %v11112 = vld [vmem:[%s11040 + $0x1ac] sm:$0xf]
    %v11113 = vld [vmem:[%s11040 + $0x1b0] sm:$0xff]
    %v11114 = vld [vmem:[%s11040 + $0x1b8] sm:$0xf]
    %v11115 = vld [vmem:[%s11040 + $0x1bc] sm:$0xff]
    %v11116 = vld [vmem:[%s11040 + $0x1c4] sm:$0xf]
    %v11117 = vld [vmem:[%s11040 + $0x1c8] sm:$0xff]
    %v11118 = vld [vmem:[%s11040 + $0x1d0] sm:$0xf]
    %v11119 = vld [vmem:[%s11040 + $0x1d4] sm:$0xff]
    %v11120 = vld [vmem:[%s11040 + $0x1dc] sm:$0xf]
    %v11121 = vld [vmem:[%s11040 + $0x1e0] sm:$0xff]
    %v11122 = vld [vmem:[%s11040 + $0x1e8] sm:$0xf]
    %v11123 = vld [vmem:[%s11040 + $0x1ec] sm:$0xff]
    %v11124 = vld [vmem:[%s11040 + $0x1f4] sm:$0xf]
    %v11125 = vld [vmem:[%s11040 + $0x1f8] sm:$0xff]
    %v11126 = vld [vmem:[%s11040 + $0x200] sm:$0xf]
    %v11127 = vld [vmem:[%s11040 + $0x204] sm:$0xff]
    %v11128 = vld [vmem:[%s11040 + $0x20c] sm:$0xf]
    %v11129 = vld [vmem:[%s11040 + $0x210] sm:$0xff]
    %v11130 = vld [vmem:[%s11040 + $0x218] sm:$0xf]
    %v11131 = vld [vmem:[%s11040 + $0x21c] sm:$0xff]
    %v11132 = vld [vmem:[%s11040 + $0x224] sm:$0xf]
    %v11133 = vld [vmem:[%s11040 + $0x228] sm:$0xff]
    %v11134 = vld [vmem:[%s11040 + $0x230] sm:$0xf]
    %v11135 = vld [vmem:[%s11040 + $0x234] sm:$0xff]
    %v11136 = vld [vmem:[%s11040 + $0x23c] sm:$0xf]
    %v11233 = vunpack.c.l.b16 %v11041
    %v11234 = vunpack.c.h.b16 %v11041
    %v11235 = vunpack.c.l.b16 %v11042
    %v11236 = vunpack.c.l.b16 %v11043
    %v11237 = vunpack.c.h.b16 %v11043
    %v11238 = vunpack.c.l.b16 %v11044
    %v11239 = vunpack.c.l.b16 %v11045
    %v11240 = vunpack.c.h.b16 %v11045
    %v11241 = vunpack.c.l.b16 %v11046
    %v11242 = vunpack.c.l.b16 %v11047
    %v11243 = vunpack.c.h.b16 %v11047
    %v11244 = vunpack.c.l.b16 %v11048
    %v11245 = vunpack.c.l.b16 %v11049
    %v11246 = vunpack.c.h.b16 %v11049
    %v11247 = vunpack.c.l.b16 %v11050
    %v11248 = vunpack.c.l.b16 %v11051
    %v11249 = vunpack.c.h.b16 %v11051
    %v11250 = vunpack.c.l.b16 %v11052
    %v11251 = vunpack.c.l.b16 %v11053
    %v11252 = vunpack.c.h.b16 %v11053
    %v11253 = vunpack.c.l.b16 %v11054
    %v11254 = vunpack.c.l.b16 %v11055
    %v11255 = vunpack.c.h.b16 %v11055
    %v11256 = vunpack.c.l.b16 %v11056
    %v11257 = vunpack.c.l.b16 %v11057
    %v11258 = vunpack.c.h.b16 %v11057
    %v11259 = vunpack.c.l.b16 %v11058
    %v11260 = vunpack.c.l.b16 %v11059
    %v11261 = vunpack.c.h.b16 %v11059
    %v11262 = vunpack.c.l.b16 %v11060
    %v11263 = vunpack.c.l.b16 %v11061
    %v11264 = vunpack.c.h.b16 %v11061
    %v11265 = vunpack.c.l.b16 %v11062
    %v11266 = vunpack.c.l.b16 %v11063
    %v11267 = vunpack.c.h.b16 %v11063
    %v11268 = vunpack.c.l.b16 %v11064
    %v11269 = vunpack.c.l.b16 %v11065
    %v11270 = vunpack.c.h.b16 %v11065
    %v11271 = vunpack.c.l.b16 %v11066
    %v11272 = vunpack.c.l.b16 %v11067
    %v11273 = vunpack.c.h.b16 %v11067
    %v11274 = vunpack.c.l.b16 %v11068
    %v11275 = vunpack.c.l.b16 %v11069
    %v11276 = vunpack.c.h.b16 %v11069
    %v11277 = vunpack.c.l.b16 %v11070
    %v11278 = vunpack.c.l.b16 %v11071
    %v11279 = vunpack.c.h.b16 %v11071
    %v11280 = vunpack.c.l.b16 %v11072
    %v11281 = vunpack.c.l.b16 %v11073
    %v11282 = vunpack.c.h.b16 %v11073
    %v11283 = vunpack.c.l.b16 %v11074
    %v11284 = vunpack.c.l.b16 %v11075
    %v11285 = vunpack.c.h.b16 %v11075
    %v11286 = vunpack.c.l.b16 %v11076
    %v11287 = vunpack.c.l.b16 %v11077
    %v11288 = vunpack.c.h.b16 %v11077
    %v11289 = vunpack.c.l.b16 %v11078
    %v11290 = vunpack.c.l.b16 %v11079
    %v11291 = vunpack.c.h.b16 %v11079
    %v11292 = vunpack.c.l.b16 %v11080
    %v11293 = vunpack.c.l.b16 %v11081
    %v11294 = vunpack.c.h.b16 %v11081
    %v11295 = vunpack.c.l.b16 %v11082
    %v11296 = vunpack.c.l.b16 %v11083
    %v11297 = vunpack.c.h.b16 %v11083
    %v11298 = vunpack.c.l.b16 %v11084
    %v11299 = vunpack.c.l.b16 %v11085
    %v11300 = vunpack.c.h.b16 %v11085
    %v11301 = vunpack.c.l.b16 %v11086
    %v11302 = vunpack.c.l.b16 %v11087
    %v11303 = vunpack.c.h.b16 %v11087
    %v11304 = vunpack.c.l.b16 %v11088
    %v11305 = vunpack.c.l.b16 %v11089
    %v11306 = vunpack.c.h.b16 %v11089
    %v11307 = vunpack.c.l.b16 %v11090
    %v11308 = vunpack.c.l.b16 %v11091
    %v11309 = vunpack.c.h.b16 %v11091
    %v11310 = vunpack.c.l.b16 %v11092
    %v11311 = vunpack.c.l.b16 %v11093
    %v11312 = vunpack.c.h.b16 %v11093
    %v11313 = vunpack.c.l.b16 %v11094
    %v11314 = vunpack.c.l.b16 %v11095
    %v11315 = vunpack.c.h.b16 %v11095
    %v11316 = vunpack.c.l.b16 %v11096
    %v11317 = vunpack.c.l.b16 %v11097
    %v11318 = vunpack.c.h.b16 %v11097
    %v11319 = vunpack.c.l.b16 %v11098
    %v11320 = vunpack.c.l.b16 %v11099
    %v11321 = vunpack.c.h.b16 %v11099
    %v11322 = vunpack.c.l.b16 %v11100
    %v11323 = vunpack.c.l.b16 %v11101
    %v11324 = vunpack.c.h.b16 %v11101
    %v11325 = vunpack.c.l.b16 %v11102
    %v11326 = vunpack.c.l.b16 %v11103
    %v11327 = vunpack.c.h.b16 %v11103
    %v11328 = vunpack.c.l.b16 %v11104
    %v11329 = vunpack.c.l.b16 %v11105
    %v11330 = vunpack.c.h.b16 %v11105
    %v11331 = vunpack.c.l.b16 %v11106
    %v11332 = vunpack.c.l.b16 %v11107
    %v11333 = vunpack.c.h.b16 %v11107
    %v11334 = vunpack.c.l.b16 %v11108
    %v11335 = vunpack.c.l.b16 %v11109
    %v11336 = vunpack.c.h.b16 %v11109
    %v11337 = vunpack.c.l.b16 %v11110
    %v11338 = vunpack.c.l.b16 %v11111
    %v11339 = vunpack.c.h.b16 %v11111
    %v11340 = vunpack.c.l.b16 %v11112
    %v11341 = vunpack.c.l.b16 %v11113
    %v11342 = vunpack.c.h.b16 %v11113
    %v11343 = vunpack.c.l.b16 %v11114
    %v11344 = vunpack.c.l.b16 %v11115
    %v11345 = vunpack.c.h.b16 %v11115
    %v11346 = vunpack.c.l.b16 %v11116
    %v11347 = vunpack.c.l.b16 %v11117
    %v11348 = vunpack.c.h.b16 %v11117
    %v11349 = vunpack.c.l.b16 %v11118
    %v11350 = vunpack.c.l.b16 %v11119
    %v11351 = vunpack.c.h.b16 %v11119
    %v11352 = vunpack.c.l.b16 %v11120
    %v11353 = vunpack.c.l.b16 %v11121
    %v11354 = vunpack.c.h.b16 %v11121
    %v11355 = vunpack.c.l.b16 %v11122
    %v11356 = vunpack.c.l.b16 %v11123
    %v11357 = vunpack.c.h.b16 %v11123
    %v11358 = vunpack.c.l.b16 %v11124
    %v11359 = vunpack.c.l.b16 %v11125
    %v11360 = vunpack.c.h.b16 %v11125
    %v11361 = vunpack.c.l.b16 %v11126
    %v11362 = vunpack.c.l.b16 %v11127
    %v11363 = vunpack.c.h.b16 %v11127
    %v11364 = vunpack.c.l.b16 %v11128
    %v11365 = vunpack.c.l.b16 %v11129
    %v11366 = vunpack.c.h.b16 %v11129
    %v11367 = vunpack.c.l.b16 %v11130
    %v11368 = vunpack.c.l.b16 %v11131
    %v11369 = vunpack.c.h.b16 %v11131
    %v11370 = vunpack.c.l.b16 %v11132
    %v11371 = vunpack.c.l.b16 %v11133
    %v11372 = vunpack.c.h.b16 %v11133
    %v11373 = vunpack.c.l.b16 %v11134
    %v11374 = vunpack.c.l.b16 %v11135
    %v11375 = vunpack.c.h.b16 %v11135
    %v11376 = vunpack.c.l.b16 %v11136
    %v11377 = vpack.c.b16 %v11236, %v11233
    %v11378 = vpack.c.b16 %v11237, %v11234
    %v11379 = vpack.c.b16 %v11238, %v11235
    %v11380 = vpack.c.b16 %v11242, %v11239
    %v11381 = vpack.c.b16 %v11243, %v11240
    %v11382 = vpack.c.b16 %v11244, %v11241
    %v11383 = vpack.c.b16 %v11248, %v11245
    %v11384 = vpack.c.b16 %v11249, %v11246
    %v11385 = vpack.c.b16 %v11250, %v11247
    %v11386 = vpack.c.b16 %v11254, %v11251
    %v11387 = vpack.c.b16 %v11255, %v11252
    %v11388 = vpack.c.b16 %v11256, %v11253
    %v11389 = vpack.c.b16 %v11260, %v11257
    %v11390 = vpack.c.b16 %v11261, %v11258
    %v11391 = vpack.c.b16 %v11262, %v11259
    %v11392 = vpack.c.b16 %v11266, %v11263
    %v11393 = vpack.c.b16 %v11267, %v11264
    %v11394 = vpack.c.b16 %v11268, %v11265
    %v11395 = vpack.c.b16 %v11272, %v11269
    %v11396 = vpack.c.b16 %v11273, %v11270
    %v11397 = vpack.c.b16 %v11274, %v11271
    %v11398 = vpack.c.b16 %v11278, %v11275
    %v11399 = vpack.c.b16 %v11279, %v11276
    %v11400 = vpack.c.b16 %v11280, %v11277
    %v11401 = vpack.c.b16 %v11284, %v11281
    %v11402 = vpack.c.b16 %v11285, %v11282
    %v11403 = vpack.c.b16 %v11286, %v11283
    %v11404 = vpack.c.b16 %v11290, %v11287
    %v11405 = vpack.c.b16 %v11291, %v11288
    %v11406 = vpack.c.b16 %v11292, %v11289
    %v11407 = vpack.c.b16 %v11296, %v11293
    %v11408 = vpack.c.b16 %v11297, %v11294
    %v11409 = vpack.c.b16 %v11298, %v11295
    %v11410 = vpack.c.b16 %v11302, %v11299
    %v11411 = vpack.c.b16 %v11303, %v11300
    %v11412 = vpack.c.b16 %v11304, %v11301
    %v11413 = vpack.c.b16 %v11308, %v11305
    %v11414 = vpack.c.b16 %v11309, %v11306
    %v11415 = vpack.c.b16 %v11310, %v11307
    %v11416 = vpack.c.b16 %v11314, %v11311
    %v11417 = vpack.c.b16 %v11315, %v11312
    %v11418 = vpack.c.b16 %v11316, %v11313
    %v11419 = vpack.c.b16 %v11320, %v11317
    %v11420 = vpack.c.b16 %v11321, %v11318
    %v11421 = vpack.c.b16 %v11322, %v11319
    %v11422 = vpack.c.b16 %v11326, %v11323
    %v11423 = vpack.c.b16 %v11327, %v11324
    %v11424 = vpack.c.b16 %v11328, %v11325
    %v11425 = vpack.c.b16 %v11332, %v11329
    %v11426 = vpack.c.b16 %v11333, %v11330
    %v11427 = vpack.c.b16 %v11334, %v11331
    %v11428 = vpack.c.b16 %v11338, %v11335
    %v11429 = vpack.c.b16 %v11339, %v11336
    %v11430 = vpack.c.b16 %v11340, %v11337
    %v11431 = vpack.c.b16 %v11344, %v11341
    %v11432 = vpack.c.b16 %v11345, %v11342
    %v11433 = vpack.c.b16 %v11346, %v11343
    %v11434 = vpack.c.b16 %v11350, %v11347
    %v11435 = vpack.c.b16 %v11351, %v11348
    %v11436 = vpack.c.b16 %v11352, %v11349
    %v11437 = vpack.c.b16 %v11356, %v11353
    %v11438 = vpack.c.b16 %v11357, %v11354
    %v11439 = vpack.c.b16 %v11358, %v11355
    %v11440 = vpack.c.b16 %v11362, %v11359
    %v11441 = vpack.c.b16 %v11363, %v11360
    %v11442 = vpack.c.b16 %v11364, %v11361
    %v11443 = vpack.c.b16 %v11368, %v11365
    %v11444 = vpack.c.b16 %v11369, %v11366
    %v11445 = vpack.c.b16 %v11370, %v11367
    %v11446 = vpack.c.b16 %v11374, %v11371
    %v11447 = vpack.c.b16 %v11375, %v11372
    %v11448 = vpack.c.b16 %v11376, %v11373
    %11521 = vmatprep.subr.bf16.mxu0 %v11378
    %11522 = vmatpush1.bf16.msra.mxu0 %v11377
    %11523 = vmatprep.subr.bf16.mxu0 %v11381
    %11524 = vmatpush1.bf16.msra.mxu0 %v11380
    %11525 = vmatprep.subr.bf16.mxu0 %v11384
    %11526 = vmatpush1.bf16.msra.mxu0 %v11383
    %11527 = vmatprep.subr.bf16.mxu0 %v11387
    %11528 = vmatpush1.bf16.msra.mxu0 %v11386
    %11529 = vmatprep.subr.bf16.mxu0 %v11390
    %11530 = vmatpush1.bf16.msra.mxu0 %v11389
    %11531 = vmatprep.subr.bf16.mxu0 %v11393
    %11532 = vmatpush1.bf16.msra.mxu0 %v11392
    %11533 = vmatprep.subr.bf16.mxu0 %v11396
    %11534 = vmatpush1.bf16.msra.mxu0 %v11395
    %11535 = vmatprep.subr.bf16.mxu0 %v11399
    %11536 = vmatpush1.bf16.msra.mxu0 %v11398
    %11537 = vmatprep.subr.bf16.mxu0 %v11402
    %11538 = vmatpush1.bf16.msra.mxu0 %v11401
    %11539 = vmatprep.subr.bf16.mxu0 %v11405
    %11540 = vmatpush1.bf16.msra.mxu0 %v11404
    %11541 = vmatprep.subr.bf16.mxu0 %v11408
    %11542 = vmatpush1.bf16.msra.mxu0 %v11407
    %11543 = vmatprep.subr.bf16.mxu0 %v11411
    %11544 = vmatpush1.bf16.msra.mxu0 %v11410
    %11545 = vmatprep.subr.bf16.mxu0 %v11414
    %11546 = vmatpush1.bf16.msra.mxu0 %v11413
    %11547 = vmatprep.subr.bf16.mxu0 %v11417
    %11548 = vmatpush1.bf16.msra.mxu0 %v11416
    %11549 = vmatprep.subr.bf16.mxu0 %v11420
    %11550 = vmatpush1.bf16.msra.mxu0 %v11419
    %11551 = vmatprep.subr.bf16.mxu0 %v11423
    %11552 = vmatpush1.bf16.msra.mxu0 %v11422
    %11553 = vmatprep.mubr.bf16.mxu0 %v11038
    %11554 = vmatmul.mubr.bf16.gmra.mrb[0].mxu0 %v11037
    %v11555 = vpop.f32.mrb[0].mxu0
    %v11556 = vadd.f32 0.0, %v11555
    %v11557 = vpop.f32.mrb[0].mxu0
    %v11558 = vadd.f32 0.0, %v11557
    %v11559 = vpop.f32.mrb[0].mxu0
    %v11560 = vpop.f32.mrb[0].mxu0
    %11561 = vdwg.mxu0
    %11562 = vmatprep.subr.bf16.mxu0 %v11426
    %11563 = vmatpush1.bf16.msra.mxu0 %v11425
    %11564 = vmatprep.subr.bf16.mxu0 %v11429
    %11565 = vmatpush1.bf16.msra.mxu0 %v11428
    %11566 = vmatprep.subr.bf16.mxu0 %v11432
    %11567 = vmatpush1.bf16.msra.mxu0 %v11431
    %11568 = vmatprep.subr.bf16.mxu0 %v11435
    %11569 = vmatpush1.bf16.msra.mxu0 %v11434
    %11570 = vmatprep.subr.bf16.mxu0 %v11438
    %11571 = vmatpush1.bf16.msra.mxu0 %v11437
    %11572 = vmatprep.subr.bf16.mxu0 %v11441
    %11573 = vmatpush1.bf16.msra.mxu0 %v11440
    %11574 = vmatprep.subr.bf16.mxu0 %v11444
    %11575 = vmatpush1.bf16.msra.mxu0 %v11443
    %11576 = vmatprep.subr.bf16.mxu0 %v11447
    %11577 = vmatpush1.bf16.msra.mxu0 %v11446
    %11578 = vmatprep.subr.bf16.mxu0 0
    %11579 = vmatpush1.bf16.msra.mxu0 0
    %11580 = vmatprep.subr.bf16.mxu0 0
    %11581 = vmatpush1.bf16.msra.mxu0 0
    %11582 = vmatprep.subr.bf16.mxu0 0
    %11583 = vmatpush1.bf16.msra.mxu0 0
    %11584 = vmatprep.subr.bf16.mxu0 0
    %11585 = vmatpush1.bf16.msra.mxu0 0
    %11586 = vmatprep.subr.bf16.mxu0 0
    %11587 = vmatpush1.bf16.msra.mxu0 0
    %11588 = vmatprep.subr.bf16.mxu0 0
    %11589 = vmatpush1.bf16.msra.mxu0 0
    %11590 = vmatprep.subr.bf16.mxu0 0
    %11591 = vmatpush1.bf16.msra.mxu0 0
    %11592 = vmatprep.subr.bf16.mxu0 0
    %11593 = vmatpush1.bf16.msra.mxu0 0
    %11594 = vmatprep.mubr.bf16.mxu0 0
    %11595 = vmatmul.mubr.bf16.gmra.mrb[0].mxu0 %v11039
    %v11596 = vpop.f32.mrb[0].mxu0
    %v11597 = vadd.f32 %v11556, %v11596
    %v11598 = vpop.f32.mrb[0].mxu0
    %v11599 = vadd.f32 %v11558, %v11598
    %v11600 = vpop.f32.mrb[0].mxu0
    %v11601 = vpop.f32.mrb[0].mxu0
    %11602 = vdwg.mxu0
    %11603 = vmatprep.subr.bf16.mxu0 0
    %11604 = vmatpush1.bf16.msra.mxu0 %v11379
    %11605 = vmatprep.subr.bf16.mxu0 0
    %11606 = vmatpush1.bf16.msra.mxu0 %v11382
    %11607 = vmatprep.subr.bf16.mxu0 0
    %11608 = vmatpush1.bf16.msra.mxu0 %v11385
    %11609 = vmatprep.subr.bf16.mxu0 0
    %11610 = vmatpush1.bf16.msra.mxu0 %v11388
    %11611 = vmatprep.subr.bf16.mxu0 0
    %11612 = vmatpush1.bf16.msra.mxu0 %v11391
    %11613 = vmatprep.subr.bf16.mxu0 0
    %11614 = vmatpush1.bf16.msra.mxu0 %v11394
    %11615 = vmatprep.subr.bf16.mxu0 0
    %11616 = vmatpush1.bf16.msra.mxu0 %v11397
    %11617 = vmatprep.subr.bf16.mxu0 0
    %11618 = vmatpush1.bf16.msra.mxu0 %v11400
    %11619 = vmatprep.subr.bf16.mxu0 0
    %11620 = vmatpush1.bf16.msra.mxu0 %v11403
    %11621 = vmatprep.subr.bf16.mxu0 0
    %11622 = vmatpush1.bf16.msra.mxu0 %v11406
    %11623 = vmatprep.subr.bf16.mxu0 0
    %11624 = vmatpush1.bf16.msra.mxu0 %v11409
    %11625 = vmatprep.subr.bf16.mxu0 0
    %11626 = vmatpush1.bf16.msra.mxu0 %v11412
    %11627 = vmatprep.subr.bf16.mxu0 0
    %11628 = vmatpush1.bf16.msra.mxu0 %v11415
    %11629 = vmatprep.subr.bf16.mxu0 0
    %11630 = vmatpush1.bf16.msra.mxu0 %v11418
    %11631 = vmatprep.subr.bf16.mxu0 0
    %11632 = vmatpush1.bf16.msra.mxu0 %v11421
    %11633 = vmatprep.subr.bf16.mxu0 0
    %11634 = vmatpush1.bf16.msra.mxu0 %v11424
    %11635 = vmatprep.mubr.bf16.mxu0 %v11038
    %11636 = vmatmul.mubr.bf16.gmra.mrb[0].mxu0 %v11037
    %v11637 = vpop.f32.mrb[0].mxu0
    %v11638 = vadd.f32 0.0, %v11637
    %v11639 = vpop.f32.mrb[0].mxu0
    %v11640 = vpop.f32.mrb[0].mxu0
    %v11641 = vpop.f32.mrb[0].mxu0
    %11642 = vdwg.mxu0
    %11643 = vmatprep.subr.bf16.mxu0 0
    %11644 = vmatpush1.bf16.msra.mxu0 %v11427
    %11645 = vmatprep.subr.bf16.mxu0 0
    %11646 = vmatpush1.bf16.msra.mxu0 %v11430
    %11647 = vmatprep.subr.bf16.mxu0 0
    %11648 = vmatpush1.bf16.msra.mxu0 %v11433
    %11649 = vmatprep.subr.bf16.mxu0 0
    %11650 = vmatpush1.bf16.msra.mxu0 %v11436
    %11651 = vmatprep.subr.bf16.mxu0 0
    %11652 = vmatpush1.bf16.msra.mxu0 %v11439
    %11653 = vmatprep.subr.bf16.mxu0 0
    %11654 = vmatpush1.bf16.msra.mxu0 %v11442
    %11655 = vmatprep.subr.bf16.mxu0 0
    %11656 = vmatpush1.bf16.msra.mxu0 %v11445
    %11657 = vmatprep.subr.bf16.mxu0 0
    %11658 = vmatpush1.bf16.msra.mxu0 %v11448
    %11659 = vmatprep.subr.bf16.mxu0 0
    %11660 = vmatpush1.bf16.msra.mxu0 0
    %11661 = vmatprep.subr.bf16.mxu0 0
    %11662 = vmatpush1.bf16.msra.mxu0 0
    %11663 = vmatprep.subr.bf16.mxu0 0
    %11664 = vmatpush1.bf16.msra.mxu0 0
    %11665 = vmatprep.subr.bf16.mxu0 0
    %11666 = vmatpush1.bf16.msra.mxu0 0
    %11667 = vmatprep.subr.bf16.mxu0 0
    %11668 = vmatpush1.bf16.msra.mxu0 0
    %11669 = vmatprep.subr.bf16.mxu0 0
    %11670 = vmatpush1.bf16.msra.mxu0 0
    %11671 = vmatprep.subr.bf16.mxu0 0
    %11672 = vmatpush1.bf16.msra.mxu0 0
    %11673 = vmatprep.subr.bf16.mxu0 0
    %11674 = vmatpush1.bf16.msra.mxu0 0
    %11675 = vmatprep.mubr.bf16.mxu0 0
    %11676 = vmatmul.mubr.bf16.gmra.mrb[0].mxu0 %v11039
    %v11677 = vpop.f32.mrb[0].mxu0
    %v11678 = vadd.f32 %v11638, %v11677
    %v11679 = vpop.f32.mrb[0].mxu0
    %v11680 = vpop.f32.mrb[0].mxu0
    %v11681 = vpop.f32.mrb[0].mxu0
    %11682 = vdwg.mxu0
    %v11683 = vadd.f32 %v10865, %v11597
    %v11684 = vadd.f32 %v10867, %v11599
    %v11685 = vadd.f32 %v10946, %v11678
    %v11686 = vld [vmem:[%s8] sm:$0x7]
    %v11688 = vlaneseq
    %v11689 = vshrl.u32 %v11688, 7
    %v11690 = vsub.s32 0, %v11689
    %v11691 = vrot.slane %v11686, %v11690
    %v11692 = vlaneseq
    %v11693 = vshrl.u32 %v11692, 7
    %v11694 = vsub.s32 1, %v11693
    %v11695 = vrot.slane %v11686, %v11694
    %v11696 = vlaneseq
    %v11697 = vshrl.u32 %v11696, 7
    %v11698 = vsub.s32 2, %v11697
    %v11699 = vrot.slane %v11686, %v11698
    %v11703 = vadd.f32 %v11683, %v11691
    %v11704 = vadd.f32 %v11684, %v11695
    %v11705 = vadd.f32 %v11685, %v11699
    %v11706 = vtanh.pop %v11703
    %v11707 = vtanh.pop %v11704
    %v11708 = vtanh.pop %v11705
    %v11709 = vpack.c.bf16 %v11706, %v11706
    %v11710 = vpack.c.bf16 %v11707, %v11707
    %v11711 = vpack.c.bf16 %v11708, %v11708
    %v11712 = vld [vmem:[%s9] sm:$0xf]
    %v11713 = vld [vmem:[%s9 + $0x4] sm:$0xf]
    %v11714 = vld [vmem:[%s9 + $0x8] sm:$0xf]
    %v11715 = vld [vmem:[%s9 + $0xc] sm:$0xf]
    %v11716 = vld [vmem:[%s9 + $0x10] sm:$0xf]
    %v11717 = vld [vmem:[%s9 + $0x14] sm:$0xf]
    %v11718 = vld [vmem:[%s9 + $0x18] sm:$0xf]
    %v11719 = vld [vmem:[%s9 + $0x1c] sm:$0xf]
    %v11720 = vld [vmem:[%s9 + $0x20] sm:$0xf]
    %v11721 = vld [vmem:[%s9 + $0x24] sm:$0xf]
    %v11722 = vld [vmem:[%s9 + $0x28] sm:$0xf]
    %v11723 = vld [vmem:[%s9 + $0x2c] sm:$0xf]
    %v11724 = vld [vmem:[%s9 + $0x30] sm:$0xf]
    %v11725 = vld [vmem:[%s9 + $0x34] sm:$0xf]
    %v11726 = vld [vmem:[%s9 + $0x38] sm:$0xf]
    %v11727 = vld [vmem:[%s9 + $0x3c] sm:$0xf]
    %v11728 = vld [vmem:[%s9 + $0x40] sm:$0xf]
    %v11729 = vld [vmem:[%s9 + $0x44] sm:$0xf]
    %v11730 = vld [vmem:[%s9 + $0x48] sm:$0xf]
    %v11731 = vld [vmem:[%s9 + $0x4c] sm:$0xf]
    %v11732 = vld [vmem:[%s9 + $0x50] sm:$0xf]
    %v11733 = vld [vmem:[%s9 + $0x54] sm:$0xf]
    %v11734 = vld [vmem:[%s9 + $0x58] sm:$0xf]
    %v11735 = vld [vmem:[%s9 + $0x5c] sm:$0xf]
    %v11736 = vld [vmem:[%s9 + $0x60] sm:$0xf]
    %v11737 = vld [vmem:[%s9 + $0x64] sm:$0xf]
    %v11738 = vld [vmem:[%s9 + $0x68] sm:$0xf]
    %v11739 = vld [vmem:[%s9 + $0x6c] sm:$0xf]
    %v11740 = vld [vmem:[%s9 + $0x70] sm:$0xf]
    %v11741 = vld [vmem:[%s9 + $0x74] sm:$0xf]
    %v11742 = vld [vmem:[%s9 + $0x78] sm:$0xf]
    %v11743 = vld [vmem:[%s9 + $0x7c] sm:$0xf]
    %v11744 = vld [vmem:[%s9 + $0x80] sm:$0xf]
    %v11745 = vld [vmem:[%s9 + $0x84] sm:$0xf]
    %v11746 = vld [vmem:[%s9 + $0x88] sm:$0xf]
    %v11747 = vld [vmem:[%s9 + $0x8c] sm:$0xf]
    %v11748 = vld [vmem:[%s9 + $0x90] sm:$0xf]
    %v11749 = vld [vmem:[%s9 + $0x94] sm:$0xf]
    %v11750 = vld [vmem:[%s9 + $0x98] sm:$0xf]
    %v11751 = vld [vmem:[%s9 + $0x9c] sm:$0xf]
    %v11752 = vld [vmem:[%s9 + $0xa0] sm:$0xf]
    %v11753 = vld [vmem:[%s9 + $0xa4] sm:$0xf]
    %v11754 = vld [vmem:[%s9 + $0xa8] sm:$0xf]
    %v11755 = vld [vmem:[%s9 + $0xac] sm:$0xf]
    %v11756 = vld [vmem:[%s9 + $0xb0] sm:$0xf]
    %v11757 = vld [vmem:[%s9 + $0xb4] sm:$0xf]
    %v11758 = vld [vmem:[%s9 + $0xb8] sm:$0xf]
    %v11759 = vld [vmem:[%s9 + $0xbc] sm:$0xf]
    %v11760 = vld [vmem:[%s10] sm:$0x1]
    %v11762 = vlaneseq
    %v11763 = vshrl.u32 %v11762, 7
    %v11764 = vsub.s32 0, %v11763
    %v11765 = vrot.slane %v11760, %v11764
    %v11815 = vunpack.c.l.b16 %v11712
    %v11816 = vunpack.c.l.b16 %v11713
    %v11817 = vunpack.c.l.b16 %v11714
    %v11818 = vunpack.c.l.b16 %v11715
    %v11819 = vunpack.c.l.b16 %v11716
    %v11820 = vunpack.c.l.b16 %v11717
    %v11821 = vunpack.c.l.b16 %v11718
    %v11822 = vunpack.c.l.b16 %v11719
    %v11823 = vunpack.c.l.b16 %v11720
    %v11824 = vunpack.c.l.b16 %v11721
    %v11825 = vunpack.c.l.b16 %v11722
    %v11826 = vunpack.c.l.b16 %v11723
    %v11827 = vunpack.c.l.b16 %v11724
    %v11828 = vunpack.c.l.b16 %v11725
    %v11829 = vunpack.c.l.b16 %v11726
    %v11830 = vunpack.c.l.b16 %v11727
    %v11831 = vunpack.c.l.b16 %v11728
    %v11832 = vunpack.c.l.b16 %v11729
    %v11833 = vunpack.c.l.b16 %v11730
    %v11834 = vunpack.c.l.b16 %v11731
    %v11835 = vunpack.c.l.b16 %v11732
    %v11836 = vunpack.c.l.b16 %v11733
    %v11837 = vunpack.c.l.b16 %v11734
    %v11838 = vunpack.c.l.b16 %v11735
    %v11839 = vunpack.c.l.b16 %v11736
    %v11840 = vunpack.c.l.b16 %v11737
    %v11841 = vunpack.c.l.b16 %v11738
    %v11842 = vunpack.c.l.b16 %v11739
    %v11843 = vunpack.c.l.b16 %v11740
    %v11844 = vunpack.c.l.b16 %v11741
    %v11845 = vunpack.c.l.b16 %v11742
    %v11846 = vunpack.c.l.b16 %v11743
    %v11847 = vunpack.c.l.b16 %v11744
    %v11848 = vunpack.c.l.b16 %v11745
    %v11849 = vunpack.c.l.b16 %v11746
    %v11850 = vunpack.c.l.b16 %v11747
    %v11851 = vunpack.c.l.b16 %v11748
    %v11852 = vunpack.c.l.b16 %v11749
    %v11853 = vunpack.c.l.b16 %v11750
    %v11854 = vunpack.c.l.b16 %v11751
    %v11855 = vunpack.c.l.b16 %v11752
    %v11856 = vunpack.c.l.b16 %v11753
    %v11857 = vunpack.c.l.b16 %v11754
    %v11858 = vunpack.c.l.b16 %v11755
    %v11859 = vunpack.c.l.b16 %v11756
    %v11860 = vunpack.c.l.b16 %v11757
    %v11861 = vunpack.c.l.b16 %v11758
    %v11862 = vunpack.c.l.b16 %v11759
    %v11863 = vpack.c.b16 %v11816, %v11815
    %v11864 = vpack.c.b16 %v11818, %v11817
    %v11865 = vpack.c.b16 %v11820, %v11819
    %v11866 = vpack.c.b16 %v11822, %v11821
    %v11867 = vpack.c.b16 %v11824, %v11823
    %v11868 = vpack.c.b16 %v11826, %v11825
    %v11869 = vpack.c.b16 %v11828, %v11827
    %v11870 = vpack.c.b16 %v11830, %v11829
    %v11871 = vpack.c.b16 %v11832, %v11831
    %v11872 = vpack.c.b16 %v11834, %v11833
    %v11873 = vpack.c.b16 %v11836, %v11835
    %v11874 = vpack.c.b16 %v11838, %v11837
    %v11875 = vpack.c.b16 %v11840, %v11839
    %v11876 = vpack.c.b16 %v11842, %v11841
    %v11877 = vpack.c.b16 %v11844, %v11843
    %v11878 = vpack.c.b16 %v11846, %v11845
    %v11879 = vpack.c.b16 %v11848, %v11847
    %v11880 = vpack.c.b16 %v11850, %v11849
    %v11881 = vpack.c.b16 %v11852, %v11851
    %v11882 = vpack.c.b16 %v11854, %v11853
    %v11883 = vpack.c.b16 %v11856, %v11855
    %v11884 = vpack.c.b16 %v11858, %v11857
    %v11885 = vpack.c.b16 %v11860, %v11859
    %v11886 = vpack.c.b16 %v11862, %v11861
    %11911 = vmatprep.subr.bf16.mxu0 0
    %11912 = vmatpush1.bf16.msra.mxu0 %v11863
    %11913 = vmatprep.subr.bf16.mxu0 0
    %11914 = vmatpush1.bf16.msra.mxu0 %v11864
    %11915 = vmatprep.subr.bf16.mxu0 0
    %11916 = vmatpush1.bf16.msra.mxu0 %v11865
    %11917 = vmatprep.subr.bf16.mxu0 0
    %11918 = vmatpush1.bf16.msra.mxu0 %v11866
    %11919 = vmatprep.subr.bf16.mxu0 0
    %11920 = vmatpush1.bf16.msra.mxu0 %v11867
    %11921 = vmatprep.subr.bf16.mxu0 0
    %11922 = vmatpush1.bf16.msra.mxu0 %v11868
    %11923 = vmatprep.subr.bf16.mxu0 0
    %11924 = vmatpush1.bf16.msra.mxu0 %v11869
    %11925 = vmatprep.subr.bf16.mxu0 0
    %11926 = vmatpush1.bf16.msra.mxu0 %v11870
    %11927 = vmatprep.subr.bf16.mxu0 0
    %11928 = vmatpush1.bf16.msra.mxu0 %v11871
    %11929 = vmatprep.subr.bf16.mxu0 0
    %11930 = vmatpush1.bf16.msra.mxu0 %v11872
    %11931 = vmatprep.subr.bf16.mxu0 0
    %11932 = vmatpush1.bf16.msra.mxu0 %v11873
    %11933 = vmatprep.subr.bf16.mxu0 0
    %11934 = vmatpush1.bf16.msra.mxu0 %v11874
    %11935 = vmatprep.subr.bf16.mxu0 0
    %11936 = vmatpush1.bf16.msra.mxu0 %v11875
    %11937 = vmatprep.subr.bf16.mxu0 0
    %11938 = vmatpush1.bf16.msra.mxu0 %v11876
    %11939 = vmatprep.subr.bf16.mxu0 0
    %11940 = vmatpush1.bf16.msra.mxu0 %v11877
    %11941 = vmatprep.subr.bf16.mxu0 0
    %11942 = vmatpush1.bf16.msra.mxu0 %v11878
    %11943 = vmatprep.mubr.bf16.mxu0 %v11710
    %11944 = vmatmul.mubr.bf16.gmra.mrb[0].mxu0 %v11709
    %v11945 = vpop.f32.mrb[0].mxu0
    %v11946 = vadd.f32 %v11765, %v11945
    %v11947 = vpop.f32.mrb[0].mxu0
    %v11948 = vpop.f32.mrb[0].mxu0
    %v11949 = vpop.f32.mrb[0].mxu0
    %11950 = vdwg.mxu0
    %11951 = vmatprep.subr.bf16.mxu0 0
    %11952 = vmatpush1.bf16.msra.mxu0 %v11879
    %11953 = vmatprep.subr.bf16.mxu0 0
    %11954 = vmatpush1.bf16.msra.mxu0 %v11880
    %11955 = vmatprep.subr.bf16.mxu0 0
    %11956 = vmatpush1.bf16.msra.mxu0 %v11881
    %11957 = vmatprep.subr.bf16.mxu0 0
    %11958 = vmatpush1.bf16.msra.mxu0 %v11882
    %11959 = vmatprep.subr.bf16.mxu0 0
    %11960 = vmatpush1.bf16.msra.mxu0 %v11883
    %11961 = vmatprep.subr.bf16.mxu0 0
    %11962 = vmatpush1.bf16.msra.mxu0 %v11884
    %11963 = vmatprep.subr.bf16.mxu0 0
    %11964 = vmatpush1.bf16.msra.mxu0 %v11885
    %11965 = vmatprep.subr.bf16.mxu0 0
    %11966 = vmatpush1.bf16.msra.mxu0 %v11886
    %11967 = vmatprep.subr.bf16.mxu0 0
    %11968 = vmatpush1.bf16.msra.mxu0 0
    %11969 = vmatprep.subr.bf16.mxu0 0
    %11970 = vmatpush1.bf16.msra.mxu0 0
    %11971 = vmatprep.subr.bf16.mxu0 0
    %11972 = vmatpush1.bf16.msra.mxu0 0
    %11973 = vmatprep.subr.bf16.mxu0 0
    %11974 = vmatpush1.bf16.msra.mxu0 0
    %11975 = vmatprep.subr.bf16.mxu0 0
    %11976 = vmatpush1.bf16.msra.mxu0 0
    %11977 = vmatprep.subr.bf16.mxu0 0
    %11978 = vmatpush1.bf16.msra.mxu0 0
    %11979 = vmatprep.subr.bf16.mxu0 0
    %11980 = vmatpush1.bf16.msra.mxu0 0
    %11981 = vmatprep.subr.bf16.mxu0 0
    %11982 = vmatpush1.bf16.msra.mxu0 0
    %11983 = vmatprep.mubr.bf16.mxu0 0
    %11984 = vmatmul.mubr.bf16.gmra.mrb[0].mxu0 %v11711
    %v11985 = vpop.f32.mrb[0].mxu0
    %v11986 = vadd.f32 %v11946, %v11985
    %v11987 = vpop.f32.mrb[0].mxu0
    %v11988 = vpop.f32.mrb[0].mxu0
    %v11989 = vpop.f32.mrb[0].mxu0
    %11990 = vdwg.mxu0
    %11991 = vst [vmem:[%s12] sm:$0xff] %v11986
    // Predicated region
    $region54: #{rnd_forward.1} parent=1 // pred_check
      _
    $region55: #{rnd_forward.1} parent=1 // pred_check_branch
      %11993 = sbr.rel (0) target = $region57
    $region56: #{rnd_forward.1} parent=1 // pred_region
      _
    $region57: #{rnd_forward.1} parent=1 // pred_fallthru
      _
    // Predicated region
    $region58: #{rnd_forward.1} parent=1 // pred_check
      _
    $region59: #{rnd_forward.1} parent=1 // pred_check_branch
      %11995 = sbr.rel (0) target = $region61
    $region60: #{rnd_forward.1} parent=1 // pred_region
      _
    $region61: #{rnd_forward.1} parent=1 // pred_fallthru
      _
    %11996 = vsyncpa [#allocation5], 1

</llo_original>
